<compile_context>
chip_gen: v7x
topology: tpu7x:2x2x1
jax: 0.10.0
libtpu: 0.0.40
codegen_flags: <defaults>
</compile_context>

<pallas_src>
import functools

import jax
import jax.numpy as jnp
from jax.experimental import pallas as pl
from jax.experimental.pallas import tpu as pltpu

EPS = 1e-5  # PyTorch BatchNorm2d default eps


# ------------------------------ common helpers ------------------------------

def _cparams():
    return pltpu.CompilerParams(
        dimension_semantics=("parallel",),      # batch axis -> megacore on v7x
        vmem_limit_bytes=32 * 1024 * 1024,
    )


def _batch_spec(block_shape):
    # one image per grid step
    n_rest = len(block_shape) - 1
    return pl.BlockSpec(block_shape, lambda n: (n,) + (0,) * n_rest)


def _full_spec(shape):
    # whole array, same block every grid step -> stays VMEM-resident
    return pl.BlockSpec(shape, lambda n: (0,) * len(shape))


# ----------------------------- Pallas kernels -------------------------------

def _convt_kernel(x_ref, wt_ref, bt_ref, o_ref):
    # per-pixel dense map: (H*W, Ci) @ (Ci, 4*Co) + (1, 4*Co)
    x = x_ref[0].astype(jnp.bfloat16)
    o_ref[0] = (jnp.dot(x, wt_ref[...], preferred_element_type=jnp.float32)
                + bt_ref[...])


def _conv_epilogue(acc, o_ref, st_ref, *, M, Win, Wvalid, Lout, relu, stats):
    co = o_ref.shape[-1]
    if relu:
        acc = jnp.maximum(acc, 0.0)
    o_ref[0, 0:M, :] = acc
    if Lout > M:
        o_ref[0, M:Lout, :] = jnp.zeros((Lout - M, co), jnp.float32)
    if stats:
        # per-image sum / sum-of-squares over VALID pixels only
        r = jax.lax.broadcasted_iota(jnp.int32, (M, 1), 0)
        av = jnp.where((r % Win) < Wvalid, acc, 0.0)
        st_ref[0, 0:1, :] = jnp.sum(av, axis=0, keepdims=True)
        st_ref[0, 1:2, :] = jnp.sum(av * av, axis=0, keepdims=True)
    else:
        st_ref[0, :, :] = jnp.zeros((2, co), jnp.float32)


def _conv1_kernel(y_ref, xd_ref, wy_ref, wd_ref, b_ref, o_ref, st_ref,
                  *, M, Win, Wvalid, Lout, relu, stats):
    # 3x3 valid conv over [convT-output ; cropped skip], im2col fused in-kernel
    # (9 shifted flat-row matmuls), channel concat fused via weight split.
    co = o_ref.shape[-1]
    acc = jnp.broadcast_to(b_ref[...], (M, co)).astype(jnp.float32)
    for t in range(9):
        di, dj = divmod(t, 3)
        off = di * Win + dj
        py = y_ref[0, off:off + M, :].astype(jnp.bfloat16)
        pd = xd_ref[0, off:off + M, :].astype(jnp.bfloat16)
        acc = acc + jnp.dot(py, wy_ref[t], preferred_element_type=jnp.float32)
        acc = acc + jnp.dot(pd, wd_ref[t], preferred_element_type=jnp.float32)
    _conv_epilogue(acc, o_ref, st_ref, M=M, Win=Win, Wvalid=Wvalid,
                   Lout=Lout, relu=relu, stats=stats)


def _conv2_kernel(h_ref, w_ref, b_ref, sc_ref, sh_ref, o_ref, st_ref,
                  *, M, Win, Wvalid, Lout, relu, stats):
    # 3x3 valid conv with the previous BatchNorm affine fused into the loads.
    co = o_ref.shape[-1]
    sc = sc_ref[...]
    sh = sh_ref[...]
    acc = jnp.broadcast_to(b_ref[...], (M, co)).astype(jnp.float32)
    for t in range(9):
        di, dj = divmod(t, 3)
        off = di * Win + dj
        p = (h_ref[0, off:off + M, :] * sc + sh).astype(jnp.bfloat16)
        acc = acc + jnp.dot(p, w_ref[t], preferred_element_type=jnp.float32)
    _conv_epilogue(acc, o_ref, st_ref, M=M, Win=Win, Wvalid=Wvalid,
                   Lout=Lout, relu=relu, stats=stats)


def _bn_apply_kernel(h_ref, sc_ref, sh_ref, o_ref):
    o_ref[0] = h_ref[0] * sc_ref[...] + sh_ref[...]


# ----------------------------- pallas_call wrappers --------------------------

def _convt_call(x_flat, wt, bt4):
    n, p, ci = x_flat.shape
    c4 = wt.shape[1]
    return pl.pallas_call(
        _convt_kernel,
        out_shape=jax.ShapeDtypeStruct((n, p, c4), jnp.float32),
        grid_spec=pltpu.PrefetchScalarGridSpec(
            num_scalar_prefetch=0, grid=(n,),
            in_specs=[_batch_spec((1, p, ci)),
                      _full_spec((ci, c4)),
                      _full_spec((1, c4))],
            out_specs=_batch_spec((1, p, c4))),
        compiler_params=_cparams(),
    )(x_flat, wt, bt4)


def _conv1_call(y_flat, xd_flat, wy, wd, b1, *, Win, Wvalid, M, Lout,
                relu, stats):
    n, lin, cy = y_flat.shape
    cd = xd_flat.shape[-1]
    co = wy.shape[-1]
    kern = functools.partial(_conv1_kernel, M=M, Win=Win, Wvalid=Wvalid,
                             Lout=Lout, relu=relu, stats=stats)
    return pl.pallas_call(
        kern,
        out_shape=(jax.ShapeDtypeStruct((n, Lout, co), jnp.float32),
                   jax.ShapeDtypeStruct((n, 2, co), jnp.float32)),
        grid_spec=pltpu.PrefetchScalarGridSpec(
            num_scalar_prefetch=0, grid=(n,),
            in_specs=[_batch_spec((1, lin, cy)),
                      _batch_spec((1, lin, cd)),
                      _full_spec((9, cy, co)),
                      _full_spec((9, cd, co)),
                      _full_spec((1, co))],
            out_specs=(_batch_spec((1, Lout, co)),
                       _batch_spec((1, 2, co)))),
        compiler_params=_cparams(),
    )(y_flat, xd_flat, wy, wd, b1)


def _conv2_call(h1, w2, b2, scale1, shift1, *, Win, Wvalid, M, Lout,
                relu, stats):
    n, lin, ci = h1.shape
    co = w2.shape[-1]
    kern = functools.partial(_conv2_kernel, M=M, Win=Win, Wvalid=Wvalid,
                             Lout=Lout, relu=relu, stats=stats)
    return pl.pallas_call(
        kern,
        out_shape=(jax.ShapeDtypeStruct((n, Lout, co), jnp.float32),
                   jax.ShapeDtypeStruct((n, 2, co), jnp.float32)),
        grid_spec=pltpu.PrefetchScalarGridSpec(
            num_scalar_prefetch=0, grid=(n,),
            in_specs=[_batch_spec((1, lin, ci)),
                      _full_spec((9, ci, co)),
                      _full_spec((1, co)),
                      _full_spec((1, ci)),
                      _full_spec((1, ci))],
            out_specs=(_batch_spec((1, Lout, co)),
                       _batch_spec((1, 2, co)))),
        compiler_params=_cparams(),
    )(h1, w2, b2, scale1, shift1)


def _bn_apply_call(h, scale, shift):
    n, l, co = h.shape
    return pl.pallas_call(
        _bn_apply_kernel,
        out_shape=jax.ShapeDtypeStruct((n, l, co), jnp.float32),
        grid_spec=pltpu.PrefetchScalarGridSpec(
            num_scalar_prefetch=0, grid=(n,),
            in_specs=[_batch_spec((1, l, co)),
                      _full_spec((1, co)),
                      _full_spec((1, co))],
            out_specs=_batch_spec((1, l, co))),
        compiler_params=_cparams(),
    )(h, scale, shift)


# ------------------------------- forward pass -------------------------------

def _bn_affine(stats, count, gamma, beta):
    # global (train-mode) batch statistics from per-image partial sums
    s = jnp.sum(stats, axis=0)                 # (2, Co)
    mean = s[0] / count
    var = s[1] / count - mean * mean           # biased variance
    inv = jax.lax.rsqrt(var + EPS)
    scale = (gamma * inv).astype(jnp.float32)
    shift = (beta - mean * scale).astype(jnp.float32)
    return scale.reshape(1, -1), shift.reshape(1, -1)


def up_step_forward(x, x_down, params, with_relu=True):
    N, Ci, H, W = x.shape
    Co = params["Wt"].shape[1]
    Cd = x_down.shape[1]
    assert Ci == Co + Cd, (Ci, Co, Cd)

    Hin, Win = 2 * H, 2 * W
    Ho1, Wo1 = Hin - 2, Win - 2
    Ho2, Wo2 = Ho1 - 2, Wo1 - 2
    # conv kernels compute Ho*Win - 2 flat rows (row stride = Win); the
    # wrap-around columns are garbage, masked from BN stats and cropped away.
    M1, L1 = Ho1 * Win - 2, Ho1 * Win
    M2, L2 = Ho2 * Win - 2, Ho2 * Win

    f32, bf16 = jnp.float32, jnp.bfloat16

    # ---- weight repacks (bf16 MXU operands; biases / BN params stay f32) ----
    wt = jnp.transpose(params["Wt"], (0, 2, 3, 1)).reshape(Ci, 4 * Co).astype(bf16)
    bt4 = jnp.tile(params["bt"], 4).reshape(1, 4 * Co).astype(f32)
    w1 = jnp.transpose(params["W1"], (2, 3, 1, 0)).reshape(9, Ci, Co).astype(bf16)
    w1y, w1d = w1[:, :Co, :], w1[:, Co:, :]     # split = fused channel concat
    w2 = jnp.transpose(params["W2"], (2, 3, 1, 0)).reshape(9, Co, Co).astype(bf16)
    b1 = params["b1"].reshape(1, Co).astype(f32)
    b2 = params["b2"].reshape(1, Co).astype(f32)
    gamma, beta = params["gamma"], params["beta"]

    # ---- boundary layout: NCHW -> flattened NHWC rows (channels on lanes) ---
    x_flat = jnp.transpose(x, (0, 2, 3, 1)).reshape(N, H * W, Ci).astype(f32)
    dh = (x_down.shape[2] - Hin) // 2
    dw = (x_down.shape[3] - Win) // 2
    xd_flat = jnp.transpose(
        x_down[:, :, dh:dh + Hin, dw:dw + Win], (0, 2, 3, 1)
    ).reshape(N, Hin * Win, Cd).astype(f32)

    # ---- ConvTranspose2d(k=2, s=2) ----
    ydot = _convt_call(x_flat, wt, bt4)                       # (N, H*W, 4*Co)
    # 2x2 depth-to-space interleave (single XLA transpose)
    y_flat = ydot.reshape(N, H, W, 2, 2, Co).transpose(0, 1, 3, 2, 4, 5) \
                 .reshape(N, Hin * Win, Co)

    # ---- conv1 over [convT ; cropped skip] (+ReLU, + BN partial stats) ----
    h1, st1 = _conv1_call(y_flat, xd_flat, w1y, w1d, b1,
                          Win=Win, Wvalid=Wo1, M=M1, Lout=L1,
                          relu=with_relu, stats=with_relu)

    if with_relu:
        scale1, shift1 = _bn_affine(st1, N * Ho1 * Wo1, gamma, beta)
    else:
        scale1 = jnp.ones((1, Co), f32)
        shift1 = jnp.zeros((1, Co), f32)

    # ---- conv2 with BN-1 apply fused into its loads ----
    h2, st2 = _conv2_call(h1, w2, b2, scale1, shift1,
                          Win=Win, Wvalid=Wo2, M=M2, Lout=L2,
                          relu=with_relu, stats=with_relu)

    if with_relu:
        scale2, shift2 = _bn_affine(st2, N * Ho2 * Wo2, gamma, beta)
        out_flat = _bn_apply_call(h2, scale2, shift2)
    else:
        out_flat = h2

    # drop the garbage wrap-around columns and return NCHW
    out = out_flat.reshape(N, Ho2, Win, Co)[:, :, :Wo2, :]
    return jnp.transpose(out, (0, 3, 1, 2))


# --------------------------- plain-JAX reference -----------------------------

def _q(a):
    # mirror the kernels' bf16 MXU-operand rounding (accumulation stays f32)
    return a.astype(jnp.bfloat16).astype(jnp.float32)


def ref_up_step(x, x_down, params, with_relu=True):
    N, _, H, W = x.shape
    Co = params["Wt"].shape[1]
    y4 = jnp.einsum("ncij,cokl->noikjl", _q(x), _q(params["Wt"]),
                    precision=jax.lax.Precision.HIGHEST)
    y = y4.reshape(N, Co, 2 * H, 2 * W) + params["bt"][None, :, None, None]
    dh = (x_down.shape[2] - 2 * H) // 2
    dw = (x_down.shape[3] - 2 * W) // 2
    xcat = x_down[:, :, dh:dh + 2 * H, dw:dw + 2 * W]
    z = jnp.concatenate([y, xcat], axis=1)

    def conv3x3(a, wc, bc):
        o = jax.lax.conv_general_dilated(
            _q(a), _q(wc), window_strides=(1, 1), padding="VALID",
            dimension_numbers=("NCHW", "OIHW", "NCHW"),
            precision=jax.lax.Precision.HIGHEST)
        return o + bc[None, :, None, None]

    def bn(a):
        m = jnp.mean(a, axis=(0, 2, 3), keepdims=True)
        v = jnp.mean(jnp.square(a - m), axis=(0, 2, 3), keepdims=True)
        return (params["gamma"][None, :, None, None] * (a - m)
                * jax.lax.rsqrt(v + EPS)
                + params["beta"][None, :, None, None])

    if with_relu:
        a = bn(jnp.maximum(conv3x3(z, params["W1"], params["b1"]), 0.0))
        a = bn(jnp.maximum(conv3x3(a, params["W2"], params["b2"]), 0.0))
    else:
        a = conv3x3(conv3x3(z, params["W1"], params["b1"]),
                    params["W2"], params["b2"])
    return a


# ---------------------------------- main -------------------------------------

if __name__ == "__main__":
    key = jax.random.PRNGKey(0)
    ks = jax.random.split(key, 8)

    N, inC, outC, H, W = 2, 8, 4, 8, 8
    skipC = inC - outC
    Hd = Wd = 2 * H + 4          # skip connection is larger; center-cropped

    x = jax.random.normal(ks[0], (N, inC, H, W), jnp.float32)
    x_down = jax.random.normal(ks[1], (N, skipC, Hd, Wd), jnp.float32)

    params = {
        # ConvTranspose2d(inC, outC, 2, stride=2): weight (inC, outC, 2, 2)
        "Wt": 0.1 * jax.random.normal(ks[2], (inC, outC, 2, 2), jnp.float32),
        "bt": 0.1 * jax.random.normal(ks[3], (outC,), jnp.float32),
        # Conv2d(inC, outC, 3): weight (outC, inC, 3, 3)
        "W1": 0.1 * jax.random.normal(ks[4], (outC, inC, 3, 3), jnp.float32),
        "b1": 0.1 * jax.random.normal(ks[5], (outC,), jnp.float32),
        # Conv2d(outC, outC, 3): weight (outC, outC, 3, 3)
        "W2": 0.1 * jax.random.normal(ks[6], (outC, outC, 3, 3), jnp.float32),
        "b2": 0.1 * jax.random.normal(ks[7], (outC,), jnp.float32),
        # BatchNorm2d(outC) defaults
        "gamma": jnp.ones((outC,), jnp.float32),
        "beta": jnp.zeros((outC,), jnp.float32),
    }

    fwd = jax.jit(functools.partial(up_step_forward, with_relu=True))
    out = jax.block_until_ready(fwd(x, x_down, params))
    ref = ref_up_step(x, x_down, params, with_relu=True)

    assert out.shape == (N, outC, 2 * H - 4, 2 * W - 4), out.shape
    assert bool(jnp.all(jnp.isfinite(out)))
    err = float(jnp.max(jnp.abs(out - ref)))
    assert bool(jnp.allclose(out, ref, atol=5e-3, rtol=5e-3)), err

    # withReLU=False path: x = conv2(conv1(cat(convT(x), crop(x_down))))
    fwd2 = jax.jit(functools.partial(up_step_forward, with_relu=False))
    out2 = jax.block_until_ready(fwd2(x, x_down, params))
    ref2 = ref_up_step(x, x_down, params, with_relu=False)
    err2 = float(jnp.max(jnp.abs(out2 - ref2)))
    assert bool(jnp.allclose(out2, ref2, atol=5e-3, rtol=5e-3)), err2

    print("KERNEL_OK")
</pallas_src>

<mosaic_0001>
module attributes {stable_mosaic.version = 11 : i64} {
  func.func @_convt_kernel(%arg0: i32, %arg1: memref<1x64x8xf32, #tpu.memory_space<vmem>>, %arg2: memref<8x16xbf16, #tpu.memory_space<vmem>>, %arg3: memref<1x16xf32, #tpu.memory_space<vmem>>, %arg4: memref<1x64x16xf32, #tpu.memory_space<vmem>>) attributes {dimension_semantics = [#tpu.dimension_semantics<parallel>], iteration_bounds = array<i64: 2>, scalar_prefetch = 0 : i64, scratch_operands = 0 : i64, tpu.core_type = #tpu.core_type<tc>, window_params = [{transform_indices = @transform_0, window_bounds = array<i64: 1, 64, 8>}, {pipeline_mode = #tpu.pipeline_mode<synchronous>, transform_indices = @transform_1, window_bounds = array<i64: 8, 16>}, {pipeline_mode = #tpu.pipeline_mode<synchronous>, transform_indices = @transform_2, window_bounds = array<i64: 1, 16>}, {transform_indices = @transform_3, window_bounds = array<i64: 1, 64, 16>}]} {
    %c0 = arith.constant 0 : index
    %c0_0 = arith.constant 0 : index
    %c0_1 = arith.constant 0 : index
    %0 = vector.load %arg1[%c0, %c0_0, %c0_1] : memref<1x64x8xf32, #tpu.memory_space<vmem>>, vector<1x64x8xf32>
    %1 = vector.shape_cast %0 : vector<1x64x8xf32> to vector<64x8xf32>
    %2 = arith.truncf %1 : vector<64x8xf32> to vector<64x8xbf16>
    %c0_2 = arith.constant 0 : index
    %c0_3 = arith.constant 0 : index
    %3 = vector.load %arg2[%c0_2, %c0_3] : memref<8x16xbf16, #tpu.memory_space<vmem>>, vector<8x16xbf16>
    %cst = arith.constant dense<0.000000e+00> : vector<64x16xf32>
    %4 = tpu.matmul %2, %3, %cst {dimension_numbers = #tpu.dot_dimension_numbers<[1], [0], [0], [1], [0, 0, 1, 1], [], []>} : vector<64x8xbf16>, vector<8x16xbf16>, vector<64x16xf32> -> vector<64x16xf32>
    %c0_4 = arith.constant 0 : index
    %c0_5 = arith.constant 0 : index
    %5 = vector.load %arg3[%c0_4, %c0_5] : memref<1x16xf32, #tpu.memory_space<vmem>>, vector<1x16xf32>
    %6 = vector.broadcast %5 : vector<1x16xf32> to vector<64x16xf32>
    %7 = arith.addf %4, %6 : vector<64x16xf32>
    %c0_6 = arith.constant 0 : index
    %c0_7 = arith.constant 0 : index
    %c0_8 = arith.constant 0 : index
    %8 = vector.load %arg4[%c0_6, %c0_7, %c0_8] : memref<1x64x16xf32, #tpu.memory_space<vmem>>, vector<1x64x16xf32>
    %9 = vector.shape_cast %8 : vector<1x64x16xf32> to vector<64x16xf32>
    %10 = vector.shape_cast %7 : vector<64x16xf32> to vector<1x64x16xf32>
    tpu.vector_store %arg4[%c0_6, %c0_7, %c0_8], %10 {strides = array<i32>} : memref<1x64x16xf32, #tpu.memory_space<vmem>>, vector<1x64x16xf32>,
    return
  }
  func.func @transform_0(%arg0: i32) -> (i32, i32, i32) {
    %c0_i32 = arith.constant 0 : i32
    %c0_i32_0 = arith.constant 0 : i32
    %c0_i32_1 = arith.constant 0 : i32
    return %arg0, %c0_i32, %c0_i32_0 : i32, i32, i32
  }
  func.func @transform_1(%arg0: i32) -> (i32, i32) {
    %c0_i32 = arith.constant 0 : i32
    %c0_i32_0 = arith.constant 0 : i32
    %c0_i32_1 = arith.constant 0 : i32
    return %c0_i32, %c0_i32_0 : i32, i32
  }
  func.func @transform_2(%arg0: i32) -> (i32, i32) {
    %c0_i32 = arith.constant 0 : i32
    %c0_i32_0 = arith.constant 0 : i32
    %c0_i32_1 = arith.constant 0 : i32
    return %c0_i32, %c0_i32_0 : i32, i32
  }
  func.func @transform_3(%arg0: i32) -> (i32, i32, i32) {
    %c0_i32 = arith.constant 0 : i32
    %c0_i32_0 = arith.constant 0 : i32
    %c0_i32_1 = arith.constant 0 : i32
    return %arg0, %c0_i32, %c0_i32_0 : i32, i32, i32
  }
}

module attributes {stable_mosaic.version = 11 : i64} {
  func.func @_conv1_kernel(%arg0: i32, %arg1: memref<1x256x4xf32, #tpu.memory_space<vmem>>, %arg2: memref<1x256x4xf32, #tpu.memory_space<vmem>>, %arg3: memref<9x4x4xbf16, #tpu.memory_space<vmem>>, %arg4: memref<9x4x4xbf16, #tpu.memory_space<vmem>>, %arg5: memref<1x4xf32, #tpu.memory_space<vmem>>, %arg6: memref<1x224x4xf32, #tpu.memory_space<vmem>>, %arg7: memref<1x2x4xf32, #tpu.memory_space<vmem>>) attributes {dimension_semantics = [#tpu.dimension_semantics<parallel>], iteration_bounds = array<i64: 2>, scalar_prefetch = 0 : i64, scratch_operands = 0 : i64, tpu.core_type = #tpu.core_type<tc>, window_params = [{transform_indices = @transform_0, window_bounds = array<i64: 1, 256, 4>}, {transform_indices = @transform_1, window_bounds = array<i64: 1, 256, 4>}, {pipeline_mode = #tpu.pipeline_mode<synchronous>, transform_indices = @transform_2, window_bounds = array<i64: 9, 4, 4>}, {pipeline_mode = #tpu.pipeline_mode<synchronous>, transform_indices = @transform_3, window_bounds = array<i64: 9, 4, 4>}, {pipeline_mode = #tpu.pipeline_mode<synchronous>, transform_indices = @transform_4, window_bounds = array<i64: 1, 4>}, {transform_indices = @transform_5, window_bounds = array<i64: 1, 224, 4>}, {transform_indices = @transform_6, window_bounds = array<i64: 1, 2, 4>}]} {
    %c0 = arith.constant 0 : index
    %c0_0 = arith.constant 0 : index
    %0 = vector.load %arg5[%c0, %c0_0] : memref<1x4xf32, #tpu.memory_space<vmem>>, vector<1x4xf32>
    %1 = vector.shape_cast %0 : vector<1x4xf32> to vector<1x4xf32>
    %2 = vector.broadcast %1 : vector<1x4xf32> to vector<222x4xf32>
    %c0_1 = arith.constant 0 : index
    %c0_2 = arith.constant 0 : index
    %c0_3 = arith.constant 0 : index
    %3 = vector.load %arg1[%c0_1, %c0_2, %c0_3] : memref<1x256x4xf32, #tpu.memory_space<vmem>>, vector<1x222x4xf32>
    %4 = vector.shape_cast %3 : vector<1x222x4xf32> to vector<222x4xf32>
    %5 = arith.truncf %4 : vector<222x4xf32> to vector<222x4xbf16>
    %c0_4 = arith.constant 0 : index
    %c0_5 = arith.constant 0 : index
    %c0_6 = arith.constant 0 : index
    %6 = vector.load %arg2[%c0_4, %c0_5, %c0_6] : memref<1x256x4xf32, #tpu.memory_space<vmem>>, vector<1x222x4xf32>
    %7 = vector.shape_cast %6 : vector<1x222x4xf32> to vector<222x4xf32>
    %8 = arith.truncf %7 : vector<222x4xf32> to vector<222x4xbf16>
    %c0_7 = arith.constant 0 : index
    %c0_8 = arith.constant 0 : index
    %c0_9 = arith.constant 0 : index
    %9 = vector.load %arg3[%c0_7, %c0_8, %c0_9] : memref<9x4x4xbf16, #tpu.memory_space<vmem>>, vector<1x4x4xbf16>
    %10 = vector.shape_cast %9 : vector<1x4x4xbf16> to vector<4x4xbf16>
    %cst = arith.constant dense<0.000000e+00> : vector<222x4xf32>
    %11 = tpu.matmul %5, %10, %cst {dimension_numbers = #tpu.dot_dimension_numbers<[1], [0], [0], [1], [0, 0, 1, 1], [], []>} : vector<222x4xbf16>, vector<4x4xbf16>, vector<222x4xf32> -> vector<222x4xf32>
    %12 = arith.addf %2, %11 : vector<222x4xf32>
    %c0_10 = arith.constant 0 : index
    %c0_11 = arith.constant 0 : index
    %c0_12 = arith.constant 0 : index
    %13 = vector.load %arg4[%c0_10, %c0_11, %c0_12] : memref<9x4x4xbf16, #tpu.memory_space<vmem>>, vector<1x4x4xbf16>
    %14 = vector.shape_cast %13 : vector<1x4x4xbf16> to vector<4x4xbf16>
    %cst_13 = arith.constant dense<0.000000e+00> : vector<222x4xf32>
    %15 = tpu.matmul %8, %14, %cst_13 {dimension_numbers = #tpu.dot_dimension_numbers<[1], [0], [0], [1], [0, 0, 1, 1], [], []>} : vector<222x4xbf16>, vector<4x4xbf16>, vector<222x4xf32> -> vector<222x4xf32>
    %16 = arith.addf %12, %15 : vector<222x4xf32>
    %c0_14 = arith.constant 0 : index
    %c1 = arith.constant 1 : index
    %c0_15 = arith.constant 0 : index
    %17 = vector.load %arg1[%c0_14, %c1, %c0_15] : memref<1x256x4xf32, #tpu.memory_space<vmem>>, vector<1x222x4xf32>
    %18 = vector.shape_cast %17 : vector<1x222x4xf32> to vector<222x4xf32>
    %19 = arith.truncf %18 : vector<222x4xf32> to vector<222x4xbf16>
    %c0_16 = arith.constant 0 : index
    %c1_17 = arith.constant 1 : index
    %c0_18 = arith.constant 0 : index
    %20 = vector.load %arg2[%c0_16, %c1_17, %c0_18] : memref<1x256x4xf32, #tpu.memory_space<vmem>>, vector<1x222x4xf32>
    %21 = vector.shape_cast %20 : vector<1x222x4xf32> to vector<222x4xf32>
    %22 = arith.truncf %21 : vector<222x4xf32> to vector<222x4xbf16>
    %c1_19 = arith.constant 1 : index
    %c0_20 = arith.constant 0 : index
    %c0_21 = arith.constant 0 : index
    %23 = vector.load %arg3[%c1_19, %c0_20, %c0_21] : memref<9x4x4xbf16, #tpu.memory_space<vmem>>, vector<1x4x4xbf16>
    %24 = vector.shape_cast %23 : vector<1x4x4xbf16> to vector<4x4xbf16>
    %cst_22 = arith.constant dense<0.000000e+00> : vector<222x4xf32>
    %25 = tpu.matmul %19, %24, %cst_22 {dimension_numbers = #tpu.dot_dimension_numbers<[1], [0], [0], [1], [0, 0, 1, 1], [], []>} : vector<222x4xbf16>, vector<4x4xbf16>, vector<222x4xf32> -> vector<222x4xf32>
    %26 = arith.addf %16, %25 : vector<222x4xf32>
    %c1_23 = arith.constant 1 : index
    %c0_24 = arith.constant 0 : index
    %c0_25 = arith.constant 0 : index
    %27 = vector.load %arg4[%c1_23, %c0_24, %c0_25] : memref<9x4x4xbf16, #tpu.memory_space<vmem>>, vector<1x4x4xbf16>
    %28 = vector.shape_cast %27 : vector<1x4x4xbf16> to vector<4x4xbf16>
    %cst_26 = arith.constant dense<0.000000e+00> : vector<222x4xf32>
    %29 = tpu.matmul %22, %28, %cst_26 {dimension_numbers = #tpu.dot_dimension_numbers<[1], [0], [0], [1], [0, 0, 1, 1], [], []>} : vector<222x4xbf16>, vector<4x4xbf16>, vector<222x4xf32> -> vector<222x4xf32>
    %30 = arith.addf %26, %29 : vector<222x4xf32>
    %c0_27 = arith.constant 0 : index
    %c2 = arith.constant 2 : index
    %c0_28 = arith.constant 0 : index
    %31 = vector.load %arg1[%c0_27, %c2, %c0_28] : memref<1x256x4xf32, #tpu.memory_space<vmem>>, vector<1x222x4xf32>
    %32 = vector.shape_cast %31 : vector<1x222x4xf32> to vector<222x4xf32>
    %33 = arith.truncf %32 : vector<222x4xf32> to vector<222x4xbf16>
    %c0_29 = arith.constant 0 : index
    %c2_30 = arith.constant 2 : index
    %c0_31 = arith.constant 0 : index
    %34 = vector.load %arg2[%c0_29, %c2_30, %c0_31] : memref<1x256x4xf32, #tpu.memory_space<vmem>>, vector<1x222x4xf32>
    %35 = vector.shape_cast %34 : vector<1x222x4xf32> to vector<222x4xf32>
    %36 = arith.truncf %35 : vector<222x4xf32> to vector<222x4xbf16>
    %c2_32 = arith.constant 2 : index
    %c0_33 = arith.constant 0 : index
    %c0_34 = arith.constant 0 : index
    %37 = vector.load %arg3[%c2_32, %c0_33, %c0_34] : memref<9x4x4xbf16, #tpu.memory_space<vmem>>, vector<1x4x4xbf16>
    %38 = vector.shape_cast %37 : vector<1x4x4xbf16> to vector<4x4xbf16>
    %cst_35 = arith.constant dense<0.000000e+00> : vector<222x4xf32>
    %39 = tpu.matmul %33, %38, %cst_35 {dimension_numbers = #tpu.dot_dimension_numbers<[1], [0], [0], [1], [0, 0, 1, 1], [], []>} : vector<222x4xbf16>, vector<4x4xbf16>, vector<222x4xf32> -> vector<222x4xf32>
    %40 = arith.addf %30, %39 : vector<222x4xf32>
    %c2_36 = arith.constant 2 : index
    %c0_37 = arith.constant 0 : index
    %c0_38 = arith.constant 0 : index
    %41 = vector.load %arg4[%c2_36, %c0_37, %c0_38] : memref<9x4x4xbf16, #tpu.memory_space<vmem>>, vector<1x4x4xbf16>
    %42 = vector.shape_cast %41 : vector<1x4x4xbf16> to vector<4x4xbf16>
    %cst_39 = arith.constant dense<0.000000e+00> : vector<222x4xf32>
    %43 = tpu.matmul %36, %42, %cst_39 {dimension_numbers = #tpu.dot_dimension_numbers<[1], [0], [0], [1], [0, 0, 1, 1], [], []>} : vector<222x4xbf16>, vector<4x4xbf16>, vector<222x4xf32> -> vector<222x4xf32>
    %44 = arith.addf %40, %43 : vector<222x4xf32>
    %c0_40 = arith.constant 0 : index
    %c16 = arith.constant 16 : index
    %c0_41 = arith.constant 0 : index
    %45 = vector.load %arg1[%c0_40, %c16, %c0_41] : memref<1x256x4xf32, #tpu.memory_space<vmem>>, vector<1x222x4xf32>
    %46 = vector.shape_cast %45 : vector<1x222x4xf32> to vector<222x4xf32>
    %47 = arith.truncf %46 : vector<222x4xf32> to vector<222x4xbf16>
    %c0_42 = arith.constant 0 : index
    %c16_43 = arith.constant 16 : index
    %c0_44 = arith.constant 0 : index
    %48 = vector.load %arg2[%c0_42, %c16_43, %c0_44] : memref<1x256x4xf32, #tpu.memory_space<vmem>>, vector<1x222x4xf32>
    %49 = vector.shape_cast %48 : vector<1x222x4xf32> to vector<222x4xf32>
    %50 = arith.truncf %49 : vector<222x4xf32> to vector<222x4xbf16>
    %c3 = arith.constant 3 : index
    %c0_45 = arith.constant 0 : index
    %c0_46 = arith.constant 0 : index
    %51 = vector.load %arg3[%c3, %c0_45, %c0_46] : memref<9x4x4xbf16, #tpu.memory_space<vmem>>, vector<1x4x4xbf16>
    %52 = vector.shape_cast %51 : vector<1x4x4xbf16> to vector<4x4xbf16>
    %cst_47 = arith.constant dense<0.000000e+00> : vector<222x4xf32>
    %53 = tpu.matmul %47, %52, %cst_47 {dimension_numbers = #tpu.dot_dimension_numbers<[1], [0], [0], [1], [0, 0, 1, 1], [], []>} : vector<222x4xbf16>, vector<4x4xbf16>, vector<222x4xf32> -> vector<222x4xf32>
    %54 = arith.addf %44, %53 : vector<222x4xf32>
    %c3_48 = arith.constant 3 : index
    %c0_49 = arith.constant 0 : index
    %c0_50 = arith.constant 0 : index
    %55 = vector.load %arg4[%c3_48, %c0_49, %c0_50] : memref<9x4x4xbf16, #tpu.memory_space<vmem>>, vector<1x4x4xbf16>
    %56 = vector.shape_cast %55 : vector<1x4x4xbf16> to vector<4x4xbf16>
    %cst_51 = arith.constant dense<0.000000e+00> : vector<222x4xf32>
    %57 = tpu.matmul %50, %56, %cst_51 {dimension_numbers = #tpu.dot_dimension_numbers<[1], [0], [0], [1], [0, 0, 1, 1], [], []>} : vector<222x4xbf16>, vector<4x4xbf16>, vector<222x4xf32> -> vector<222x4xf32>
    %58 = arith.addf %54, %57 : vector<222x4xf32>
    %c0_52 = arith.constant 0 : index
    %c17 = arith.constant 17 : index
    %c0_53 = arith.constant 0 : index
    %59 = vector.load %arg1[%c0_52, %c17, %c0_53] : memref<1x256x4xf32, #tpu.memory_space<vmem>>, vector<1x222x4xf32>
    %60 = vector.shape_cast %59 : vector<1x222x4xf32> to vector<222x4xf32>
    %61 = arith.truncf %60 : vector<222x4xf32> to vector<222x4xbf16>
    %c0_54 = arith.constant 0 : index
    %c17_55 = arith.constant 17 : index
    %c0_56 = arith.constant 0 : index
    %62 = vector.load %arg2[%c0_54, %c17_55, %c0_56] : memref<1x256x4xf32, #tpu.memory_space<vmem>>, vector<1x222x4xf32>
    %63 = vector.shape_cast %62 : vector<1x222x4xf32> to vector<222x4xf32>
    %64 = arith.truncf %63 : vector<222x4xf32> to vector<222x4xbf16>
    %c4 = arith.constant 4 : index
    %c0_57 = arith.constant 0 : index
    %c0_58 = arith.constant 0 : index
    %65 = vector.load %arg3[%c4, %c0_57, %c0_58] : memref<9x4x4xbf16, #tpu.memory_space<vmem>>, vector<1x4x4xbf16>
    %66 = vector.shape_cast %65 : vector<1x4x4xbf16> to vector<4x4xbf16>
    %cst_59 = arith.constant dense<0.000000e+00> : vector<222x4xf32>
    %67 = tpu.matmul %61, %66, %cst_59 {dimension_numbers = #tpu.dot_dimension_numbers<[1], [0], [0], [1], [0, 0, 1, 1], [], []>} : vector<222x4xbf16>, vector<4x4xbf16>, vector<222x4xf32> -> vector<222x4xf32>
    %68 = arith.addf %58, %67 : vector<222x4xf32>
    %c4_60 = arith.constant 4 : index
    %c0_61 = arith.constant 0 : index
    %c0_62 = arith.constant 0 : index
    %69 = vector.load %arg4[%c4_60, %c0_61, %c0_62] : memref<9x4x4xbf16, #tpu.memory_space<vmem>>, vector<1x4x4xbf16>
    %70 = vector.shape_cast %69 : vector<1x4x4xbf16> to vector<4x4xbf16>
    %cst_63 = arith.constant dense<0.000000e+00> : vector<222x4xf32>
    %71 = tpu.matmul %64, %70, %cst_63 {dimension_numbers = #tpu.dot_dimension_numbers<[1], [0], [0], [1], [0, 0, 1, 1], [], []>} : vector<222x4xbf16>, vector<4x4xbf16>, vector<222x4xf32> -> vector<222x4xf32>
    %72 = arith.addf %68, %71 : vector<222x4xf32>
    %c0_64 = arith.constant 0 : index
    %c18 = arith.constant 18 : index
    %c0_65 = arith.constant 0 : index
    %73 = vector.load %arg1[%c0_64, %c18, %c0_65] : memref<1x256x4xf32, #tpu.memory_space<vmem>>, vector<1x222x4xf32>
    %74 = vector.shape_cast %73 : vector<1x222x4xf32> to vector<222x4xf32>
    %75 = arith.truncf %74 : vector<222x4xf32> to vector<222x4xbf16>
    %c0_66 = arith.constant 0 : index
    %c18_67 = arith.constant 18 : index
    %c0_68 = arith.constant 0 : index
    %76 = vector.load %arg2[%c0_66, %c18_67, %c0_68] : memref<1x256x4xf32, #tpu.memory_space<vmem>>, vector<1x222x4xf32>
    %77 = vector.shape_cast %76 : vector<1x222x4xf32> to vector<222x4xf32>
    %78 = arith.truncf %77 : vector<222x4xf32> to vector<222x4xbf16>
    %c5 = arith.constant 5 : index
    %c0_69 = arith.constant 0 : index
    %c0_70 = arith.constant 0 : index
    %79 = vector.load %arg3[%c5, %c0_69, %c0_70] : memref<9x4x4xbf16, #tpu.memory_space<vmem>>, vector<1x4x4xbf16>
    %80 = vector.shape_cast %79 : vector<1x4x4xbf16> to vector<4x4xbf16>
    %cst_71 = arith.constant dense<0.000000e+00> : vector<222x4xf32>
    %81 = tpu.matmul %75, %80, %cst_71 {dimension_numbers = #tpu.dot_dimension_numbers<[1], [0], [0], [1], [0, 0, 1, 1], [], []>} : vector<222x4xbf16>, vector<4x4xbf16>, vector<222x4xf32> -> vector<222x4xf32>
    %82 = arith.addf %72, %81 : vector<222x4xf32>
    %c5_72 = arith.constant 5 : index
    %c0_73 = arith.constant 0 : index
    %c0_74 = arith.constant 0 : index
    %83 = vector.load %arg4[%c5_72, %c0_73, %c0_74] : memref<9x4x4xbf16, #tpu.memory_space<vmem>>, vector<1x4x4xbf16>
    %84 = vector.shape_cast %83 : vector<1x4x4xbf16> to vector<4x4xbf16>
    %cst_75 = arith.constant dense<0.000000e+00> : vector<222x4xf32>
    %85 = tpu.matmul %78, %84, %cst_75 {dimension_numbers = #tpu.dot_dimension_numbers<[1], [0], [0], [1], [0, 0, 1, 1], [], []>} : vector<222x4xbf16>, vector<4x4xbf16>, vector<222x4xf32> -> vector<222x4xf32>
    %86 = arith.addf %82, %85 : vector<222x4xf32>
    %c0_76 = arith.constant 0 : index
    %c32 = arith.constant 32 : index
    %c0_77 = arith.constant 0 : index
    %87 = vector.load %arg1[%c0_76, %c32, %c0_77] : memref<1x256x4xf32, #tpu.memory_space<vmem>>, vector<1x222x4xf32>
    %88 = vector.shape_cast %87 : vector<1x222x4xf32> to vector<222x4xf32>
    %89 = arith.truncf %88 : vector<222x4xf32> to vector<222x4xbf16>
    %c0_78 = arith.constant 0 : index
    %c32_79 = arith.constant 32 : index
    %c0_80 = arith.constant 0 : index
    %90 = vector.load %arg2[%c0_78, %c32_79, %c0_80] : memref<1x256x4xf32, #tpu.memory_space<vmem>>, vector<1x222x4xf32>
    %91 = vector.shape_cast %90 : vector<1x222x4xf32> to vector<222x4xf32>
    %92 = arith.truncf %91 : vector<222x4xf32> to vector<222x4xbf16>
    %c6 = arith.constant 6 : index
    %c0_81 = arith.constant 0 : index
    %c0_82 = arith.constant 0 : index
    %93 = vector.load %arg3[%c6, %c0_81, %c0_82] : memref<9x4x4xbf16, #tpu.memory_space<vmem>>, vector<1x4x4xbf16>
    %94 = vector.shape_cast %93 : vector<1x4x4xbf16> to vector<4x4xbf16>
    %cst_83 = arith.constant dense<0.000000e+00> : vector<222x4xf32>
    %95 = tpu.matmul %89, %94, %cst_83 {dimension_numbers = #tpu.dot_dimension_numbers<[1], [0], [0], [1], [0, 0, 1, 1], [], []>} : vector<222x4xbf16>, vector<4x4xbf16>, vector<222x4xf32> -> vector<222x4xf32>
    %96 = arith.addf %86, %95 : vector<222x4xf32>
    %c6_84 = arith.constant 6 : index
    %c0_85 = arith.constant 0 : index
    %c0_86 = arith.constant 0 : index
    %97 = vector.load %arg4[%c6_84, %c0_85, %c0_86] : memref<9x4x4xbf16, #tpu.memory_space<vmem>>, vector<1x4x4xbf16>
    %98 = vector.shape_cast %97 : vector<1x4x4xbf16> to vector<4x4xbf16>
    %cst_87 = arith.constant dense<0.000000e+00> : vector<222x4xf32>
    %99 = tpu.matmul %92, %98, %cst_87 {dimension_numbers = #tpu.dot_dimension_numbers<[1], [0], [0], [1], [0, 0, 1, 1], [], []>} : vector<222x4xbf16>, vector<4x4xbf16>, vector<222x4xf32> -> vector<222x4xf32>
    %100 = arith.addf %96, %99 : vector<222x4xf32>
    %c0_88 = arith.constant 0 : index
    %c33 = arith.constant 33 : index
    %c0_89 = arith.constant 0 : index
    %101 = vector.load %arg1[%c0_88, %c33, %c0_89] : memref<1x256x4xf32, #tpu.memory_space<vmem>>, vector<1x222x4xf32>
    %102 = vector.shape_cast %101 : vector<1x222x4xf32> to vector<222x4xf32>
    %103 = arith.truncf %102 : vector<222x4xf32> to vector<222x4xbf16>
    %c0_90 = arith.constant 0 : index
    %c33_91 = arith.constant 33 : index
    %c0_92 = arith.constant 0 : index
    %104 = vector.load %arg2[%c0_90, %c33_91, %c0_92] : memref<1x256x4xf32, #tpu.memory_space<vmem>>, vector<1x222x4xf32>
    %105 = vector.shape_cast %104 : vector<1x222x4xf32> to vector<222x4xf32>
    %106 = arith.truncf %105 : vector<222x4xf32> to vector<222x4xbf16>
    %c7 = arith.constant 7 : index
    %c0_93 = arith.constant 0 : index
    %c0_94 = arith.constant 0 : index
    %107 = vector.load %arg3[%c7, %c0_93, %c0_94] : memref<9x4x4xbf16, #tpu.memory_space<vmem>>, vector<1x4x4xbf16>
    %108 = vector.shape_cast %107 : vector<1x4x4xbf16> to vector<4x4xbf16>
    %cst_95 = arith.constant dense<0.000000e+00> : vector<222x4xf32>
    %109 = tpu.matmul %103, %108, %cst_95 {dimension_numbers = #tpu.dot_dimension_numbers<[1], [0], [0], [1], [0, 0, 1, 1], [], []>} : vector<222x4xbf16>, vector<4x4xbf16>, vector<222x4xf32> -> vector<222x4xf32>
    %110 = arith.addf %100, %109 : vector<222x4xf32>
    %c7_96 = arith.constant 7 : index
    %c0_97 = arith.constant 0 : index
    %c0_98 = arith.constant 0 : index
    %111 = vector.load %arg4[%c7_96, %c0_97, %c0_98] : memref<9x4x4xbf16, #tpu.memory_space<vmem>>, vector<1x4x4xbf16>
    %112 = vector.shape_cast %111 : vector<1x4x4xbf16> to vector<4x4xbf16>
    %cst_99 = arith.constant dense<0.000000e+00> : vector<222x4xf32>
    %113 = tpu.matmul %106, %112, %cst_99 {dimension_numbers = #tpu.dot_dimension_numbers<[1], [0], [0], [1], [0, 0, 1, 1], [], []>} : vector<222x4xbf16>, vector<4x4xbf16>, vector<222x4xf32> -> vector<222x4xf32>
    %114 = arith.addf %110, %113 : vector<222x4xf32>
    %c0_100 = arith.constant 0 : index
    %c34 = arith.constant 34 : index
    %c0_101 = arith.constant 0 : index
    %115 = vector.load %arg1[%c0_100, %c34, %c0_101] : memref<1x256x4xf32, #tpu.memory_space<vmem>>, vector<1x222x4xf32>
    %116 = vector.shape_cast %115 : vector<1x222x4xf32> to vector<222x4xf32>
    %117 = arith.truncf %116 : vector<222x4xf32> to vector<222x4xbf16>
    %c0_102 = arith.constant 0 : index
    %c34_103 = arith.constant 34 : index
    %c0_104 = arith.constant 0 : index
    %118 = vector.load %arg2[%c0_102, %c34_103, %c0_104] : memref<1x256x4xf32, #tpu.memory_space<vmem>>, vector<1x222x4xf32>
    %119 = vector.shape_cast %118 : vector<1x222x4xf32> to vector<222x4xf32>
    %120 = arith.truncf %119 : vector<222x4xf32> to vector<222x4xbf16>
    %c8 = arith.constant 8 : index
    %c0_105 = arith.constant 0 : index
    %c0_106 = arith.constant 0 : index
    %121 = vector.load %arg3[%c8, %c0_105, %c0_106] : memref<9x4x4xbf16, #tpu.memory_space<vmem>>, vector<1x4x4xbf16>
    %122 = vector.shape_cast %121 : vector<1x4x4xbf16> to vector<4x4xbf16>
    %cst_107 = arith.constant dense<0.000000e+00> : vector<222x4xf32>
    %123 = tpu.matmul %117, %122, %cst_107 {dimension_numbers = #tpu.dot_dimension_numbers<[1], [0], [0], [1], [0, 0, 1, 1], [], []>} : vector<222x4xbf16>, vector<4x4xbf16>, vector<222x4xf32> -> vector<222x4xf32>
    %124 = arith.addf %114, %123 : vector<222x4xf32>
    %c8_108 = arith.constant 8 : index
    %c0_109 = arith.constant 0 : index
    %c0_110 = arith.constant 0 : index
    %125 = vector.load %arg4[%c8_108, %c0_109, %c0_110] : memref<9x4x4xbf16, #tpu.memory_space<vmem>>, vector<1x4x4xbf16>
    %126 = vector.shape_cast %125 : vector<1x4x4xbf16> to vector<4x4xbf16>
    %cst_111 = arith.constant dense<0.000000e+00> : vector<222x4xf32>
    %127 = tpu.matmul %120, %126, %cst_111 {dimension_numbers = #tpu.dot_dimension_numbers<[1], [0], [0], [1], [0, 0, 1, 1], [], []>} : vector<222x4xbf16>, vector<4x4xbf16>, vector<222x4xf32> -> vector<222x4xf32>
    %128 = arith.addf %124, %127 : vector<222x4xf32>
    %cst_112 = arith.constant 0.000000e+00 : f32
    %129 = vector.broadcast %cst_112 : f32 to vector<222x4xf32>
    %130 = arith.maximumf %128, %129 : vector<222x4xf32>
    %c0_113 = arith.constant 0 : index
    %c0_114 = arith.constant 0 : index
    %c0_115 = arith.constant 0 : index
    %131 = vector.load %arg6[%c0_113, %c0_114, %c0_115] : memref<1x224x4xf32, #tpu.memory_space<vmem>>, vector<1x222x4xf32>
    %132 = vector.shape_cast %131 : vector<1x222x4xf32> to vector<222x4xf32>
    %133 = vector.shape_cast %130 : vector<222x4xf32> to vector<1x222x4xf32>
    tpu.vector_store %arg6[%c0_113, %c0_114, %c0_115], %133 {strides = array<i32>} : memref<1x224x4xf32, #tpu.memory_space<vmem>>, vector<1x222x4xf32>,
    %cst_116 = arith.constant 0.000000e+00 : f32
    %134 = vector.broadcast %cst_116 : f32 to vector<2x4xf32>
    %c0_117 = arith.constant 0 : index
    %c222 = arith.constant 222 : index
    %c0_118 = arith.constant 0 : index
    %135 = vector.load %arg6[%c0_117, %c222, %c0_118] : memref<1x224x4xf32, #tpu.memory_space<vmem>>, vector<1x2x4xf32>
    %136 = vector.shape_cast %135 : vector<1x2x4xf32> to vector<2x4xf32>
    %137 = vector.shape_cast %134 : vector<2x4xf32> to vector<1x2x4xf32>
    tpu.vector_store %arg6[%c0_117, %c222, %c0_118], %137 {strides = array<i32>} : memref<1x224x4xf32, #tpu.memory_space<vmem>>, vector<1x2x4xf32>,
    %138 = tpu.iota {dimensions = array<i32: 0>} : vector<222x1xi32>
    %c16_i32 = arith.constant 16 : i32
    %c0_i32 = arith.constant 0 : i32
    %139 = arith.cmpi eq, %c16_i32, %c0_i32 : i32
    %c1_i32 = arith.constant 1 : i32
    %140 = arith.select %139, %c1_i32, %c16_i32 : i32
    %141 = vector.broadcast %140 : i32 to vector<222x1xi32>
    %142 = arith.remsi %138, %141 : vector<222x1xi32>
    %c0_i32_119 = arith.constant 0 : i32
    %143 = vector.broadcast %c0_i32_119 : i32 to vector<222x1xi32>
    %144 = arith.cmpi ne, %142, %143 : vector<222x1xi32>
    %c0_i32_120 = arith.constant 0 : i32
    %145 = vector.broadcast %c0_i32_120 : i32 to vector<222x1xi32>
    %146 = arith.cmpi slt, %142, %145 : vector<222x1xi32>
    %c0_i32_121 = arith.constant 0 : i32
    %147 = arith.cmpi slt, %140, %c0_i32_121 : i32
    %148 = vector.broadcast %147 : i1 to vector<222x1xi1>
    %149 = vector.broadcast %148 : vector<222x1xi1> to vector<222x1xi1>
    %150 = arith.xori %146, %149 : vector<222x1xi1>
    %151 = arith.andi %150, %144 : vector<222x1xi1>
    %152 = vector.broadcast %140 : i32 to vector<222x1xi32>
    %153 = arith.addi %142, %152 : vector<222x1xi32>
    %154 = arith.select %151, %153, %142 : vector<222x1xi1>, vector<222x1xi32>
    %c14_i32 = arith.constant 14 : i32
    %155 = vector.broadcast %c14_i32 : i32 to vector<222x1xi32>
    %156 = arith.cmpi slt, %154, %155 : vector<222x1xi32>
    %cst_122 = arith.constant 0.000000e+00 : f32
    %157 = vector.shape_cast %156 : vector<222x1xi1> to vector<222x1xi1>
    %158 = vector.broadcast %157 : vector<222x1xi1> to vector<222x4xi1>
    %159 = vector.broadcast %cst_122 : f32 to vector<222x4xf32>
    %160 = arith.select %158, %130, %159 : vector<222x4xi1>, vector<222x4xf32>
    %cst_123 = arith.constant dense<0.000000e+00> : vector<4xf32>
    %161 = vector.multi_reduction <add>, %160, %cst_123 [0] : vector<222x4xf32> to vector<4xf32>
    %162 = vector.shape_cast %161 : vector<4xf32> to vector<1x4xf32>
    %c0_124 = arith.constant 0 : index
    %c0_125 = arith.constant 0 : index
    %c0_126 = arith.constant 0 : index
    %163 = vector.load %arg7[%c0_124, %c0_125, %c0_126] : memref<1x2x4xf32, #tpu.memory_space<vmem>>, vector<1x1x4xf32>
    %164 = vector.shape_cast %163 : vector<1x1x4xf32> to vector<1x4xf32>
    %165 = vector.shape_cast %162 : vector<1x4xf32> to vector<1x1x4xf32>
    tpu.vector_store %arg7[%c0_124, %c0_125, %c0_126], %165 {strides = array<i32>} : memref<1x2x4xf32, #tpu.memory_space<vmem>>, vector<1x1x4xf32>,
    %166 = arith.mulf %160, %160 : vector<222x4xf32>
    %cst_127 = arith.constant dense<0.000000e+00> : vector<4xf32>
    %167 = vector.multi_reduction <add>, %166, %cst_127 [0] : vector<222x4xf32> to vector<4xf32>
    %168 = vector.shape_cast %167 : vector<4xf32> to vector<1x4xf32>
    %c0_128 = arith.constant 0 : index
    %c1_129 = arith.constant 1 : index
    %c0_130 = arith.constant 0 : index
    %169 = vector.load %arg7[%c0_128, %c1_129, %c0_130] : memref<1x2x4xf32, #tpu.memory_space<vmem>>, vector<1x1x4xf32>
    %170 = vector.shape_cast %169 : vector<1x1x4xf32> to vector<1x4xf32>
    %171 = vector.shape_cast %168 : vector<1x4xf32> to vector<1x1x4xf32>
    tpu.vector_store %arg7[%c0_128, %c1_129, %c0_130], %171 {strides = array<i32>} : memref<1x2x4xf32, #tpu.memory_space<vmem>>, vector<1x1x4xf32>,
    return
  }
  func.func @transform_0(%arg0: i32) -> (i32, i32, i32) {
    %c0_i32 = arith.constant 0 : i32
    %c0_i32_0 = arith.constant 0 : i32
    %c0_i32_1 = arith.constant 0 : i32
    return %arg0, %c0_i32, %c0_i32_0 : i32, i32, i32
  }
  func.func @transform_1(%arg0: i32) -> (i32, i32, i32) {
    %c0_i32 = arith.constant 0 : i32
    %c0_i32_0 = arith.constant 0 : i32
    %c0_i32_1 = arith.constant 0 : i32
    return %arg0, %c0_i32, %c0_i32_0 : i32, i32, i32
  }
  func.func @transform_2(%arg0: i32) -> (i32, i32, i32) {
    %c0_i32 = arith.constant 0 : i32
    %c0_i32_0 = arith.constant 0 : i32
    %c0_i32_1 = arith.constant 0 : i32
    %c0_i32_2 = arith.constant 0 : i32
    return %c0_i32, %c0_i32_0, %c0_i32_1 : i32, i32, i32
  }
  func.func @transform_3(%arg0: i32) -> (i32, i32, i32) {
    %c0_i32 = arith.constant 0 : i32
    %c0_i32_0 = arith.constant 0 : i32
    %c0_i32_1 = arith.constant 0 : i32
    %c0_i32_2 = arith.constant 0 : i32
    return %c0_i32, %c0_i32_0, %c0_i32_1 : i32, i32, i32
  }
  func.func @transform_4(%arg0: i32) -> (i32, i32) {
    %c0_i32 = arith.constant 0 : i32
    %c0_i32_0 = arith.constant 0 : i32
    %c0_i32_1 = arith.constant 0 : i32
    return %c0_i32, %c0_i32_0 : i32, i32
  }
  func.func @transform_5(%arg0: i32) -> (i32, i32, i32) {
    %c0_i32 = arith.constant 0 : i32
    %c0_i32_0 = arith.constant 0 : i32
    %c0_i32_1 = arith.constant 0 : i32
    return %arg0, %c0_i32, %c0_i32_0 : i32, i32, i32
  }
  func.func @transform_6(%arg0: i32) -> (i32, i32, i32) {
    %c0_i32 = arith.constant 0 : i32
    %c0_i32_0 = arith.constant 0 : i32
    %c0_i32_1 = arith.constant 0 : i32
    return %arg0, %c0_i32, %c0_i32_0 : i32, i32, i32
  }
}

module attributes {stable_mosaic.version = 11 : i64} {
  func.func @_conv2_kernel(%arg0: i32, %arg1: memref<1x224x4xf32, #tpu.memory_space<vmem>>, %arg2: memref<9x4x4xbf16, #tpu.memory_space<vmem>>, %arg3: memref<1x4xf32, #tpu.memory_space<vmem>>, %arg4: memref<1x4xf32, #tpu.memory_space<vmem>>, %arg5: memref<1x4xf32, #tpu.memory_space<vmem>>, %arg6: memref<1x192x4xf32, #tpu.memory_space<vmem>>, %arg7: memref<1x2x4xf32, #tpu.memory_space<vmem>>) attributes {dimension_semantics = [#tpu.dimension_semantics<parallel>], iteration_bounds = array<i64: 2>, scalar_prefetch = 0 : i64, scratch_operands = 0 : i64, tpu.core_type = #tpu.core_type<tc>, window_params = [{transform_indices = @transform_0, window_bounds = array<i64: 1, 224, 4>}, {pipeline_mode = #tpu.pipeline_mode<synchronous>, transform_indices = @transform_1, window_bounds = array<i64: 9, 4, 4>}, {pipeline_mode = #tpu.pipeline_mode<synchronous>, transform_indices = @transform_2, window_bounds = array<i64: 1, 4>}, {pipeline_mode = #tpu.pipeline_mode<synchronous>, transform_indices = @transform_3, window_bounds = array<i64: 1, 4>}, {pipeline_mode = #tpu.pipeline_mode<synchronous>, transform_indices = @transform_4, window_bounds = array<i64: 1, 4>}, {transform_indices = @transform_5, window_bounds = array<i64: 1, 192, 4>}, {transform_indices = @transform_6, window_bounds = array<i64: 1, 2, 4>}]} {
    %c0 = arith.constant 0 : index
    %c0_0 = arith.constant 0 : index
    %0 = vector.load %arg4[%c0, %c0_0] : memref<1x4xf32, #tpu.memory_space<vmem>>, vector<1x4xf32>
    %c0_1 = arith.constant 0 : index
    %c0_2 = arith.constant 0 : index
    %1 = vector.load %arg5[%c0_1, %c0_2] : memref<1x4xf32, #tpu.memory_space<vmem>>, vector<1x4xf32>
    %c0_3 = arith.constant 0 : index
    %c0_4 = arith.constant 0 : index
    %2 = vector.load %arg3[%c0_3, %c0_4] : memref<1x4xf32, #tpu.memory_space<vmem>>, vector<1x4xf32>
    %3 = vector.shape_cast %2 : vector<1x4xf32> to vector<1x4xf32>
    %4 = vector.broadcast %3 : vector<1x4xf32> to vector<190x4xf32>
    %c0_5 = arith.constant 0 : index
    %c0_6 = arith.constant 0 : index
    %c0_7 = arith.constant 0 : index
    %5 = vector.load %arg1[%c0_5, %c0_6, %c0_7] : memref<1x224x4xf32, #tpu.memory_space<vmem>>, vector<1x190x4xf32>
    %6 = vector.shape_cast %5 : vector<1x190x4xf32> to vector<190x4xf32>
    %7 = vector.broadcast %0 : vector<1x4xf32> to vector<190x4xf32>
    %8 = arith.mulf %6, %7 : vector<190x4xf32>
    %9 = vector.broadcast %1 : vector<1x4xf32> to vector<190x4xf32>
    %10 = arith.addf %8, %9 : vector<190x4xf32>
    %11 = arith.truncf %10 : vector<190x4xf32> to vector<190x4xbf16>
    %c0_8 = arith.constant 0 : index
    %c0_9 = arith.constant 0 : index
    %c0_10 = arith.constant 0 : index
    %12 = vector.load %arg2[%c0_8, %c0_9, %c0_10] : memref<9x4x4xbf16, #tpu.memory_space<vmem>>, vector<1x4x4xbf16>
    %13 = vector.shape_cast %12 : vector<1x4x4xbf16> to vector<4x4xbf16>
    %cst = arith.constant dense<0.000000e+00> : vector<190x4xf32>
    %14 = tpu.matmul %11, %13, %cst {dimension_numbers = #tpu.dot_dimension_numbers<[1], [0], [0], [1], [0, 0, 1, 1], [], []>} : vector<190x4xbf16>, vector<4x4xbf16>, vector<190x4xf32> -> vector<190x4xf32>
    %15 = arith.addf %4, %14 : vector<190x4xf32>
    %c0_11 = arith.constant 0 : index
    %c1 = arith.constant 1 : index
    %c0_12 = arith.constant 0 : index
    %16 = vector.load %arg1[%c0_11, %c1, %c0_12] : memref<1x224x4xf32, #tpu.memory_space<vmem>>, vector<1x190x4xf32>
    %17 = vector.shape_cast %16 : vector<1x190x4xf32> to vector<190x4xf32>
    %18 = vector.broadcast %0 : vector<1x4xf32> to vector<190x4xf32>
    %19 = arith.mulf %17, %18 : vector<190x4xf32>
    %20 = vector.broadcast %1 : vector<1x4xf32> to vector<190x4xf32>
    %21 = arith.addf %19, %20 : vector<190x4xf32>
    %22 = arith.truncf %21 : vector<190x4xf32> to vector<190x4xbf16>
    %c1_13 = arith.constant 1 : index
    %c0_14 = arith.constant 0 : index
    %c0_15 = arith.constant 0 : index
    %23 = vector.load %arg2[%c1_13, %c0_14, %c0_15] : memref<9x4x4xbf16, #tpu.memory_space<vmem>>, vector<1x4x4xbf16>
    %24 = vector.shape_cast %23 : vector<1x4x4xbf16> to vector<4x4xbf16>
    %cst_16 = arith.constant dense<0.000000e+00> : vector<190x4xf32>
    %25 = tpu.matmul %22, %24, %cst_16 {dimension_numbers = #tpu.dot_dimension_numbers<[1], [0], [0], [1], [0, 0, 1, 1], [], []>} : vector<190x4xbf16>, vector<4x4xbf16>, vector<190x4xf32> -> vector<190x4xf32>
    %26 = arith.addf %15, %25 : vector<190x4xf32>
    %c0_17 = arith.constant 0 : index
    %c2 = arith.constant 2 : index
    %c0_18 = arith.constant 0 : index
    %27 = vector.load %arg1[%c0_17, %c2, %c0_18] : memref<1x224x4xf32, #tpu.memory_space<vmem>>, vector<1x190x4xf32>
    %28 = vector.shape_cast %27 : vector<1x190x4xf32> to vector<190x4xf32>
    %29 = vector.broadcast %0 : vector<1x4xf32> to vector<190x4xf32>
    %30 = arith.mulf %28, %29 : vector<190x4xf32>
    %31 = vector.broadcast %1 : vector<1x4xf32> to vector<190x4xf32>
    %32 = arith.addf %30, %31 : vector<190x4xf32>
    %33 = arith.truncf %32 : vector<190x4xf32> to vector<190x4xbf16>
    %c2_19 = arith.constant 2 : index
    %c0_20 = arith.constant 0 : index
    %c0_21 = arith.constant 0 : index
    %34 = vector.load %arg2[%c2_19, %c0_20, %c0_21] : memref<9x4x4xbf16, #tpu.memory_space<vmem>>, vector<1x4x4xbf16>
    %35 = vector.shape_cast %34 : vector<1x4x4xbf16> to vector<4x4xbf16>
    %cst_22 = arith.constant dense<0.000000e+00> : vector<190x4xf32>
    %36 = tpu.matmul %33, %35, %cst_22 {dimension_numbers = #tpu.dot_dimension_numbers<[1], [0], [0], [1], [0, 0, 1, 1], [], []>} : vector<190x4xbf16>, vector<4x4xbf16>, vector<190x4xf32> -> vector<190x4xf32>
    %37 = arith.addf %26, %36 : vector<190x4xf32>
    %c0_23 = arith.constant 0 : index
    %c16 = arith.constant 16 : index
    %c0_24 = arith.constant 0 : index
    %38 = vector.load %arg1[%c0_23, %c16, %c0_24] : memref<1x224x4xf32, #tpu.memory_space<vmem>>, vector<1x190x4xf32>
    %39 = vector.shape_cast %38 : vector<1x190x4xf32> to vector<190x4xf32>
    %40 = vector.broadcast %0 : vector<1x4xf32> to vector<190x4xf32>
    %41 = arith.mulf %39, %40 : vector<190x4xf32>
    %42 = vector.broadcast %1 : vector<1x4xf32> to vector<190x4xf32>
    %43 = arith.addf %41, %42 : vector<190x4xf32>
    %44 = arith.truncf %43 : vector<190x4xf32> to vector<190x4xbf16>
    %c3 = arith.constant 3 : index
    %c0_25 = arith.constant 0 : index
    %c0_26 = arith.constant 0 : index
    %45 = vector.load %arg2[%c3, %c0_25, %c0_26] : memref<9x4x4xbf16, #tpu.memory_space<vmem>>, vector<1x4x4xbf16>
    %46 = vector.shape_cast %45 : vector<1x4x4xbf16> to vector<4x4xbf16>
    %cst_27 = arith.constant dense<0.000000e+00> : vector<190x4xf32>
    %47 = tpu.matmul %44, %46, %cst_27 {dimension_numbers = #tpu.dot_dimension_numbers<[1], [0], [0], [1], [0, 0, 1, 1], [], []>} : vector<190x4xbf16>, vector<4x4xbf16>, vector<190x4xf32> -> vector<190x4xf32>
    %48 = arith.addf %37, %47 : vector<190x4xf32>
    %c0_28 = arith.constant 0 : index
    %c17 = arith.constant 17 : index
    %c0_29 = arith.constant 0 : index
    %49 = vector.load %arg1[%c0_28, %c17, %c0_29] : memref<1x224x4xf32, #tpu.memory_space<vmem>>, vector<1x190x4xf32>
    %50 = vector.shape_cast %49 : vector<1x190x4xf32> to vector<190x4xf32>
    %51 = vector.broadcast %0 : vector<1x4xf32> to vector<190x4xf32>
    %52 = arith.mulf %50, %51 : vector<190x4xf32>
    %53 = vector.broadcast %1 : vector<1x4xf32> to vector<190x4xf32>
    %54 = arith.addf %52, %53 : vector<190x4xf32>
    %55 = arith.truncf %54 : vector<190x4xf32> to vector<190x4xbf16>
    %c4 = arith.constant 4 : index
    %c0_30 = arith.constant 0 : index
    %c0_31 = arith.constant 0 : index
    %56 = vector.load %arg2[%c4, %c0_30, %c0_31] : memref<9x4x4xbf16, #tpu.memory_space<vmem>>, vector<1x4x4xbf16>
    %57 = vector.shape_cast %56 : vector<1x4x4xbf16> to vector<4x4xbf16>
    %cst_32 = arith.constant dense<0.000000e+00> : vector<190x4xf32>
    %58 = tpu.matmul %55, %57, %cst_32 {dimension_numbers = #tpu.dot_dimension_numbers<[1], [0], [0], [1], [0, 0, 1, 1], [], []>} : vector<190x4xbf16>, vector<4x4xbf16>, vector<190x4xf32> -> vector<190x4xf32>
    %59 = arith.addf %48, %58 : vector<190x4xf32>
    %c0_33 = arith.constant 0 : index
    %c18 = arith.constant 18 : index
    %c0_34 = arith.constant 0 : index
    %60 = vector.load %arg1[%c0_33, %c18, %c0_34] : memref<1x224x4xf32, #tpu.memory_space<vmem>>, vector<1x190x4xf32>
    %61 = vector.shape_cast %60 : vector<1x190x4xf32> to vector<190x4xf32>
    %62 = vector.broadcast %0 : vector<1x4xf32> to vector<190x4xf32>
    %63 = arith.mulf %61, %62 : vector<190x4xf32>
    %64 = vector.broadcast %1 : vector<1x4xf32> to vector<190x4xf32>
    %65 = arith.addf %63, %64 : vector<190x4xf32>
    %66 = arith.truncf %65 : vector<190x4xf32> to vector<190x4xbf16>
    %c5 = arith.constant 5 : index
    %c0_35 = arith.constant 0 : index
    %c0_36 = arith.constant 0 : index
    %67 = vector.load %arg2[%c5, %c0_35, %c0_36] : memref<9x4x4xbf16, #tpu.memory_space<vmem>>, vector<1x4x4xbf16>
    %68 = vector.shape_cast %67 : vector<1x4x4xbf16> to vector<4x4xbf16>
    %cst_37 = arith.constant dense<0.000000e+00> : vector<190x4xf32>
    %69 = tpu.matmul %66, %68, %cst_37 {dimension_numbers = #tpu.dot_dimension_numbers<[1], [0], [0], [1], [0, 0, 1, 1], [], []>} : vector<190x4xbf16>, vector<4x4xbf16>, vector<190x4xf32> -> vector<190x4xf32>
    %70 = arith.addf %59, %69 : vector<190x4xf32>
    %c0_38 = arith.constant 0 : index
    %c32 = arith.constant 32 : index
    %c0_39 = arith.constant 0 : index
    %71 = vector.load %arg1[%c0_38, %c32, %c0_39] : memref<1x224x4xf32, #tpu.memory_space<vmem>>, vector<1x190x4xf32>
    %72 = vector.shape_cast %71 : vector<1x190x4xf32> to vector<190x4xf32>
    %73 = vector.broadcast %0 : vector<1x4xf32> to vector<190x4xf32>
    %74 = arith.mulf %72, %73 : vector<190x4xf32>
    %75 = vector.broadcast %1 : vector<1x4xf32> to vector<190x4xf32>
    %76 = arith.addf %74, %75 : vector<190x4xf32>
    %77 = arith.truncf %76 : vector<190x4xf32> to vector<190x4xbf16>
    %c6 = arith.constant 6 : index
    %c0_40 = arith.constant 0 : index
    %c0_41 = arith.constant 0 : index
    %78 = vector.load %arg2[%c6, %c0_40, %c0_41] : memref<9x4x4xbf16, #tpu.memory_space<vmem>>, vector<1x4x4xbf16>
    %79 = vector.shape_cast %78 : vector<1x4x4xbf16> to vector<4x4xbf16>
    %cst_42 = arith.constant dense<0.000000e+00> : vector<190x4xf32>
    %80 = tpu.matmul %77, %79, %cst_42 {dimension_numbers = #tpu.dot_dimension_numbers<[1], [0], [0], [1], [0, 0, 1, 1], [], []>} : vector<190x4xbf16>, vector<4x4xbf16>, vector<190x4xf32> -> vector<190x4xf32>
    %81 = arith.addf %70, %80 : vector<190x4xf32>
    %c0_43 = arith.constant 0 : index
    %c33 = arith.constant 33 : index
    %c0_44 = arith.constant 0 : index
    %82 = vector.load %arg1[%c0_43, %c33, %c0_44] : memref<1x224x4xf32, #tpu.memory_space<vmem>>, vector<1x190x4xf32>
    %83 = vector.shape_cast %82 : vector<1x190x4xf32> to vector<190x4xf32>
    %84 = vector.broadcast %0 : vector<1x4xf32> to vector<190x4xf32>
    %85 = arith.mulf %83, %84 : vector<190x4xf32>
    %86 = vector.broadcast %1 : vector<1x4xf32> to vector<190x4xf32>
    %87 = arith.addf %85, %86 : vector<190x4xf32>
    %88 = arith.truncf %87 : vector<190x4xf32> to vector<190x4xbf16>
    %c7 = arith.constant 7 : index
    %c0_45 = arith.constant 0 : index
    %c0_46 = arith.constant 0 : index
    %89 = vector.load %arg2[%c7, %c0_45, %c0_46] : memref<9x4x4xbf16, #tpu.memory_space<vmem>>, vector<1x4x4xbf16>
    %90 = vector.shape_cast %89 : vector<1x4x4xbf16> to vector<4x4xbf16>
    %cst_47 = arith.constant dense<0.000000e+00> : vector<190x4xf32>
    %91 = tpu.matmul %88, %90, %cst_47 {dimension_numbers = #tpu.dot_dimension_numbers<[1], [0], [0], [1], [0, 0, 1, 1], [], []>} : vector<190x4xbf16>, vector<4x4xbf16>, vector<190x4xf32> -> vector<190x4xf32>
    %92 = arith.addf %81, %91 : vector<190x4xf32>
    %c0_48 = arith.constant 0 : index
    %c34 = arith.constant 34 : index
    %c0_49 = arith.constant 0 : index
    %93 = vector.load %arg1[%c0_48, %c34, %c0_49] : memref<1x224x4xf32, #tpu.memory_space<vmem>>, vector<1x190x4xf32>
    %94 = vector.shape_cast %93 : vector<1x190x4xf32> to vector<190x4xf32>
    %95 = vector.broadcast %0 : vector<1x4xf32> to vector<190x4xf32>
    %96 = arith.mulf %94, %95 : vector<190x4xf32>
    %97 = vector.broadcast %1 : vector<1x4xf32> to vector<190x4xf32>
    %98 = arith.addf %96, %97 : vector<190x4xf32>
    %99 = arith.truncf %98 : vector<190x4xf32> to vector<190x4xbf16>
    %c8 = arith.constant 8 : index
    %c0_50 = arith.constant 0 : index
    %c0_51 = arith.constant 0 : index
    %100 = vector.load %arg2[%c8, %c0_50, %c0_51] : memref<9x4x4xbf16, #tpu.memory_space<vmem>>, vector<1x4x4xbf16>
    %101 = vector.shape_cast %100 : vector<1x4x4xbf16> to vector<4x4xbf16>
    %cst_52 = arith.constant dense<0.000000e+00> : vector<190x4xf32>
    %102 = tpu.matmul %99, %101, %cst_52 {dimension_numbers = #tpu.dot_dimension_numbers<[1], [0], [0], [1], [0, 0, 1, 1], [], []>} : vector<190x4xbf16>, vector<4x4xbf16>, vector<190x4xf32> -> vector<190x4xf32>
    %103 = arith.addf %92, %102 : vector<190x4xf32>
    %cst_53 = arith.constant 0.000000e+00 : f32
    %104 = vector.broadcast %cst_53 : f32 to vector<190x4xf32>
    %105 = arith.maximumf %103, %104 : vector<190x4xf32>
    %c0_54 = arith.constant 0 : index
    %c0_55 = arith.constant 0 : index
    %c0_56 = arith.constant 0 : index
    %106 = vector.load %arg6[%c0_54, %c0_55, %c0_56] : memref<1x192x4xf32, #tpu.memory_space<vmem>>, vector<1x190x4xf32>
    %107 = vector.shape_cast %106 : vector<1x190x4xf32> to vector<190x4xf32>
    %108 = vector.shape_cast %105 : vector<190x4xf32> to vector<1x190x4xf32>
    tpu.vector_store %arg6[%c0_54, %c0_55, %c0_56], %108 {strides = array<i32>} : memref<1x192x4xf32, #tpu.memory_space<vmem>>, vector<1x190x4xf32>,
    %cst_57 = arith.constant 0.000000e+00 : f32
    %109 = vector.broadcast %cst_57 : f32 to vector<2x4xf32>
    %c0_58 = arith.constant 0 : index
    %c190 = arith.constant 190 : index
    %c0_59 = arith.constant 0 : index
    %110 = vector.load %arg6[%c0_58, %c190, %c0_59] : memref<1x192x4xf32, #tpu.memory_space<vmem>>, vector<1x2x4xf32>
    %111 = vector.shape_cast %110 : vector<1x2x4xf32> to vector<2x4xf32>
    %112 = vector.shape_cast %109 : vector<2x4xf32> to vector<1x2x4xf32>
    tpu.vector_store %arg6[%c0_58, %c190, %c0_59], %112 {strides = array<i32>} : memref<1x192x4xf32, #tpu.memory_space<vmem>>, vector<1x2x4xf32>,
    %113 = tpu.iota {dimensions = array<i32: 0>} : vector<190x1xi32>
    %c16_i32 = arith.constant 16 : i32
    %c0_i32 = arith.constant 0 : i32
    %114 = arith.cmpi eq, %c16_i32, %c0_i32 : i32
    %c1_i32 = arith.constant 1 : i32
    %115 = arith.select %114, %c1_i32, %c16_i32 : i32
    %116 = vector.broadcast %115 : i32 to vector<190x1xi32>
    %117 = arith.remsi %113, %116 : vector<190x1xi32>
    %c0_i32_60 = arith.constant 0 : i32
    %118 = vector.broadcast %c0_i32_60 : i32 to vector<190x1xi32>
    %119 = arith.cmpi ne, %117, %118 : vector<190x1xi32>
    %c0_i32_61 = arith.constant 0 : i32
    %120 = vector.broadcast %c0_i32_61 : i32 to vector<190x1xi32>
    %121 = arith.cmpi slt, %117, %120 : vector<190x1xi32>
    %c0_i32_62 = arith.constant 0 : i32
    %122 = arith.cmpi slt, %115, %c0_i32_62 : i32
    %123 = vector.broadcast %122 : i1 to vector<190x1xi1>
    %124 = vector.broadcast %123 : vector<190x1xi1> to vector<190x1xi1>
    %125 = arith.xori %121, %124 : vector<190x1xi1>
    %126 = arith.andi %125, %119 : vector<190x1xi1>
    %127 = vector.broadcast %115 : i32 to vector<190x1xi32>
    %128 = arith.addi %117, %127 : vector<190x1xi32>
    %129 = arith.select %126, %128, %117 : vector<190x1xi1>, vector<190x1xi32>
    %c12_i32 = arith.constant 12 : i32
    %130 = vector.broadcast %c12_i32 : i32 to vector<190x1xi32>
    %131 = arith.cmpi slt, %129, %130 : vector<190x1xi32>
    %cst_63 = arith.constant 0.000000e+00 : f32
    %132 = vector.shape_cast %131 : vector<190x1xi1> to vector<190x1xi1>
    %133 = vector.broadcast %132 : vector<190x1xi1> to vector<190x4xi1>
    %134 = vector.broadcast %cst_63 : f32 to vector<190x4xf32>
    %135 = arith.select %133, %105, %134 : vector<190x4xi1>, vector<190x4xf32>
    %cst_64 = arith.constant dense<0.000000e+00> : vector<4xf32>
    %136 = vector.multi_reduction <add>, %135, %cst_64 [0] : vector<190x4xf32> to vector<4xf32>
    %137 = vector.shape_cast %136 : vector<4xf32> to vector<1x4xf32>
    %c0_65 = arith.constant 0 : index
    %c0_66 = arith.constant 0 : index
    %c0_67 = arith.constant 0 : index
    %138 = vector.load %arg7[%c0_65, %c0_66, %c0_67] : memref<1x2x4xf32, #tpu.memory_space<vmem>>, vector<1x1x4xf32>
    %139 = vector.shape_cast %138 : vector<1x1x4xf32> to vector<1x4xf32>
    %140 = vector.shape_cast %137 : vector<1x4xf32> to vector<1x1x4xf32>
    tpu.vector_store %arg7[%c0_65, %c0_66, %c0_67], %140 {strides = array<i32>} : memref<1x2x4xf32, #tpu.memory_space<vmem>>, vector<1x1x4xf32>,
    %141 = arith.mulf %135, %135 : vector<190x4xf32>
    %cst_68 = arith.constant dense<0.000000e+00> : vector<4xf32>
    %142 = vector.multi_reduction <add>, %141, %cst_68 [0] : vector<190x4xf32> to vector<4xf32>
    %143 = vector.shape_cast %142 : vector<4xf32> to vector<1x4xf32>
    %c0_69 = arith.constant 0 : index
    %c1_70 = arith.constant 1 : index
    %c0_71 = arith.constant 0 : index
    %144 = vector.load %arg7[%c0_69, %c1_70, %c0_71] : memref<1x2x4xf32, #tpu.memory_space<vmem>>, vector<1x1x4xf32>
    %145 = vector.shape_cast %144 : vector<1x1x4xf32> to vector<1x4xf32>
    %146 = vector.shape_cast %143 : vector<1x4xf32> to vector<1x1x4xf32>
    tpu.vector_store %arg7[%c0_69, %c1_70, %c0_71], %146 {strides = array<i32>} : memref<1x2x4xf32, #tpu.memory_space<vmem>>, vector<1x1x4xf32>,
    return
  }
  func.func @transform_0(%arg0: i32) -> (i32, i32, i32) {
    %c0_i32 = arith.constant 0 : i32
    %c0_i32_0 = arith.constant 0 : i32
    %c0_i32_1 = arith.constant 0 : i32
    return %arg0, %c0_i32, %c0_i32_0 : i32, i32, i32
  }
  func.func @transform_1(%arg0: i32) -> (i32, i32, i32) {
    %c0_i32 = arith.constant 0 : i32
    %c0_i32_0 = arith.constant 0 : i32
    %c0_i32_1 = arith.constant 0 : i32
    %c0_i32_2 = arith.constant 0 : i32
    return %c0_i32, %c0_i32_0, %c0_i32_1 : i32, i32, i32
  }
  func.func @transform_2(%arg0: i32) -> (i32, i32) {
    %c0_i32 = arith.constant 0 : i32
    %c0_i32_0 = arith.constant 0 : i32
    %c0_i32_1 = arith.constant 0 : i32
    return %c0_i32, %c0_i32_0 : i32, i32
  }
  func.func @transform_3(%arg0: i32) -> (i32, i32) {
    %c0_i32 = arith.constant 0 : i32
    %c0_i32_0 = arith.constant 0 : i32
    %c0_i32_1 = arith.constant 0 : i32
    return %c0_i32, %c0_i32_0 : i32, i32
  }
  func.func @transform_4(%arg0: i32) -> (i32, i32) {
    %c0_i32 = arith.constant 0 : i32
    %c0_i32_0 = arith.constant 0 : i32
    %c0_i32_1 = arith.constant 0 : i32
    return %c0_i32, %c0_i32_0 : i32, i32
  }
  func.func @transform_5(%arg0: i32) -> (i32, i32, i32) {
    %c0_i32 = arith.constant 0 : i32
    %c0_i32_0 = arith.constant 0 : i32
    %c0_i32_1 = arith.constant 0 : i32
    return %arg0, %c0_i32, %c0_i32_0 : i32, i32, i32
  }
  func.func @transform_6(%arg0: i32) -> (i32, i32, i32) {
    %c0_i32 = arith.constant 0 : i32
    %c0_i32_0 = arith.constant 0 : i32
    %c0_i32_1 = arith.constant 0 : i32
    return %arg0, %c0_i32, %c0_i32_0 : i32, i32, i32
  }
}

module attributes {stable_mosaic.version = 11 : i64} {
  func.func @_bn_apply_kernel(%arg0: i32, %arg1: memref<1x192x4xf32, #tpu.memory_space<vmem>>, %arg2: memref<1x4xf32, #tpu.memory_space<vmem>>, %arg3: memref<1x4xf32, #tpu.memory_space<vmem>>, %arg4: memref<1x192x4xf32, #tpu.memory_space<vmem>>) attributes {dimension_semantics = [#tpu.dimension_semantics<parallel>], iteration_bounds = array<i64: 2>, scalar_prefetch = 0 : i64, scratch_operands = 0 : i64, tpu.core_type = #tpu.core_type<tc>, window_params = [{transform_indices = @transform_0, window_bounds = array<i64: 1, 192, 4>}, {pipeline_mode = #tpu.pipeline_mode<synchronous>, transform_indices = @transform_1, window_bounds = array<i64: 1, 4>}, {pipeline_mode = #tpu.pipeline_mode<synchronous>, transform_indices = @transform_2, window_bounds = array<i64: 1, 4>}, {transform_indices = @transform_3, window_bounds = array<i64: 1, 192, 4>}]} {
    %c0 = arith.constant 0 : index
    %c0_0 = arith.constant 0 : index
    %c0_1 = arith.constant 0 : index
    %0 = vector.load %arg1[%c0, %c0_0, %c0_1] : memref<1x192x4xf32, #tpu.memory_space<vmem>>, vector<1x192x4xf32>
    %1 = vector.shape_cast %0 : vector<1x192x4xf32> to vector<192x4xf32>
    %c0_2 = arith.constant 0 : index
    %c0_3 = arith.constant 0 : index
    %2 = vector.load %arg2[%c0_2, %c0_3] : memref<1x4xf32, #tpu.memory_space<vmem>>, vector<1x4xf32>
    %3 = vector.broadcast %2 : vector<1x4xf32> to vector<192x4xf32>
    %4 = arith.mulf %1, %3 : vector<192x4xf32>
    %c0_4 = arith.constant 0 : index
    %c0_5 = arith.constant 0 : index
    %5 = vector.load %arg3[%c0_4, %c0_5] : memref<1x4xf32, #tpu.memory_space<vmem>>, vector<1x4xf32>
    %6 = vector.broadcast %5 : vector<1x4xf32> to vector<192x4xf32>
    %7 = arith.addf %4, %6 : vector<192x4xf32>
    %c0_6 = arith.constant 0 : index
    %c0_7 = arith.constant 0 : index
    %c0_8 = arith.constant 0 : index
    %8 = vector.load %arg4[%c0_6, %c0_7, %c0_8] : memref<1x192x4xf32, #tpu.memory_space<vmem>>, vector<1x192x4xf32>
    %9 = vector.shape_cast %8 : vector<1x192x4xf32> to vector<192x4xf32>
    %10 = vector.shape_cast %7 : vector<192x4xf32> to vector<1x192x4xf32>
    tpu.vector_store %arg4[%c0_6, %c0_7, %c0_8], %10 {strides = array<i32>} : memref<1x192x4xf32, #tpu.memory_space<vmem>>, vector<1x192x4xf32>,
    return
  }
  func.func @transform_0(%arg0: i32) -> (i32, i32, i32) {
    %c0_i32 = arith.constant 0 : i32
    %c0_i32_0 = arith.constant 0 : i32
    %c0_i32_1 = arith.constant 0 : i32
    return %arg0, %c0_i32, %c0_i32_0 : i32, i32, i32
  }
  func.func @transform_1(%arg0: i32) -> (i32, i32) {
    %c0_i32 = arith.constant 0 : i32
    %c0_i32_0 = arith.constant 0 : i32
    %c0_i32_1 = arith.constant 0 : i32
    return %c0_i32, %c0_i32_0 : i32, i32
  }
  func.func @transform_2(%arg0: i32) -> (i32, i32) {
    %c0_i32 = arith.constant 0 : i32
    %c0_i32_0 = arith.constant 0 : i32
    %c0_i32_1 = arith.constant 0 : i32
    return %c0_i32, %c0_i32_0 : i32, i32
  }
  func.func @transform_3(%arg0: i32) -> (i32, i32, i32) {
    %c0_i32 = arith.constant 0 : i32
    %c0_i32_0 = arith.constant 0 : i32
    %c0_i32_1 = arith.constant 0 : i32
    return %arg0, %c0_i32, %c0_i32_0 : i32, i32, i32
  }
}

</mosaic_0001>

<llo_original>
// kernel: tile.8
$region0: #{tile.8}
  #allocation0 [shape = 's32[1]{0}', space=sflag, size = 0x4, scoped, tag = 'scoped memory for tile.8']
  %s0 = inlined_call_operand.vmem [shape: f32[4], index: 0, kind: input, shape index: {}]
  %s1 = inlined_call_operand.vmem [shape: f32[4,4], index: 1, kind: output, shape index: {}]
  // Predicated region
  $region2: #{tile.8} parent=0 // pred_check
    _
  $region3: #{tile.8} parent=0 // pred_check_branch
    %3 = sbr.rel (0) target = $region5
  $region4: #{tile.8} parent=0 // pred_region
    _
  $region5: #{tile.8} parent=0 // pred_fallthru
    _
  %v4 = vld [vmem:[%s0] ss:$0 sm:$0xff]
  %5 = vst [vmem:[%s1] sm:$0xf] %v4

// kernel: tile.9
$region0: #{tile.9}
  %s0 = inlined_call_operand.vmem [shape: f32[4,4], index: 0, kind: input, shape index: {}]
  %s1 = inlined_call_operand.vmem [shape: f32[1,16], index: 1, kind: output, shape index: {}]
  $region1: #{tile.9} parent=0
    #allocation0 [shape = 'u8[4096]{0}', space=vmem, size = 0x1000, scoped, tag = 'scoped mem for output reshape']
    #allocation1 [shape = 'u8[4096]{0}', space=vmem, size = 0x1000, scoped, tag = 'scoped mem for input reshape']
    %s3 = sshllo.u32 0, 4
    %v4 = vld [vmem:[%s0] sm:%s3]
    %5 = vst [vmem:[#allocation1] sm:%s3] %v4
    %v6 = vld [vmem:[#allocation1] sm:$0x1]
    %vm7 = vcmask 31744
    %8 = vst.msk [vmem:[#allocation0] sm:$0x1] %vm7, %v6
    %s9 = scalar_lea.vmem [#allocation1], 3
    %v10 = vld [vmem:[%s9] sm:$0x1]
    %11 = vrot.lane.b32.xlu0 %v10, 12
    %v12 = vpop.permute.xlu0 %11
    %vm13 = vcmask 130144
    %14 = vst.msk [vmem:[#allocation0] sm:$0x1] %vm13, %v12
    %s15 = scalar_lea.vmem [#allocation1], 2
    %v16 = vld [vmem:[%s15] sm:$0x1]
    %17 = vrot.lane.b32.xlu0 %v16, 8
    %v18 = vpop.permute.xlu0 %17
    %vm19 = vcmask 97344
    %20 = vst.msk [vmem:[#allocation0] sm:$0x1] %vm19, %v18
    %s21 = scalar_lea.vmem [#allocation1], 1
    %v22 = vld [vmem:[%s21] sm:$0x1]
    %23 = vrot.lane.b32.xlu0 %v22, 4
    %v24 = vpop.permute.xlu0 %23
    %vm25 = vcmask 64544
    %26 = vst.msk [vmem:[#allocation0] sm:$0x1] %vm25, %v24
    %s28 = sshllo.u32 0, 1
    %v30 = vld [vmem:[#allocation0] sm:%s28]
    %s31 = sshllo.u32 0, 1
    %32 = vst [vmem:[%s1] sm:%s31] %v30

// kernel: up_step_forward.4
$region0: #{up_step_forward.4}
  #allocation0 [shape = 'u32[]', space=smem, size = 0x4, offset = 0x4, fixed_abs, tag = 'smem constant byte address 0x4 - core index']
  #allocation1 [shape = 'u32[144,128]{1,0:T(1,128)}', space=vmem, size = 0x12000, scoped, tag = 'internal scratch']
  %s0 = inlined_call_operand.vmem [shape: f32[2,64,8], index: 0, kind: input, shape index: {}]
  %s1 = inlined_call_operand.vmem [shape: bf16[8,16], index: 1, kind: input, shape index: {}]
  %s2 = inlined_call_operand.vmem [shape: f32[1,16], index: 2, kind: input, shape index: {}]
  %s3 = inlined_call_operand.vmem [shape: f32[2,64,16], index: 3, kind: output, shape index: {}]
  %s4 = sld [smem:[#allocation0]]
  $region45: #{up_step_forward.4} parent=0
    _
  %s6 = ssub.s32 1, %s4
  %s7 = scalar_select 0, %s6, %s4
  loop: start=0, step=1, limit=4
  $region2: #{up_step_forward.4} parent=0 // loop_pre_header
    _
  $region3: #{up_step_forward.4} parent=0 // loop_header
    %s9 = sphi 0, %s13
    %p10 = scmp.ge.s32.totalorder %s9, 4
    %s19 = sphi 0, %s21
    %s22 = sphi 0, %s19
    %s23 = sphi 0, %s22
    %s39 = sphi 0, %s23
    %s43 = sphi 0, %s43
    %s45 = sphi 0, %s43
    %s46 = sphi 0, %s45
    %s60 = sphi 0, %s46
    %s64 = sphi 0, %s64
    %s66 = sphi 0, %s64
    %s67 = sphi 0, %s66
    %s81 = sphi 0, %s67
    %s87 = sphi 0, %s89
    %s90 = sphi 0, %s87
    %s91 = sphi 0, %s90
    %s107 = sphi 0, %s91
  $region4: #{up_step_forward.4} parent=0 // loop_header_branch
    %12 = sbr.rel (%p10) target = $region8
  $region5: #{up_step_forward.4} parent=0 // loop_body
    %s14 = ssub.s32 %s9, 1
    %s15 = ssub.s32 %s9, 2
    %s16 = sadd.s32 %s9, 1
    %s17 = ssub.s32 %s9, %s16
    %p18 = scmp.eq.s32.totalorder %s17, 0
    %s20 = sadd.s32 %s19, 1
    %s21 = scalar_select %p18, %s19, %s20
    %p24 = pneg %p18
    %p25 = scmp.eq.s32.totalorder %s9, 1
    %p26 = por %p24, %p25
    %p27 = scmp.ne.s32.totalorder %s19, %s22
    %p28 = scmp.eq.s32.totalorder %s9, 0
    %p29 = por %p27, %p28
    %p30 = scmp.ne.s32.totalorder %s19, %s22
    %p31 = scmp.eq.s32.totalorder %s14, 1
    %p32 = por %p30, %p31
    %p33 = scmp.ne.s32.totalorder %s22, %s23
    %p34 = scmp.eq.s32.totalorder %s14, 0
    %p35 = por %p33, %p34
    %p36 = scmp.ne.s32.totalorder %s22, %s23
    %p37 = scmp.eq.s32.totalorder %s15, 1
    %p38 = por %p36, %p37
    %p40 = scmp.ne.s32.totalorder %s23, %s39
    %p41 = scmp.eq.s32.totalorder %s15, 0
    %p42 = por %p40, %p41
    %s44 = sadd.s32 %s43, 1
    %p47 = scmp.eq.s32.totalorder %s9, 1
    %p48 = scmp.ne.s32.totalorder %s43, %s45
    %p49 = scmp.eq.s32.totalorder %s9, 0
    %p50 = por %p48, %p49
    %p51 = scmp.ne.s32.totalorder %s43, %s45
    %p52 = scmp.eq.s32.totalorder %s14, 1
    %p53 = por %p51, %p52
    %p54 = scmp.ne.s32.totalorder %s45, %s46
    %p55 = scmp.eq.s32.totalorder %s14, 0
    %p56 = por %p54, %p55
    %p57 = scmp.ne.s32.totalorder %s45, %s46
    %p58 = scmp.eq.s32.totalorder %s15, 1
    %p59 = por %p57, %p58
    %p61 = scmp.ne.s32.totalorder %s46, %s60
    %p62 = scmp.eq.s32.totalorder %s15, 0
    %p63 = por %p61, %p62
    %s65 = sadd.s32 %s64, 1
    %p68 = scmp.eq.s32.totalorder %s9, 1
    %p69 = scmp.ne.s32.totalorder %s64, %s66
    %p70 = scmp.eq.s32.totalorder %s9, 0
    %p71 = por %p69, %p70
    %p72 = scmp.ne.s32.totalorder %s64, %s66
    %p73 = scmp.eq.s32.totalorder %s14, 1
    %p74 = por %p72, %p73
    %p75 = scmp.ne.s32.totalorder %s66, %s67
    %p76 = scmp.eq.s32.totalorder %s14, 0
    %p77 = por %p75, %p76
    %p78 = scmp.ne.s32.totalorder %s66, %s67
    %p79 = scmp.eq.s32.totalorder %s15, 1
    %p80 = por %p78, %p79
    %p82 = scmp.ne.s32.totalorder %s67, %s81
    %p83 = scmp.eq.s32.totalorder %s15, 0
    %p84 = por %p82, %p83
    %s85 = ssub.s32 %s9, %s16
    %p86 = scmp.eq.s32.totalorder %s85, 0
    %s88 = sadd.s32 %s87, 1
    %s89 = scalar_select %p86, %s87, %s88
    %p92 = pneg %p86
    %p93 = scmp.eq.s32.totalorder %s9, 1
    %p94 = por %p92, %p93
    %p95 = scmp.ne.s32.totalorder %s87, %s90
    %p96 = scmp.eq.s32.totalorder %s9, 0
    %p97 = por %p95, %p96
    %p98 = scmp.ne.s32.totalorder %s87, %s90
    %p99 = scmp.eq.s32.totalorder %s14, 1
    %p100 = por %p98, %p99
    %p101 = scmp.ne.s32.totalorder %s90, %s91
    %p102 = scmp.eq.s32.totalorder %s14, 0
    %p103 = por %p101, %p102
    %p104 = scmp.ne.s32.totalorder %s90, %s91
    %p105 = scmp.eq.s32.totalorder %s15, 1
    %p106 = por %p104, %p105
    %p108 = scmp.ne.s32.totalorder %s91, %s107
    %p109 = scmp.eq.s32.totalorder %s15, 0
    %p110 = por %p108, %p109
    %p111 = scmp.le.s32.totalorder 1, %s9
    %p112 = scmp.lt.s32.totalorder %s9, 3
    %p113 = pnand %p111, %p112
    %p114 = pneg %p113
    // Predicated region
    $region9: #{up_step_forward.4} parent=5 // pred_check
      _
    $region10: #{up_step_forward.4} parent=5 // pred_check_branch
      %116 = sbr.rel (%p113) target = $region12
    $region11: #{up_step_forward.4} parent=5 // pred_region
      %s117 = ssub.s32 %s9, 1
      // Predicated region
      $region13: #{up_step_forward.4} parent=11 // pred_check
        %p118 = pneg %p56
      $region14: #{up_step_forward.4} parent=11 // pred_check_branch
        %120 = sbr.rel (%p118) target = $region16
      $region15: #{up_step_forward.4} parent=11 // pred_region
        _
      $region16: #{up_step_forward.4} parent=11 // pred_fallthru
        _
      // Predicated region
      $region17: #{up_step_forward.4} parent=11 // pred_check
        %p121 = pneg %p77
      $region18: #{up_step_forward.4} parent=11 // pred_check_branch
        %123 = sbr.rel (%p121) target = $region20
      $region19: #{up_step_forward.4} parent=11 // pred_region
        _
      $region20: #{up_step_forward.4} parent=11 // pred_fallthru
        _
    $region12: #{up_step_forward.4} parent=5 // pred_fallthru
      _
    %p124 = scmp.lt.s32.totalorder %s9, 2
    // Predicated region
    $region21: #{up_step_forward.4} parent=5 // pred_check
      %p125 = pneg %p124
    $region22: #{up_step_forward.4} parent=5 // pred_check_branch
      %127 = sbr.rel (%p125) target = $region24
    $region23: #{up_step_forward.4} parent=5 // pred_region
      // Predicated region
      $region25: #{up_step_forward.4} parent=23 // pred_check
        %p128 = pneg %p29
      $region26: #{up_step_forward.4} parent=23 // pred_check_branch
        %130 = sbr.rel (%p128) target = $region28
      $region27: #{up_step_forward.4} parent=23 // pred_region
        %p131 = scmp.lt.s32.totalorder %s9, 1
        %s132 = scalar_select %p131, %s9, 1
        %s133 = smul.addr %s132, 8
        %s134 = smul.addr %s133, 8
        %s135 = scalar_lea.vmem %s0, %s134
      $region28: #{up_step_forward.4} parent=23 // pred_fallthru
        _
    $region24: #{up_step_forward.4} parent=5 // pred_fallthru
      _
    %p136 = scmp.le.s32.totalorder 1, %s9
    %p137 = scmp.lt.s32.totalorder %s9, 3
    %p138 = pnand %p136, %p137
    %p139 = pneg %p138
    // Predicated region
    $region29: #{up_step_forward.4} parent=5 // pred_check
      _
    $region30: #{up_step_forward.4} parent=5 // pred_check_branch
      %141 = sbr.rel (%p138) target = $region32
    $region31: #{up_step_forward.4} parent=5 // pred_region
      %s142 = ssub.s32 %s9, 1
      %p143 = scmp.lt.s32.totalorder %s14, 1
      %s144 = scalar_select %p143, %s14, 1
      %s145 = smul.addr %s144, 8
      %s146 = smul.addr %s145, 8
      %s147 = scalar_lea.vmem %s0, %s146
      %p148 = pneg %p35
      %p149 = pneg %p32
      %p150 = pneg %p56
      %p151 = pneg %p53
      %p152 = pneg %p77
      %p153 = pneg %p74
      %p154 = pneg %p103
      %p155 = pneg %p100
      %p156 = scmp.lt.s32.totalorder %s14, 1
      %s157 = scalar_select %p156, %s14, 1
      %s158 = smul.addr %s157, 8
      %s159 = smul.addr %s158, 8
      %s160 = scalar_lea.vmem %s3, %s159
      %p161 = scmp.lt.s32.totalorder %s14, 1
      %s162 = scalar_select %p161, %s14, 1
      %s163 = smul.addr %s162, 8
      %s164 = smul.addr %s163, 8
      %s165 = scalar_lea.vmem %s0, %s164
      %p166 = scmp.lt.s32.totalorder %s14, 1
      %s167 = scalar_select %p166, %s14, 1
      %s168 = smul.addr %s167, 8
      %s169 = smul.addr %s168, 8
      %s170 = scalar_lea.vmem %s3, %s169
      %v172 = vld [vmem:[%s165] sm:$0xff]
      %v173 = vld [vmem:[%s165 + $0x8] sm:$0xff]
      %v174 = vld [vmem:[%s165 + $0x10] sm:$0xff]
      %v175 = vld [vmem:[%s165 + $0x18] sm:$0xff]
      %v176 = vld [vmem:[%s165 + $0x20] sm:$0xff]
      %v177 = vld [vmem:[%s165 + $0x28] sm:$0xff]
      %v178 = vld [vmem:[%s165 + $0x30] sm:$0xff]
      %v179 = vld [vmem:[%s165 + $0x38] sm:$0xff]
      %v180 = vpack.c.bf16 %v173, %v172
      %v181 = vpack.c.bf16 %v175, %v174
      %v182 = vpack.c.bf16 %v177, %v176
      %v183 = vpack.c.bf16 %v179, %v178
      %v184 = vld [vmem:[%s1] sm:$0xf]
      %v185 = vld [vmem:[%s2] sm:$0x1]
      %v187 = vlaneseq
      %v188 = vshrl.u32 %v187, 7
      %v189 = vsub.s32 0, %v188
      %v190 = vrot.slane %v185, %v189
      %vm192 = vcmask 64512
      %v194 = vsel %vm192, %v180, 0
      %v197 = vsel %vm192, %v181, 0
      %v200 = vsel %vm192, %v182, 0
      %v203 = vsel %vm192, %v183, 0
      %vm205 = vcmask 1043456
      %v207 = vsel %vm205, %v184, 0
      %209 = vmatprep.subr.bf16.mxu0 0
      %210 = vmatpush1.bf16.msra.mxu0 %v207
      %211 = vmatprep.subr.bf16.mxu0 0
      %212 = vmatpush1.bf16.msra.mxu0 0
      %213 = vmatprep.subr.bf16.mxu0 0
      %214 = vmatpush1.bf16.msra.mxu0 0
      %215 = vmatprep.subr.bf16.mxu0 0
      %216 = vmatpush1.bf16.msra.mxu0 0
      %217 = vmatprep.subr.bf16.mxu0 0
      %218 = vmatpush1.bf16.msra.mxu0 0
      %219 = vmatprep.subr.bf16.mxu0 0
      %220 = vmatpush1.bf16.msra.mxu0 0
      %221 = vmatprep.subr.bf16.mxu0 0
      %222 = vmatpush1.bf16.msra.mxu0 0
      %223 = vmatprep.subr.bf16.mxu0 0
      %224 = vmatpush1.bf16.msra.mxu0 0
      %225 = vmatprep.subr.bf16.mxu0 0
      %226 = vmatpush1.bf16.msra.mxu0 0
      %227 = vmatprep.subr.bf16.mxu0 0
      %228 = vmatpush1.bf16.msra.mxu0 0
      %229 = vmatprep.subr.bf16.mxu0 0
      %230 = vmatpush1.bf16.msra.mxu0 0
      %231 = vmatprep.subr.bf16.mxu0 0
      %232 = vmatpush1.bf16.msra.mxu0 0
      %233 = vmatprep.subr.bf16.mxu0 0
      %234 = vmatpush1.bf16.msra.mxu0 0
      %235 = vmatprep.subr.bf16.mxu0 0
      %236 = vmatpush1.bf16.msra.mxu0 0
      %237 = vmatprep.subr.bf16.mxu0 0
      %238 = vmatpush1.bf16.msra.mxu0 0
      %239 = vmatprep.subr.bf16.mxu0 0
      %240 = vmatpush1.bf16.msra.mxu0 0
      %241 = vmatprep.mubr.bf16.mxu0 0
      %242 = vmatmul.mubr.bf16.gmra.mrb[0].mxu0 %v194
      %v243 = vpop.f32.mrb[0].mxu0
      %v244 = vadd.f32 %v190, %v243
      %v245 = vpop.f32.mrb[0].mxu0
      %v246 = vpop.f32.mrb[0].mxu0
      %v247 = vadd.f32 %v190, %v246
      %v248 = vpop.f32.mrb[0].mxu0
      %249 = vmatprep.mubr.bf16.mxu0 0
      %250 = vmatmul.mubr.bf16.gmra.mrb[0].mxu0 %v197
      %v251 = vpop.f32.mrb[0].mxu0
      %v252 = vadd.f32 %v190, %v251
      %v253 = vpop.f32.mrb[0].mxu0
      %v254 = vpop.f32.mrb[0].mxu0
      %v255 = vadd.f32 %v190, %v254
      %v256 = vpop.f32.mrb[0].mxu0
      %257 = vmatprep.mubr.bf16.mxu0 0
      %258 = vmatmul.mubr.bf16.gmra.mrb[0].mxu0 %v200
      %v259 = vpop.f32.mrb[0].mxu0
      %v260 = vadd.f32 %v190, %v259
      %v261 = vpop.f32.mrb[0].mxu0
      %v262 = vpop.f32.mrb[0].mxu0
      %v263 = vadd.f32 %v190, %v262
      %v264 = vpop.f32.mrb[0].mxu0
      %265 = vmatprep.mubr.bf16.mxu0 0
      %266 = vmatmul.mubr.bf16.gmra.mrb[0].mxu0 %v203
      %v267 = vpop.f32.mrb[0].mxu0
      %v268 = vadd.f32 %v190, %v267
      %v269 = vpop.f32.mrb[0].mxu0
      %v270 = vpop.f32.mrb[0].mxu0
      %v271 = vadd.f32 %v190, %v270
      %v272 = vpop.f32.mrb[0].mxu0
      %273 = vdwg.mxu0
      %vm274 = vcmask 130048
      %275 = vst.msk [vmem:[%s170] sm:$0xff] %vm274, %v244
      %276 = vst.msk [vmem:[%s170 + $0x8] sm:$0xff] %vm274, %v247
      %277 = vst.msk [vmem:[%s170 + $0x10] sm:$0xff] %vm274, %v252
      %278 = vst.msk [vmem:[%s170 + $0x18] sm:$0xff] %vm274, %v255
      %279 = vst.msk [vmem:[%s170 + $0x20] sm:$0xff] %vm274, %v260
      %280 = vst.msk [vmem:[%s170 + $0x28] sm:$0xff] %vm274, %v263
      %281 = vst.msk [vmem:[%s170 + $0x30] sm:$0xff] %vm274, %v268
      %282 = vst.msk [vmem:[%s170 + $0x38] sm:$0xff] %vm274, %v271
      %p283 = scmp.lt.s32.totalorder %s14, 1
      %s284 = scalar_select %p283, %s14, 1
      %s285 = smul.addr %s284, 8
      %s286 = smul.addr %s285, 8
      %s287 = scalar_lea.vmem %s3, %s286
      // Predicated region
      $region33: #{up_step_forward.4} parent=31 // pred_check
        %p288 = pneg %p100
      $region34: #{up_step_forward.4} parent=31 // pred_check_branch
        %290 = sbr.rel (%p288) target = $region36
      $region35: #{up_step_forward.4} parent=31 // pred_region
        _
      $region36: #{up_step_forward.4} parent=31 // pred_fallthru
        _
    $region32: #{up_step_forward.4} parent=5 // pred_fallthru
      _
    %p291 = scmp.le.s32.totalorder 2, %s9
    // Predicated region
    $region37: #{up_step_forward.4} parent=5 // pred_check
      %p292 = pneg %p291
    $region38: #{up_step_forward.4} parent=5 // pred_check_branch
      %294 = sbr.rel (%p292) target = $region40
    $region39: #{up_step_forward.4} parent=5 // pred_region
      %s295 = ssub.s32 %s9, 2
      // Predicated region
      $region41: #{up_step_forward.4} parent=39 // pred_check
        %p296 = pneg %p106
      $region42: #{up_step_forward.4} parent=39 // pred_check_branch
        %298 = sbr.rel (%p296) target = $region44
      $region43: #{up_step_forward.4} parent=39 // pred_region
        %p299 = scmp.lt.s32.totalorder %s15, 1
        %s300 = scalar_select %p299, %s15, 1
        %s301 = smul.addr %s300, 8
        %s302 = smul.addr %s301, 8
        %s303 = scalar_lea.vmem %s3, %s302
      $region44: #{up_step_forward.4} parent=39 // pred_fallthru
        _
    $region40: #{up_step_forward.4} parent=5 // pred_fallthru
      _
  $region6: #{up_step_forward.4} parent=0 // loop_footer
    %s13 = sadd.s32 1, %s9
  $region7: #{up_step_forward.4} parent=0 // loop_footer_branch
    %8 = sbr.rel target = $region3
  $region8: #{up_step_forward.4} parent=0 // loop_exit
    _

// kernel: up_step_forward.7
$region0: #{up_step_forward.7}
  #allocation0 [shape = 'u32[]', space=smem, size = 0x4, offset = 0x4, fixed_abs, tag = 'smem constant byte address 0x4 - core index']
  #allocation1 [shape = 'u32[144,128]{1,0:T(1,128)}', space=vmem, size = 0x12000, scoped, tag = 'internal scratch']
  %s0 = inlined_call_operand.vmem [shape: f32[2,192,4], index: 0, kind: input, shape index: {}]
  %s1 = inlined_call_operand.vmem [shape: f32[1,4], index: 1, kind: input, shape index: {}]
  %s2 = inlined_call_operand.vmem [shape: f32[1,4], index: 2, kind: input, shape index: {}]
  %s3 = inlined_call_operand.vmem [shape: f32[2,192,4], index: 3, kind: output, shape index: {}]
  %s4 = sld [smem:[#allocation0]]
  $region45: #{up_step_forward.7} parent=0
    _
  %s6 = ssub.s32 1, %s4
  %s7 = scalar_select 0, %s6, %s4
  loop: start=0, step=1, limit=4
  $region2: #{up_step_forward.7} parent=0 // loop_pre_header
    _
  $region3: #{up_step_forward.7} parent=0 // loop_header
    %s9 = sphi 0, %s13
    %p10 = scmp.ge.s32.totalorder %s9, 4
    %s19 = sphi 0, %s21
    %s22 = sphi 0, %s19
    %s23 = sphi 0, %s22
    %s39 = sphi 0, %s23
    %s43 = sphi 0, %s43
    %s45 = sphi 0, %s43
    %s46 = sphi 0, %s45
    %s60 = sphi 0, %s46
    %s64 = sphi 0, %s64
    %s66 = sphi 0, %s64
    %s67 = sphi 0, %s66
    %s81 = sphi 0, %s67
    %s87 = sphi 0, %s89
    %s90 = sphi 0, %s87
    %s91 = sphi 0, %s90
    %s107 = sphi 0, %s91
  $region4: #{up_step_forward.7} parent=0 // loop_header_branch
    %12 = sbr.rel (%p10) target = $region8
  $region5: #{up_step_forward.7} parent=0 // loop_body
    %s14 = ssub.s32 %s9, 1
    %s15 = ssub.s32 %s9, 2
    %s16 = sadd.s32 %s9, 1
    %s17 = ssub.s32 %s9, %s16
    %p18 = scmp.eq.s32.totalorder %s17, 0
    %s20 = sadd.s32 %s19, 1
    %s21 = scalar_select %p18, %s19, %s20
    %p24 = pneg %p18
    %p25 = scmp.eq.s32.totalorder %s9, 1
    %p26 = por %p24, %p25
    %p27 = scmp.ne.s32.totalorder %s19, %s22
    %p28 = scmp.eq.s32.totalorder %s9, 0
    %p29 = por %p27, %p28
    %p30 = scmp.ne.s32.totalorder %s19, %s22
    %p31 = scmp.eq.s32.totalorder %s14, 1
    %p32 = por %p30, %p31
    %p33 = scmp.ne.s32.totalorder %s22, %s23
    %p34 = scmp.eq.s32.totalorder %s14, 0
    %p35 = por %p33, %p34
    %p36 = scmp.ne.s32.totalorder %s22, %s23
    %p37 = scmp.eq.s32.totalorder %s15, 1
    %p38 = por %p36, %p37
    %p40 = scmp.ne.s32.totalorder %s23, %s39
    %p41 = scmp.eq.s32.totalorder %s15, 0
    %p42 = por %p40, %p41
    %s44 = sadd.s32 %s43, 1
    %p47 = scmp.eq.s32.totalorder %s9, 1
    %p48 = scmp.ne.s32.totalorder %s43, %s45
    %p49 = scmp.eq.s32.totalorder %s9, 0
    %p50 = por %p48, %p49
    %p51 = scmp.ne.s32.totalorder %s43, %s45
    %p52 = scmp.eq.s32.totalorder %s14, 1
    %p53 = por %p51, %p52
    %p54 = scmp.ne.s32.totalorder %s45, %s46
    %p55 = scmp.eq.s32.totalorder %s14, 0
    %p56 = por %p54, %p55
    %p57 = scmp.ne.s32.totalorder %s45, %s46
    %p58 = scmp.eq.s32.totalorder %s15, 1
    %p59 = por %p57, %p58
    %p61 = scmp.ne.s32.totalorder %s46, %s60
    %p62 = scmp.eq.s32.totalorder %s15, 0
    %p63 = por %p61, %p62
    %s65 = sadd.s32 %s64, 1
    %p68 = scmp.eq.s32.totalorder %s9, 1
    %p69 = scmp.ne.s32.totalorder %s64, %s66
    %p70 = scmp.eq.s32.totalorder %s9, 0
    %p71 = por %p69, %p70
    %p72 = scmp.ne.s32.totalorder %s64, %s66
    %p73 = scmp.eq.s32.totalorder %s14, 1
    %p74 = por %p72, %p73
    %p75 = scmp.ne.s32.totalorder %s66, %s67
    %p76 = scmp.eq.s32.totalorder %s14, 0
    %p77 = por %p75, %p76
    %p78 = scmp.ne.s32.totalorder %s66, %s67
    %p79 = scmp.eq.s32.totalorder %s15, 1
    %p80 = por %p78, %p79
    %p82 = scmp.ne.s32.totalorder %s67, %s81
    %p83 = scmp.eq.s32.totalorder %s15, 0
    %p84 = por %p82, %p83
    %s85 = ssub.s32 %s9, %s16
    %p86 = scmp.eq.s32.totalorder %s85, 0
    %s88 = sadd.s32 %s87, 1
    %s89 = scalar_select %p86, %s87, %s88
    %p92 = pneg %p86
    %p93 = scmp.eq.s32.totalorder %s9, 1
    %p94 = por %p92, %p93
    %p95 = scmp.ne.s32.totalorder %s87, %s90
    %p96 = scmp.eq.s32.totalorder %s9, 0
    %p97 = por %p95, %p96
    %p98 = scmp.ne.s32.totalorder %s87, %s90
    %p99 = scmp.eq.s32.totalorder %s14, 1
    %p100 = por %p98, %p99
    %p101 = scmp.ne.s32.totalorder %s90, %s91
    %p102 = scmp.eq.s32.totalorder %s14, 0
    %p103 = por %p101, %p102
    %p104 = scmp.ne.s32.totalorder %s90, %s91
    %p105 = scmp.eq.s32.totalorder %s15, 1
    %p106 = por %p104, %p105
    %p108 = scmp.ne.s32.totalorder %s91, %s107
    %p109 = scmp.eq.s32.totalorder %s15, 0
    %p110 = por %p108, %p109
    %p111 = scmp.le.s32.totalorder 1, %s9
    %p112 = scmp.lt.s32.totalorder %s9, 3
    %p113 = pnand %p111, %p112
    %p114 = pneg %p113
    // Predicated region
    $region9: #{up_step_forward.7} parent=5 // pred_check
      _
    $region10: #{up_step_forward.7} parent=5 // pred_check_branch
      %116 = sbr.rel (%p113) target = $region12
    $region11: #{up_step_forward.7} parent=5 // pred_region
      %s117 = ssub.s32 %s9, 1
      // Predicated region
      $region13: #{up_step_forward.7} parent=11 // pred_check
        %p118 = pneg %p56
      $region14: #{up_step_forward.7} parent=11 // pred_check_branch
        %120 = sbr.rel (%p118) target = $region16
      $region15: #{up_step_forward.7} parent=11 // pred_region
        _
      $region16: #{up_step_forward.7} parent=11 // pred_fallthru
        _
      // Predicated region
      $region17: #{up_step_forward.7} parent=11 // pred_check
        %p121 = pneg %p77
      $region18: #{up_step_forward.7} parent=11 // pred_check_branch
        %123 = sbr.rel (%p121) target = $region20
      $region19: #{up_step_forward.7} parent=11 // pred_region
        _
      $region20: #{up_step_forward.7} parent=11 // pred_fallthru
        _
    $region12: #{up_step_forward.7} parent=5 // pred_fallthru
      _
    %p124 = scmp.lt.s32.totalorder %s9, 2
    // Predicated region
    $region21: #{up_step_forward.7} parent=5 // pred_check
      %p125 = pneg %p124
    $region22: #{up_step_forward.7} parent=5 // pred_check_branch
      %127 = sbr.rel (%p125) target = $region24
    $region23: #{up_step_forward.7} parent=5 // pred_region
      // Predicated region
      $region25: #{up_step_forward.7} parent=23 // pred_check
        %p128 = pneg %p29
      $region26: #{up_step_forward.7} parent=23 // pred_check_branch
        %130 = sbr.rel (%p128) target = $region28
      $region27: #{up_step_forward.7} parent=23 // pred_region
        %p131 = scmp.lt.s32.totalorder %s9, 1
        %s132 = scalar_select %p131, %s9, 1
        %s133 = smul.addr %s132, 24
        %s134 = smul.addr %s133, 8
        %s135 = scalar_lea.vmem %s0, %s134
      $region28: #{up_step_forward.7} parent=23 // pred_fallthru
        _
    $region24: #{up_step_forward.7} parent=5 // pred_fallthru
      _
    %p136 = scmp.le.s32.totalorder 1, %s9
    %p137 = scmp.lt.s32.totalorder %s9, 3
    %p138 = pnand %p136, %p137
    %p139 = pneg %p138
    // Predicated region
    $region29: #{up_step_forward.7} parent=5 // pred_check
      _
    $region30: #{up_step_forward.7} parent=5 // pred_check_branch
      %141 = sbr.rel (%p138) target = $region32
    $region31: #{up_step_forward.7} parent=5 // pred_region
      %s142 = ssub.s32 %s9, 1
      %p143 = scmp.lt.s32.totalorder %s14, 1
      %s144 = scalar_select %p143, %s14, 1
      %s145 = smul.addr %s144, 24
      %s146 = smul.addr %s145, 8
      %s147 = scalar_lea.vmem %s0, %s146
      %p148 = pneg %p35
      %p149 = pneg %p32
      %p150 = pneg %p56
      %p151 = pneg %p53
      %p152 = pneg %p77
      %p153 = pneg %p74
      %p154 = pneg %p103
      %p155 = pneg %p100
      %p156 = scmp.lt.s32.totalorder %s14, 1
      %s157 = scalar_select %p156, %s14, 1
      %s158 = smul.addr %s157, 24
      %s159 = smul.addr %s158, 8
      %s160 = scalar_lea.vmem %s3, %s159
      %p161 = scmp.lt.s32.totalorder %s14, 1
      %s162 = scalar_select %p161, %s14, 1
      %s163 = smul.addr %s162, 24
      %s164 = smul.addr %s163, 8
      %s165 = scalar_lea.vmem %s0, %s164
      %p166 = scmp.lt.s32.totalorder %s14, 1
      %s167 = scalar_select %p166, %s14, 1
      %s168 = smul.addr %s167, 24
      %s169 = smul.addr %s168, 8
      %s170 = scalar_lea.vmem %s3, %s169
      %v171 = vld [vmem:[%s165] sm:$0xff]
      %v172 = vld [vmem:[%s165 + $0x8] sm:$0xff]
      %v173 = vld [vmem:[%s165 + $0x10] sm:$0xff]
      %v174 = vld [vmem:[%s165 + $0x18] sm:$0xff]
      %v175 = vld [vmem:[%s165 + $0x20] sm:$0xff]
      %v176 = vld [vmem:[%s165 + $0x28] sm:$0xff]
      %v177 = vld [vmem:[%s165 + $0x30] sm:$0xff]
      %v178 = vld [vmem:[%s165 + $0x38] sm:$0xff]
      %v179 = vld [vmem:[%s165 + $0x40] sm:$0xff]
      %v180 = vld [vmem:[%s165 + $0x48] sm:$0xff]
      %v181 = vld [vmem:[%s165 + $0x50] sm:$0xff]
      %v182 = vld [vmem:[%s165 + $0x58] sm:$0xff]
      %v183 = vld [vmem:[%s165 + $0x60] sm:$0xff]
      %v184 = vld [vmem:[%s165 + $0x68] sm:$0xff]
      %v185 = vld [vmem:[%s165 + $0x70] sm:$0xff]
      %v186 = vld [vmem:[%s165 + $0x78] sm:$0xff]
      %v187 = vld [vmem:[%s165 + $0x80] sm:$0xff]
      %v188 = vld [vmem:[%s165 + $0x88] sm:$0xff]
      %v189 = vld [vmem:[%s165 + $0x90] sm:$0xff]
      %v190 = vld [vmem:[%s165 + $0x98] sm:$0xff]
      %v191 = vld [vmem:[%s165 + $0xa0] sm:$0xff]
      %v192 = vld [vmem:[%s165 + $0xa8] sm:$0xff]
      %v193 = vld [vmem:[%s165 + $0xb0] sm:$0xff]
      %v194 = vld [vmem:[%s165 + $0xb8] sm:$0xff]
      %v195 = vld [vmem:[%s1] sm:$0x1]
      %v197 = vlaneseq
      %v198 = vshrl.u32 %v197, 7
      %v199 = vsub.s32 0, %v198
      %v200 = vrot.slane %v195, %v199
      %v202 = vmul.f32 %v171, %v200
      %v203 = vmul.f32 %v172, %v200
      %v204 = vmul.f32 %v173, %v200
      %v205 = vmul.f32 %v174, %v200
      %v206 = vmul.f32 %v175, %v200
      %v207 = vmul.f32 %v176, %v200
      %v208 = vmul.f32 %v177, %v200
      %v209 = vmul.f32 %v178, %v200
      %v210 = vmul.f32 %v179, %v200
      %v211 = vmul.f32 %v180, %v200
      %v212 = vmul.f32 %v181, %v200
      %v213 = vmul.f32 %v182, %v200
      %v214 = vmul.f32 %v183, %v200
      %v215 = vmul.f32 %v184, %v200
      %v216 = vmul.f32 %v185, %v200
      %v217 = vmul.f32 %v186, %v200
      %v218 = vmul.f32 %v187, %v200
      %v219 = vmul.f32 %v188, %v200
      %v220 = vmul.f32 %v189, %v200
      %v221 = vmul.f32 %v190, %v200
      %v222 = vmul.f32 %v191, %v200
      %v223 = vmul.f32 %v192, %v200
      %v224 = vmul.f32 %v193, %v200
      %v225 = vmul.f32 %v194, %v200
      %v226 = vld [vmem:[%s2] sm:$0x1]
      %v228 = vlaneseq
      %v229 = vshrl.u32 %v228, 7
      %v230 = vsub.s32 0, %v229
      %v231 = vrot.slane %v226, %v230
      %v233 = vadd.f32 %v202, %v231
      %v234 = vadd.f32 %v203, %v231
      %v235 = vadd.f32 %v204, %v231
      %v236 = vadd.f32 %v205, %v231
      %v237 = vadd.f32 %v206, %v231
      %v238 = vadd.f32 %v207, %v231
      %v239 = vadd.f32 %v208, %v231
      %v240 = vadd.f32 %v209, %v231
      %v241 = vadd.f32 %v210, %v231
      %v242 = vadd.f32 %v211, %v231
      %v243 = vadd.f32 %v212, %v231
      %v244 = vadd.f32 %v213, %v231
      %v245 = vadd.f32 %v214, %v231
      %v246 = vadd.f32 %v215, %v231
      %v247 = vadd.f32 %v216, %v231
      %v248 = vadd.f32 %v217, %v231
      %v249 = vadd.f32 %v218, %v231
      %v250 = vadd.f32 %v219, %v231
      %v251 = vadd.f32 %v220, %v231
      %v252 = vadd.f32 %v221, %v231
      %v253 = vadd.f32 %v222, %v231
      %v254 = vadd.f32 %v223, %v231
      %v255 = vadd.f32 %v224, %v231
      %v256 = vadd.f32 %v225, %v231
      %vm257 = vcmask 31744
      %258 = vst.msk [vmem:[%s170] sm:$0xff] %vm257, %v233
      %259 = vst.msk [vmem:[%s170 + $0x8] sm:$0xff] %vm257, %v234
      %260 = vst.msk [vmem:[%s170 + $0x10] sm:$0xff] %vm257, %v235
      %261 = vst.msk [vmem:[%s170 + $0x18] sm:$0xff] %vm257, %v236
      %262 = vst.msk [vmem:[%s170 + $0x20] sm:$0xff] %vm257, %v237
      %263 = vst.msk [vmem:[%s170 + $0x28] sm:$0xff] %vm257, %v238
      %264 = vst.msk [vmem:[%s170 + $0x30] sm:$0xff] %vm257, %v239
      %265 = vst.msk [vmem:[%s170 + $0x38] sm:$0xff] %vm257, %v240
      %266 = vst.msk [vmem:[%s170 + $0x40] sm:$0xff] %vm257, %v241
      %267 = vst.msk [vmem:[%s170 + $0x48] sm:$0xff] %vm257, %v242
      %268 = vst.msk [vmem:[%s170 + $0x50] sm:$0xff] %vm257, %v243
      %269 = vst.msk [vmem:[%s170 + $0x58] sm:$0xff] %vm257, %v244
      %270 = vst.msk [vmem:[%s170 + $0x60] sm:$0xff] %vm257, %v245
      %271 = vst.msk [vmem:[%s170 + $0x68] sm:$0xff] %vm257, %v246
      %272 = vst.msk [vmem:[%s170 + $0x70] sm:$0xff] %vm257, %v247
      %273 = vst.msk [vmem:[%s170 + $0x78] sm:$0xff] %vm257, %v248
      %274 = vst.msk [vmem:[%s170 + $0x80] sm:$0xff] %vm257, %v249
      %275 = vst.msk [vmem:[%s170 + $0x88] sm:$0xff] %vm257, %v250
      %276 = vst.msk [vmem:[%s170 + $0x90] sm:$0xff] %vm257, %v251
      %277 = vst.msk [vmem:[%s170 + $0x98] sm:$0xff] %vm257, %v252
      %278 = vst.msk [vmem:[%s170 + $0xa0] sm:$0xff] %vm257, %v253
      %279 = vst.msk [vmem:[%s170 + $0xa8] sm:$0xff] %vm257, %v254
      %280 = vst.msk [vmem:[%s170 + $0xb0] sm:$0xff] %vm257, %v255
      %281 = vst.msk [vmem:[%s170 + $0xb8] sm:$0xff] %vm257, %v256
      %p282 = scmp.lt.s32.totalorder %s14, 1
      %s283 = scalar_select %p282, %s14, 1
      %s284 = smul.addr %s283, 24
      %s285 = smul.addr %s284, 8
      %s286 = scalar_lea.vmem %s3, %s285
      // Predicated region
      $region33: #{up_step_forward.7} parent=31 // pred_check
        %p287 = pneg %p100
      $region34: #{up_step_forward.7} parent=31 // pred_check_branch
        %289 = sbr.rel (%p287) target = $region36
      $region35: #{up_step_forward.7} parent=31 // pred_region
        _
      $region36: #{up_step_forward.7} parent=31 // pred_fallthru
        _
    $region32: #{up_step_forward.7} parent=5 // pred_fallthru
      _
    %p290 = scmp.le.s32.totalorder 2, %s9
    // Predicated region
    $region37: #{up_step_forward.7} parent=5 // pred_check
      %p291 = pneg %p290
    $region38: #{up_step_forward.7} parent=5 // pred_check_branch
      %293 = sbr.rel (%p291) target = $region40
    $region39: #{up_step_forward.7} parent=5 // pred_region
      %s294 = ssub.s32 %s9, 2
      // Predicated region
      $region41: #{up_step_forward.7} parent=39 // pred_check
        %p295 = pneg %p106
      $region42: #{up_step_forward.7} parent=39 // pred_check_branch
        %297 = sbr.rel (%p295) target = $region44
      $region43: #{up_step_forward.7} parent=39 // pred_region
        %p298 = scmp.lt.s32.totalorder %s15, 1
        %s299 = scalar_select %p298, %s15, 1
        %s300 = smul.addr %s299, 24
        %s301 = smul.addr %s300, 8
        %s302 = scalar_lea.vmem %s3, %s301
      $region44: #{up_step_forward.7} parent=39 // pred_fallthru
        _
    $region40: #{up_step_forward.7} parent=5 // pred_fallthru
      _
  $region6: #{up_step_forward.7} parent=0 // loop_footer
    %s13 = sadd.s32 1, %s9
  $region7: #{up_step_forward.7} parent=0 // loop_footer_branch
    %8 = sbr.rel target = $region3
  $region8: #{up_step_forward.7} parent=0 // loop_exit
    _

// kernel: up_step_forward.6
$region0: #{up_step_forward.6}
  #allocation0 [shape = 'u32[]', space=smem, size = 0x4, offset = 0x4, fixed_abs, tag = 'smem constant byte address 0x4 - core index']
  #allocation1 [shape = 'u32[144,128]{1,0:T(1,128)}', space=vmem, size = 0x12000, scoped, tag = 'internal scratch']
  %s0 = inlined_call_operand.vmem [shape: f32[2,224,4], index: 0, kind: input, shape index: {}]
  %s1 = inlined_call_operand.vmem [shape: bf16[9,4,4], index: 1, kind: input, shape index: {}]
  %s2 = inlined_call_operand.vmem [shape: f32[1,4], index: 2, kind: input, shape index: {}]
  %s3 = inlined_call_operand.vmem [shape: f32[1,4], index: 3, kind: input, shape index: {}]
  %s4 = inlined_call_operand.vmem [shape: f32[1,4], index: 4, kind: input, shape index: {}]
  %s5 = inlined_call_operand.vmem [shape: f32[2,192,4], index: 5, kind: output, shape index: {0}]
  %s6 = inlined_call_operand.vmem [shape: f32[2,2,4], index: 6, kind: output, shape index: {1}]
  %7 = xla_tuple %s5, %s6
  %s8 = sld [smem:[#allocation0]]
  $region61: #{up_step_forward.6} parent=0
    _
  %s10 = ssub.s32 1, %s8
  %s11 = scalar_select 0, %s10, %s8
  loop: start=0, step=1, limit=4
  $region2: #{up_step_forward.6} parent=0 // loop_pre_header
    _
  $region3: #{up_step_forward.6} parent=0 // loop_header
    %s13 = sphi 0, %s17
    %p14 = scmp.ge.s32.totalorder %s13, 4
    %s23 = sphi 0, %s25
    %s26 = sphi 0, %s23
    %s27 = sphi 0, %s26
    %s43 = sphi 0, %s27
    %s47 = sphi 0, %s47
    %s49 = sphi 0, %s47
    %s50 = sphi 0, %s49
    %s64 = sphi 0, %s50
    %s68 = sphi 0, %s68
    %s70 = sphi 0, %s68
    %s71 = sphi 0, %s70
    %s85 = sphi 0, %s71
    %s89 = sphi 0, %s89
    %s91 = sphi 0, %s89
    %s92 = sphi 0, %s91
    %s106 = sphi 0, %s92
    %s110 = sphi 0, %s110
    %s112 = sphi 0, %s110
    %s113 = sphi 0, %s112
    %s127 = sphi 0, %s113
    %s133 = sphi 0, %s135
    %s136 = sphi 0, %s133
    %s137 = sphi 0, %s136
    %s153 = sphi 0, %s137
    %s159 = sphi 0, %s161
    %s162 = sphi 0, %s159
    %s163 = sphi 0, %s162
    %s179 = sphi 0, %s163
  $region4: #{up_step_forward.6} parent=0 // loop_header_branch
    %16 = sbr.rel (%p14) target = $region8
  $region5: #{up_step_forward.6} parent=0 // loop_body
    %s18 = ssub.s32 %s13, 1
    %s19 = ssub.s32 %s13, 2
    %s20 = sadd.s32 %s13, 1
    %s21 = ssub.s32 %s13, %s20
    %p22 = scmp.eq.s32.totalorder %s21, 0
    %s24 = sadd.s32 %s23, 1
    %s25 = scalar_select %p22, %s23, %s24
    %p28 = pneg %p22
    %p29 = scmp.eq.s32.totalorder %s13, 1
    %p30 = por %p28, %p29
    %p31 = scmp.ne.s32.totalorder %s23, %s26
    %p32 = scmp.eq.s32.totalorder %s13, 0
    %p33 = por %p31, %p32
    %p34 = scmp.ne.s32.totalorder %s23, %s26
    %p35 = scmp.eq.s32.totalorder %s18, 1
    %p36 = por %p34, %p35
    %p37 = scmp.ne.s32.totalorder %s26, %s27
    %p38 = scmp.eq.s32.totalorder %s18, 0
    %p39 = por %p37, %p38
    %p40 = scmp.ne.s32.totalorder %s26, %s27
    %p41 = scmp.eq.s32.totalorder %s19, 1
    %p42 = por %p40, %p41
    %p44 = scmp.ne.s32.totalorder %s27, %s43
    %p45 = scmp.eq.s32.totalorder %s19, 0
    %p46 = por %p44, %p45
    %s48 = sadd.s32 %s47, 1
    %p51 = scmp.eq.s32.totalorder %s13, 1
    %p52 = scmp.ne.s32.totalorder %s47, %s49
    %p53 = scmp.eq.s32.totalorder %s13, 0
    %p54 = por %p52, %p53
    %p55 = scmp.ne.s32.totalorder %s47, %s49
    %p56 = scmp.eq.s32.totalorder %s18, 1
    %p57 = por %p55, %p56
    %p58 = scmp.ne.s32.totalorder %s49, %s50
    %p59 = scmp.eq.s32.totalorder %s18, 0
    %p60 = por %p58, %p59
    %p61 = scmp.ne.s32.totalorder %s49, %s50
    %p62 = scmp.eq.s32.totalorder %s19, 1
    %p63 = por %p61, %p62
    %p65 = scmp.ne.s32.totalorder %s50, %s64
    %p66 = scmp.eq.s32.totalorder %s19, 0
    %p67 = por %p65, %p66
    %s69 = sadd.s32 %s68, 1
    %p72 = scmp.eq.s32.totalorder %s13, 1
    %p73 = scmp.ne.s32.totalorder %s68, %s70
    %p74 = scmp.eq.s32.totalorder %s13, 0
    %p75 = por %p73, %p74
    %p76 = scmp.ne.s32.totalorder %s68, %s70
    %p77 = scmp.eq.s32.totalorder %s18, 1
    %p78 = por %p76, %p77
    %p79 = scmp.ne.s32.totalorder %s70, %s71
    %p80 = scmp.eq.s32.totalorder %s18, 0
    %p81 = por %p79, %p80
    %p82 = scmp.ne.s32.totalorder %s70, %s71
    %p83 = scmp.eq.s32.totalorder %s19, 1
    %p84 = por %p82, %p83
    %p86 = scmp.ne.s32.totalorder %s71, %s85
    %p87 = scmp.eq.s32.totalorder %s19, 0
    %p88 = por %p86, %p87
    %s90 = sadd.s32 %s89, 1
    %p93 = scmp.eq.s32.totalorder %s13, 1
    %p94 = scmp.ne.s32.totalorder %s89, %s91
    %p95 = scmp.eq.s32.totalorder %s13, 0
    %p96 = por %p94, %p95
    %p97 = scmp.ne.s32.totalorder %s89, %s91
    %p98 = scmp.eq.s32.totalorder %s18, 1
    %p99 = por %p97, %p98
    %p100 = scmp.ne.s32.totalorder %s91, %s92
    %p101 = scmp.eq.s32.totalorder %s18, 0
    %p102 = por %p100, %p101
    %p103 = scmp.ne.s32.totalorder %s91, %s92
    %p104 = scmp.eq.s32.totalorder %s19, 1
    %p105 = por %p103, %p104
    %p107 = scmp.ne.s32.totalorder %s92, %s106
    %p108 = scmp.eq.s32.totalorder %s19, 0
    %p109 = por %p107, %p108
    %s111 = sadd.s32 %s110, 1
    %p114 = scmp.eq.s32.totalorder %s13, 1
    %p115 = scmp.ne.s32.totalorder %s110, %s112
    %p116 = scmp.eq.s32.totalorder %s13, 0
    %p117 = por %p115, %p116
    %p118 = scmp.ne.s32.totalorder %s110, %s112
    %p119 = scmp.eq.s32.totalorder %s18, 1
    %p120 = por %p118, %p119
    %p121 = scmp.ne.s32.totalorder %s112, %s113
    %p122 = scmp.eq.s32.totalorder %s18, 0
    %p123 = por %p121, %p122
    %p124 = scmp.ne.s32.totalorder %s112, %s113
    %p125 = scmp.eq.s32.totalorder %s19, 1
    %p126 = por %p124, %p125
    %p128 = scmp.ne.s32.totalorder %s113, %s127
    %p129 = scmp.eq.s32.totalorder %s19, 0
    %p130 = por %p128, %p129
    %s131 = ssub.s32 %s13, %s20
    %p132 = scmp.eq.s32.totalorder %s131, 0
    %s134 = sadd.s32 %s133, 1
    %s135 = scalar_select %p132, %s133, %s134
    %p138 = pneg %p132
    %p139 = scmp.eq.s32.totalorder %s13, 1
    %p140 = por %p138, %p139
    %p141 = scmp.ne.s32.totalorder %s133, %s136
    %p142 = scmp.eq.s32.totalorder %s13, 0
    %p143 = por %p141, %p142
    %p144 = scmp.ne.s32.totalorder %s133, %s136
    %p145 = scmp.eq.s32.totalorder %s18, 1
    %p146 = por %p144, %p145
    %p147 = scmp.ne.s32.totalorder %s136, %s137
    %p148 = scmp.eq.s32.totalorder %s18, 0
    %p149 = por %p147, %p148
    %p150 = scmp.ne.s32.totalorder %s136, %s137
    %p151 = scmp.eq.s32.totalorder %s19, 1
    %p152 = por %p150, %p151
    %p154 = scmp.ne.s32.totalorder %s137, %s153
    %p155 = scmp.eq.s32.totalorder %s19, 0
    %p156 = por %p154, %p155
    %s157 = ssub.s32 %s13, %s20
    %p158 = scmp.eq.s32.totalorder %s157, 0
    %s160 = sadd.s32 %s159, 1
    %s161 = scalar_select %p158, %s159, %s160
    %p164 = pneg %p158
    %p165 = scmp.eq.s32.totalorder %s13, 1
    %p166 = por %p164, %p165
    %p167 = scmp.ne.s32.totalorder %s159, %s162
    %p168 = scmp.eq.s32.totalorder %s13, 0
    %p169 = por %p167, %p168
    %p170 = scmp.ne.s32.totalorder %s159, %s162
    %p171 = scmp.eq.s32.totalorder %s18, 1
    %p172 = por %p170, %p171
    %p173 = scmp.ne.s32.totalorder %s162, %s163
    %p174 = scmp.eq.s32.totalorder %s18, 0
    %p175 = por %p173, %p174
    %p176 = scmp.ne.s32.totalorder %s162, %s163
    %p177 = scmp.eq.s32.totalorder %s19, 1
    %p178 = por %p176, %p177
    %p180 = scmp.ne.s32.totalorder %s163, %s179
    %p181 = scmp.eq.s32.totalorder %s19, 0
    %p182 = por %p180, %p181
    %p183 = scmp.le.s32.totalorder 1, %s13
    %p184 = scmp.lt.s32.totalorder %s13, 3
    %p185 = pnand %p183, %p184
    %p186 = pneg %p185
    // Predicated region
    $region9: #{up_step_forward.6} parent=5 // pred_check
      _
    $region10: #{up_step_forward.6} parent=5 // pred_check_branch
      %188 = sbr.rel (%p185) target = $region12
    $region11: #{up_step_forward.6} parent=5 // pred_region
      %s189 = ssub.s32 %s13, 1
      // Predicated region
      $region13: #{up_step_forward.6} parent=11 // pred_check
        %p190 = pneg %p60
      $region14: #{up_step_forward.6} parent=11 // pred_check_branch
        %192 = sbr.rel (%p190) target = $region16
      $region15: #{up_step_forward.6} parent=11 // pred_region
        _
      $region16: #{up_step_forward.6} parent=11 // pred_fallthru
        _
      // Predicated region
      $region17: #{up_step_forward.6} parent=11 // pred_check
        %p193 = pneg %p81
      $region18: #{up_step_forward.6} parent=11 // pred_check_branch
        %195 = sbr.rel (%p193) target = $region20
      $region19: #{up_step_forward.6} parent=11 // pred_region
        _
      $region20: #{up_step_forward.6} parent=11 // pred_fallthru
        _
      // Predicated region
      $region21: #{up_step_forward.6} parent=11 // pred_check
        %p196 = pneg %p102
      $region22: #{up_step_forward.6} parent=11 // pred_check_branch
        %198 = sbr.rel (%p196) target = $region24
      $region23: #{up_step_forward.6} parent=11 // pred_region
        _
      $region24: #{up_step_forward.6} parent=11 // pred_fallthru
        _
      // Predicated region
      $region25: #{up_step_forward.6} parent=11 // pred_check
        %p199 = pneg %p123
      $region26: #{up_step_forward.6} parent=11 // pred_check_branch
        %201 = sbr.rel (%p199) target = $region28
      $region27: #{up_step_forward.6} parent=11 // pred_region
        _
      $region28: #{up_step_forward.6} parent=11 // pred_fallthru
        _
    $region12: #{up_step_forward.6} parent=5 // pred_fallthru
      _
    %p202 = scmp.lt.s32.totalorder %s13, 2
    // Predicated region
    $region29: #{up_step_forward.6} parent=5 // pred_check
      %p203 = pneg %p202
    $region30: #{up_step_forward.6} parent=5 // pred_check_branch
      %205 = sbr.rel (%p203) target = $region32
    $region31: #{up_step_forward.6} parent=5 // pred_region
      // Predicated region
      $region33: #{up_step_forward.6} parent=31 // pred_check
        %p206 = pneg %p33
      $region34: #{up_step_forward.6} parent=31 // pred_check_branch
        %208 = sbr.rel (%p206) target = $region36
      $region35: #{up_step_forward.6} parent=31 // pred_region
        %p209 = scmp.lt.s32.totalorder %s13, 1
        %s210 = scalar_select %p209, %s13, 1
        %s211 = smul.addr %s210, 28
        %s212 = smul.addr %s211, 8
        %s213 = scalar_lea.vmem %s0, %s212
      $region36: #{up_step_forward.6} parent=31 // pred_fallthru
        _
    $region32: #{up_step_forward.6} parent=5 // pred_fallthru
      _
    %p214 = scmp.le.s32.totalorder 1, %s13
    %p215 = scmp.lt.s32.totalorder %s13, 3
    %p216 = pnand %p214, %p215
    %p217 = pneg %p216
    // Predicated region
    $region37: #{up_step_forward.6} parent=5 // pred_check
      _
    $region38: #{up_step_forward.6} parent=5 // pred_check_branch
      %219 = sbr.rel (%p216) target = $region40
    $region39: #{up_step_forward.6} parent=5 // pred_region
      %s220 = ssub.s32 %s13, 1
      %p221 = scmp.lt.s32.totalorder %s18, 1
      %s222 = scalar_select %p221, %s18, 1
      %s223 = smul.addr %s222, 28
      %s224 = smul.addr %s223, 8
      %s225 = scalar_lea.vmem %s0, %s224
      %p226 = pneg %p39
      %p227 = pneg %p36
      %p228 = pneg %p60
      %p229 = pneg %p57
      %p230 = pneg %p81
      %p231 = pneg %p78
      %p232 = pneg %p102
      %p233 = pneg %p99
      %p234 = pneg %p123
      %p235 = pneg %p120
      %p236 = pneg %p149
      %p237 = pneg %p146
      %p238 = scmp.lt.s32.totalorder %s18, 1
      %s239 = scalar_select %p238, %s18, 1
      %s240 = smul.addr %s239, 24
      %s241 = smul.addr %s240, 8
      %s242 = scalar_lea.vmem %s5, %s241
      %p243 = pneg %p175
      %p244 = pneg %p172
      %p245 = scmp.lt.s32.totalorder %s18, 1
      %s246 = scalar_select %p245, %s18, 1
      %s247 = smul.addr %s246, 2
      %s248 = scalar_lea.vmem %s6, %s247
      %p249 = scmp.lt.s32.totalorder %s18, 1
      %s250 = scalar_select %p249, %s18, 1
      %s251 = smul.addr %s250, 28
      %s252 = smul.addr %s251, 8
      %s253 = scalar_lea.vmem %s0, %s252
      %p254 = scmp.lt.s32.totalorder %s18, 1
      %s255 = scalar_select %p254, %s18, 1
      %s256 = smul.addr %s255, 24
      %s257 = smul.addr %s256, 8
      %s258 = scalar_lea.vmem %s5, %s257
      %p259 = scmp.lt.s32.totalorder %s18, 1
      %s260 = scalar_select %p259, %s18, 1
      %s261 = smul.addr %s260, 2
      %s262 = scalar_lea.vmem %s6, %s261
      %v264 = vld [vmem:[%s3] sm:$0x1]
      %v265 = vld [vmem:[%s4] sm:$0x1]
      %v266 = vld [vmem:[%s2] sm:$0x1]
      %v268 = vlaneseq
      %v269 = vshrl.u32 %v268, 7
      %v270 = vsub.s32 0, %v269
      %v271 = vrot.slane %v266, %v270
      %v273 = vld [vmem:[%s253] sm:$0xff]
      %v274 = vld [vmem:[%s253 + $0x8] sm:$0xff]
      %v275 = vld [vmem:[%s253 + $0x10] sm:$0xff]
      %v276 = vld [vmem:[%s253 + $0x18] sm:$0xff]
      %v277 = vld [vmem:[%s253 + $0x20] sm:$0xff]
      %v278 = vld [vmem:[%s253 + $0x28] sm:$0xff]
      %v279 = vld [vmem:[%s253 + $0x30] sm:$0xff]
      %v280 = vld [vmem:[%s253 + $0x38] sm:$0xff]
      %v281 = vld [vmem:[%s253 + $0x40] sm:$0xff]
      %v282 = vld [vmem:[%s253 + $0x48] sm:$0xff]
      %v283 = vld [vmem:[%s253 + $0x50] sm:$0xff]
      %v284 = vld [vmem:[%s253 + $0x58] sm:$0xff]
      %v285 = vld [vmem:[%s253 + $0x60] sm:$0xff]
      %v286 = vld [vmem:[%s253 + $0x68] sm:$0xff]
      %v287 = vld [vmem:[%s253 + $0x70] sm:$0xff]
      %v288 = vld [vmem:[%s253 + $0x78] sm:$0xff]
      %v289 = vld [vmem:[%s253 + $0x80] sm:$0xff]
      %v290 = vld [vmem:[%s253 + $0x88] sm:$0xff]
      %v291 = vld [vmem:[%s253 + $0x90] sm:$0xff]
      %v292 = vld [vmem:[%s253 + $0x98] sm:$0xff]
      %v293 = vld [vmem:[%s253 + $0xa0] sm:$0xff]
      %v294 = vld [vmem:[%s253 + $0xa8] sm:$0xff]
      %v295 = vld [vmem:[%s253 + $0xb0] sm:$0xff]
      %v296 = vld [vmem:[%s253 + $0xb8] sm:$0x3f]
      %v298 = vlaneseq
      %v299 = vshrl.u32 %v298, 7
      %v300 = vsub.s32 0, %v299
      %v301 = vrot.slane %v264, %v300
      %v303 = vmul.f32 %v273, %v301
      %v304 = vmul.f32 %v274, %v301
      %v305 = vmul.f32 %v275, %v301
      %v306 = vmul.f32 %v276, %v301
      %v307 = vmul.f32 %v277, %v301
      %v308 = vmul.f32 %v278, %v301
      %v309 = vmul.f32 %v279, %v301
      %v310 = vmul.f32 %v280, %v301
      %v311 = vmul.f32 %v281, %v301
      %v312 = vmul.f32 %v282, %v301
      %v313 = vmul.f32 %v283, %v301
      %v314 = vmul.f32 %v284, %v301
      %v315 = vmul.f32 %v285, %v301
      %v316 = vmul.f32 %v286, %v301
      %v317 = vmul.f32 %v287, %v301
      %v318 = vmul.f32 %v288, %v301
      %v319 = vmul.f32 %v289, %v301
      %v320 = vmul.f32 %v290, %v301
      %v321 = vmul.f32 %v291, %v301
      %v322 = vmul.f32 %v292, %v301
      %v323 = vmul.f32 %v293, %v301
      %v324 = vmul.f32 %v294, %v301
      %v325 = vmul.f32 %v295, %v301
      %v326 = vmul.f32 %v296, %v301
      %v328 = vlaneseq
      %v329 = vshrl.u32 %v328, 7
      %v330 = vsub.s32 0, %v329
      %v331 = vrot.slane %v265, %v330
      %v333 = vadd.f32 %v303, %v331
      %v334 = vadd.f32 %v304, %v331
      %v335 = vadd.f32 %v305, %v331
      %v336 = vadd.f32 %v306, %v331
      %v337 = vadd.f32 %v307, %v331
      %v338 = vadd.f32 %v308, %v331
      %v339 = vadd.f32 %v309, %v331
      %v340 = vadd.f32 %v310, %v331
      %v341 = vadd.f32 %v311, %v331
      %v342 = vadd.f32 %v312, %v331
      %v343 = vadd.f32 %v313, %v331
      %v344 = vadd.f32 %v314, %v331
      %v345 = vadd.f32 %v315, %v331
      %v346 = vadd.f32 %v316, %v331
      %v347 = vadd.f32 %v317, %v331
      %v348 = vadd.f32 %v318, %v331
      %v349 = vadd.f32 %v319, %v331
      %v350 = vadd.f32 %v320, %v331
      %v351 = vadd.f32 %v321, %v331
      %v352 = vadd.f32 %v322, %v331
      %v353 = vadd.f32 %v323, %v331
      %v354 = vadd.f32 %v324, %v331
      %v355 = vadd.f32 %v325, %v331
      %v356 = vadd.f32 %v326, %v331
      %v357 = vpack.c.bf16 %v334, %v333
      %v358 = vpack.c.bf16 %v336, %v335
      %v359 = vpack.c.bf16 %v338, %v337
      %v360 = vpack.c.bf16 %v340, %v339
      %v361 = vpack.c.bf16 %v342, %v341
      %v362 = vpack.c.bf16 %v344, %v343
      %v363 = vpack.c.bf16 %v346, %v345
      %v364 = vpack.c.bf16 %v348, %v347
      %v365 = vpack.c.bf16 %v350, %v349
      %v366 = vpack.c.bf16 %v352, %v351
      %v367 = vpack.c.bf16 %v354, %v353
      %v368 = vpack.c.bf16 %v356, %v355
      %v369 = vld [vmem:[%s1] sm:$0x3]
      %vm370 = vcmask 31744
      %v372 = vsel %vm370, %v357, 0
      %v375 = vsel %vm370, %v358, 0
      %v378 = vsel %vm370, %v359, 0
      %v381 = vsel %vm370, %v360, 0
      %v384 = vsel %vm370, %v361, 0
      %v387 = vsel %vm370, %v362, 0
      %v390 = vsel %vm370, %v363, 0
      %v393 = vsel %vm370, %v364, 0
      %v396 = vsel %vm370, %v365, 0
      %v399 = vsel %vm370, %v366, 0
      %v402 = vsel %vm370, %v367, 0
      %v405 = vsel %vm370, %v368, 0
      %vm407 = vcmask 1041408
      %v409 = vsel %vm407, %v369, 0
      %411 = vmatprep.subr.bf16.mxu0 0
      %412 = vmatpush1.bf16.msra.mxu0 %v409
      %413 = vmatprep.subr.bf16.mxu0 0
      %414 = vmatpush1.bf16.msra.mxu0 0
      %415 = vmatprep.subr.bf16.mxu0 0
      %416 = vmatpush1.bf16.msra.mxu0 0
      %417 = vmatprep.subr.bf16.mxu0 0
      %418 = vmatpush1.bf16.msra.mxu0 0
      %419 = vmatprep.subr.bf16.mxu0 0
      %420 = vmatpush1.bf16.msra.mxu0 0
      %421 = vmatprep.subr.bf16.mxu0 0
      %422 = vmatpush1.bf16.msra.mxu0 0
      %423 = vmatprep.subr.bf16.mxu0 0
      %424 = vmatpush1.bf16.msra.mxu0 0
      %425 = vmatprep.subr.bf16.mxu0 0
      %426 = vmatpush1.bf16.msra.mxu0 0
      %427 = vmatprep.subr.bf16.mxu0 0
      %428 = vmatpush1.bf16.msra.mxu0 0
      %429 = vmatprep.subr.bf16.mxu0 0
      %430 = vmatpush1.bf16.msra.mxu0 0
      %431 = vmatprep.subr.bf16.mxu0 0
      %432 = vmatpush1.bf16.msra.mxu0 0
      %433 = vmatprep.subr.bf16.mxu0 0
      %434 = vmatpush1.bf16.msra.mxu0 0
      %435 = vmatprep.subr.bf16.mxu0 0
      %436 = vmatpush1.bf16.msra.mxu0 0
      %437 = vmatprep.subr.bf16.mxu0 0
      %438 = vmatpush1.bf16.msra.mxu0 0
      %439 = vmatprep.subr.bf16.mxu0 0
      %440 = vmatpush1.bf16.msra.mxu0 0
      %441 = vmatprep.subr.bf16.mxu0 0
      %442 = vmatpush1.bf16.msra.mxu0 0
      %443 = vmatprep.mubr.bf16.mxu0 0
      %444 = vmatmul.mubr.bf16.gmra.mrb[0].mxu0 %v372
      %v445 = vpop.f32.mrb[0].mxu0
      %v446 = vadd.f32 0.0, %v445
      %v447 = vpop.f32.mrb[0].mxu0
      %v448 = vpop.f32.mrb[0].mxu0
      %v449 = vadd.f32 0.0, %v448
      %v450 = vpop.f32.mrb[0].mxu0
      %451 = vmatprep.mubr.bf16.mxu0 0
      %452 = vmatmul.mubr.bf16.gmra.mrb[0].mxu0 %v375
      %v453 = vpop.f32.mrb[0].mxu0
      %v454 = vadd.f32 0.0, %v453
      %v455 = vpop.f32.mrb[0].mxu0
      %v456 = vpop.f32.mrb[0].mxu0
      %v457 = vadd.f32 0.0, %v456
      %v458 = vpop.f32.mrb[0].mxu0
      %459 = vmatprep.mubr.bf16.mxu0 0
      %460 = vmatmul.mubr.bf16.gmra.mrb[0].mxu0 %v378
      %v461 = vpop.f32.mrb[0].mxu0
      %v462 = vadd.f32 0.0, %v461
      %v463 = vpop.f32.mrb[0].mxu0
      %v464 = vpop.f32.mrb[0].mxu0
      %v465 = vadd.f32 0.0, %v464
      %v466 = vpop.f32.mrb[0].mxu0
      %467 = vmatprep.mubr.bf16.mxu0 0
      %468 = vmatmul.mubr.bf16.gmra.mrb[0].mxu0 %v381
      %v469 = vpop.f32.mrb[0].mxu0
      %v470 = vadd.f32 0.0, %v469
      %v471 = vpop.f32.mrb[0].mxu0
      %v472 = vpop.f32.mrb[0].mxu0
      %v473 = vadd.f32 0.0, %v472
      %v474 = vpop.f32.mrb[0].mxu0
      %475 = vmatprep.mubr.bf16.mxu0 0
      %476 = vmatmul.mubr.bf16.gmra.mrb[0].mxu0 %v384
      %v477 = vpop.f32.mrb[0].mxu0
      %v478 = vadd.f32 0.0, %v477
      %v479 = vpop.f32.mrb[0].mxu0
      %v480 = vpop.f32.mrb[0].mxu0
      %v481 = vadd.f32 0.0, %v480
      %v482 = vpop.f32.mrb[0].mxu0
      %483 = vmatprep.mubr.bf16.mxu0 0
      %484 = vmatmul.mubr.bf16.gmra.mrb[0].mxu0 %v387
      %v485 = vpop.f32.mrb[0].mxu0
      %v486 = vadd.f32 0.0, %v485
      %v487 = vpop.f32.mrb[0].mxu0
      %v488 = vpop.f32.mrb[0].mxu0
      %v489 = vadd.f32 0.0, %v488
      %v490 = vpop.f32.mrb[0].mxu0
      %491 = vmatprep.mubr.bf16.mxu0 0
      %492 = vmatmul.mubr.bf16.gmra.mrb[0].mxu0 %v390
      %v493 = vpop.f32.mrb[0].mxu0
      %v494 = vadd.f32 0.0, %v493
      %v495 = vpop.f32.mrb[0].mxu0
      %v496 = vpop.f32.mrb[0].mxu0
      %v497 = vadd.f32 0.0, %v496
      %v498 = vpop.f32.mrb[0].mxu0
      %499 = vmatprep.mubr.bf16.mxu0 0
      %500 = vmatmul.mubr.bf16.gmra.mrb[0].mxu0 %v393
      %v501 = vpop.f32.mrb[0].mxu0
      %v502 = vadd.f32 0.0, %v501
      %v503 = vpop.f32.mrb[0].mxu0
      %v504 = vpop.f32.mrb[0].mxu0
      %v505 = vadd.f32 0.0, %v504
      %v506 = vpop.f32.mrb[0].mxu0
      %507 = vmatprep.mubr.bf16.mxu0 0
      %508 = vmatmul.mubr.bf16.gmra.mrb[0].mxu0 %v396
      %v509 = vpop.f32.mrb[0].mxu0
      %v510 = vadd.f32 0.0, %v509
      %v511 = vpop.f32.mrb[0].mxu0
      %v512 = vpop.f32.mrb[0].mxu0
      %v513 = vadd.f32 0.0, %v512
      %v514 = vpop.f32.mrb[0].mxu0
      %515 = vmatprep.mubr.bf16.mxu0 0
      %516 = vmatmul.mubr.bf16.gmra.mrb[0].mxu0 %v399
      %v517 = vpop.f32.mrb[0].mxu0
      %v518 = vadd.f32 0.0, %v517
      %v519 = vpop.f32.mrb[0].mxu0
      %v520 = vpop.f32.mrb[0].mxu0
      %v521 = vadd.f32 0.0, %v520
      %v522 = vpop.f32.mrb[0].mxu0
      %523 = vmatprep.mubr.bf16.mxu0 0
      %524 = vmatmul.mubr.bf16.gmra.mrb[0].mxu0 %v402
      %v525 = vpop.f32.mrb[0].mxu0
      %v526 = vadd.f32 0.0, %v525
      %v527 = vpop.f32.mrb[0].mxu0
      %v528 = vpop.f32.mrb[0].mxu0
      %v529 = vadd.f32 0.0, %v528
      %v530 = vpop.f32.mrb[0].mxu0
      %531 = vmatprep.mubr.bf16.mxu0 0
      %532 = vmatmul.mubr.bf16.gmra.mrb[0].mxu0 %v405
      %v533 = vpop.f32.mrb[0].mxu0
      %v534 = vadd.f32 0.0, %v533
      %v535 = vpop.f32.mrb[0].mxu0
      %v536 = vpop.f32.mrb[0].mxu0
      %v537 = vadd.f32 0.0, %v536
      %v538 = vpop.f32.mrb[0].mxu0
      %539 = vdwg.mxu0
      %v540 = vadd.f32 %v271, %v446
      %v541 = vadd.f32 %v271, %v449
      %v542 = vadd.f32 %v271, %v454
      %v543 = vadd.f32 %v271, %v457
      %v544 = vadd.f32 %v271, %v462
      %v545 = vadd.f32 %v271, %v465
      %v546 = vadd.f32 %v271, %v470
      %v547 = vadd.f32 %v271, %v473
      %v548 = vadd.f32 %v271, %v478
      %v549 = vadd.f32 %v271, %v481
      %v550 = vadd.f32 %v271, %v486
      %v551 = vadd.f32 %v271, %v489
      %v552 = vadd.f32 %v271, %v494
      %v553 = vadd.f32 %v271, %v497
      %v554 = vadd.f32 %v271, %v502
      %v555 = vadd.f32 %v271, %v505
      %v556 = vadd.f32 %v271, %v510
      %v557 = vadd.f32 %v271, %v513
      %v558 = vadd.f32 %v271, %v518
      %v559 = vadd.f32 %v271, %v521
      %v560 = vadd.f32 %v271, %v526
      %v561 = vadd.f32 %v271, %v529
      %v562 = vadd.f32 %v271, %v534
      %v563 = vadd.f32 %v271, %v537
      %v564 = vld [vmem:[%s253 + $0x1] sm:$0xff]
      %v565 = vld [vmem:[%s253 + $0x9] sm:$0xff]
      %v566 = vld [vmem:[%s253 + $0x11] sm:$0xff]
      %v567 = vld [vmem:[%s253 + $0x19] sm:$0xff]
      %v568 = vld [vmem:[%s253 + $0x21] sm:$0xff]
      %v569 = vld [vmem:[%s253 + $0x29] sm:$0xff]
      %v570 = vld [vmem:[%s253 + $0x31] sm:$0xff]
      %v571 = vld [vmem:[%s253 + $0x39] sm:$0xff]
      %v572 = vld [vmem:[%s253 + $0x41] sm:$0xff]
      %v573 = vld [vmem:[%s253 + $0x49] sm:$0xff]
      %v574 = vld [vmem:[%s253 + $0x51] sm:$0xff]
      %v575 = vld [vmem:[%s253 + $0x59] sm:$0xff]
      %v576 = vld [vmem:[%s253 + $0x61] sm:$0xff]
      %v577 = vld [vmem:[%s253 + $0x69] sm:$0xff]
      %v578 = vld [vmem:[%s253 + $0x71] sm:$0xff]
      %v579 = vld [vmem:[%s253 + $0x79] sm:$0xff]
      %v580 = vld [vmem:[%s253 + $0x81] sm:$0xff]
      %v581 = vld [vmem:[%s253 + $0x89] sm:$0xff]
      %v582 = vld [vmem:[%s253 + $0x91] sm:$0xff]
      %v583 = vld [vmem:[%s253 + $0x99] sm:$0xff]
      %v584 = vld [vmem:[%s253 + $0xa1] sm:$0xff]
      %v585 = vld [vmem:[%s253 + $0xa9] sm:$0xff]
      %v586 = vld [vmem:[%s253 + $0xb1] sm:$0xff]
      %v587 = vld [vmem:[%s253 + $0xb9] sm:$0x3f]
      %v588 = vmul.f32 %v564, %v301
      %v589 = vmul.f32 %v565, %v301
      %v590 = vmul.f32 %v566, %v301
      %v591 = vmul.f32 %v567, %v301
      %v592 = vmul.f32 %v568, %v301
      %v593 = vmul.f32 %v569, %v301
      %v594 = vmul.f32 %v570, %v301
      %v595 = vmul.f32 %v571, %v301
      %v596 = vmul.f32 %v572, %v301
      %v597 = vmul.f32 %v573, %v301
      %v598 = vmul.f32 %v574, %v301
      %v599 = vmul.f32 %v575, %v301
      %v600 = vmul.f32 %v576, %v301
      %v601 = vmul.f32 %v577, %v301
      %v602 = vmul.f32 %v578, %v301
      %v603 = vmul.f32 %v579, %v301
      %v604 = vmul.f32 %v580, %v301
      %v605 = vmul.f32 %v581, %v301
      %v606 = vmul.f32 %v582, %v301
      %v607 = vmul.f32 %v583, %v301
      %v608 = vmul.f32 %v584, %v301
      %v609 = vmul.f32 %v585, %v301
      %v610 = vmul.f32 %v586, %v301
      %v611 = vmul.f32 %v587, %v301
      %v612 = vadd.f32 %v588, %v331
      %v613 = vadd.f32 %v589, %v331
      %v614 = vadd.f32 %v590, %v331
      %v615 = vadd.f32 %v591, %v331
      %v616 = vadd.f32 %v592, %v331
      %v617 = vadd.f32 %v593, %v331
      %v618 = vadd.f32 %v594, %v331
      %v619 = vadd.f32 %v595, %v331
      %v620 = vadd.f32 %v596, %v331
      %v621 = vadd.f32 %v597, %v331
      %v622 = vadd.f32 %v598, %v331
      %v623 = vadd.f32 %v599, %v331
      %v624 = vadd.f32 %v600, %v331
      %v625 = vadd.f32 %v601, %v331
      %v626 = vadd.f32 %v602, %v331
      %v627 = vadd.f32 %v603, %v331
      %v628 = vadd.f32 %v604, %v331
      %v629 = vadd.f32 %v605, %v331
      %v630 = vadd.f32 %v606, %v331
      %v631 = vadd.f32 %v607, %v331
      %v632 = vadd.f32 %v608, %v331
      %v633 = vadd.f32 %v609, %v331
      %v634 = vadd.f32 %v610, %v331
      %v635 = vadd.f32 %v611, %v331
      %v636 = vpack.c.bf16 %v613, %v612
      %v637 = vpack.c.bf16 %v615, %v614
      %v638 = vpack.c.bf16 %v617, %v616
      %v639 = vpack.c.bf16 %v619, %v618
      %v640 = vpack.c.bf16 %v621, %v620
      %v641 = vpack.c.bf16 %v623, %v622
      %v642 = vpack.c.bf16 %v625, %v624
      %v643 = vpack.c.bf16 %v627, %v626
      %v644 = vpack.c.bf16 %v629, %v628
      %v645 = vpack.c.bf16 %v631, %v630
      %v646 = vpack.c.bf16 %v633, %v632
      %v647 = vpack.c.bf16 %v635, %v634
      %s648 = scalar_lea.vmem %s1, 2
      %v649 = vld [vmem:[%s648] sm:$0x3]
      %v651 = vsel %vm370, %v636, 0
      %v654 = vsel %vm370, %v637, 0
      %v657 = vsel %vm370, %v638, 0
      %v660 = vsel %vm370, %v639, 0
      %v663 = vsel %vm370, %v640, 0
      %v666 = vsel %vm370, %v641, 0
      %v669 = vsel %vm370, %v642, 0
      %v672 = vsel %vm370, %v643, 0
      %v675 = vsel %vm370, %v644, 0
      %v678 = vsel %vm370, %v645, 0
      %v681 = vsel %vm370, %v646, 0
      %v684 = vsel %vm370, %v647, 0
      %v687 = vsel %vm407, %v649, 0
      %689 = vmatprep.subr.bf16.mxu0 0
      %690 = vmatpush1.bf16.msra.mxu0 %v687
      %691 = vmatprep.subr.bf16.mxu0 0
      %692 = vmatpush1.bf16.msra.mxu0 0
      %693 = vmatprep.subr.bf16.mxu0 0
      %694 = vmatpush1.bf16.msra.mxu0 0
      %695 = vmatprep.subr.bf16.mxu0 0
      %696 = vmatpush1.bf16.msra.mxu0 0
      %697 = vmatprep.subr.bf16.mxu0 0
      %698 = vmatpush1.bf16.msra.mxu0 0
      %699 = vmatprep.subr.bf16.mxu0 0
      %700 = vmatpush1.bf16.msra.mxu0 0
      %701 = vmatprep.subr.bf16.mxu0 0
      %702 = vmatpush1.bf16.msra.mxu0 0
      %703 = vmatprep.subr.bf16.mxu0 0
      %704 = vmatpush1.bf16.msra.mxu0 0
      %705 = vmatprep.subr.bf16.mxu0 0
      %706 = vmatpush1.bf16.msra.mxu0 0
      %707 = vmatprep.subr.bf16.mxu0 0
      %708 = vmatpush1.bf16.msra.mxu0 0
      %709 = vmatprep.subr.bf16.mxu0 0
      %710 = vmatpush1.bf16.msra.mxu0 0
      %711 = vmatprep.subr.bf16.mxu0 0
      %712 = vmatpush1.bf16.msra.mxu0 0
      %713 = vmatprep.subr.bf16.mxu0 0
      %714 = vmatpush1.bf16.msra.mxu0 0
      %715 = vmatprep.subr.bf16.mxu0 0
      %716 = vmatpush1.bf16.msra.mxu0 0
      %717 = vmatprep.subr.bf16.mxu0 0
      %718 = vmatpush1.bf16.msra.mxu0 0
      %719 = vmatprep.subr.bf16.mxu0 0
      %720 = vmatpush1.bf16.msra.mxu0 0
      %721 = vmatprep.mubr.bf16.mxu0 0
      %722 = vmatmul.mubr.bf16.gmra.mrb[0].mxu0 %v651
      %v723 = vpop.f32.mrb[0].mxu0
      %v724 = vadd.f32 0.0, %v723
      %v725 = vpop.f32.mrb[0].mxu0
      %v726 = vpop.f32.mrb[0].mxu0
      %v727 = vadd.f32 0.0, %v726
      %v728 = vpop.f32.mrb[0].mxu0
      %729 = vmatprep.mubr.bf16.mxu0 0
      %730 = vmatmul.mubr.bf16.gmra.mrb[0].mxu0 %v654
      %v731 = vpop.f32.mrb[0].mxu0
      %v732 = vadd.f32 0.0, %v731
      %v733 = vpop.f32.mrb[0].mxu0
      %v734 = vpop.f32.mrb[0].mxu0
      %v735 = vadd.f32 0.0, %v734
      %v736 = vpop.f32.mrb[0].mxu0
      %737 = vmatprep.mubr.bf16.mxu0 0
      %738 = vmatmul.mubr.bf16.gmra.mrb[0].mxu0 %v657
      %v739 = vpop.f32.mrb[0].mxu0
      %v740 = vadd.f32 0.0, %v739
      %v741 = vpop.f32.mrb[0].mxu0
      %v742 = vpop.f32.mrb[0].mxu0
      %v743 = vadd.f32 0.0, %v742
      %v744 = vpop.f32.mrb[0].mxu0
      %745 = vmatprep.mubr.bf16.mxu0 0
      %746 = vmatmul.mubr.bf16.gmra.mrb[0].mxu0 %v660
      %v747 = vpop.f32.mrb[0].mxu0
      %v748 = vadd.f32 0.0, %v747
      %v749 = vpop.f32.mrb[0].mxu0
      %v750 = vpop.f32.mrb[0].mxu0
      %v751 = vadd.f32 0.0, %v750
      %v752 = vpop.f32.mrb[0].mxu0
      %753 = vmatprep.mubr.bf16.mxu0 0
      %754 = vmatmul.mubr.bf16.gmra.mrb[0].mxu0 %v663
      %v755 = vpop.f32.mrb[0].mxu0
      %v756 = vadd.f32 0.0, %v755
      %v757 = vpop.f32.mrb[0].mxu0
      %v758 = vpop.f32.mrb[0].mxu0
      %v759 = vadd.f32 0.0, %v758
      %v760 = vpop.f32.mrb[0].mxu0
      %761 = vmatprep.mubr.bf16.mxu0 0
      %762 = vmatmul.mubr.bf16.gmra.mrb[0].mxu0 %v666
      %v763 = vpop.f32.mrb[0].mxu0
      %v764 = vadd.f32 0.0, %v763
      %v765 = vpop.f32.mrb[0].mxu0
      %v766 = vpop.f32.mrb[0].mxu0
      %v767 = vadd.f32 0.0, %v766
      %v768 = vpop.f32.mrb[0].mxu0
      %769 = vmatprep.mubr.bf16.mxu0 0
      %770 = vmatmul.mubr.bf16.gmra.mrb[0].mxu0 %v669
      %v771 = vpop.f32.mrb[0].mxu0
      %v772 = vadd.f32 0.0, %v771
      %v773 = vpop.f32.mrb[0].mxu0
      %v774 = vpop.f32.mrb[0].mxu0
      %v775 = vadd.f32 0.0, %v774
      %v776 = vpop.f32.mrb[0].mxu0
      %777 = vmatprep.mubr.bf16.mxu0 0
      %778 = vmatmul.mubr.bf16.gmra.mrb[0].mxu0 %v672
      %v779 = vpop.f32.mrb[0].mxu0
      %v780 = vadd.f32 0.0, %v779
      %v781 = vpop.f32.mrb[0].mxu0
      %v782 = vpop.f32.mrb[0].mxu0
      %v783 = vadd.f32 0.0, %v782
      %v784 = vpop.f32.mrb[0].mxu0
      %785 = vmatprep.mubr.bf16.mxu0 0
      %786 = vmatmul.mubr.bf16.gmra.mrb[0].mxu0 %v675
      %v787 = vpop.f32.mrb[0].mxu0
      %v788 = vadd.f32 0.0, %v787
      %v789 = vpop.f32.mrb[0].mxu0
      %v790 = vpop.f32.mrb[0].mxu0
      %v791 = vadd.f32 0.0, %v790
      %v792 = vpop.f32.mrb[0].mxu0
      %793 = vmatprep.mubr.bf16.mxu0 0
      %794 = vmatmul.mubr.bf16.gmra.mrb[0].mxu0 %v678
      %v795 = vpop.f32.mrb[0].mxu0
      %v796 = vadd.f32 0.0, %v795
      %v797 = vpop.f32.mrb[0].mxu0
      %v798 = vpop.f32.mrb[0].mxu0
      %v799 = vadd.f32 0.0, %v798
      %v800 = vpop.f32.mrb[0].mxu0
      %801 = vmatprep.mubr.bf16.mxu0 0
      %802 = vmatmul.mubr.bf16.gmra.mrb[0].mxu0 %v681
      %v803 = vpop.f32.mrb[0].mxu0
      %v804 = vadd.f32 0.0, %v803
      %v805 = vpop.f32.mrb[0].mxu0
      %v806 = vpop.f32.mrb[0].mxu0
      %v807 = vadd.f32 0.0, %v806
      %v808 = vpop.f32.mrb[0].mxu0
      %809 = vmatprep.mubr.bf16.mxu0 0
      %810 = vmatmul.mubr.bf16.gmra.mrb[0].mxu0 %v684
      %v811 = vpop.f32.mrb[0].mxu0
      %v812 = vadd.f32 0.0, %v811
      %v813 = vpop.f32.mrb[0].mxu0
      %v814 = vpop.f32.mrb[0].mxu0
      %v815 = vadd.f32 0.0, %v814
      %v816 = vpop.f32.mrb[0].mxu0
      %817 = vdwg.mxu0
      %v818 = vadd.f32 %v540, %v724
      %v819 = vadd.f32 %v541, %v727
      %v820 = vadd.f32 %v542, %v732
      %v821 = vadd.f32 %v543, %v735
      %v822 = vadd.f32 %v544, %v740
      %v823 = vadd.f32 %v545, %v743
      %v824 = vadd.f32 %v546, %v748
      %v825 = vadd.f32 %v547, %v751
      %v826 = vadd.f32 %v548, %v756
      %v827 = vadd.f32 %v549, %v759
      %v828 = vadd.f32 %v550, %v764
      %v829 = vadd.f32 %v551, %v767
      %v830 = vadd.f32 %v552, %v772
      %v831 = vadd.f32 %v553, %v775
      %v832 = vadd.f32 %v554, %v780
      %v833 = vadd.f32 %v555, %v783
      %v834 = vadd.f32 %v556, %v788
      %v835 = vadd.f32 %v557, %v791
      %v836 = vadd.f32 %v558, %v796
      %v837 = vadd.f32 %v559, %v799
      %v838 = vadd.f32 %v560, %v804
      %v839 = vadd.f32 %v561, %v807
      %v840 = vadd.f32 %v562, %v812
      %v841 = vadd.f32 %v563, %v815
      %v842 = vld [vmem:[%s253 + $0x2] sm:$0xff]
      %v843 = vld [vmem:[%s253 + $0xa] sm:$0xff]
      %v844 = vld [vmem:[%s253 + $0x12] sm:$0xff]
      %v845 = vld [vmem:[%s253 + $0x1a] sm:$0xff]
      %v846 = vld [vmem:[%s253 + $0x22] sm:$0xff]
      %v847 = vld [vmem:[%s253 + $0x2a] sm:$0xff]
      %v848 = vld [vmem:[%s253 + $0x32] sm:$0xff]
      %v849 = vld [vmem:[%s253 + $0x3a] sm:$0xff]
      %v850 = vld [vmem:[%s253 + $0x42] sm:$0xff]
      %v851 = vld [vmem:[%s253 + $0x4a] sm:$0xff]
      %v852 = vld [vmem:[%s253 + $0x52] sm:$0xff]
      %v853 = vld [vmem:[%s253 + $0x5a] sm:$0xff]
      %v854 = vld [vmem:[%s253 + $0x62] sm:$0xff]
      %v855 = vld [vmem:[%s253 + $0x6a] sm:$0xff]
      %v856 = vld [vmem:[%s253 + $0x72] sm:$0xff]
      %v857 = vld [vmem:[%s253 + $0x7a] sm:$0xff]
      %v858 = vld [vmem:[%s253 + $0x82] sm:$0xff]
      %v859 = vld [vmem:[%s253 + $0x8a] sm:$0xff]
      %v860 = vld [vmem:[%s253 + $0x92] sm:$0xff]
      %v861 = vld [vmem:[%s253 + $0x9a] sm:$0xff]
      %v862 = vld [vmem:[%s253 + $0xa2] sm:$0xff]
      %v863 = vld [vmem:[%s253 + $0xaa] sm:$0xff]
      %v864 = vld [vmem:[%s253 + $0xb2] sm:$0xff]
      %v865 = vld [vmem:[%s253 + $0xba] sm:$0x3f]
      %v866 = vmul.f32 %v842, %v301
      %v867 = vmul.f32 %v843, %v301
      %v868 = vmul.f32 %v844, %v301
      %v869 = vmul.f32 %v845, %v301
      %v870 = vmul.f32 %v846, %v301
      %v871 = vmul.f32 %v847, %v301
      %v872 = vmul.f32 %v848, %v301
      %v873 = vmul.f32 %v849, %v301
      %v874 = vmul.f32 %v850, %v301
      %v875 = vmul.f32 %v851, %v301
      %v876 = vmul.f32 %v852, %v301
      %v877 = vmul.f32 %v853, %v301
      %v878 = vmul.f32 %v854, %v301
      %v879 = vmul.f32 %v855, %v301
      %v880 = vmul.f32 %v856, %v301
      %v881 = vmul.f32 %v857, %v301
      %v882 = vmul.f32 %v858, %v301
      %v883 = vmul.f32 %v859, %v301
      %v884 = vmul.f32 %v860, %v301
      %v885 = vmul.f32 %v861, %v301
      %v886 = vmul.f32 %v862, %v301
      %v887 = vmul.f32 %v863, %v301
      %v888 = vmul.f32 %v864, %v301
      %v889 = vmul.f32 %v865, %v301
      %v890 = vadd.f32 %v866, %v331
      %v891 = vadd.f32 %v867, %v331
      %v892 = vadd.f32 %v868, %v331
      %v893 = vadd.f32 %v869, %v331
      %v894 = vadd.f32 %v870, %v331
      %v895 = vadd.f32 %v871, %v331
      %v896 = vadd.f32 %v872, %v331
      %v897 = vadd.f32 %v873, %v331
      %v898 = vadd.f32 %v874, %v331
      %v899 = vadd.f32 %v875, %v331
      %v900 = vadd.f32 %v876, %v331
      %v901 = vadd.f32 %v877, %v331
      %v902 = vadd.f32 %v878, %v331
      %v903 = vadd.f32 %v879, %v331
      %v904 = vadd.f32 %v880, %v331
      %v905 = vadd.f32 %v881, %v331
      %v906 = vadd.f32 %v882, %v331
      %v907 = vadd.f32 %v883, %v331
      %v908 = vadd.f32 %v884, %v331
      %v909 = vadd.f32 %v885, %v331
      %v910 = vadd.f32 %v886, %v331
      %v911 = vadd.f32 %v887, %v331
      %v912 = vadd.f32 %v888, %v331
      %v913 = vadd.f32 %v889, %v331
      %v914 = vpack.c.bf16 %v891, %v890
      %v915 = vpack.c.bf16 %v893, %v892
      %v916 = vpack.c.bf16 %v895, %v894
      %v917 = vpack.c.bf16 %v897, %v896
      %v918 = vpack.c.bf16 %v899, %v898
      %v919 = vpack.c.bf16 %v901, %v900
      %v920 = vpack.c.bf16 %v903, %v902
      %v921 = vpack.c.bf16 %v905, %v904
      %v922 = vpack.c.bf16 %v907, %v906
      %v923 = vpack.c.bf16 %v909, %v908
      %v924 = vpack.c.bf16 %v911, %v910
      %v925 = vpack.c.bf16 %v913, %v912
      %s926 = scalar_lea.vmem %s1, 4
      %v927 = vld [vmem:[%s926] sm:$0x3]
      %v929 = vsel %vm370, %v914, 0
      %v932 = vsel %vm370, %v915, 0
      %v935 = vsel %vm370, %v916, 0
      %v938 = vsel %vm370, %v917, 0
      %v941 = vsel %vm370, %v918, 0
      %v944 = vsel %vm370, %v919, 0
      %v947 = vsel %vm370, %v920, 0
      %v950 = vsel %vm370, %v921, 0
      %v953 = vsel %vm370, %v922, 0
      %v956 = vsel %vm370, %v923, 0
      %v959 = vsel %vm370, %v924, 0
      %v962 = vsel %vm370, %v925, 0
      %v965 = vsel %vm407, %v927, 0
      %967 = vmatprep.subr.bf16.mxu0 0
      %968 = vmatpush1.bf16.msra.mxu0 %v965
      %969 = vmatprep.subr.bf16.mxu0 0
      %970 = vmatpush1.bf16.msra.mxu0 0
      %971 = vmatprep.subr.bf16.mxu0 0
      %972 = vmatpush1.bf16.msra.mxu0 0
      %973 = vmatprep.subr.bf16.mxu0 0
      %974 = vmatpush1.bf16.msra.mxu0 0
      %975 = vmatprep.subr.bf16.mxu0 0
      %976 = vmatpush1.bf16.msra.mxu0 0
      %977 = vmatprep.subr.bf16.mxu0 0
      %978 = vmatpush1.bf16.msra.mxu0 0
      %979 = vmatprep.subr.bf16.mxu0 0
      %980 = vmatpush1.bf16.msra.mxu0 0
      %981 = vmatprep.subr.bf16.mxu0 0
      %982 = vmatpush1.bf16.msra.mxu0 0
      %983 = vmatprep.subr.bf16.mxu0 0
      %984 = vmatpush1.bf16.msra.mxu0 0
      %985 = vmatprep.subr.bf16.mxu0 0
      %986 = vmatpush1.bf16.msra.mxu0 0
      %987 = vmatprep.subr.bf16.mxu0 0
      %988 = vmatpush1.bf16.msra.mxu0 0
      %989 = vmatprep.subr.bf16.mxu0 0
      %990 = vmatpush1.bf16.msra.mxu0 0
      %991 = vmatprep.subr.bf16.mxu0 0
      %992 = vmatpush1.bf16.msra.mxu0 0
      %993 = vmatprep.subr.bf16.mxu0 0
      %994 = vmatpush1.bf16.msra.mxu0 0
      %995 = vmatprep.subr.bf16.mxu0 0
      %996 = vmatpush1.bf16.msra.mxu0 0
      %997 = vmatprep.subr.bf16.mxu0 0
      %998 = vmatpush1.bf16.msra.mxu0 0
      %999 = vmatprep.mubr.bf16.mxu0 0
      %1000 = vmatmul.mubr.bf16.gmra.mrb[0].mxu0 %v929
      %v1001 = vpop.f32.mrb[0].mxu0
      %v1002 = vadd.f32 0.0, %v1001
      %v1003 = vpop.f32.mrb[0].mxu0
      %v1004 = vpop.f32.mrb[0].mxu0
      %v1005 = vadd.f32 0.0, %v1004
      %v1006 = vpop.f32.mrb[0].mxu0
      %1007 = vmatprep.mubr.bf16.mxu0 0
      %1008 = vmatmul.mubr.bf16.gmra.mrb[0].mxu0 %v932
      %v1009 = vpop.f32.mrb[0].mxu0
      %v1010 = vadd.f32 0.0, %v1009
      %v1011 = vpop.f32.mrb[0].mxu0
      %v1012 = vpop.f32.mrb[0].mxu0
      %v1013 = vadd.f32 0.0, %v1012
      %v1014 = vpop.f32.mrb[0].mxu0
      %1015 = vmatprep.mubr.bf16.mxu0 0
      %1016 = vmatmul.mubr.bf16.gmra.mrb[0].mxu0 %v935
      %v1017 = vpop.f32.mrb[0].mxu0
      %v1018 = vadd.f32 0.0, %v1017
      %v1019 = vpop.f32.mrb[0].mxu0
      %v1020 = vpop.f32.mrb[0].mxu0
      %v1021 = vadd.f32 0.0, %v1020
      %v1022 = vpop.f32.mrb[0].mxu0
      %1023 = vmatprep.mubr.bf16.mxu0 0
      %1024 = vmatmul.mubr.bf16.gmra.mrb[0].mxu0 %v938
      %v1025 = vpop.f32.mrb[0].mxu0
      %v1026 = vadd.f32 0.0, %v1025
      %v1027 = vpop.f32.mrb[0].mxu0
      %v1028 = vpop.f32.mrb[0].mxu0
      %v1029 = vadd.f32 0.0, %v1028
      %v1030 = vpop.f32.mrb[0].mxu0
      %1031 = vmatprep.mubr.bf16.mxu0 0
      %1032 = vmatmul.mubr.bf16.gmra.mrb[0].mxu0 %v941
      %v1033 = vpop.f32.mrb[0].mxu0
      %v1034 = vadd.f32 0.0, %v1033
      %v1035 = vpop.f32.mrb[0].mxu0
      %v1036 = vpop.f32.mrb[0].mxu0
      %v1037 = vadd.f32 0.0, %v1036
      %v1038 = vpop.f32.mrb[0].mxu0
      %1039 = vmatprep.mubr.bf16.mxu0 0
      %1040 = vmatmul.mubr.bf16.gmra.mrb[0].mxu0 %v944
      %v1041 = vpop.f32.mrb[0].mxu0
      %v1042 = vadd.f32 0.0, %v1041
      %v1043 = vpop.f32.mrb[0].mxu0
      %v1044 = vpop.f32.mrb[0].mxu0
      %v1045 = vadd.f32 0.0, %v1044
      %v1046 = vpop.f32.mrb[0].mxu0
      %1047 = vmatprep.mubr.bf16.mxu0 0
      %1048 = vmatmul.mubr.bf16.gmra.mrb[0].mxu0 %v947
      %v1049 = vpop.f32.mrb[0].mxu0
      %v1050 = vadd.f32 0.0, %v1049
      %v1051 = vpop.f32.mrb[0].mxu0
      %v1052 = vpop.f32.mrb[0].mxu0
      %v1053 = vadd.f32 0.0, %v1052
      %v1054 = vpop.f32.mrb[0].mxu0
      %1055 = vmatprep.mubr.bf16.mxu0 0
      %1056 = vmatmul.mubr.bf16.gmra.mrb[0].mxu0 %v950
      %v1057 = vpop.f32.mrb[0].mxu0
      %v1058 = vadd.f32 0.0, %v1057
      %v1059 = vpop.f32.mrb[0].mxu0
      %v1060 = vpop.f32.mrb[0].mxu0
      %v1061 = vadd.f32 0.0, %v1060
      %v1062 = vpop.f32.mrb[0].mxu0
      %1063 = vmatprep.mubr.bf16.mxu0 0
      %1064 = vmatmul.mubr.bf16.gmra.mrb[0].mxu0 %v953
      %v1065 = vpop.f32.mrb[0].mxu0
      %v1066 = vadd.f32 0.0, %v1065
      %v1067 = vpop.f32.mrb[0].mxu0
      %v1068 = vpop.f32.mrb[0].mxu0
      %v1069 = vadd.f32 0.0, %v1068
      %v1070 = vpop.f32.mrb[0].mxu0
      %1071 = vmatprep.mubr.bf16.mxu0 0
      %1072 = vmatmul.mubr.bf16.gmra.mrb[0].mxu0 %v956
      %v1073 = vpop.f32.mrb[0].mxu0
      %v1074 = vadd.f32 0.0, %v1073
      %v1075 = vpop.f32.mrb[0].mxu0
      %v1076 = vpop.f32.mrb[0].mxu0
      %v1077 = vadd.f32 0.0, %v1076
      %v1078 = vpop.f32.mrb[0].mxu0
      %1079 = vmatprep.mubr.bf16.mxu0 0
      %1080 = vmatmul.mubr.bf16.gmra.mrb[0].mxu0 %v959
      %v1081 = vpop.f32.mrb[0].mxu0
      %v1082 = vadd.f32 0.0, %v1081
      %v1083 = vpop.f32.mrb[0].mxu0
      %v1084 = vpop.f32.mrb[0].mxu0
      %v1085 = vadd.f32 0.0, %v1084
      %v1086 = vpop.f32.mrb[0].mxu0
      %1087 = vmatprep.mubr.bf16.mxu0 0
      %1088 = vmatmul.mubr.bf16.gmra.mrb[0].mxu0 %v962
      %v1089 = vpop.f32.mrb[0].mxu0
      %v1090 = vadd.f32 0.0, %v1089
      %v1091 = vpop.f32.mrb[0].mxu0
      %v1092 = vpop.f32.mrb[0].mxu0
      %v1093 = vadd.f32 0.0, %v1092
      %v1094 = vpop.f32.mrb[0].mxu0
      %1095 = vdwg.mxu0
      %v1096 = vadd.f32 %v818, %v1002
      %v1097 = vadd.f32 %v819, %v1005
      %v1098 = vadd.f32 %v820, %v1010
      %v1099 = vadd.f32 %v821, %v1013
      %v1100 = vadd.f32 %v822, %v1018
      %v1101 = vadd.f32 %v823, %v1021
      %v1102 = vadd.f32 %v824, %v1026
      %v1103 = vadd.f32 %v825, %v1029
      %v1104 = vadd.f32 %v826, %v1034
      %v1105 = vadd.f32 %v827, %v1037
      %v1106 = vadd.f32 %v828, %v1042
      %v1107 = vadd.f32 %v829, %v1045
      %v1108 = vadd.f32 %v830, %v1050
      %v1109 = vadd.f32 %v831, %v1053
      %v1110 = vadd.f32 %v832, %v1058
      %v1111 = vadd.f32 %v833, %v1061
      %v1112 = vadd.f32 %v834, %v1066
      %v1113 = vadd.f32 %v835, %v1069
      %v1114 = vadd.f32 %v836, %v1074
      %v1115 = vadd.f32 %v837, %v1077
      %v1116 = vadd.f32 %v838, %v1082
      %v1117 = vadd.f32 %v839, %v1085
      %v1118 = vadd.f32 %v840, %v1090
      %v1119 = vadd.f32 %v841, %v1093
      %v1120 = vld [vmem:[%s253 + $0x10] sm:$0xff]
      %v1121 = vld [vmem:[%s253 + $0x18] sm:$0xff]
      %v1122 = vld [vmem:[%s253 + $0x20] sm:$0xff]
      %v1123 = vld [vmem:[%s253 + $0x28] sm:$0xff]
      %v1124 = vld [vmem:[%s253 + $0x30] sm:$0xff]
      %v1125 = vld [vmem:[%s253 + $0x38] sm:$0xff]
      %v1126 = vld [vmem:[%s253 + $0x40] sm:$0xff]
      %v1127 = vld [vmem:[%s253 + $0x48] sm:$0xff]
      %v1128 = vld [vmem:[%s253 + $0x50] sm:$0xff]
      %v1129 = vld [vmem:[%s253 + $0x58] sm:$0xff]
      %v1130 = vld [vmem:[%s253 + $0x60] sm:$0xff]
      %v1131 = vld [vmem:[%s253 + $0x68] sm:$0xff]
      %v1132 = vld [vmem:[%s253 + $0x70] sm:$0xff]
      %v1133 = vld [vmem:[%s253 + $0x78] sm:$0xff]
      %v1134 = vld [vmem:[%s253 + $0x80] sm:$0xff]
      %v1135 = vld [vmem:[%s253 + $0x88] sm:$0xff]
      %v1136 = vld [vmem:[%s253 + $0x90] sm:$0xff]
      %v1137 = vld [vmem:[%s253 + $0x98] sm:$0xff]
      %v1138 = vld [vmem:[%s253 + $0xa0] sm:$0xff]
      %v1139 = vld [vmem:[%s253 + $0xa8] sm:$0xff]
      %v1140 = vld [vmem:[%s253 + $0xb0] sm:$0xff]
      %v1141 = vld [vmem:[%s253 + $0xb8] sm:$0xff]
      %v1142 = vld [vmem:[%s253 + $0xc0] sm:$0xff]
      %v1143 = vld [vmem:[%s253 + $0xc8] sm:$0x3f]
      %v1144 = vmul.f32 %v1120, %v301
      %v1145 = vmul.f32 %v1121, %v301
      %v1146 = vmul.f32 %v1122, %v301
      %v1147 = vmul.f32 %v1123, %v301
      %v1148 = vmul.f32 %v1124, %v301
      %v1149 = vmul.f32 %v1125, %v301
      %v1150 = vmul.f32 %v1126, %v301
      %v1151 = vmul.f32 %v1127, %v301
      %v1152 = vmul.f32 %v1128, %v301
      %v1153 = vmul.f32 %v1129, %v301
      %v1154 = vmul.f32 %v1130, %v301
      %v1155 = vmul.f32 %v1131, %v301
      %v1156 = vmul.f32 %v1132, %v301
      %v1157 = vmul.f32 %v1133, %v301
      %v1158 = vmul.f32 %v1134, %v301
      %v1159 = vmul.f32 %v1135, %v301
      %v1160 = vmul.f32 %v1136, %v301
      %v1161 = vmul.f32 %v1137, %v301
      %v1162 = vmul.f32 %v1138, %v301
      %v1163 = vmul.f32 %v1139, %v301
      %v1164 = vmul.f32 %v1140, %v301
      %v1165 = vmul.f32 %v1141, %v301
      %v1166 = vmul.f32 %v1142, %v301
      %v1167 = vmul.f32 %v1143, %v301
      %v1168 = vadd.f32 %v1144, %v331
      %v1169 = vadd.f32 %v1145, %v331
      %v1170 = vadd.f32 %v1146, %v331
      %v1171 = vadd.f32 %v1147, %v331
      %v1172 = vadd.f32 %v1148, %v331
      %v1173 = vadd.f32 %v1149, %v331
      %v1174 = vadd.f32 %v1150, %v331
      %v1175 = vadd.f32 %v1151, %v331
      %v1176 = vadd.f32 %v1152, %v331
      %v1177 = vadd.f32 %v1153, %v331
      %v1178 = vadd.f32 %v1154, %v331
      %v1179 = vadd.f32 %v1155, %v331
      %v1180 = vadd.f32 %v1156, %v331
      %v1181 = vadd.f32 %v1157, %v331
      %v1182 = vadd.f32 %v1158, %v331
      %v1183 = vadd.f32 %v1159, %v331
      %v1184 = vadd.f32 %v1160, %v331
      %v1185 = vadd.f32 %v1161, %v331
      %v1186 = vadd.f32 %v1162, %v331
      %v1187 = vadd.f32 %v1163, %v331
      %v1188 = vadd.f32 %v1164, %v331
      %v1189 = vadd.f32 %v1165, %v331
      %v1190 = vadd.f32 %v1166, %v331
      %v1191 = vadd.f32 %v1167, %v331
      %v1192 = vpack.c.bf16 %v1169, %v1168
      %v1193 = vpack.c.bf16 %v1171, %v1170
      %v1194 = vpack.c.bf16 %v1173, %v1172
      %v1195 = vpack.c.bf16 %v1175, %v1174
      %v1196 = vpack.c.bf16 %v1177, %v1176
      %v1197 = vpack.c.bf16 %v1179, %v1178
      %v1198 = vpack.c.bf16 %v1181, %v1180
      %v1199 = vpack.c.bf16 %v1183, %v1182
      %v1200 = vpack.c.bf16 %v1185, %v1184
      %v1201 = vpack.c.bf16 %v1187, %v1186
      %v1202 = vpack.c.bf16 %v1189, %v1188
      %v1203 = vpack.c.bf16 %v1191, %v1190
      %s1204 = scalar_lea.vmem %s1, 6
      %v1205 = vld [vmem:[%s1204] sm:$0x3]
      %v1207 = vsel %vm370, %v1192, 0
      %v1210 = vsel %vm370, %v1193, 0
      %v1213 = vsel %vm370, %v1194, 0
      %v1216 = vsel %vm370, %v1195, 0
      %v1219 = vsel %vm370, %v1196, 0
      %v1222 = vsel %vm370, %v1197, 0
      %v1225 = vsel %vm370, %v1198, 0
      %v1228 = vsel %vm370, %v1199, 0
      %v1231 = vsel %vm370, %v1200, 0
      %v1234 = vsel %vm370, %v1201, 0
      %v1237 = vsel %vm370, %v1202, 0
      %v1240 = vsel %vm370, %v1203, 0
      %v1243 = vsel %vm407, %v1205, 0
      %1245 = vmatprep.subr.bf16.mxu0 0
      %1246 = vmatpush1.bf16.msra.mxu0 %v1243
      %1247 = vmatprep.subr.bf16.mxu0 0
      %1248 = vmatpush1.bf16.msra.mxu0 0
      %1249 = vmatprep.subr.bf16.mxu0 0
      %1250 = vmatpush1.bf16.msra.mxu0 0
      %1251 = vmatprep.subr.bf16.mxu0 0
      %1252 = vmatpush1.bf16.msra.mxu0 0
      %1253 = vmatprep.subr.bf16.mxu0 0
      %1254 = vmatpush1.bf16.msra.mxu0 0
      %1255 = vmatprep.subr.bf16.mxu0 0
      %1256 = vmatpush1.bf16.msra.mxu0 0
      %1257 = vmatprep.subr.bf16.mxu0 0
      %1258 = vmatpush1.bf16.msra.mxu0 0
      %1259 = vmatprep.subr.bf16.mxu0 0
      %1260 = vmatpush1.bf16.msra.mxu0 0
      %1261 = vmatprep.subr.bf16.mxu0 0
      %1262 = vmatpush1.bf16.msra.mxu0 0
      %1263 = vmatprep.subr.bf16.mxu0 0
      %1264 = vmatpush1.bf16.msra.mxu0 0
      %1265 = vmatprep.subr.bf16.mxu0 0
      %1266 = vmatpush1.bf16.msra.mxu0 0
      %1267 = vmatprep.subr.bf16.mxu0 0
      %1268 = vmatpush1.bf16.msra.mxu0 0
      %1269 = vmatprep.subr.bf16.mxu0 0
      %1270 = vmatpush1.bf16.msra.mxu0 0
      %1271 = vmatprep.subr.bf16.mxu0 0
      %1272 = vmatpush1.bf16.msra.mxu0 0
      %1273 = vmatprep.subr.bf16.mxu0 0
      %1274 = vmatpush1.bf16.msra.mxu0 0
      %1275 = vmatprep.subr.bf16.mxu0 0
      %1276 = vmatpush1.bf16.msra.mxu0 0
      %1277 = vmatprep.mubr.bf16.mxu0 0
      %1278 = vmatmul.mubr.bf16.gmra.mrb[0].mxu0 %v1207
      %v1279 = vpop.f32.mrb[0].mxu0
      %v1280 = vadd.f32 0.0, %v1279
      %v1281 = vpop.f32.mrb[0].mxu0
      %v1282 = vpop.f32.mrb[0].mxu0
      %v1283 = vadd.f32 0.0, %v1282
      %v1284 = vpop.f32.mrb[0].mxu0
      %1285 = vmatprep.mubr.bf16.mxu0 0
      %1286 = vmatmul.mubr.bf16.gmra.mrb[0].mxu0 %v1210
      %v1287 = vpop.f32.mrb[0].mxu0
      %v1288 = vadd.f32 0.0, %v1287
      %v1289 = vpop.f32.mrb[0].mxu0
      %v1290 = vpop.f32.mrb[0].mxu0
      %v1291 = vadd.f32 0.0, %v1290
      %v1292 = vpop.f32.mrb[0].mxu0
      %1293 = vmatprep.mubr.bf16.mxu0 0
      %1294 = vmatmul.mubr.bf16.gmra.mrb[0].mxu0 %v1213
      %v1295 = vpop.f32.mrb[0].mxu0
      %v1296 = vadd.f32 0.0, %v1295
      %v1297 = vpop.f32.mrb[0].mxu0
      %v1298 = vpop.f32.mrb[0].mxu0
      %v1299 = vadd.f32 0.0, %v1298
      %v1300 = vpop.f32.mrb[0].mxu0
      %1301 = vmatprep.mubr.bf16.mxu0 0
      %1302 = vmatmul.mubr.bf16.gmra.mrb[0].mxu0 %v1216
      %v1303 = vpop.f32.mrb[0].mxu0
      %v1304 = vadd.f32 0.0, %v1303
      %v1305 = vpop.f32.mrb[0].mxu0
      %v1306 = vpop.f32.mrb[0].mxu0
      %v1307 = vadd.f32 0.0, %v1306
      %v1308 = vpop.f32.mrb[0].mxu0
      %1309 = vmatprep.mubr.bf16.mxu0 0
      %1310 = vmatmul.mubr.bf16.gmra.mrb[0].mxu0 %v1219
      %v1311 = vpop.f32.mrb[0].mxu0
      %v1312 = vadd.f32 0.0, %v1311
      %v1313 = vpop.f32.mrb[0].mxu0
      %v1314 = vpop.f32.mrb[0].mxu0
      %v1315 = vadd.f32 0.0, %v1314
      %v1316 = vpop.f32.mrb[0].mxu0
      %1317 = vmatprep.mubr.bf16.mxu0 0
      %1318 = vmatmul.mubr.bf16.gmra.mrb[0].mxu0 %v1222
      %v1319 = vpop.f32.mrb[0].mxu0
      %v1320 = vadd.f32 0.0, %v1319
      %v1321 = vpop.f32.mrb[0].mxu0
      %v1322 = vpop.f32.mrb[0].mxu0
      %v1323 = vadd.f32 0.0, %v1322
      %v1324 = vpop.f32.mrb[0].mxu0
      %1325 = vmatprep.mubr.bf16.mxu0 0
      %1326 = vmatmul.mubr.bf16.gmra.mrb[0].mxu0 %v1225
      %v1327 = vpop.f32.mrb[0].mxu0
      %v1328 = vadd.f32 0.0, %v1327
      %v1329 = vpop.f32.mrb[0].mxu0
      %v1330 = vpop.f32.mrb[0].mxu0
      %v1331 = vadd.f32 0.0, %v1330
      %v1332 = vpop.f32.mrb[0].mxu0
      %1333 = vmatprep.mubr.bf16.mxu0 0
      %1334 = vmatmul.mubr.bf16.gmra.mrb[0].mxu0 %v1228
      %v1335 = vpop.f32.mrb[0].mxu0
      %v1336 = vadd.f32 0.0, %v1335
      %v1337 = vpop.f32.mrb[0].mxu0
      %v1338 = vpop.f32.mrb[0].mxu0
      %v1339 = vadd.f32 0.0, %v1338
      %v1340 = vpop.f32.mrb[0].mxu0
      %1341 = vmatprep.mubr.bf16.mxu0 0
      %1342 = vmatmul.mubr.bf16.gmra.mrb[0].mxu0 %v1231
      %v1343 = vpop.f32.mrb[0].mxu0
      %v1344 = vadd.f32 0.0, %v1343
      %v1345 = vpop.f32.mrb[0].mxu0
      %v1346 = vpop.f32.mrb[0].mxu0
      %v1347 = vadd.f32 0.0, %v1346
      %v1348 = vpop.f32.mrb[0].mxu0
      %1349 = vmatprep.mubr.bf16.mxu0 0
      %1350 = vmatmul.mubr.bf16.gmra.mrb[0].mxu0 %v1234
      %v1351 = vpop.f32.mrb[0].mxu0
      %v1352 = vadd.f32 0.0, %v1351
      %v1353 = vpop.f32.mrb[0].mxu0
      %v1354 = vpop.f32.mrb[0].mxu0
      %v1355 = vadd.f32 0.0, %v1354
      %v1356 = vpop.f32.mrb[0].mxu0
      %1357 = vmatprep.mubr.bf16.mxu0 0
      %1358 = vmatmul.mubr.bf16.gmra.mrb[0].mxu0 %v1237
      %v1359 = vpop.f32.mrb[0].mxu0
      %v1360 = vadd.f32 0.0, %v1359
      %v1361 = vpop.f32.mrb[0].mxu0
      %v1362 = vpop.f32.mrb[0].mxu0
      %v1363 = vadd.f32 0.0, %v1362
      %v1364 = vpop.f32.mrb[0].mxu0
      %1365 = vmatprep.mubr.bf16.mxu0 0
      %1366 = vmatmul.mubr.bf16.gmra.mrb[0].mxu0 %v1240
      %v1367 = vpop.f32.mrb[0].mxu0
      %v1368 = vadd.f32 0.0, %v1367
      %v1369 = vpop.f32.mrb[0].mxu0
      %v1370 = vpop.f32.mrb[0].mxu0
      %v1371 = vadd.f32 0.0, %v1370
      %v1372 = vpop.f32.mrb[0].mxu0
      %1373 = vdwg.mxu0
      %v1374 = vadd.f32 %v1096, %v1280
      %v1375 = vadd.f32 %v1097, %v1283
      %v1376 = vadd.f32 %v1098, %v1288
      %v1377 = vadd.f32 %v1099, %v1291
      %v1378 = vadd.f32 %v1100, %v1296
      %v1379 = vadd.f32 %v1101, %v1299
      %v1380 = vadd.f32 %v1102, %v1304
      %v1381 = vadd.f32 %v1103, %v1307
      %v1382 = vadd.f32 %v1104, %v1312
      %v1383 = vadd.f32 %v1105, %v1315
      %v1384 = vadd.f32 %v1106, %v1320
      %v1385 = vadd.f32 %v1107, %v1323
      %v1386 = vadd.f32 %v1108, %v1328
      %v1387 = vadd.f32 %v1109, %v1331
      %v1388 = vadd.f32 %v1110, %v1336
      %v1389 = vadd.f32 %v1111, %v1339
      %v1390 = vadd.f32 %v1112, %v1344
      %v1391 = vadd.f32 %v1113, %v1347
      %v1392 = vadd.f32 %v1114, %v1352
      %v1393 = vadd.f32 %v1115, %v1355
      %v1394 = vadd.f32 %v1116, %v1360
      %v1395 = vadd.f32 %v1117, %v1363
      %v1396 = vadd.f32 %v1118, %v1368
      %v1397 = vadd.f32 %v1119, %v1371
      %v1398 = vld [vmem:[%s253 + $0x11] sm:$0xff]
      %v1399 = vld [vmem:[%s253 + $0x19] sm:$0xff]
      %v1400 = vld [vmem:[%s253 + $0x21] sm:$0xff]
      %v1401 = vld [vmem:[%s253 + $0x29] sm:$0xff]
      %v1402 = vld [vmem:[%s253 + $0x31] sm:$0xff]
      %v1403 = vld [vmem:[%s253 + $0x39] sm:$0xff]
      %v1404 = vld [vmem:[%s253 + $0x41] sm:$0xff]
      %v1405 = vld [vmem:[%s253 + $0x49] sm:$0xff]
      %v1406 = vld [vmem:[%s253 + $0x51] sm:$0xff]
      %v1407 = vld [vmem:[%s253 + $0x59] sm:$0xff]
      %v1408 = vld [vmem:[%s253 + $0x61] sm:$0xff]
      %v1409 = vld [vmem:[%s253 + $0x69] sm:$0xff]
      %v1410 = vld [vmem:[%s253 + $0x71] sm:$0xff]
      %v1411 = vld [vmem:[%s253 + $0x79] sm:$0xff]
      %v1412 = vld [vmem:[%s253 + $0x81] sm:$0xff]
      %v1413 = vld [vmem:[%s253 + $0x89] sm:$0xff]
      %v1414 = vld [vmem:[%s253 + $0x91] sm:$0xff]
      %v1415 = vld [vmem:[%s253 + $0x99] sm:$0xff]
      %v1416 = vld [vmem:[%s253 + $0xa1] sm:$0xff]
      %v1417 = vld [vmem:[%s253 + $0xa9] sm:$0xff]
      %v1418 = vld [vmem:[%s253 + $0xb1] sm:$0xff]
      %v1419 = vld [vmem:[%s253 + $0xb9] sm:$0xff]
      %v1420 = vld [vmem:[%s253 + $0xc1] sm:$0xff]
      %v1421 = vld [vmem:[%s253 + $0xc9] sm:$0x3f]
      %v1422 = vmul.f32 %v1398, %v301
      %v1423 = vmul.f32 %v1399, %v301
      %v1424 = vmul.f32 %v1400, %v301
      %v1425 = vmul.f32 %v1401, %v301
      %v1426 = vmul.f32 %v1402, %v301
      %v1427 = vmul.f32 %v1403, %v301
      %v1428 = vmul.f32 %v1404, %v301
      %v1429 = vmul.f32 %v1405, %v301
      %v1430 = vmul.f32 %v1406, %v301
      %v1431 = vmul.f32 %v1407, %v301
      %v1432 = vmul.f32 %v1408, %v301
      %v1433 = vmul.f32 %v1409, %v301
      %v1434 = vmul.f32 %v1410, %v301
      %v1435 = vmul.f32 %v1411, %v301
      %v1436 = vmul.f32 %v1412, %v301
      %v1437 = vmul.f32 %v1413, %v301
      %v1438 = vmul.f32 %v1414, %v301
      %v1439 = vmul.f32 %v1415, %v301
      %v1440 = vmul.f32 %v1416, %v301
      %v1441 = vmul.f32 %v1417, %v301
      %v1442 = vmul.f32 %v1418, %v301
      %v1443 = vmul.f32 %v1419, %v301
      %v1444 = vmul.f32 %v1420, %v301
      %v1445 = vmul.f32 %v1421, %v301
      %v1446 = vadd.f32 %v1422, %v331
      %v1447 = vadd.f32 %v1423, %v331
      %v1448 = vadd.f32 %v1424, %v331
      %v1449 = vadd.f32 %v1425, %v331
      %v1450 = vadd.f32 %v1426, %v331
      %v1451 = vadd.f32 %v1427, %v331
      %v1452 = vadd.f32 %v1428, %v331
      %v1453 = vadd.f32 %v1429, %v331
      %v1454 = vadd.f32 %v1430, %v331
      %v1455 = vadd.f32 %v1431, %v331
      %v1456 = vadd.f32 %v1432, %v331
      %v1457 = vadd.f32 %v1433, %v331
      %v1458 = vadd.f32 %v1434, %v331
      %v1459 = vadd.f32 %v1435, %v331
      %v1460 = vadd.f32 %v1436, %v331
      %v1461 = vadd.f32 %v1437, %v331
      %v1462 = vadd.f32 %v1438, %v331
      %v1463 = vadd.f32 %v1439, %v331
      %v1464 = vadd.f32 %v1440, %v331
      %v1465 = vadd.f32 %v1441, %v331
      %v1466 = vadd.f32 %v1442, %v331
      %v1467 = vadd.f32 %v1443, %v331
      %v1468 = vadd.f32 %v1444, %v331
      %v1469 = vadd.f32 %v1445, %v331
      %v1470 = vpack.c.bf16 %v1447, %v1446
      %v1471 = vpack.c.bf16 %v1449, %v1448
      %v1472 = vpack.c.bf16 %v1451, %v1450
      %v1473 = vpack.c.bf16 %v1453, %v1452
      %v1474 = vpack.c.bf16 %v1455, %v1454
      %v1475 = vpack.c.bf16 %v1457, %v1456
      %v1476 = vpack.c.bf16 %v1459, %v1458
      %v1477 = vpack.c.bf16 %v1461, %v1460
      %v1478 = vpack.c.bf16 %v1463, %v1462
      %v1479 = vpack.c.bf16 %v1465, %v1464
      %v1480 = vpack.c.bf16 %v1467, %v1466
      %v1481 = vpack.c.bf16 %v1469, %v1468
      %s1482 = scalar_lea.vmem %s1, 8
      %v1483 = vld [vmem:[%s1482] sm:$0x3]
      %v1485 = vsel %vm370, %v1470, 0
      %v1488 = vsel %vm370, %v1471, 0
      %v1491 = vsel %vm370, %v1472, 0
      %v1494 = vsel %vm370, %v1473, 0
      %v1497 = vsel %vm370, %v1474, 0
      %v1500 = vsel %vm370, %v1475, 0
      %v1503 = vsel %vm370, %v1476, 0
      %v1506 = vsel %vm370, %v1477, 0
      %v1509 = vsel %vm370, %v1478, 0
      %v1512 = vsel %vm370, %v1479, 0
      %v1515 = vsel %vm370, %v1480, 0
      %v1518 = vsel %vm370, %v1481, 0
      %v1521 = vsel %vm407, %v1483, 0
      %1523 = vmatprep.subr.bf16.mxu0 0
      %1524 = vmatpush1.bf16.msra.mxu0 %v1521
      %1525 = vmatprep.subr.bf16.mxu0 0
      %1526 = vmatpush1.bf16.msra.mxu0 0
      %1527 = vmatprep.subr.bf16.mxu0 0
      %1528 = vmatpush1.bf16.msra.mxu0 0
      %1529 = vmatprep.subr.bf16.mxu0 0
      %1530 = vmatpush1.bf16.msra.mxu0 0
      %1531 = vmatprep.subr.bf16.mxu0 0
      %1532 = vmatpush1.bf16.msra.mxu0 0
      %1533 = vmatprep.subr.bf16.mxu0 0
      %1534 = vmatpush1.bf16.msra.mxu0 0
      %1535 = vmatprep.subr.bf16.mxu0 0
      %1536 = vmatpush1.bf16.msra.mxu0 0
      %1537 = vmatprep.subr.bf16.mxu0 0
      %1538 = vmatpush1.bf16.msra.mxu0 0
      %1539 = vmatprep.subr.bf16.mxu0 0
      %1540 = vmatpush1.bf16.msra.mxu0 0
      %1541 = vmatprep.subr.bf16.mxu0 0
      %1542 = vmatpush1.bf16.msra.mxu0 0
      %1543 = vmatprep.subr.bf16.mxu0 0
      %1544 = vmatpush1.bf16.msra.mxu0 0
      %1545 = vmatprep.subr.bf16.mxu0 0
      %1546 = vmatpush1.bf16.msra.mxu0 0
      %1547 = vmatprep.subr.bf16.mxu0 0
      %1548 = vmatpush1.bf16.msra.mxu0 0
      %1549 = vmatprep.subr.bf16.mxu0 0
      %1550 = vmatpush1.bf16.msra.mxu0 0
      %1551 = vmatprep.subr.bf16.mxu0 0
      %1552 = vmatpush1.bf16.msra.mxu0 0
      %1553 = vmatprep.subr.bf16.mxu0 0
      %1554 = vmatpush1.bf16.msra.mxu0 0
      %1555 = vmatprep.mubr.bf16.mxu0 0
      %1556 = vmatmul.mubr.bf16.gmra.mrb[0].mxu0 %v1485
      %v1557 = vpop.f32.mrb[0].mxu0
      %v1558 = vadd.f32 0.0, %v1557
      %v1559 = vpop.f32.mrb[0].mxu0
      %v1560 = vpop.f32.mrb[0].mxu0
      %v1561 = vadd.f32 0.0, %v1560
      %v1562 = vpop.f32.mrb[0].mxu0
      %1563 = vmatprep.mubr.bf16.mxu0 0
      %1564 = vmatmul.mubr.bf16.gmra.mrb[0].mxu0 %v1488
      %v1565 = vpop.f32.mrb[0].mxu0
      %v1566 = vadd.f32 0.0, %v1565
      %v1567 = vpop.f32.mrb[0].mxu0
      %v1568 = vpop.f32.mrb[0].mxu0
      %v1569 = vadd.f32 0.0, %v1568
      %v1570 = vpop.f32.mrb[0].mxu0
      %1571 = vmatprep.mubr.bf16.mxu0 0
      %1572 = vmatmul.mubr.bf16.gmra.mrb[0].mxu0 %v1491
      %v1573 = vpop.f32.mrb[0].mxu0
      %v1574 = vadd.f32 0.0, %v1573
      %v1575 = vpop.f32.mrb[0].mxu0
      %v1576 = vpop.f32.mrb[0].mxu0
      %v1577 = vadd.f32 0.0, %v1576
      %v1578 = vpop.f32.mrb[0].mxu0
      %1579 = vmatprep.mubr.bf16.mxu0 0
      %1580 = vmatmul.mubr.bf16.gmra.mrb[0].mxu0 %v1494
      %v1581 = vpop.f32.mrb[0].mxu0
      %v1582 = vadd.f32 0.0, %v1581
      %v1583 = vpop.f32.mrb[0].mxu0
      %v1584 = vpop.f32.mrb[0].mxu0
      %v1585 = vadd.f32 0.0, %v1584
      %v1586 = vpop.f32.mrb[0].mxu0
      %1587 = vmatprep.mubr.bf16.mxu0 0
      %1588 = vmatmul.mubr.bf16.gmra.mrb[0].mxu0 %v1497
      %v1589 = vpop.f32.mrb[0].mxu0
      %v1590 = vadd.f32 0.0, %v1589
      %v1591 = vpop.f32.mrb[0].mxu0
      %v1592 = vpop.f32.mrb[0].mxu0
      %v1593 = vadd.f32 0.0, %v1592
      %v1594 = vpop.f32.mrb[0].mxu0
      %1595 = vmatprep.mubr.bf16.mxu0 0
      %1596 = vmatmul.mubr.bf16.gmra.mrb[0].mxu0 %v1500
      %v1597 = vpop.f32.mrb[0].mxu0
      %v1598 = vadd.f32 0.0, %v1597
      %v1599 = vpop.f32.mrb[0].mxu0
      %v1600 = vpop.f32.mrb[0].mxu0
      %v1601 = vadd.f32 0.0, %v1600
      %v1602 = vpop.f32.mrb[0].mxu0
      %1603 = vmatprep.mubr.bf16.mxu0 0
      %1604 = vmatmul.mubr.bf16.gmra.mrb[0].mxu0 %v1503
      %v1605 = vpop.f32.mrb[0].mxu0
      %v1606 = vadd.f32 0.0, %v1605
      %v1607 = vpop.f32.mrb[0].mxu0
      %v1608 = vpop.f32.mrb[0].mxu0
      %v1609 = vadd.f32 0.0, %v1608
      %v1610 = vpop.f32.mrb[0].mxu0
      %1611 = vmatprep.mubr.bf16.mxu0 0
      %1612 = vmatmul.mubr.bf16.gmra.mrb[0].mxu0 %v1506
      %v1613 = vpop.f32.mrb[0].mxu0
      %v1614 = vadd.f32 0.0, %v1613
      %v1615 = vpop.f32.mrb[0].mxu0
      %v1616 = vpop.f32.mrb[0].mxu0
      %v1617 = vadd.f32 0.0, %v1616
      %v1618 = vpop.f32.mrb[0].mxu0
      %1619 = vmatprep.mubr.bf16.mxu0 0
      %1620 = vmatmul.mubr.bf16.gmra.mrb[0].mxu0 %v1509
      %v1621 = vpop.f32.mrb[0].mxu0
      %v1622 = vadd.f32 0.0, %v1621
      %v1623 = vpop.f32.mrb[0].mxu0
      %v1624 = vpop.f32.mrb[0].mxu0
      %v1625 = vadd.f32 0.0, %v1624
      %v1626 = vpop.f32.mrb[0].mxu0
      %1627 = vmatprep.mubr.bf16.mxu0 0
      %1628 = vmatmul.mubr.bf16.gmra.mrb[0].mxu0 %v1512
      %v1629 = vpop.f32.mrb[0].mxu0
      %v1630 = vadd.f32 0.0, %v1629
      %v1631 = vpop.f32.mrb[0].mxu0
      %v1632 = vpop.f32.mrb[0].mxu0
      %v1633 = vadd.f32 0.0, %v1632
      %v1634 = vpop.f32.mrb[0].mxu0
      %1635 = vmatprep.mubr.bf16.mxu0 0
      %1636 = vmatmul.mubr.bf16.gmra.mrb[0].mxu0 %v1515
      %v1637 = vpop.f32.mrb[0].mxu0
      %v1638 = vadd.f32 0.0, %v1637
      %v1639 = vpop.f32.mrb[0].mxu0
      %v1640 = vpop.f32.mrb[0].mxu0
      %v1641 = vadd.f32 0.0, %v1640
      %v1642 = vpop.f32.mrb[0].mxu0
      %1643 = vmatprep.mubr.bf16.mxu0 0
      %1644 = vmatmul.mubr.bf16.gmra.mrb[0].mxu0 %v1518
      %v1645 = vpop.f32.mrb[0].mxu0
      %v1646 = vadd.f32 0.0, %v1645
      %v1647 = vpop.f32.mrb[0].mxu0
      %v1648 = vpop.f32.mrb[0].mxu0
      %v1649 = vadd.f32 0.0, %v1648
      %v1650 = vpop.f32.mrb[0].mxu0
      %1651 = vdwg.mxu0
      %v1652 = vadd.f32 %v1374, %v1558
      %v1653 = vadd.f32 %v1375, %v1561
      %v1654 = vadd.f32 %v1376, %v1566
      %v1655 = vadd.f32 %v1377, %v1569
      %v1656 = vadd.f32 %v1378, %v1574
      %v1657 = vadd.f32 %v1379, %v1577
      %v1658 = vadd.f32 %v1380, %v1582
      %v1659 = vadd.f32 %v1381, %v1585
      %v1660 = vadd.f32 %v1382, %v1590
      %v1661 = vadd.f32 %v1383, %v1593
      %v1662 = vadd.f32 %v1384, %v1598
      %v1663 = vadd.f32 %v1385, %v1601
      %v1664 = vadd.f32 %v1386, %v1606
      %v1665 = vadd.f32 %v1387, %v1609
      %v1666 = vadd.f32 %v1388, %v1614
      %v1667 = vadd.f32 %v1389, %v1617
      %v1668 = vadd.f32 %v1390, %v1622
      %v1669 = vadd.f32 %v1391, %v1625
      %v1670 = vadd.f32 %v1392, %v1630
      %v1671 = vadd.f32 %v1393, %v1633
      %v1672 = vadd.f32 %v1394, %v1638
      %v1673 = vadd.f32 %v1395, %v1641
      %v1674 = vadd.f32 %v1396, %v1646
      %v1675 = vadd.f32 %v1397, %v1649
      %v1676 = vld [vmem:[%s253 + $0x12] sm:$0xff]
      %v1677 = vld [vmem:[%s253 + $0x1a] sm:$0xff]
      %v1678 = vld [vmem:[%s253 + $0x22] sm:$0xff]
      %v1679 = vld [vmem:[%s253 + $0x2a] sm:$0xff]
      %v1680 = vld [vmem:[%s253 + $0x32] sm:$0xff]
      %v1681 = vld [vmem:[%s253 + $0x3a] sm:$0xff]
      %v1682 = vld [vmem:[%s253 + $0x42] sm:$0xff]
      %v1683 = vld [vmem:[%s253 + $0x4a] sm:$0xff]
      %v1684 = vld [vmem:[%s253 + $0x52] sm:$0xff]
      %v1685 = vld [vmem:[%s253 + $0x5a] sm:$0xff]
      %v1686 = vld [vmem:[%s253 + $0x62] sm:$0xff]
      %v1687 = vld [vmem:[%s253 + $0x6a] sm:$0xff]
      %v1688 = vld [vmem:[%s253 + $0x72] sm:$0xff]
      %v1689 = vld [vmem:[%s253 + $0x7a] sm:$0xff]
      %v1690 = vld [vmem:[%s253 + $0x82] sm:$0xff]
      %v1691 = vld [vmem:[%s253 + $0x8a] sm:$0xff]
      %v1692 = vld [vmem:[%s253 + $0x92] sm:$0xff]
      %v1693 = vld [vmem:[%s253 + $0x9a] sm:$0xff]
      %v1694 = vld [vmem:[%s253 + $0xa2] sm:$0xff]
      %v1695 = vld [vmem:[%s253 + $0xaa] sm:$0xff]
      %v1696 = vld [vmem:[%s253 + $0xb2] sm:$0xff]
      %v1697 = vld [vmem:[%s253 + $0xba] sm:$0xff]
      %v1698 = vld [vmem:[%s253 + $0xc2] sm:$0xff]
      %v1699 = vld [vmem:[%s253 + $0xca] sm:$0x3f]
      %v1700 = vmul.f32 %v1676, %v301
      %v1701 = vmul.f32 %v1677, %v301
      %v1702 = vmul.f32 %v1678, %v301
      %v1703 = vmul.f32 %v1679, %v301
      %v1704 = vmul.f32 %v1680, %v301
      %v1705 = vmul.f32 %v1681, %v301
      %v1706 = vmul.f32 %v1682, %v301
      %v1707 = vmul.f32 %v1683, %v301
      %v1708 = vmul.f32 %v1684, %v301
      %v1709 = vmul.f32 %v1685, %v301
      %v1710 = vmul.f32 %v1686, %v301
      %v1711 = vmul.f32 %v1687, %v301
      %v1712 = vmul.f32 %v1688, %v301
      %v1713 = vmul.f32 %v1689, %v301
      %v1714 = vmul.f32 %v1690, %v301
      %v1715 = vmul.f32 %v1691, %v301
      %v1716 = vmul.f32 %v1692, %v301
      %v1717 = vmul.f32 %v1693, %v301
      %v1718 = vmul.f32 %v1694, %v301
      %v1719 = vmul.f32 %v1695, %v301
      %v1720 = vmul.f32 %v1696, %v301
      %v1721 = vmul.f32 %v1697, %v301
      %v1722 = vmul.f32 %v1698, %v301
      %v1723 = vmul.f32 %v1699, %v301
      %v1724 = vadd.f32 %v1700, %v331
      %v1725 = vadd.f32 %v1701, %v331
      %v1726 = vadd.f32 %v1702, %v331
      %v1727 = vadd.f32 %v1703, %v331
      %v1728 = vadd.f32 %v1704, %v331
      %v1729 = vadd.f32 %v1705, %v331
      %v1730 = vadd.f32 %v1706, %v331
      %v1731 = vadd.f32 %v1707, %v331
      %v1732 = vadd.f32 %v1708, %v331
      %v1733 = vadd.f32 %v1709, %v331
      %v1734 = vadd.f32 %v1710, %v331
      %v1735 = vadd.f32 %v1711, %v331
      %v1736 = vadd.f32 %v1712, %v331
      %v1737 = vadd.f32 %v1713, %v331
      %v1738 = vadd.f32 %v1714, %v331
      %v1739 = vadd.f32 %v1715, %v331
      %v1740 = vadd.f32 %v1716, %v331
      %v1741 = vadd.f32 %v1717, %v331
      %v1742 = vadd.f32 %v1718, %v331
      %v1743 = vadd.f32 %v1719, %v331
      %v1744 = vadd.f32 %v1720, %v331
      %v1745 = vadd.f32 %v1721, %v331
      %v1746 = vadd.f32 %v1722, %v331
      %v1747 = vadd.f32 %v1723, %v331
      %v1748 = vpack.c.bf16 %v1725, %v1724
      %v1749 = vpack.c.bf16 %v1727, %v1726
      %v1750 = vpack.c.bf16 %v1729, %v1728
      %v1751 = vpack.c.bf16 %v1731, %v1730
      %v1752 = vpack.c.bf16 %v1733, %v1732
      %v1753 = vpack.c.bf16 %v1735, %v1734
      %v1754 = vpack.c.bf16 %v1737, %v1736
      %v1755 = vpack.c.bf16 %v1739, %v1738
      %v1756 = vpack.c.bf16 %v1741, %v1740
      %v1757 = vpack.c.bf16 %v1743, %v1742
      %v1758 = vpack.c.bf16 %v1745, %v1744
      %v1759 = vpack.c.bf16 %v1747, %v1746
      %s1760 = scalar_lea.vmem %s1, 10
      %v1761 = vld [vmem:[%s1760] sm:$0x3]
      %v1763 = vsel %vm370, %v1748, 0
      %v1766 = vsel %vm370, %v1749, 0
      %v1769 = vsel %vm370, %v1750, 0
      %v1772 = vsel %vm370, %v1751, 0
      %v1775 = vsel %vm370, %v1752, 0
      %v1778 = vsel %vm370, %v1753, 0
      %v1781 = vsel %vm370, %v1754, 0
      %v1784 = vsel %vm370, %v1755, 0
      %v1787 = vsel %vm370, %v1756, 0
      %v1790 = vsel %vm370, %v1757, 0
      %v1793 = vsel %vm370, %v1758, 0
      %v1796 = vsel %vm370, %v1759, 0
      %v1799 = vsel %vm407, %v1761, 0
      %1801 = vmatprep.subr.bf16.mxu0 0
      %1802 = vmatpush1.bf16.msra.mxu0 %v1799
      %1803 = vmatprep.subr.bf16.mxu0 0
      %1804 = vmatpush1.bf16.msra.mxu0 0
      %1805 = vmatprep.subr.bf16.mxu0 0
      %1806 = vmatpush1.bf16.msra.mxu0 0
      %1807 = vmatprep.subr.bf16.mxu0 0
      %1808 = vmatpush1.bf16.msra.mxu0 0
      %1809 = vmatprep.subr.bf16.mxu0 0
      %1810 = vmatpush1.bf16.msra.mxu0 0
      %1811 = vmatprep.subr.bf16.mxu0 0
      %1812 = vmatpush1.bf16.msra.mxu0 0
      %1813 = vmatprep.subr.bf16.mxu0 0
      %1814 = vmatpush1.bf16.msra.mxu0 0
      %1815 = vmatprep.subr.bf16.mxu0 0
      %1816 = vmatpush1.bf16.msra.mxu0 0
      %1817 = vmatprep.subr.bf16.mxu0 0
      %1818 = vmatpush1.bf16.msra.mxu0 0
      %1819 = vmatprep.subr.bf16.mxu0 0
      %1820 = vmatpush1.bf16.msra.mxu0 0
      %1821 = vmatprep.subr.bf16.mxu0 0
      %1822 = vmatpush1.bf16.msra.mxu0 0
      %1823 = vmatprep.subr.bf16.mxu0 0
      %1824 = vmatpush1.bf16.msra.mxu0 0
      %1825 = vmatprep.subr.bf16.mxu0 0
      %1826 = vmatpush1.bf16.msra.mxu0 0
      %1827 = vmatprep.subr.bf16.mxu0 0
      %1828 = vmatpush1.bf16.msra.mxu0 0
      %1829 = vmatprep.subr.bf16.mxu0 0
      %1830 = vmatpush1.bf16.msra.mxu0 0
      %1831 = vmatprep.subr.bf16.mxu0 0
      %1832 = vmatpush1.bf16.msra.mxu0 0
      %1833 = vmatprep.mubr.bf16.mxu0 0
      %1834 = vmatmul.mubr.bf16.gmra.mrb[0].mxu0 %v1763
      %v1835 = vpop.f32.mrb[0].mxu0
      %v1836 = vadd.f32 0.0, %v1835
      %v1837 = vpop.f32.mrb[0].mxu0
      %v1838 = vpop.f32.mrb[0].mxu0
      %v1839 = vadd.f32 0.0, %v1838
      %v1840 = vpop.f32.mrb[0].mxu0
      %1841 = vmatprep.mubr.bf16.mxu0 0
      %1842 = vmatmul.mubr.bf16.gmra.mrb[0].mxu0 %v1766
      %v1843 = vpop.f32.mrb[0].mxu0
      %v1844 = vadd.f32 0.0, %v1843
      %v1845 = vpop.f32.mrb[0].mxu0
      %v1846 = vpop.f32.mrb[0].mxu0
      %v1847 = vadd.f32 0.0, %v1846
      %v1848 = vpop.f32.mrb[0].mxu0
      %1849 = vmatprep.mubr.bf16.mxu0 0
      %1850 = vmatmul.mubr.bf16.gmra.mrb[0].mxu0 %v1769
      %v1851 = vpop.f32.mrb[0].mxu0
      %v1852 = vadd.f32 0.0, %v1851
      %v1853 = vpop.f32.mrb[0].mxu0
      %v1854 = vpop.f32.mrb[0].mxu0
      %v1855 = vadd.f32 0.0, %v1854
      %v1856 = vpop.f32.mrb[0].mxu0
      %1857 = vmatprep.mubr.bf16.mxu0 0
      %1858 = vmatmul.mubr.bf16.gmra.mrb[0].mxu0 %v1772
      %v1859 = vpop.f32.mrb[0].mxu0
      %v1860 = vadd.f32 0.0, %v1859
      %v1861 = vpop.f32.mrb[0].mxu0
      %v1862 = vpop.f32.mrb[0].mxu0
      %v1863 = vadd.f32 0.0, %v1862
      %v1864 = vpop.f32.mrb[0].mxu0
      %1865 = vmatprep.mubr.bf16.mxu0 0
      %1866 = vmatmul.mubr.bf16.gmra.mrb[0].mxu0 %v1775
      %v1867 = vpop.f32.mrb[0].mxu0
      %v1868 = vadd.f32 0.0, %v1867
      %v1869 = vpop.f32.mrb[0].mxu0
      %v1870 = vpop.f32.mrb[0].mxu0
      %v1871 = vadd.f32 0.0, %v1870
      %v1872 = vpop.f32.mrb[0].mxu0
      %1873 = vmatprep.mubr.bf16.mxu0 0
      %1874 = vmatmul.mubr.bf16.gmra.mrb[0].mxu0 %v1778
      %v1875 = vpop.f32.mrb[0].mxu0
      %v1876 = vadd.f32 0.0, %v1875
      %v1877 = vpop.f32.mrb[0].mxu0
      %v1878 = vpop.f32.mrb[0].mxu0
      %v1879 = vadd.f32 0.0, %v1878
      %v1880 = vpop.f32.mrb[0].mxu0
      %1881 = vmatprep.mubr.bf16.mxu0 0
      %1882 = vmatmul.mubr.bf16.gmra.mrb[0].mxu0 %v1781
      %v1883 = vpop.f32.mrb[0].mxu0
      %v1884 = vadd.f32 0.0, %v1883
      %v1885 = vpop.f32.mrb[0].mxu0
      %v1886 = vpop.f32.mrb[0].mxu0
      %v1887 = vadd.f32 0.0, %v1886
      %v1888 = vpop.f32.mrb[0].mxu0
      %1889 = vmatprep.mubr.bf16.mxu0 0
      %1890 = vmatmul.mubr.bf16.gmra.mrb[0].mxu0 %v1784
      %v1891 = vpop.f32.mrb[0].mxu0
      %v1892 = vadd.f32 0.0, %v1891
      %v1893 = vpop.f32.mrb[0].mxu0
      %v1894 = vpop.f32.mrb[0].mxu0
      %v1895 = vadd.f32 0.0, %v1894
      %v1896 = vpop.f32.mrb[0].mxu0
      %1897 = vmatprep.mubr.bf16.mxu0 0
      %1898 = vmatmul.mubr.bf16.gmra.mrb[0].mxu0 %v1787
      %v1899 = vpop.f32.mrb[0].mxu0
      %v1900 = vadd.f32 0.0, %v1899
      %v1901 = vpop.f32.mrb[0].mxu0
      %v1902 = vpop.f32.mrb[0].mxu0
      %v1903 = vadd.f32 0.0, %v1902
      %v1904 = vpop.f32.mrb[0].mxu0
      %1905 = vmatprep.mubr.bf16.mxu0 0
      %1906 = vmatmul.mubr.bf16.gmra.mrb[0].mxu0 %v1790
      %v1907 = vpop.f32.mrb[0].mxu0
      %v1908 = vadd.f32 0.0, %v1907
      %v1909 = vpop.f32.mrb[0].mxu0
      %v1910 = vpop.f32.mrb[0].mxu0
      %v1911 = vadd.f32 0.0, %v1910
      %v1912 = vpop.f32.mrb[0].mxu0
      %1913 = vmatprep.mubr.bf16.mxu0 0
      %1914 = vmatmul.mubr.bf16.gmra.mrb[0].mxu0 %v1793
      %v1915 = vpop.f32.mrb[0].mxu0
      %v1916 = vadd.f32 0.0, %v1915
      %v1917 = vpop.f32.mrb[0].mxu0
      %v1918 = vpop.f32.mrb[0].mxu0
      %v1919 = vadd.f32 0.0, %v1918
      %v1920 = vpop.f32.mrb[0].mxu0
      %1921 = vmatprep.mubr.bf16.mxu0 0
      %1922 = vmatmul.mubr.bf16.gmra.mrb[0].mxu0 %v1796
      %v1923 = vpop.f32.mrb[0].mxu0
      %v1924 = vadd.f32 0.0, %v1923
      %v1925 = vpop.f32.mrb[0].mxu0
      %v1926 = vpop.f32.mrb[0].mxu0
      %v1927 = vadd.f32 0.0, %v1926
      %v1928 = vpop.f32.mrb[0].mxu0
      %1929 = vdwg.mxu0
      %v1930 = vadd.f32 %v1652, %v1836
      %v1931 = vadd.f32 %v1653, %v1839
      %v1932 = vadd.f32 %v1654, %v1844
      %v1933 = vadd.f32 %v1655, %v1847
      %v1934 = vadd.f32 %v1656, %v1852
      %v1935 = vadd.f32 %v1657, %v1855
      %v1936 = vadd.f32 %v1658, %v1860
      %v1937 = vadd.f32 %v1659, %v1863
      %v1938 = vadd.f32 %v1660, %v1868
      %v1939 = vadd.f32 %v1661, %v1871
      %v1940 = vadd.f32 %v1662, %v1876
      %v1941 = vadd.f32 %v1663, %v1879
      %v1942 = vadd.f32 %v1664, %v1884
      %v1943 = vadd.f32 %v1665, %v1887
      %v1944 = vadd.f32 %v1666, %v1892
      %v1945 = vadd.f32 %v1667, %v1895
      %v1946 = vadd.f32 %v1668, %v1900
      %v1947 = vadd.f32 %v1669, %v1903
      %v1948 = vadd.f32 %v1670, %v1908
      %v1949 = vadd.f32 %v1671, %v1911
      %v1950 = vadd.f32 %v1672, %v1916
      %v1951 = vadd.f32 %v1673, %v1919
      %v1952 = vadd.f32 %v1674, %v1924
      %v1953 = vadd.f32 %v1675, %v1927
      %v1954 = vld [vmem:[%s253 + $0x20] sm:$0xff]
      %v1955 = vld [vmem:[%s253 + $0x28] sm:$0xff]
      %v1956 = vld [vmem:[%s253 + $0x30] sm:$0xff]
      %v1957 = vld [vmem:[%s253 + $0x38] sm:$0xff]
      %v1958 = vld [vmem:[%s253 + $0x40] sm:$0xff]
      %v1959 = vld [vmem:[%s253 + $0x48] sm:$0xff]
      %v1960 = vld [vmem:[%s253 + $0x50] sm:$0xff]
      %v1961 = vld [vmem:[%s253 + $0x58] sm:$0xff]
      %v1962 = vld [vmem:[%s253 + $0x60] sm:$0xff]
      %v1963 = vld [vmem:[%s253 + $0x68] sm:$0xff]
      %v1964 = vld [vmem:[%s253 + $0x70] sm:$0xff]
      %v1965 = vld [vmem:[%s253 + $0x78] sm:$0xff]
      %v1966 = vld [vmem:[%s253 + $0x80] sm:$0xff]
      %v1967 = vld [vmem:[%s253 + $0x88] sm:$0xff]
      %v1968 = vld [vmem:[%s253 + $0x90] sm:$0xff]
      %v1969 = vld [vmem:[%s253 + $0x98] sm:$0xff]
      %v1970 = vld [vmem:[%s253 + $0xa0] sm:$0xff]
      %v1971 = vld [vmem:[%s253 + $0xa8] sm:$0xff]
      %v1972 = vld [vmem:[%s253 + $0xb0] sm:$0xff]
      %v1973 = vld [vmem:[%s253 + $0xb8] sm:$0xff]
      %v1974 = vld [vmem:[%s253 + $0xc0] sm:$0xff]
      %v1975 = vld [vmem:[%s253 + $0xc8] sm:$0xff]
      %v1976 = vld [vmem:[%s253 + $0xd0] sm:$0xff]
      %v1977 = vld [vmem:[%s253 + $0xd8] sm:$0x3f]
      %v1978 = vmul.f32 %v1954, %v301
      %v1979 = vmul.f32 %v1955, %v301
      %v1980 = vmul.f32 %v1956, %v301
      %v1981 = vmul.f32 %v1957, %v301
      %v1982 = vmul.f32 %v1958, %v301
      %v1983 = vmul.f32 %v1959, %v301
      %v1984 = vmul.f32 %v1960, %v301
      %v1985 = vmul.f32 %v1961, %v301
      %v1986 = vmul.f32 %v1962, %v301
      %v1987 = vmul.f32 %v1963, %v301
      %v1988 = vmul.f32 %v1964, %v301
      %v1989 = vmul.f32 %v1965, %v301
      %v1990 = vmul.f32 %v1966, %v301
      %v1991 = vmul.f32 %v1967, %v301
      %v1992 = vmul.f32 %v1968, %v301
      %v1993 = vmul.f32 %v1969, %v301
      %v1994 = vmul.f32 %v1970, %v301
      %v1995 = vmul.f32 %v1971, %v301
      %v1996 = vmul.f32 %v1972, %v301
      %v1997 = vmul.f32 %v1973, %v301
      %v1998 = vmul.f32 %v1974, %v301
      %v1999 = vmul.f32 %v1975, %v301
      %v2000 = vmul.f32 %v1976, %v301
      %v2001 = vmul.f32 %v1977, %v301
      %v2002 = vadd.f32 %v1978, %v331
      %v2003 = vadd.f32 %v1979, %v331
      %v2004 = vadd.f32 %v1980, %v331
      %v2005 = vadd.f32 %v1981, %v331
      %v2006 = vadd.f32 %v1982, %v331
      %v2007 = vadd.f32 %v1983, %v331
      %v2008 = vadd.f32 %v1984, %v331
      %v2009 = vadd.f32 %v1985, %v331
      %v2010 = vadd.f32 %v1986, %v331
      %v2011 = vadd.f32 %v1987, %v331
      %v2012 = vadd.f32 %v1988, %v331
      %v2013 = vadd.f32 %v1989, %v331
      %v2014 = vadd.f32 %v1990, %v331
      %v2015 = vadd.f32 %v1991, %v331
      %v2016 = vadd.f32 %v1992, %v331
      %v2017 = vadd.f32 %v1993, %v331
      %v2018 = vadd.f32 %v1994, %v331
      %v2019 = vadd.f32 %v1995, %v331
      %v2020 = vadd.f32 %v1996, %v331
      %v2021 = vadd.f32 %v1997, %v331
      %v2022 = vadd.f32 %v1998, %v331
      %v2023 = vadd.f32 %v1999, %v331
      %v2024 = vadd.f32 %v2000, %v331
      %v2025 = vadd.f32 %v2001, %v331
      %v2026 = vpack.c.bf16 %v2003, %v2002
      %v2027 = vpack.c.bf16 %v2005, %v2004
      %v2028 = vpack.c.bf16 %v2007, %v2006
      %v2029 = vpack.c.bf16 %v2009, %v2008
      %v2030 = vpack.c.bf16 %v2011, %v2010
      %v2031 = vpack.c.bf16 %v2013, %v2012
      %v2032 = vpack.c.bf16 %v2015, %v2014
      %v2033 = vpack.c.bf16 %v2017, %v2016
      %v2034 = vpack.c.bf16 %v2019, %v2018
      %v2035 = vpack.c.bf16 %v2021, %v2020
      %v2036 = vpack.c.bf16 %v2023, %v2022
      %v2037 = vpack.c.bf16 %v2025, %v2024
      %s2038 = scalar_lea.vmem %s1, 12
      %v2039 = vld [vmem:[%s2038] sm:$0x3]
      %v2041 = vsel %vm370, %v2026, 0
      %v2044 = vsel %vm370, %v2027, 0
      %v2047 = vsel %vm370, %v2028, 0
      %v2050 = vsel %vm370, %v2029, 0
      %v2053 = vsel %vm370, %v2030, 0
      %v2056 = vsel %vm370, %v2031, 0
      %v2059 = vsel %vm370, %v2032, 0
      %v2062 = vsel %vm370, %v2033, 0
      %v2065 = vsel %vm370, %v2034, 0
      %v2068 = vsel %vm370, %v2035, 0
      %v2071 = vsel %vm370, %v2036, 0
      %v2074 = vsel %vm370, %v2037, 0
      %v2077 = vsel %vm407, %v2039, 0
      %2079 = vmatprep.subr.bf16.mxu0 0
      %2080 = vmatpush1.bf16.msra.mxu0 %v2077
      %2081 = vmatprep.subr.bf16.mxu0 0
      %2082 = vmatpush1.bf16.msra.mxu0 0
      %2083 = vmatprep.subr.bf16.mxu0 0
      %2084 = vmatpush1.bf16.msra.mxu0 0
      %2085 = vmatprep.subr.bf16.mxu0 0
      %2086 = vmatpush1.bf16.msra.mxu0 0
      %2087 = vmatprep.subr.bf16.mxu0 0
      %2088 = vmatpush1.bf16.msra.mxu0 0
      %2089 = vmatprep.subr.bf16.mxu0 0
      %2090 = vmatpush1.bf16.msra.mxu0 0
      %2091 = vmatprep.subr.bf16.mxu0 0
      %2092 = vmatpush1.bf16.msra.mxu0 0
      %2093 = vmatprep.subr.bf16.mxu0 0
      %2094 = vmatpush1.bf16.msra.mxu0 0
      %2095 = vmatprep.subr.bf16.mxu0 0
      %2096 = vmatpush1.bf16.msra.mxu0 0
      %2097 = vmatprep.subr.bf16.mxu0 0
      %2098 = vmatpush1.bf16.msra.mxu0 0
      %2099 = vmatprep.subr.bf16.mxu0 0
      %2100 = vmatpush1.bf16.msra.mxu0 0
      %2101 = vmatprep.subr.bf16.mxu0 0
      %2102 = vmatpush1.bf16.msra.mxu0 0
      %2103 = vmatprep.subr.bf16.mxu0 0
      %2104 = vmatpush1.bf16.msra.mxu0 0
      %2105 = vmatprep.subr.bf16.mxu0 0
      %2106 = vmatpush1.bf16.msra.mxu0 0
      %2107 = vmatprep.subr.bf16.mxu0 0
      %2108 = vmatpush1.bf16.msra.mxu0 0
      %2109 = vmatprep.subr.bf16.mxu0 0
      %2110 = vmatpush1.bf16.msra.mxu0 0
      %2111 = vmatprep.mubr.bf16.mxu0 0
      %2112 = vmatmul.mubr.bf16.gmra.mrb[0].mxu0 %v2041
      %v2113 = vpop.f32.mrb[0].mxu0
      %v2114 = vadd.f32 0.0, %v2113
      %v2115 = vpop.f32.mrb[0].mxu0
      %v2116 = vpop.f32.mrb[0].mxu0
      %v2117 = vadd.f32 0.0, %v2116
      %v2118 = vpop.f32.mrb[0].mxu0
      %2119 = vmatprep.mubr.bf16.mxu0 0
      %2120 = vmatmul.mubr.bf16.gmra.mrb[0].mxu0 %v2044
      %v2121 = vpop.f32.mrb[0].mxu0
      %v2122 = vadd.f32 0.0, %v2121
      %v2123 = vpop.f32.mrb[0].mxu0
      %v2124 = vpop.f32.mrb[0].mxu0
      %v2125 = vadd.f32 0.0, %v2124
      %v2126 = vpop.f32.mrb[0].mxu0
      %2127 = vmatprep.mubr.bf16.mxu0 0
      %2128 = vmatmul.mubr.bf16.gmra.mrb[0].mxu0 %v2047
      %v2129 = vpop.f32.mrb[0].mxu0
      %v2130 = vadd.f32 0.0, %v2129
      %v2131 = vpop.f32.mrb[0].mxu0
      %v2132 = vpop.f32.mrb[0].mxu0
      %v2133 = vadd.f32 0.0, %v2132
      %v2134 = vpop.f32.mrb[0].mxu0
      %2135 = vmatprep.mubr.bf16.mxu0 0
      %2136 = vmatmul.mubr.bf16.gmra.mrb[0].mxu0 %v2050
      %v2137 = vpop.f32.mrb[0].mxu0
      %v2138 = vadd.f32 0.0, %v2137
      %v2139 = vpop.f32.mrb[0].mxu0
      %v2140 = vpop.f32.mrb[0].mxu0
      %v2141 = vadd.f32 0.0, %v2140
      %v2142 = vpop.f32.mrb[0].mxu0
      %2143 = vmatprep.mubr.bf16.mxu0 0
      %2144 = vmatmul.mubr.bf16.gmra.mrb[0].mxu0 %v2053
      %v2145 = vpop.f32.mrb[0].mxu0
      %v2146 = vadd.f32 0.0, %v2145
      %v2147 = vpop.f32.mrb[0].mxu0
      %v2148 = vpop.f32.mrb[0].mxu0
      %v2149 = vadd.f32 0.0, %v2148
      %v2150 = vpop.f32.mrb[0].mxu0
      %2151 = vmatprep.mubr.bf16.mxu0 0
      %2152 = vmatmul.mubr.bf16.gmra.mrb[0].mxu0 %v2056
      %v2153 = vpop.f32.mrb[0].mxu0
      %v2154 = vadd.f32 0.0, %v2153
      %v2155 = vpop.f32.mrb[0].mxu0
      %v2156 = vpop.f32.mrb[0].mxu0
      %v2157 = vadd.f32 0.0, %v2156
      %v2158 = vpop.f32.mrb[0].mxu0
      %2159 = vmatprep.mubr.bf16.mxu0 0
      %2160 = vmatmul.mubr.bf16.gmra.mrb[0].mxu0 %v2059
      %v2161 = vpop.f32.mrb[0].mxu0
      %v2162 = vadd.f32 0.0, %v2161
      %v2163 = vpop.f32.mrb[0].mxu0
      %v2164 = vpop.f32.mrb[0].mxu0
      %v2165 = vadd.f32 0.0, %v2164
      %v2166 = vpop.f32.mrb[0].mxu0
      %2167 = vmatprep.mubr.bf16.mxu0 0
      %2168 = vmatmul.mubr.bf16.gmra.mrb[0].mxu0 %v2062
      %v2169 = vpop.f32.mrb[0].mxu0
      %v2170 = vadd.f32 0.0, %v2169
      %v2171 = vpop.f32.mrb[0].mxu0
      %v2172 = vpop.f32.mrb[0].mxu0
      %v2173 = vadd.f32 0.0, %v2172
      %v2174 = vpop.f32.mrb[0].mxu0
      %2175 = vmatprep.mubr.bf16.mxu0 0
      %2176 = vmatmul.mubr.bf16.gmra.mrb[0].mxu0 %v2065
      %v2177 = vpop.f32.mrb[0].mxu0
      %v2178 = vadd.f32 0.0, %v2177
      %v2179 = vpop.f32.mrb[0].mxu0
      %v2180 = vpop.f32.mrb[0].mxu0
      %v2181 = vadd.f32 0.0, %v2180
      %v2182 = vpop.f32.mrb[0].mxu0
      %2183 = vmatprep.mubr.bf16.mxu0 0
      %2184 = vmatmul.mubr.bf16.gmra.mrb[0].mxu0 %v2068
      %v2185 = vpop.f32.mrb[0].mxu0
      %v2186 = vadd.f32 0.0, %v2185
      %v2187 = vpop.f32.mrb[0].mxu0
      %v2188 = vpop.f32.mrb[0].mxu0
      %v2189 = vadd.f32 0.0, %v2188
      %v2190 = vpop.f32.mrb[0].mxu0
      %2191 = vmatprep.mubr.bf16.mxu0 0
      %2192 = vmatmul.mubr.bf16.gmra.mrb[0].mxu0 %v2071
      %v2193 = vpop.f32.mrb[0].mxu0
      %v2194 = vadd.f32 0.0, %v2193
      %v2195 = vpop.f32.mrb[0].mxu0
      %v2196 = vpop.f32.mrb[0].mxu0
      %v2197 = vadd.f32 0.0, %v2196
      %v2198 = vpop.f32.mrb[0].mxu0
      %2199 = vmatprep.mubr.bf16.mxu0 0
      %2200 = vmatmul.mubr.bf16.gmra.mrb[0].mxu0 %v2074
      %v2201 = vpop.f32.mrb[0].mxu0
      %v2202 = vadd.f32 0.0, %v2201
      %v2203 = vpop.f32.mrb[0].mxu0
      %v2204 = vpop.f32.mrb[0].mxu0
      %v2205 = vadd.f32 0.0, %v2204
      %v2206 = vpop.f32.mrb[0].mxu0
      %2207 = vdwg.mxu0
      %v2208 = vadd.f32 %v1930, %v2114
      %v2209 = vadd.f32 %v1931, %v2117
      %v2210 = vadd.f32 %v1932, %v2122
      %v2211 = vadd.f32 %v1933, %v2125
      %v2212 = vadd.f32 %v1934, %v2130
      %v2213 = vadd.f32 %v1935, %v2133
      %v2214 = vadd.f32 %v1936, %v2138
      %v2215 = vadd.f32 %v1937, %v2141
      %v2216 = vadd.f32 %v1938, %v2146
      %v2217 = vadd.f32 %v1939, %v2149
      %v2218 = vadd.f32 %v1940, %v2154
      %v2219 = vadd.f32 %v1941, %v2157
      %v2220 = vadd.f32 %v1942, %v2162
      %v2221 = vadd.f32 %v1943, %v2165
      %v2222 = vadd.f32 %v1944, %v2170
      %v2223 = vadd.f32 %v1945, %v2173
      %v2224 = vadd.f32 %v1946, %v2178
      %v2225 = vadd.f32 %v1947, %v2181
      %v2226 = vadd.f32 %v1948, %v2186
      %v2227 = vadd.f32 %v1949, %v2189
      %v2228 = vadd.f32 %v1950, %v2194
      %v2229 = vadd.f32 %v1951, %v2197
      %v2230 = vadd.f32 %v1952, %v2202
      %v2231 = vadd.f32 %v1953, %v2205
      %v2232 = vld [vmem:[%s253 + $0x21] sm:$0xff]
      %v2233 = vld [vmem:[%s253 + $0x29] sm:$0xff]
      %v2234 = vld [vmem:[%s253 + $0x31] sm:$0xff]
      %v2235 = vld [vmem:[%s253 + $0x39] sm:$0xff]
      %v2236 = vld [vmem:[%s253 + $0x41] sm:$0xff]
      %v2237 = vld [vmem:[%s253 + $0x49] sm:$0xff]
      %v2238 = vld [vmem:[%s253 + $0x51] sm:$0xff]
      %v2239 = vld [vmem:[%s253 + $0x59] sm:$0xff]
      %v2240 = vld [vmem:[%s253 + $0x61] sm:$0xff]
      %v2241 = vld [vmem:[%s253 + $0x69] sm:$0xff]
      %v2242 = vld [vmem:[%s253 + $0x71] sm:$0xff]
      %v2243 = vld [vmem:[%s253 + $0x79] sm:$0xff]
      %v2244 = vld [vmem:[%s253 + $0x81] sm:$0xff]
      %v2245 = vld [vmem:[%s253 + $0x89] sm:$0xff]
      %v2246 = vld [vmem:[%s253 + $0x91] sm:$0xff]
      %v2247 = vld [vmem:[%s253 + $0x99] sm:$0xff]
      %v2248 = vld [vmem:[%s253 + $0xa1] sm:$0xff]
      %v2249 = vld [vmem:[%s253 + $0xa9] sm:$0xff]
      %v2250 = vld [vmem:[%s253 + $0xb1] sm:$0xff]
      %v2251 = vld [vmem:[%s253 + $0xb9] sm:$0xff]
      %v2252 = vld [vmem:[%s253 + $0xc1] sm:$0xff]
      %v2253 = vld [vmem:[%s253 + $0xc9] sm:$0xff]
      %v2254 = vld [vmem:[%s253 + $0xd1] sm:$0xff]
      %v2255 = vld [vmem:[%s253 + $0xd9] sm:$0x3f]
      %v2256 = vmul.f32 %v2232, %v301
      %v2257 = vmul.f32 %v2233, %v301
      %v2258 = vmul.f32 %v2234, %v301
      %v2259 = vmul.f32 %v2235, %v301
      %v2260 = vmul.f32 %v2236, %v301
      %v2261 = vmul.f32 %v2237, %v301
      %v2262 = vmul.f32 %v2238, %v301
      %v2263 = vmul.f32 %v2239, %v301
      %v2264 = vmul.f32 %v2240, %v301
      %v2265 = vmul.f32 %v2241, %v301
      %v2266 = vmul.f32 %v2242, %v301
      %v2267 = vmul.f32 %v2243, %v301
      %v2268 = vmul.f32 %v2244, %v301
      %v2269 = vmul.f32 %v2245, %v301
      %v2270 = vmul.f32 %v2246, %v301
      %v2271 = vmul.f32 %v2247, %v301
      %v2272 = vmul.f32 %v2248, %v301
      %v2273 = vmul.f32 %v2249, %v301
      %v2274 = vmul.f32 %v2250, %v301
      %v2275 = vmul.f32 %v2251, %v301
      %v2276 = vmul.f32 %v2252, %v301
      %v2277 = vmul.f32 %v2253, %v301
      %v2278 = vmul.f32 %v2254, %v301
      %v2279 = vmul.f32 %v2255, %v301
      %v2280 = vadd.f32 %v2256, %v331
      %v2281 = vadd.f32 %v2257, %v331
      %v2282 = vadd.f32 %v2258, %v331
      %v2283 = vadd.f32 %v2259, %v331
      %v2284 = vadd.f32 %v2260, %v331
      %v2285 = vadd.f32 %v2261, %v331
      %v2286 = vadd.f32 %v2262, %v331
      %v2287 = vadd.f32 %v2263, %v331
      %v2288 = vadd.f32 %v2264, %v331
      %v2289 = vadd.f32 %v2265, %v331
      %v2290 = vadd.f32 %v2266, %v331
      %v2291 = vadd.f32 %v2267, %v331
      %v2292 = vadd.f32 %v2268, %v331
      %v2293 = vadd.f32 %v2269, %v331
      %v2294 = vadd.f32 %v2270, %v331
      %v2295 = vadd.f32 %v2271, %v331
      %v2296 = vadd.f32 %v2272, %v331
      %v2297 = vadd.f32 %v2273, %v331
      %v2298 = vadd.f32 %v2274, %v331
      %v2299 = vadd.f32 %v2275, %v331
      %v2300 = vadd.f32 %v2276, %v331
      %v2301 = vadd.f32 %v2277, %v331
      %v2302 = vadd.f32 %v2278, %v331
      %v2303 = vadd.f32 %v2279, %v331
      %v2304 = vpack.c.bf16 %v2281, %v2280
      %v2305 = vpack.c.bf16 %v2283, %v2282
      %v2306 = vpack.c.bf16 %v2285, %v2284
      %v2307 = vpack.c.bf16 %v2287, %v2286
      %v2308 = vpack.c.bf16 %v2289, %v2288
      %v2309 = vpack.c.bf16 %v2291, %v2290
      %v2310 = vpack.c.bf16 %v2293, %v2292
      %v2311 = vpack.c.bf16 %v2295, %v2294
      %v2312 = vpack.c.bf16 %v2297, %v2296
      %v2313 = vpack.c.bf16 %v2299, %v2298
      %v2314 = vpack.c.bf16 %v2301, %v2300
      %v2315 = vpack.c.bf16 %v2303, %v2302
      %s2316 = scalar_lea.vmem %s1, 14
      %v2317 = vld [vmem:[%s2316] sm:$0x3]
      %v2319 = vsel %vm370, %v2304, 0
      %v2322 = vsel %vm370, %v2305, 0
      %v2325 = vsel %vm370, %v2306, 0
      %v2328 = vsel %vm370, %v2307, 0
      %v2331 = vsel %vm370, %v2308, 0
      %v2334 = vsel %vm370, %v2309, 0
      %v2337 = vsel %vm370, %v2310, 0
      %v2340 = vsel %vm370, %v2311, 0
      %v2343 = vsel %vm370, %v2312, 0
      %v2346 = vsel %vm370, %v2313, 0
      %v2349 = vsel %vm370, %v2314, 0
      %v2352 = vsel %vm370, %v2315, 0
      %v2355 = vsel %vm407, %v2317, 0
      %2357 = vmatprep.subr.bf16.mxu0 0
      %2358 = vmatpush1.bf16.msra.mxu0 %v2355
      %2359 = vmatprep.subr.bf16.mxu0 0
      %2360 = vmatpush1.bf16.msra.mxu0 0
      %2361 = vmatprep.subr.bf16.mxu0 0
      %2362 = vmatpush1.bf16.msra.mxu0 0
      %2363 = vmatprep.subr.bf16.mxu0 0
      %2364 = vmatpush1.bf16.msra.mxu0 0
      %2365 = vmatprep.subr.bf16.mxu0 0
      %2366 = vmatpush1.bf16.msra.mxu0 0
      %2367 = vmatprep.subr.bf16.mxu0 0
      %2368 = vmatpush1.bf16.msra.mxu0 0
      %2369 = vmatprep.subr.bf16.mxu0 0
      %2370 = vmatpush1.bf16.msra.mxu0 0
      %2371 = vmatprep.subr.bf16.mxu0 0
      %2372 = vmatpush1.bf16.msra.mxu0 0
      %2373 = vmatprep.subr.bf16.mxu0 0
      %2374 = vmatpush1.bf16.msra.mxu0 0
      %2375 = vmatprep.subr.bf16.mxu0 0
      %2376 = vmatpush1.bf16.msra.mxu0 0
      %2377 = vmatprep.subr.bf16.mxu0 0
      %2378 = vmatpush1.bf16.msra.mxu0 0
      %2379 = vmatprep.subr.bf16.mxu0 0
      %2380 = vmatpush1.bf16.msra.mxu0 0
      %2381 = vmatprep.subr.bf16.mxu0 0
      %2382 = vmatpush1.bf16.msra.mxu0 0
      %2383 = vmatprep.subr.bf16.mxu0 0
      %2384 = vmatpush1.bf16.msra.mxu0 0
      %2385 = vmatprep.subr.bf16.mxu0 0
      %2386 = vmatpush1.bf16.msra.mxu0 0
      %2387 = vmatprep.subr.bf16.mxu0 0
      %2388 = vmatpush1.bf16.msra.mxu0 0
      %2389 = vmatprep.mubr.bf16.mxu0 0
      %2390 = vmatmul.mubr.bf16.gmra.mrb[0].mxu0 %v2319
      %v2391 = vpop.f32.mrb[0].mxu0
      %v2392 = vadd.f32 0.0, %v2391
      %v2393 = vpop.f32.mrb[0].mxu0
      %v2394 = vpop.f32.mrb[0].mxu0
      %v2395 = vadd.f32 0.0, %v2394
      %v2396 = vpop.f32.mrb[0].mxu0
      %2397 = vmatprep.mubr.bf16.mxu0 0
      %2398 = vmatmul.mubr.bf16.gmra.mrb[0].mxu0 %v2322
      %v2399 = vpop.f32.mrb[0].mxu0
      %v2400 = vadd.f32 0.0, %v2399
      %v2401 = vpop.f32.mrb[0].mxu0
      %v2402 = vpop.f32.mrb[0].mxu0
      %v2403 = vadd.f32 0.0, %v2402
      %v2404 = vpop.f32.mrb[0].mxu0
      %2405 = vmatprep.mubr.bf16.mxu0 0
      %2406 = vmatmul.mubr.bf16.gmra.mrb[0].mxu0 %v2325
      %v2407 = vpop.f32.mrb[0].mxu0
      %v2408 = vadd.f32 0.0, %v2407
      %v2409 = vpop.f32.mrb[0].mxu0
      %v2410 = vpop.f32.mrb[0].mxu0
      %v2411 = vadd.f32 0.0, %v2410
      %v2412 = vpop.f32.mrb[0].mxu0
      %2413 = vmatprep.mubr.bf16.mxu0 0
      %2414 = vmatmul.mubr.bf16.gmra.mrb[0].mxu0 %v2328
      %v2415 = vpop.f32.mrb[0].mxu0
      %v2416 = vadd.f32 0.0, %v2415
      %v2417 = vpop.f32.mrb[0].mxu0
      %v2418 = vpop.f32.mrb[0].mxu0
      %v2419 = vadd.f32 0.0, %v2418
      %v2420 = vpop.f32.mrb[0].mxu0
      %2421 = vmatprep.mubr.bf16.mxu0 0
      %2422 = vmatmul.mubr.bf16.gmra.mrb[0].mxu0 %v2331
      %v2423 = vpop.f32.mrb[0].mxu0
      %v2424 = vadd.f32 0.0, %v2423
      %v2425 = vpop.f32.mrb[0].mxu0
      %v2426 = vpop.f32.mrb[0].mxu0
      %v2427 = vadd.f32 0.0, %v2426
      %v2428 = vpop.f32.mrb[0].mxu0
      %2429 = vmatprep.mubr.bf16.mxu0 0
      %2430 = vmatmul.mubr.bf16.gmra.mrb[0].mxu0 %v2334
      %v2431 = vpop.f32.mrb[0].mxu0
      %v2432 = vadd.f32 0.0, %v2431
      %v2433 = vpop.f32.mrb[0].mxu0
      %v2434 = vpop.f32.mrb[0].mxu0
      %v2435 = vadd.f32 0.0, %v2434
      %v2436 = vpop.f32.mrb[0].mxu0
      %2437 = vmatprep.mubr.bf16.mxu0 0
      %2438 = vmatmul.mubr.bf16.gmra.mrb[0].mxu0 %v2337
      %v2439 = vpop.f32.mrb[0].mxu0
      %v2440 = vadd.f32 0.0, %v2439
      %v2441 = vpop.f32.mrb[0].mxu0
      %v2442 = vpop.f32.mrb[0].mxu0
      %v2443 = vadd.f32 0.0, %v2442
      %v2444 = vpop.f32.mrb[0].mxu0
      %2445 = vmatprep.mubr.bf16.mxu0 0
      %2446 = vmatmul.mubr.bf16.gmra.mrb[0].mxu0 %v2340
      %v2447 = vpop.f32.mrb[0].mxu0
      %v2448 = vadd.f32 0.0, %v2447
      %v2449 = vpop.f32.mrb[0].mxu0
      %v2450 = vpop.f32.mrb[0].mxu0
      %v2451 = vadd.f32 0.0, %v2450
      %v2452 = vpop.f32.mrb[0].mxu0
      %2453 = vmatprep.mubr.bf16.mxu0 0
      %2454 = vmatmul.mubr.bf16.gmra.mrb[0].mxu0 %v2343
      %v2455 = vpop.f32.mrb[0].mxu0
      %v2456 = vadd.f32 0.0, %v2455
      %v2457 = vpop.f32.mrb[0].mxu0
      %v2458 = vpop.f32.mrb[0].mxu0
      %v2459 = vadd.f32 0.0, %v2458
      %v2460 = vpop.f32.mrb[0].mxu0
      %2461 = vmatprep.mubr.bf16.mxu0 0
      %2462 = vmatmul.mubr.bf16.gmra.mrb[0].mxu0 %v2346
      %v2463 = vpop.f32.mrb[0].mxu0
      %v2464 = vadd.f32 0.0, %v2463
      %v2465 = vpop.f32.mrb[0].mxu0
      %v2466 = vpop.f32.mrb[0].mxu0
      %v2467 = vadd.f32 0.0, %v2466
      %v2468 = vpop.f32.mrb[0].mxu0
      %2469 = vmatprep.mubr.bf16.mxu0 0
      %2470 = vmatmul.mubr.bf16.gmra.mrb[0].mxu0 %v2349
      %v2471 = vpop.f32.mrb[0].mxu0
      %v2472 = vadd.f32 0.0, %v2471
      %v2473 = vpop.f32.mrb[0].mxu0
      %v2474 = vpop.f32.mrb[0].mxu0
      %v2475 = vadd.f32 0.0, %v2474
      %v2476 = vpop.f32.mrb[0].mxu0
      %2477 = vmatprep.mubr.bf16.mxu0 0
      %2478 = vmatmul.mubr.bf16.gmra.mrb[0].mxu0 %v2352
      %v2479 = vpop.f32.mrb[0].mxu0
      %v2480 = vadd.f32 0.0, %v2479
      %v2481 = vpop.f32.mrb[0].mxu0
      %v2482 = vpop.f32.mrb[0].mxu0
      %v2483 = vadd.f32 0.0, %v2482
      %v2484 = vpop.f32.mrb[0].mxu0
      %2485 = vdwg.mxu0
      %v2486 = vadd.f32 %v2208, %v2392
      %v2487 = vadd.f32 %v2209, %v2395
      %v2488 = vadd.f32 %v2210, %v2400
      %v2489 = vadd.f32 %v2211, %v2403
      %v2490 = vadd.f32 %v2212, %v2408
      %v2491 = vadd.f32 %v2213, %v2411
      %v2492 = vadd.f32 %v2214, %v2416
      %v2493 = vadd.f32 %v2215, %v2419
      %v2494 = vadd.f32 %v2216, %v2424
      %v2495 = vadd.f32 %v2217, %v2427
      %v2496 = vadd.f32 %v2218, %v2432
      %v2497 = vadd.f32 %v2219, %v2435
      %v2498 = vadd.f32 %v2220, %v2440
      %v2499 = vadd.f32 %v2221, %v2443
      %v2500 = vadd.f32 %v2222, %v2448
      %v2501 = vadd.f32 %v2223, %v2451
      %v2502 = vadd.f32 %v2224, %v2456
      %v2503 = vadd.f32 %v2225, %v2459
      %v2504 = vadd.f32 %v2226, %v2464
      %v2505 = vadd.f32 %v2227, %v2467
      %v2506 = vadd.f32 %v2228, %v2472
      %v2507 = vadd.f32 %v2229, %v2475
      %v2508 = vadd.f32 %v2230, %v2480
      %v2509 = vadd.f32 %v2231, %v2483
      %v2510 = vld [vmem:[%s253 + $0x22] sm:$0xff]
      %v2511 = vld [vmem:[%s253 + $0x2a] sm:$0xff]
      %v2512 = vld [vmem:[%s253 + $0x32] sm:$0xff]
      %v2513 = vld [vmem:[%s253 + $0x3a] sm:$0xff]
      %v2514 = vld [vmem:[%s253 + $0x42] sm:$0xff]
      %v2515 = vld [vmem:[%s253 + $0x4a] sm:$0xff]
      %v2516 = vld [vmem:[%s253 + $0x52] sm:$0xff]
      %v2517 = vld [vmem:[%s253 + $0x5a] sm:$0xff]
      %v2518 = vld [vmem:[%s253 + $0x62] sm:$0xff]
      %v2519 = vld [vmem:[%s253 + $0x6a] sm:$0xff]
      %v2520 = vld [vmem:[%s253 + $0x72] sm:$0xff]
      %v2521 = vld [vmem:[%s253 + $0x7a] sm:$0xff]
      %v2522 = vld [vmem:[%s253 + $0x82] sm:$0xff]
      %v2523 = vld [vmem:[%s253 + $0x8a] sm:$0xff]
      %v2524 = vld [vmem:[%s253 + $0x92] sm:$0xff]
      %v2525 = vld [vmem:[%s253 + $0x9a] sm:$0xff]
      %v2526 = vld [vmem:[%s253 + $0xa2] sm:$0xff]
      %v2527 = vld [vmem:[%s253 + $0xaa] sm:$0xff]
      %v2528 = vld [vmem:[%s253 + $0xb2] sm:$0xff]
      %v2529 = vld [vmem:[%s253 + $0xba] sm:$0xff]
      %v2530 = vld [vmem:[%s253 + $0xc2] sm:$0xff]
      %v2531 = vld [vmem:[%s253 + $0xca] sm:$0xff]
      %v2532 = vld [vmem:[%s253 + $0xd2] sm:$0xff]
      %v2533 = vld [vmem:[%s253 + $0xda] sm:$0x3f]
      %v2534 = vmul.f32 %v2510, %v301
      %v2535 = vmul.f32 %v2511, %v301
      %v2536 = vmul.f32 %v2512, %v301
      %v2537 = vmul.f32 %v2513, %v301
      %v2538 = vmul.f32 %v2514, %v301
      %v2539 = vmul.f32 %v2515, %v301
      %v2540 = vmul.f32 %v2516, %v301
      %v2541 = vmul.f32 %v2517, %v301
      %v2542 = vmul.f32 %v2518, %v301
      %v2543 = vmul.f32 %v2519, %v301
      %v2544 = vmul.f32 %v2520, %v301
      %v2545 = vmul.f32 %v2521, %v301
      %v2546 = vmul.f32 %v2522, %v301
      %v2547 = vmul.f32 %v2523, %v301
      %v2548 = vmul.f32 %v2524, %v301
      %v2549 = vmul.f32 %v2525, %v301
      %v2550 = vmul.f32 %v2526, %v301
      %v2551 = vmul.f32 %v2527, %v301
      %v2552 = vmul.f32 %v2528, %v301
      %v2553 = vmul.f32 %v2529, %v301
      %v2554 = vmul.f32 %v2530, %v301
      %v2555 = vmul.f32 %v2531, %v301
      %v2556 = vmul.f32 %v2532, %v301
      %v2557 = vmul.f32 %v2533, %v301
      %v2558 = vadd.f32 %v2534, %v331
      %v2559 = vadd.f32 %v2535, %v331
      %v2560 = vadd.f32 %v2536, %v331
      %v2561 = vadd.f32 %v2537, %v331
      %v2562 = vadd.f32 %v2538, %v331
      %v2563 = vadd.f32 %v2539, %v331
      %v2564 = vadd.f32 %v2540, %v331
      %v2565 = vadd.f32 %v2541, %v331
      %v2566 = vadd.f32 %v2542, %v331
      %v2567 = vadd.f32 %v2543, %v331
      %v2568 = vadd.f32 %v2544, %v331
      %v2569 = vadd.f32 %v2545, %v331
      %v2570 = vadd.f32 %v2546, %v331
      %v2571 = vadd.f32 %v2547, %v331
      %v2572 = vadd.f32 %v2548, %v331
      %v2573 = vadd.f32 %v2549, %v331
      %v2574 = vadd.f32 %v2550, %v331
      %v2575 = vadd.f32 %v2551, %v331
      %v2576 = vadd.f32 %v2552, %v331
      %v2577 = vadd.f32 %v2553, %v331
      %v2578 = vadd.f32 %v2554, %v331
      %v2579 = vadd.f32 %v2555, %v331
      %v2580 = vadd.f32 %v2556, %v331
      %v2581 = vadd.f32 %v2557, %v331
      %v2582 = vpack.c.bf16 %v2559, %v2558
      %v2583 = vpack.c.bf16 %v2561, %v2560
      %v2584 = vpack.c.bf16 %v2563, %v2562
      %v2585 = vpack.c.bf16 %v2565, %v2564
      %v2586 = vpack.c.bf16 %v2567, %v2566
      %v2587 = vpack.c.bf16 %v2569, %v2568
      %v2588 = vpack.c.bf16 %v2571, %v2570
      %v2589 = vpack.c.bf16 %v2573, %v2572
      %v2590 = vpack.c.bf16 %v2575, %v2574
      %v2591 = vpack.c.bf16 %v2577, %v2576
      %v2592 = vpack.c.bf16 %v2579, %v2578
      %v2593 = vpack.c.bf16 %v2581, %v2580
      %s2594 = scalar_lea.vmem %s1, 16
      %v2595 = vld [vmem:[%s2594] sm:$0x3]
      %v2597 = vsel %vm370, %v2582, 0
      %v2600 = vsel %vm370, %v2583, 0
      %v2603 = vsel %vm370, %v2584, 0
      %v2606 = vsel %vm370, %v2585, 0
      %v2609 = vsel %vm370, %v2586, 0
      %v2612 = vsel %vm370, %v2587, 0
      %v2615 = vsel %vm370, %v2588, 0
      %v2618 = vsel %vm370, %v2589, 0
      %v2621 = vsel %vm370, %v2590, 0
      %v2624 = vsel %vm370, %v2591, 0
      %v2627 = vsel %vm370, %v2592, 0
      %v2630 = vsel %vm370, %v2593, 0
      %v2633 = vsel %vm407, %v2595, 0
      %2635 = vmatprep.subr.bf16.mxu0 0
      %2636 = vmatpush1.bf16.msra.mxu0 %v2633
      %2637 = vmatprep.subr.bf16.mxu0 0
      %2638 = vmatpush1.bf16.msra.mxu0 0
      %2639 = vmatprep.subr.bf16.mxu0 0
      %2640 = vmatpush1.bf16.msra.mxu0 0
      %2641 = vmatprep.subr.bf16.mxu0 0
      %2642 = vmatpush1.bf16.msra.mxu0 0
      %2643 = vmatprep.subr.bf16.mxu0 0
      %2644 = vmatpush1.bf16.msra.mxu0 0
      %2645 = vmatprep.subr.bf16.mxu0 0
      %2646 = vmatpush1.bf16.msra.mxu0 0
      %2647 = vmatprep.subr.bf16.mxu0 0
      %2648 = vmatpush1.bf16.msra.mxu0 0
      %2649 = vmatprep.subr.bf16.mxu0 0
      %2650 = vmatpush1.bf16.msra.mxu0 0
      %2651 = vmatprep.subr.bf16.mxu0 0
      %2652 = vmatpush1.bf16.msra.mxu0 0
      %2653 = vmatprep.subr.bf16.mxu0 0
      %2654 = vmatpush1.bf16.msra.mxu0 0
      %2655 = vmatprep.subr.bf16.mxu0 0
      %2656 = vmatpush1.bf16.msra.mxu0 0
      %2657 = vmatprep.subr.bf16.mxu0 0
      %2658 = vmatpush1.bf16.msra.mxu0 0
      %2659 = vmatprep.subr.bf16.mxu0 0
      %2660 = vmatpush1.bf16.msra.mxu0 0
      %2661 = vmatprep.subr.bf16.mxu0 0
      %2662 = vmatpush1.bf16.msra.mxu0 0
      %2663 = vmatprep.subr.bf16.mxu0 0
      %2664 = vmatpush1.bf16.msra.mxu0 0
      %2665 = vmatprep.subr.bf16.mxu0 0
      %2666 = vmatpush1.bf16.msra.mxu0 0
      %2667 = vmatprep.mubr.bf16.mxu0 0
      %2668 = vmatmul.mubr.bf16.gmra.mrb[0].mxu0 %v2597
      %v2669 = vpop.f32.mrb[0].mxu0
      %v2670 = vadd.f32 0.0, %v2669
      %v2671 = vpop.f32.mrb[0].mxu0
      %v2672 = vpop.f32.mrb[0].mxu0
      %v2673 = vadd.f32 0.0, %v2672
      %v2674 = vpop.f32.mrb[0].mxu0
      %2675 = vmatprep.mubr.bf16.mxu0 0
      %2676 = vmatmul.mubr.bf16.gmra.mrb[0].mxu0 %v2600
      %v2677 = vpop.f32.mrb[0].mxu0
      %v2678 = vadd.f32 0.0, %v2677
      %v2679 = vpop.f32.mrb[0].mxu0
      %v2680 = vpop.f32.mrb[0].mxu0
      %v2681 = vadd.f32 0.0, %v2680
      %v2682 = vpop.f32.mrb[0].mxu0
      %2683 = vmatprep.mubr.bf16.mxu0 0
      %2684 = vmatmul.mubr.bf16.gmra.mrb[0].mxu0 %v2603
      %v2685 = vpop.f32.mrb[0].mxu0
      %v2686 = vadd.f32 0.0, %v2685
      %v2687 = vpop.f32.mrb[0].mxu0
      %v2688 = vpop.f32.mrb[0].mxu0
      %v2689 = vadd.f32 0.0, %v2688
      %v2690 = vpop.f32.mrb[0].mxu0
      %2691 = vmatprep.mubr.bf16.mxu0 0
      %2692 = vmatmul.mubr.bf16.gmra.mrb[0].mxu0 %v2606
      %v2693 = vpop.f32.mrb[0].mxu0
      %v2694 = vadd.f32 0.0, %v2693
      %v2695 = vpop.f32.mrb[0].mxu0
      %v2696 = vpop.f32.mrb[0].mxu0
      %v2697 = vadd.f32 0.0, %v2696
      %v2698 = vpop.f32.mrb[0].mxu0
      %2699 = vmatprep.mubr.bf16.mxu0 0
      %2700 = vmatmul.mubr.bf16.gmra.mrb[0].mxu0 %v2609
      %v2701 = vpop.f32.mrb[0].mxu0
      %v2702 = vadd.f32 0.0, %v2701
      %v2703 = vpop.f32.mrb[0].mxu0
      %v2704 = vpop.f32.mrb[0].mxu0
      %v2705 = vadd.f32 0.0, %v2704
      %v2706 = vpop.f32.mrb[0].mxu0
      %2707 = vmatprep.mubr.bf16.mxu0 0
      %2708 = vmatmul.mubr.bf16.gmra.mrb[0].mxu0 %v2612
      %v2709 = vpop.f32.mrb[0].mxu0
      %v2710 = vadd.f32 0.0, %v2709
      %v2711 = vpop.f32.mrb[0].mxu0
      %v2712 = vpop.f32.mrb[0].mxu0
      %v2713 = vadd.f32 0.0, %v2712
      %v2714 = vpop.f32.mrb[0].mxu0
      %2715 = vmatprep.mubr.bf16.mxu0 0
      %2716 = vmatmul.mubr.bf16.gmra.mrb[0].mxu0 %v2615
      %v2717 = vpop.f32.mrb[0].mxu0
      %v2718 = vadd.f32 0.0, %v2717
      %v2719 = vpop.f32.mrb[0].mxu0
      %v2720 = vpop.f32.mrb[0].mxu0
      %v2721 = vadd.f32 0.0, %v2720
      %v2722 = vpop.f32.mrb[0].mxu0
      %2723 = vmatprep.mubr.bf16.mxu0 0
      %2724 = vmatmul.mubr.bf16.gmra.mrb[0].mxu0 %v2618
      %v2725 = vpop.f32.mrb[0].mxu0
      %v2726 = vadd.f32 0.0, %v2725
      %v2727 = vpop.f32.mrb[0].mxu0
      %v2728 = vpop.f32.mrb[0].mxu0
      %v2729 = vadd.f32 0.0, %v2728
      %v2730 = vpop.f32.mrb[0].mxu0
      %2731 = vmatprep.mubr.bf16.mxu0 0
      %2732 = vmatmul.mubr.bf16.gmra.mrb[0].mxu0 %v2621
      %v2733 = vpop.f32.mrb[0].mxu0
      %v2734 = vadd.f32 0.0, %v2733
      %v2735 = vpop.f32.mrb[0].mxu0
      %v2736 = vpop.f32.mrb[0].mxu0
      %v2737 = vadd.f32 0.0, %v2736
      %v2738 = vpop.f32.mrb[0].mxu0
      %2739 = vmatprep.mubr.bf16.mxu0 0
      %2740 = vmatmul.mubr.bf16.gmra.mrb[0].mxu0 %v2624
      %v2741 = vpop.f32.mrb[0].mxu0
      %v2742 = vadd.f32 0.0, %v2741
      %v2743 = vpop.f32.mrb[0].mxu0
      %v2744 = vpop.f32.mrb[0].mxu0
      %v2745 = vadd.f32 0.0, %v2744
      %v2746 = vpop.f32.mrb[0].mxu0
      %2747 = vmatprep.mubr.bf16.mxu0 0
      %2748 = vmatmul.mubr.bf16.gmra.mrb[0].mxu0 %v2627
      %v2749 = vpop.f32.mrb[0].mxu0
      %v2750 = vadd.f32 0.0, %v2749
      %v2751 = vpop.f32.mrb[0].mxu0
      %v2752 = vpop.f32.mrb[0].mxu0
      %v2753 = vadd.f32 0.0, %v2752
      %v2754 = vpop.f32.mrb[0].mxu0
      %2755 = vmatprep.mubr.bf16.mxu0 0
      %2756 = vmatmul.mubr.bf16.gmra.mrb[0].mxu0 %v2630
      %v2757 = vpop.f32.mrb[0].mxu0
      %v2758 = vadd.f32 0.0, %v2757
      %v2759 = vpop.f32.mrb[0].mxu0
      %v2760 = vpop.f32.mrb[0].mxu0
      %v2761 = vadd.f32 0.0, %v2760
      %v2762 = vpop.f32.mrb[0].mxu0
      %2763 = vdwg.mxu0
      %v2764 = vadd.f32 %v2486, %v2670
      %v2765 = vadd.f32 %v2487, %v2673
      %v2766 = vadd.f32 %v2488, %v2678
      %v2767 = vadd.f32 %v2489, %v2681
      %v2768 = vadd.f32 %v2490, %v2686
      %v2769 = vadd.f32 %v2491, %v2689
      %v2770 = vadd.f32 %v2492, %v2694
      %v2771 = vadd.f32 %v2493, %v2697
      %v2772 = vadd.f32 %v2494, %v2702
      %v2773 = vadd.f32 %v2495, %v2705
      %v2774 = vadd.f32 %v2496, %v2710
      %v2775 = vadd.f32 %v2497, %v2713
      %v2776 = vadd.f32 %v2498, %v2718
      %v2777 = vadd.f32 %v2499, %v2721
      %v2778 = vadd.f32 %v2500, %v2726
      %v2779 = vadd.f32 %v2501, %v2729
      %v2780 = vadd.f32 %v2502, %v2734
      %v2781 = vadd.f32 %v2503, %v2737
      %v2782 = vadd.f32 %v2504, %v2742
      %v2783 = vadd.f32 %v2505, %v2745
      %v2784 = vadd.f32 %v2506, %v2750
      %v2785 = vadd.f32 %v2507, %v2753
      %v2786 = vadd.f32 %v2508, %v2758
      %v2787 = vadd.f32 %v2509, %v2761
      %v2788 = vmax.f32 %v2764, 0.0
      %v2789 = vmax.f32 %v2765, 0.0
      %v2790 = vmax.f32 %v2766, 0.0
      %v2791 = vmax.f32 %v2767, 0.0
      %v2792 = vmax.f32 %v2768, 0.0
      %v2793 = vmax.f32 %v2769, 0.0
      %v2794 = vmax.f32 %v2770, 0.0
      %v2795 = vmax.f32 %v2771, 0.0
      %v2796 = vmax.f32 %v2772, 0.0
      %v2797 = vmax.f32 %v2773, 0.0
      %v2798 = vmax.f32 %v2774, 0.0
      %v2799 = vmax.f32 %v2775, 0.0
      %v2800 = vmax.f32 %v2776, 0.0
      %v2801 = vmax.f32 %v2777, 0.0
      %v2802 = vmax.f32 %v2778, 0.0
      %v2803 = vmax.f32 %v2779, 0.0
      %v2804 = vmax.f32 %v2780, 0.0
      %v2805 = vmax.f32 %v2781, 0.0
      %v2806 = vmax.f32 %v2782, 0.0
      %v2807 = vmax.f32 %v2783, 0.0
      %v2808 = vmax.f32 %v2784, 0.0
      %v2809 = vmax.f32 %v2785, 0.0
      %v2810 = vmax.f32 %v2786, 0.0
      %v2811 = vmax.f32 %v2787, 0.0
      %2812 = vst.msk [vmem:[%s258] sm:$0xff] %vm370, %v2788
      %2813 = vst.msk [vmem:[%s258 + $0x8] sm:$0xff] %vm370, %v2789
      %2814 = vst.msk [vmem:[%s258 + $0x10] sm:$0xff] %vm370, %v2790
      %2815 = vst.msk [vmem:[%s258 + $0x18] sm:$0xff] %vm370, %v2791
      %2816 = vst.msk [vmem:[%s258 + $0x20] sm:$0xff] %vm370, %v2792
      %2817 = vst.msk [vmem:[%s258 + $0x28] sm:$0xff] %vm370, %v2793
      %2818 = vst.msk [vmem:[%s258 + $0x30] sm:$0xff] %vm370, %v2794
      %2819 = vst.msk [vmem:[%s258 + $0x38] sm:$0xff] %vm370, %v2795
      %2820 = vst.msk [vmem:[%s258 + $0x40] sm:$0xff] %vm370, %v2796
      %2821 = vst.msk [vmem:[%s258 + $0x48] sm:$0xff] %vm370, %v2797
      %2822 = vst.msk [vmem:[%s258 + $0x50] sm:$0xff] %vm370, %v2798
      %2823 = vst.msk [vmem:[%s258 + $0x58] sm:$0xff] %vm370, %v2799
      %2824 = vst.msk [vmem:[%s258 + $0x60] sm:$0xff] %vm370, %v2800
      %2825 = vst.msk [vmem:[%s258 + $0x68] sm:$0xff] %vm370, %v2801
      %2826 = vst.msk [vmem:[%s258 + $0x70] sm:$0xff] %vm370, %v2802
      %2827 = vst.msk [vmem:[%s258 + $0x78] sm:$0xff] %vm370, %v2803
      %2828 = vst.msk [vmem:[%s258 + $0x80] sm:$0xff] %vm370, %v2804
      %2829 = vst.msk [vmem:[%s258 + $0x88] sm:$0xff] %vm370, %v2805
      %2830 = vst.msk [vmem:[%s258 + $0x90] sm:$0xff] %vm370, %v2806
      %2831 = vst.msk [vmem:[%s258 + $0x98] sm:$0xff] %vm370, %v2807
      %2832 = vst.msk [vmem:[%s258 + $0xa0] sm:$0xff] %vm370, %v2808
      %2833 = vst.msk [vmem:[%s258 + $0xa8] sm:$0xff] %vm370, %v2809
      %2834 = vst.msk [vmem:[%s258 + $0xb0] sm:$0xff] %vm370, %v2810
      %vm2835 = vcmask 29696
      %2836 = vst.msk [vmem:[%s258 + $0xb8] sm:$0x3f] %vm2835, %v2811
      %vm2837 = vcmask 25600
      %2838 = vst.msk [vmem:[%s258 + $0xbe] sm:$0x3] %vm2837, 0.0
      %v2839 = vlaneseq
      %v2840 = vshrl.u32 %v2839, 7
      %v2841 = vadd.s32 %v2840, 8
      %v2842 = vadd.s32 %v2840, 16
      %v2843 = vadd.s32 %v2840, 24
      %v2844 = vadd.s32 %v2840, 32
      %v2845 = vadd.s32 %v2840, 40
      %v2846 = vadd.s32 %v2840, 48
      %v2847 = vadd.s32 %v2840, 56
      %v2848 = vadd.s32 %v2840, 64
      %v2849 = vadd.s32 %v2840, 72
      %v2850 = vadd.s32 %v2840, 80
      %v2851 = vadd.s32 %v2840, 88
      %v2852 = vadd.s32 %v2840, 96
      %v2853 = vadd.s32 %v2840, 104
      %v2854 = vadd.s32 %v2840, 112
      %v2855 = vadd.s32 %v2840, 120
      %v2856 = vadd.s32 %v2840, 128
      %v2857 = vadd.s32 %v2840, 136
      %v2858 = vadd.s32 %v2840, 144
      %v2859 = vadd.s32 %v2840, 152
      %v2860 = vadd.s32 %v2840, 160
      %v2861 = vadd.s32 %v2840, 168
      %v2862 = vadd.s32 %v2840, 176
      %v2863 = vadd.s32 %v2840, 184
      %vm2864 = vcmp.lt.s32.totalorder %v2840, 0
      %v2865 = vsub.s32 0, %v2840
      %v2866 = vsel %vm2864, %v2865, %v2840
      %v2867 = vshrl.u32 %v2866, 4
      %v2868 = vand.u32 %v2866, 15
      %v2869 = vsub.s32 0, %v2868
      %v2870 = vsel %vm2864, %v2869, %v2868
      %vm2871 = vcmp.lt.s32.totalorder %v2841, 0
      %v2872 = vsub.s32 0, %v2841
      %v2873 = vsel %vm2871, %v2872, %v2841
      %v2874 = vshrl.u32 %v2873, 4
      %v2875 = vand.u32 %v2873, 15
      %v2876 = vsub.s32 0, %v2875
      %v2877 = vsel %vm2871, %v2876, %v2875
      %vm2878 = vcmp.lt.s32.totalorder %v2842, 0
      %v2879 = vsub.s32 0, %v2842
      %v2880 = vsel %vm2878, %v2879, %v2842
      %v2881 = vshrl.u32 %v2880, 4
      %v2882 = vand.u32 %v2880, 15
      %v2883 = vsub.s32 0, %v2882
      %v2884 = vsel %vm2878, %v2883, %v2882
      %vm2885 = vcmp.lt.s32.totalorder %v2843, 0
      %v2886 = vsub.s32 0, %v2843
      %v2887 = vsel %vm2885, %v2886, %v2843
      %v2888 = vshrl.u32 %v2887, 4
      %v2889 = vand.u32 %v2887, 15
      %v2890 = vsub.s32 0, %v2889
      %v2891 = vsel %vm2885, %v2890, %v2889
      %vm2892 = vcmp.lt.s32.totalorder %v2844, 0
      %v2893 = vsub.s32 0, %v2844
      %v2894 = vsel %vm2892, %v2893, %v2844
      %v2895 = vshrl.u32 %v2894, 4
      %v2896 = vand.u32 %v2894, 15
      %v2897 = vsub.s32 0, %v2896
      %v2898 = vsel %vm2892, %v2897, %v2896
      %vm2899 = vcmp.lt.s32.totalorder %v2845, 0
      %v2900 = vsub.s32 0, %v2845
      %v2901 = vsel %vm2899, %v2900, %v2845
      %v2902 = vshrl.u32 %v2901, 4
      %v2903 = vand.u32 %v2901, 15
      %v2904 = vsub.s32 0, %v2903
      %v2905 = vsel %vm2899, %v2904, %v2903
      %vm2906 = vcmp.lt.s32.totalorder %v2846, 0
      %v2907 = vsub.s32 0, %v2846
      %v2908 = vsel %vm2906, %v2907, %v2846
      %v2909 = vshrl.u32 %v2908, 4
      %v2910 = vand.u32 %v2908, 15
      %v2911 = vsub.s32 0, %v2910
      %v2912 = vsel %vm2906, %v2911, %v2910
      %vm2913 = vcmp.lt.s32.totalorder %v2847, 0
      %v2914 = vsub.s32 0, %v2847
      %v2915 = vsel %vm2913, %v2914, %v2847
      %v2916 = vshrl.u32 %v2915, 4
      %v2917 = vand.u32 %v2915, 15
      %v2918 = vsub.s32 0, %v2917
      %v2919 = vsel %vm2913, %v2918, %v2917
      %vm2920 = vcmp.lt.s32.totalorder %v2848, 0
      %v2921 = vsub.s32 0, %v2848
      %v2922 = vsel %vm2920, %v2921, %v2848
      %v2923 = vshrl.u32 %v2922, 4
      %v2924 = vand.u32 %v2922, 15
      %v2925 = vsub.s32 0, %v2924
      %v2926 = vsel %vm2920, %v2925, %v2924
      %vm2927 = vcmp.lt.s32.totalorder %v2849, 0
      %v2928 = vsub.s32 0, %v2849
      %v2929 = vsel %vm2927, %v2928, %v2849
      %v2930 = vshrl.u32 %v2929, 4
      %v2931 = vand.u32 %v2929, 15
      %v2932 = vsub.s32 0, %v2931
      %v2933 = vsel %vm2927, %v2932, %v2931
      %vm2934 = vcmp.lt.s32.totalorder %v2850, 0
      %v2935 = vsub.s32 0, %v2850
      %v2936 = vsel %vm2934, %v2935, %v2850
      %v2937 = vshrl.u32 %v2936, 4
      %v2938 = vand.u32 %v2936, 15
      %v2939 = vsub.s32 0, %v2938
      %v2940 = vsel %vm2934, %v2939, %v2938
      %vm2941 = vcmp.lt.s32.totalorder %v2851, 0
      %v2942 = vsub.s32 0, %v2851
      %v2943 = vsel %vm2941, %v2942, %v2851
      %v2944 = vshrl.u32 %v2943, 4
      %v2945 = vand.u32 %v2943, 15
      %v2946 = vsub.s32 0, %v2945
      %v2947 = vsel %vm2941, %v2946, %v2945
      %vm2948 = vcmp.lt.s32.totalorder %v2852, 0
      %v2949 = vsub.s32 0, %v2852
      %v2950 = vsel %vm2948, %v2949, %v2852
      %v2951 = vshrl.u32 %v2950, 4
      %v2952 = vand.u32 %v2950, 15
      %v2953 = vsub.s32 0, %v2952
      %v2954 = vsel %vm2948, %v2953, %v2952
      %vm2955 = vcmp.lt.s32.totalorder %v2853, 0
      %v2956 = vsub.s32 0, %v2853
      %v2957 = vsel %vm2955, %v2956, %v2853
      %v2958 = vshrl.u32 %v2957, 4
      %v2959 = vand.u32 %v2957, 15
      %v2960 = vsub.s32 0, %v2959
      %v2961 = vsel %vm2955, %v2960, %v2959
      %vm2962 = vcmp.lt.s32.totalorder %v2854, 0
      %v2963 = vsub.s32 0, %v2854
      %v2964 = vsel %vm2962, %v2963, %v2854
      %v2965 = vshrl.u32 %v2964, 4
      %v2966 = vand.u32 %v2964, 15
      %v2967 = vsub.s32 0, %v2966
      %v2968 = vsel %vm2962, %v2967, %v2966
      %vm2969 = vcmp.lt.s32.totalorder %v2855, 0
      %v2970 = vsub.s32 0, %v2855
      %v2971 = vsel %vm2969, %v2970, %v2855
      %v2972 = vshrl.u32 %v2971, 4
      %v2973 = vand.u32 %v2971, 15
      %v2974 = vsub.s32 0, %v2973
      %v2975 = vsel %vm2969, %v2974, %v2973
      %vm2976 = vcmp.lt.s32.totalorder %v2856, 0
      %v2977 = vsub.s32 0, %v2856
      %v2978 = vsel %vm2976, %v2977, %v2856
      %v2979 = vshrl.u32 %v2978, 4
      %v2980 = vand.u32 %v2978, 15
      %v2981 = vsub.s32 0, %v2980
      %v2982 = vsel %vm2976, %v2981, %v2980
      %vm2983 = vcmp.lt.s32.totalorder %v2857, 0
      %v2984 = vsub.s32 0, %v2857
      %v2985 = vsel %vm2983, %v2984, %v2857
      %v2986 = vshrl.u32 %v2985, 4
      %v2987 = vand.u32 %v2985, 15
      %v2988 = vsub.s32 0, %v2987
      %v2989 = vsel %vm2983, %v2988, %v2987
      %vm2990 = vcmp.lt.s32.totalorder %v2858, 0
      %v2991 = vsub.s32 0, %v2858
      %v2992 = vsel %vm2990, %v2991, %v2858
      %v2993 = vshrl.u32 %v2992, 4
      %v2994 = vand.u32 %v2992, 15
      %v2995 = vsub.s32 0, %v2994
      %v2996 = vsel %vm2990, %v2995, %v2994
      %vm2997 = vcmp.lt.s32.totalorder %v2859, 0
      %v2998 = vsub.s32 0, %v2859
      %v2999 = vsel %vm2997, %v2998, %v2859
      %v3000 = vshrl.u32 %v2999, 4
      %v3001 = vand.u32 %v2999, 15
      %v3002 = vsub.s32 0, %v3001
      %v3003 = vsel %vm2997, %v3002, %v3001
      %vm3004 = vcmp.lt.s32.totalorder %v2860, 0
      %v3005 = vsub.s32 0, %v2860
      %v3006 = vsel %vm3004, %v3005, %v2860
      %v3007 = vshrl.u32 %v3006, 4
      %v3008 = vand.u32 %v3006, 15
      %v3009 = vsub.s32 0, %v3008
      %v3010 = vsel %vm3004, %v3009, %v3008
      %vm3011 = vcmp.lt.s32.totalorder %v2861, 0
      %v3012 = vsub.s32 0, %v2861
      %v3013 = vsel %vm3011, %v3012, %v2861
      %v3014 = vshrl.u32 %v3013, 4
      %v3015 = vand.u32 %v3013, 15
      %v3016 = vsub.s32 0, %v3015
      %v3017 = vsel %vm3011, %v3016, %v3015
      %vm3018 = vcmp.lt.s32.totalorder %v2862, 0
      %v3019 = vsub.s32 0, %v2862
      %v3020 = vsel %vm3018, %v3019, %v2862
      %v3021 = vshrl.u32 %v3020, 4
      %v3022 = vand.u32 %v3020, 15
      %v3023 = vsub.s32 0, %v3022
      %v3024 = vsel %vm3018, %v3023, %v3022
      %vm3025 = vcmp.lt.s32.totalorder %v2863, 0
      %v3026 = vsub.s32 0, %v2863
      %v3027 = vsel %vm3025, %v3026, %v2863
      %v3028 = vshrl.u32 %v3027, 4
      %v3029 = vand.u32 %v3027, 15
      %v3030 = vsub.s32 0, %v3029
      %v3031 = vsel %vm3025, %v3030, %v3029
      %vm3032 = vcmp.ne.s32.totalorder %v2870, 0
      %vm3033 = vcmp.ne.s32.totalorder %v2877, 0
      %vm3034 = vcmp.ne.s32.totalorder %v2884, 0
      %vm3035 = vcmp.ne.s32.totalorder %v2891, 0
      %vm3036 = vcmp.ne.s32.totalorder %v2898, 0
      %vm3037 = vcmp.ne.s32.totalorder %v2905, 0
      %vm3038 = vcmp.ne.s32.totalorder %v2912, 0
      %vm3039 = vcmp.ne.s32.totalorder %v2919, 0
      %vm3040 = vcmp.ne.s32.totalorder %v2926, 0
      %vm3041 = vcmp.ne.s32.totalorder %v2933, 0
      %vm3042 = vcmp.ne.s32.totalorder %v2940, 0
      %vm3043 = vcmp.ne.s32.totalorder %v2947, 0
      %vm3044 = vcmp.ne.s32.totalorder %v2954, 0
      %vm3045 = vcmp.ne.s32.totalorder %v2961, 0
      %vm3046 = vcmp.ne.s32.totalorder %v2968, 0
      %vm3047 = vcmp.ne.s32.totalorder %v2975, 0
      %vm3048 = vcmp.ne.s32.totalorder %v2982, 0
      %vm3049 = vcmp.ne.s32.totalorder %v2989, 0
      %vm3050 = vcmp.ne.s32.totalorder %v2996, 0
      %vm3051 = vcmp.ne.s32.totalorder %v3003, 0
      %vm3052 = vcmp.ne.s32.totalorder %v3010, 0
      %vm3053 = vcmp.ne.s32.totalorder %v3017, 0
      %vm3054 = vcmp.ne.s32.totalorder %v3024, 0
      %vm3055 = vcmp.ne.s32.totalorder %v3031, 0
      %vm3056 = vcmp.lt.s32.totalorder %v2870, 0
      %vm3057 = vcmp.lt.s32.totalorder %v2877, 0
      %vm3058 = vcmp.lt.s32.totalorder %v2884, 0
      %vm3059 = vcmp.lt.s32.totalorder %v2891, 0
      %vm3060 = vcmp.lt.s32.totalorder %v2898, 0
      %vm3061 = vcmp.lt.s32.totalorder %v2905, 0
      %vm3062 = vcmp.lt.s32.totalorder %v2912, 0
      %vm3063 = vcmp.lt.s32.totalorder %v2919, 0
      %vm3064 = vcmp.lt.s32.totalorder %v2926, 0
      %vm3065 = vcmp.lt.s32.totalorder %v2933, 0
      %vm3066 = vcmp.lt.s32.totalorder %v2940, 0
      %vm3067 = vcmp.lt.s32.totalorder %v2947, 0
      %vm3068 = vcmp.lt.s32.totalorder %v2954, 0
      %vm3069 = vcmp.lt.s32.totalorder %v2961, 0
      %vm3070 = vcmp.lt.s32.totalorder %v2968, 0
      %vm3071 = vcmp.lt.s32.totalorder %v2975, 0
      %vm3072 = vcmp.lt.s32.totalorder %v2982, 0
      %vm3073 = vcmp.lt.s32.totalorder %v2989, 0
      %vm3074 = vcmp.lt.s32.totalorder %v2996, 0
      %vm3075 = vcmp.lt.s32.totalorder %v3003, 0
      %vm3076 = vcmp.lt.s32.totalorder %v3010, 0
      %vm3077 = vcmp.lt.s32.totalorder %v3017, 0
      %vm3078 = vcmp.lt.s32.totalorder %v3024, 0
      %vm3079 = vcmp.lt.s32.totalorder %v3031, 0
      %vm3080 = vmand %vm3056, %vm3032
      %vm3081 = vmand %vm3057, %vm3033
      %vm3082 = vmand %vm3058, %vm3034
      %vm3083 = vmand %vm3059, %vm3035
      %vm3084 = vmand %vm3060, %vm3036
      %vm3085 = vmand %vm3061, %vm3037
      %vm3086 = vmand %vm3062, %vm3038
      %vm3087 = vmand %vm3063, %vm3039
      %vm3088 = vmand %vm3064, %vm3040
      %vm3089 = vmand %vm3065, %vm3041
      %vm3090 = vmand %vm3066, %vm3042
      %vm3091 = vmand %vm3067, %vm3043
      %vm3092 = vmand %vm3068, %vm3044
      %vm3093 = vmand %vm3069, %vm3045
      %vm3094 = vmand %vm3070, %vm3046
      %vm3095 = vmand %vm3071, %vm3047
      %vm3096 = vmand %vm3072, %vm3048
      %vm3097 = vmand %vm3073, %vm3049
      %vm3098 = vmand %vm3074, %vm3050
      %vm3099 = vmand %vm3075, %vm3051
      %vm3100 = vmand %vm3076, %vm3052
      %vm3101 = vmand %vm3077, %vm3053
      %vm3102 = vmand %vm3078, %vm3054
      %vm3103 = vmand %vm3079, %vm3055
      %v3104 = vadd.s32 %v2870, 16
      %v3105 = vadd.s32 %v2877, 16
      %v3106 = vadd.s32 %v2884, 16
      %v3107 = vadd.s32 %v2891, 16
      %v3108 = vadd.s32 %v2898, 16
      %v3109 = vadd.s32 %v2905, 16
      %v3110 = vadd.s32 %v2912, 16
      %v3111 = vadd.s32 %v2919, 16
      %v3112 = vadd.s32 %v2926, 16
      %v3113 = vadd.s32 %v2933, 16
      %v3114 = vadd.s32 %v2940, 16
      %v3115 = vadd.s32 %v2947, 16
      %v3116 = vadd.s32 %v2954, 16
      %v3117 = vadd.s32 %v2961, 16
      %v3118 = vadd.s32 %v2968, 16
      %v3119 = vadd.s32 %v2975, 16
      %v3120 = vadd.s32 %v2982, 16
      %v3121 = vadd.s32 %v2989, 16
      %v3122 = vadd.s32 %v2996, 16
      %v3123 = vadd.s32 %v3003, 16
      %v3124 = vadd.s32 %v3010, 16
      %v3125 = vadd.s32 %v3017, 16
      %v3126 = vadd.s32 %v3024, 16
      %v3127 = vadd.s32 %v3031, 16
      %v3128 = vsel %vm3080, %v3104, %v2870
      %v3129 = vsel %vm3081, %v3105, %v2877
      %v3130 = vsel %vm3082, %v3106, %v2884
      %v3131 = vsel %vm3083, %v3107, %v2891
      %v3132 = vsel %vm3084, %v3108, %v2898
      %v3133 = vsel %vm3085, %v3109, %v2905
      %v3134 = vsel %vm3086, %v3110, %v2912
      %v3135 = vsel %vm3087, %v3111, %v2919
      %v3136 = vsel %vm3088, %v3112, %v2926
      %v3137 = vsel %vm3089, %v3113, %v2933
      %v3138 = vsel %vm3090, %v3114, %v2940
      %v3139 = vsel %vm3091, %v3115, %v2947
      %v3140 = vsel %vm3092, %v3116, %v2954
      %v3141 = vsel %vm3093, %v3117, %v2961
      %v3142 = vsel %vm3094, %v3118, %v2968
      %v3143 = vsel %vm3095, %v3119, %v2975
      %v3144 = vsel %vm3096, %v3120, %v2982
      %v3145 = vsel %vm3097, %v3121, %v2989
      %v3146 = vsel %vm3098, %v3122, %v2996
      %v3147 = vsel %vm3099, %v3123, %v3003
      %v3148 = vsel %vm3100, %v3124, %v3010
      %v3149 = vsel %vm3101, %v3125, %v3017
      %v3150 = vsel %vm3102, %v3126, %v3024
      %v3151 = vsel %vm3103, %v3127, %v3031
      %vm3152 = vcmp.lt.s32.totalorder %v3128, 12
      %vm3153 = vcmp.lt.s32.totalorder %v3129, 12
      %vm3154 = vcmp.lt.s32.totalorder %v3130, 12
      %vm3155 = vcmp.lt.s32.totalorder %v3131, 12
      %vm3156 = vcmp.lt.s32.totalorder %v3132, 12
      %vm3157 = vcmp.lt.s32.totalorder %v3133, 12
      %vm3158 = vcmp.lt.s32.totalorder %v3134, 12
      %vm3159 = vcmp.lt.s32.totalorder %v3135, 12
      %vm3160 = vcmp.lt.s32.totalorder %v3136, 12
      %vm3161 = vcmp.lt.s32.totalorder %v3137, 12
      %vm3162 = vcmp.lt.s32.totalorder %v3138, 12
      %vm3163 = vcmp.lt.s32.totalorder %v3139, 12
      %vm3164 = vcmp.lt.s32.totalorder %v3140, 12
      %vm3165 = vcmp.lt.s32.totalorder %v3141, 12
      %vm3166 = vcmp.lt.s32.totalorder %v3142, 12
      %vm3167 = vcmp.lt.s32.totalorder %v3143, 12
      %vm3168 = vcmp.lt.s32.totalorder %v3144, 12
      %vm3169 = vcmp.lt.s32.totalorder %v3145, 12
      %vm3170 = vcmp.lt.s32.totalorder %v3146, 12
      %vm3171 = vcmp.lt.s32.totalorder %v3147, 12
      %vm3172 = vcmp.lt.s32.totalorder %v3148, 12
      %vm3173 = vcmp.lt.s32.totalorder %v3149, 12
      %vm3174 = vcmp.lt.s32.totalorder %v3150, 12
      %vm3175 = vcmp.lt.s32.totalorder %v3151, 12
      %v3176 = vsel %vm3152, 1, 0
      %v3177 = vsel %vm3153, 1, 0
      %v3178 = vsel %vm3154, 1, 0
      %v3179 = vsel %vm3155, 1, 0
      %v3180 = vsel %vm3156, 1, 0
      %v3181 = vsel %vm3157, 1, 0
      %v3182 = vsel %vm3158, 1, 0
      %v3183 = vsel %vm3159, 1, 0
      %v3184 = vsel %vm3160, 1, 0
      %v3185 = vsel %vm3161, 1, 0
      %v3186 = vsel %vm3162, 1, 0
      %v3187 = vsel %vm3163, 1, 0
      %v3188 = vsel %vm3164, 1, 0
      %v3189 = vsel %vm3165, 1, 0
      %v3190 = vsel %vm3166, 1, 0
      %v3191 = vsel %vm3167, 1, 0
      %v3192 = vsel %vm3168, 1, 0
      %v3193 = vsel %vm3169, 1, 0
      %v3194 = vsel %vm3170, 1, 0
      %v3195 = vsel %vm3171, 1, 0
      %v3196 = vsel %vm3172, 1, 0
      %v3197 = vsel %vm3173, 1, 0
      %v3198 = vsel %vm3174, 1, 0
      %v3199 = vsel %vm3175, 1, 0
      %vm3200 = vcmp.eq.s32.totalorder %v3176, 1
      %vm3201 = vcmp.eq.s32.totalorder %v3177, 1
      %vm3202 = vcmp.eq.s32.totalorder %v3178, 1
      %vm3203 = vcmp.eq.s32.totalorder %v3179, 1
      %vm3204 = vcmp.eq.s32.totalorder %v3180, 1
      %vm3205 = vcmp.eq.s32.totalorder %v3181, 1
      %vm3206 = vcmp.eq.s32.totalorder %v3182, 1
      %vm3207 = vcmp.eq.s32.totalorder %v3183, 1
      %vm3208 = vcmp.eq.s32.totalorder %v3184, 1
      %vm3209 = vcmp.eq.s32.totalorder %v3185, 1
      %vm3210 = vcmp.eq.s32.totalorder %v3186, 1
      %vm3211 = vcmp.eq.s32.totalorder %v3187, 1
      %vm3212 = vcmp.eq.s32.totalorder %v3188, 1
      %vm3213 = vcmp.eq.s32.totalorder %v3189, 1
      %vm3214 = vcmp.eq.s32.totalorder %v3190, 1
      %vm3215 = vcmp.eq.s32.totalorder %v3191, 1
      %vm3216 = vcmp.eq.s32.totalorder %v3192, 1
      %vm3217 = vcmp.eq.s32.totalorder %v3193, 1
      %vm3218 = vcmp.eq.s32.totalorder %v3194, 1
      %vm3219 = vcmp.eq.s32.totalorder %v3195, 1
      %vm3220 = vcmp.eq.s32.totalorder %v3196, 1
      %vm3221 = vcmp.eq.s32.totalorder %v3197, 1
      %vm3222 = vcmp.eq.s32.totalorder %v3198, 1
      %vm3223 = vcmp.eq.s32.totalorder %v3199, 1
      %v3224 = vsel %vm3200, %v2788, 0.0
      %v3225 = vsel %vm3201, %v2789, 0.0
      %v3226 = vsel %vm3202, %v2790, 0.0
      %v3227 = vsel %vm3203, %v2791, 0.0
      %v3228 = vsel %vm3204, %v2792, 0.0
      %v3229 = vsel %vm3205, %v2793, 0.0
      %v3230 = vsel %vm3206, %v2794, 0.0
      %v3231 = vsel %vm3207, %v2795, 0.0
      %v3232 = vsel %vm3208, %v2796, 0.0
      %v3233 = vsel %vm3209, %v2797, 0.0
      %v3234 = vsel %vm3210, %v2798, 0.0
      %v3235 = vsel %vm3211, %v2799, 0.0
      %v3236 = vsel %vm3212, %v2800, 0.0
      %v3237 = vsel %vm3213, %v2801, 0.0
      %v3238 = vsel %vm3214, %v2802, 0.0
      %v3239 = vsel %vm3215, %v2803, 0.0
      %v3240 = vsel %vm3216, %v2804, 0.0
      %v3241 = vsel %vm3217, %v2805, 0.0
      %v3242 = vsel %vm3218, %v2806, 0.0
      %v3243 = vsel %vm3219, %v2807, 0.0
      %v3244 = vsel %vm3220, %v2808, 0.0
      %v3245 = vsel %vm3221, %v2809, 0.0
      %v3246 = vsel %vm3222, %v2810, 0.0
      %v3247 = vsel %vm3223, %v2811, 0.0
      %v3248 = vsel %vm370, %v3224, 0.0
      %v3249 = vsel %vm370, %v3225, 0.0
      %v3250 = vadd.f32 %v3248, %v3249
      %v3251 = vsel %vm370, %v3226, 0.0
      %v3252 = vadd.f32 %v3250, %v3251
      %v3253 = vsel %vm370, %v3227, 0.0
      %v3254 = vadd.f32 %v3252, %v3253
      %v3255 = vsel %vm370, %v3228, 0.0
      %v3256 = vadd.f32 %v3254, %v3255
      %v3257 = vsel %vm370, %v3229, 0.0
      %v3258 = vadd.f32 %v3256, %v3257
      %v3259 = vsel %vm370, %v3230, 0.0
      %v3260 = vadd.f32 %v3258, %v3259
      %v3261 = vsel %vm370, %v3231, 0.0
      %v3262 = vadd.f32 %v3260, %v3261
      %v3263 = vsel %vm370, %v3232, 0.0
      %v3264 = vadd.f32 %v3262, %v3263
      %v3265 = vsel %vm370, %v3233, 0.0
      %v3266 = vadd.f32 %v3264, %v3265
      %v3267 = vsel %vm370, %v3234, 0.0
      %v3268 = vadd.f32 %v3266, %v3267
      %v3269 = vsel %vm370, %v3235, 0.0
      %v3270 = vadd.f32 %v3268, %v3269
      %v3271 = vsel %vm370, %v3236, 0.0
      %v3272 = vadd.f32 %v3270, %v3271
      %v3273 = vsel %vm370, %v3237, 0.0
      %v3274 = vadd.f32 %v3272, %v3273
      %v3275 = vsel %vm370, %v3238, 0.0
      %v3276 = vadd.f32 %v3274, %v3275
      %v3277 = vsel %vm370, %v3239, 0.0
      %v3278 = vadd.f32 %v3276, %v3277
      %v3279 = vsel %vm370, %v3240, 0.0
      %v3280 = vadd.f32 %v3278, %v3279
      %v3281 = vsel %vm370, %v3241, 0.0
      %v3282 = vadd.f32 %v3280, %v3281
      %v3283 = vsel %vm370, %v3242, 0.0
      %v3284 = vadd.f32 %v3282, %v3283
      %v3285 = vsel %vm370, %v3243, 0.0
      %v3286 = vadd.f32 %v3284, %v3285
      %v3287 = vsel %vm370, %v3244, 0.0
      %v3288 = vadd.f32 %v3286, %v3287
      %v3289 = vsel %vm370, %v3245, 0.0
      %v3290 = vadd.f32 %v3288, %v3289
      %v3291 = vsel %vm370, %v3246, 0.0
      %v3292 = vadd.f32 %v3290, %v3291
      %v3293 = vsel %vm2835, %v3247, 0.0
      %v3294 = vadd.f32 %v3292, %v3293
      %v3295 = vrot.slane %v3294, 4
      %v3296 = vadd.f32 %v3294, %v3295
      %v3297 = vrot.slane %v3296, 2
      %v3298 = vadd.f32 %v3296, %v3297
      %v3299 = vrot.slane %v3298, 1
      %v3300 = vadd.f32 %v3298, %v3299
      %vm3301 = vcmask 24576
      %3302 = vst.msk [vmem:[%s262] sm:$0x1] %vm3301, %v3300
      %v3303 = vmul.f32 %v3224, %v3224
      %v3304 = vmul.f32 %v3225, %v3225
      %v3305 = vmul.f32 %v3226, %v3226
      %v3306 = vmul.f32 %v3227, %v3227
      %v3307 = vmul.f32 %v3228, %v3228
      %v3308 = vmul.f32 %v3229, %v3229
      %v3309 = vmul.f32 %v3230, %v3230
      %v3310 = vmul.f32 %v3231, %v3231
      %v3311 = vmul.f32 %v3232, %v3232
      %v3312 = vmul.f32 %v3233, %v3233
      %v3313 = vmul.f32 %v3234, %v3234
      %v3314 = vmul.f32 %v3235, %v3235
      %v3315 = vmul.f32 %v3236, %v3236
      %v3316 = vmul.f32 %v3237, %v3237
      %v3317 = vmul.f32 %v3238, %v3238
      %v3318 = vmul.f32 %v3239, %v3239
      %v3319 = vmul.f32 %v3240, %v3240
      %v3320 = vmul.f32 %v3241, %v3241
      %v3321 = vmul.f32 %v3242, %v3242
      %v3322 = vmul.f32 %v3243, %v3243
      %v3323 = vmul.f32 %v3244, %v3244
      %v3324 = vmul.f32 %v3245, %v3245
      %v3325 = vmul.f32 %v3246, %v3246
      %v3326 = vmul.f32 %v3247, %v3247
      %v3327 = vsel %vm370, %v3303, 0.0
      %v3328 = vsel %vm370, %v3304, 0.0
      %v3329 = vadd.f32 %v3327, %v3328
      %v3330 = vsel %vm370, %v3305, 0.0
      %v3331 = vadd.f32 %v3329, %v3330
      %v3332 = vsel %vm370, %v3306, 0.0
      %v3333 = vadd.f32 %v3331, %v3332
      %v3334 = vsel %vm370, %v3307, 0.0
      %v3335 = vadd.f32 %v3333, %v3334
      %v3336 = vsel %vm370, %v3308, 0.0
      %v3337 = vadd.f32 %v3335, %v3336
      %v3338 = vsel %vm370, %v3309, 0.0
      %v3339 = vadd.f32 %v3337, %v3338
      %v3340 = vsel %vm370, %v3310, 0.0
      %v3341 = vadd.f32 %v3339, %v3340
      %v3342 = vsel %vm370, %v3311, 0.0
      %v3343 = vadd.f32 %v3341, %v3342
      %v3344 = vsel %vm370, %v3312, 0.0
      %v3345 = vadd.f32 %v3343, %v3344
      %v3346 = vsel %vm370, %v3313, 0.0
      %v3347 = vadd.f32 %v3345, %v3346
      %v3348 = vsel %vm370, %v3314, 0.0
      %v3349 = vadd.f32 %v3347, %v3348
      %v3350 = vsel %vm370, %v3315, 0.0
      %v3351 = vadd.f32 %v3349, %v3350
      %v3352 = vsel %vm370, %v3316, 0.0
      %v3353 = vadd.f32 %v3351, %v3352
      %v3354 = vsel %vm370, %v3317, 0.0
      %v3355 = vadd.f32 %v3353, %v3354
      %v3356 = vsel %vm370, %v3318, 0.0
      %v3357 = vadd.f32 %v3355, %v3356
      %v3358 = vsel %vm370, %v3319, 0.0
      %v3359 = vadd.f32 %v3357, %v3358
      %v3360 = vsel %vm370, %v3320, 0.0
      %v3361 = vadd.f32 %v3359, %v3360
      %v3362 = vsel %vm370, %v3321, 0.0
      %v3363 = vadd.f32 %v3361, %v3362
      %v3364 = vsel %vm370, %v3322, 0.0
      %v3365 = vadd.f32 %v3363, %v3364
      %v3366 = vsel %vm370, %v3323, 0.0
      %v3367 = vadd.f32 %v3365, %v3366
      %v3368 = vsel %vm370, %v3324, 0.0
      %v3369 = vadd.f32 %v3367, %v3368
      %v3370 = vsel %vm370, %v3325, 0.0
      %v3371 = vadd.f32 %v3369, %v3370
      %v3372 = vsel %vm2835, %v3326, 0.0
      %v3373 = vadd.f32 %v3371, %v3372
      %v3374 = vrot.slane %v3373, 4
      %v3375 = vadd.f32 %v3373, %v3374
      %v3376 = vrot.slane %v3375, 2
      %v3377 = vadd.f32 %v3375, %v3376
      %v3378 = vrot.slane %v3377, 1
      %v3379 = vadd.f32 %v3377, %v3378
      %3380 = vst.msk [vmem:[%s262 + $0x1] sm:$0x1] %vm3301, %v3379
      %p3381 = scmp.lt.s32.totalorder %s18, 1
      %s3382 = scalar_select %p3381, %s18, 1
      %s3383 = smul.addr %s3382, 24
      %s3384 = smul.addr %s3383, 8
      %s3385 = scalar_lea.vmem %s5, %s3384
      %p3386 = scmp.lt.s32.totalorder %s18, 1
      %s3387 = scalar_select %p3386, %s18, 1
      %s3388 = smul.addr %s3387, 2
      %s3389 = scalar_lea.vmem %s6, %s3388
      // Predicated region
      $region41: #{up_step_forward.6} parent=39 // pred_check
        %p3390 = pneg %p146
      $region42: #{up_step_forward.6} parent=39 // pred_check_branch
        %3392 = sbr.rel (%p3390) target = $region44
      $region43: #{up_step_forward.6} parent=39 // pred_region
        _
      $region44: #{up_step_forward.6} parent=39 // pred_fallthru
        _
      // Predicated region
      $region45: #{up_step_forward.6} parent=39 // pred_check
        %p3393 = pneg %p172
      $region46: #{up_step_forward.6} parent=39 // pred_check_branch
        %3395 = sbr.rel (%p3393) target = $region48
      $region47: #{up_step_forward.6} parent=39 // pred_region
        _
      $region48: #{up_step_forward.6} parent=39 // pred_fallthru
        _
    $region40: #{up_step_forward.6} parent=5 // pred_fallthru
      _
    %p3396 = scmp.le.s32.totalorder 2, %s13
    // Predicated region
    $region49: #{up_step_forward.6} parent=5 // pred_check
      %p3397 = pneg %p3396
    $region50: #{up_step_forward.6} parent=5 // pred_check_branch
      %3399 = sbr.rel (%p3397) target = $region52
    $region51: #{up_step_forward.6} parent=5 // pred_region
      %s3400 = ssub.s32 %s13, 2
      // Predicated region
      $region53: #{up_step_forward.6} parent=51 // pred_check
        %p3401 = pneg %p152
      $region54: #{up_step_forward.6} parent=51 // pred_check_branch
        %3403 = sbr.rel (%p3401) target = $region56
      $region55: #{up_step_forward.6} parent=51 // pred_region
        %p3404 = scmp.lt.s32.totalorder %s19, 1
        %s3405 = scalar_select %p3404, %s19, 1
        %s3406 = smul.addr %s3405, 24
        %s3407 = smul.addr %s3406, 8
        %s3408 = scalar_lea.vmem %s5, %s3407
      $region56: #{up_step_forward.6} parent=51 // pred_fallthru
        _
      // Predicated region
      $region57: #{up_step_forward.6} parent=51 // pred_check
        %p3409 = pneg %p178
      $region58: #{up_step_forward.6} parent=51 // pred_check_branch
        %3411 = sbr.rel (%p3409) target = $region60
      $region59: #{up_step_forward.6} parent=51 // pred_region
        %p3412 = scmp.lt.s32.totalorder %s19, 1
        %s3413 = scalar_select %p3412, %s19, 1
        %s3414 = smul.addr %s3413, 2
        %s3415 = scalar_lea.vmem %s6, %s3414
      $region60: #{up_step_forward.6} parent=51 // pred_fallthru
        _
    $region52: #{up_step_forward.6} parent=5 // pred_fallthru
      _
  $region6: #{up_step_forward.6} parent=0 // loop_footer
    %s17 = sadd.s32 1, %s13
  $region7: #{up_step_forward.6} parent=0 // loop_footer_branch
    %12 = sbr.rel target = $region3
  $region8: #{up_step_forward.6} parent=0 // loop_exit
    _

// kernel: up_step_forward.5
$region0: #{up_step_forward.5}
  #allocation0 [shape = 'u32[]', space=smem, size = 0x4, offset = 0x4, fixed_abs, tag = 'smem constant byte address 0x4 - core index']
  #allocation1 [shape = 'u32[144,128]{1,0:T(1,128)}', space=vmem, size = 0x12000, scoped, tag = 'internal scratch']
  %s0 = inlined_call_operand.vmem [shape: f32[2,256,4], index: 0, kind: input, shape index: {}]
  %s1 = inlined_call_operand.vmem [shape: f32[2,256,4], index: 1, kind: input, shape index: {}]
  %s2 = inlined_call_operand.vmem [shape: bf16[9,4,4], index: 2, kind: input, shape index: {}]
  %s3 = inlined_call_operand.vmem [shape: bf16[9,4,4], index: 3, kind: input, shape index: {}]
  %s4 = inlined_call_operand.vmem [shape: f32[1,4], index: 4, kind: input, shape index: {}]
  %s5 = inlined_call_operand.vmem [shape: f32[2,224,4], index: 5, kind: output, shape index: {0}]
  %s6 = inlined_call_operand.vmem [shape: f32[2,2,4], index: 6, kind: output, shape index: {1}]
  %7 = xla_tuple %s5, %s6
  %s8 = sld [smem:[#allocation0]]
  $region61: #{up_step_forward.5} parent=0
    _
  %s10 = ssub.s32 1, %s8
  %s11 = scalar_select 0, %s10, %s8
  loop: start=0, step=1, limit=4
  $region2: #{up_step_forward.5} parent=0 // loop_pre_header
    _
  $region3: #{up_step_forward.5} parent=0 // loop_header
    %s13 = sphi 0, %s17
    %p14 = scmp.ge.s32.totalorder %s13, 4
    %s23 = sphi 0, %s25
    %s26 = sphi 0, %s23
    %s27 = sphi 0, %s26
    %s43 = sphi 0, %s27
    %s49 = sphi 0, %s51
    %s52 = sphi 0, %s49
    %s53 = sphi 0, %s52
    %s69 = sphi 0, %s53
    %s73 = sphi 0, %s73
    %s75 = sphi 0, %s73
    %s76 = sphi 0, %s75
    %s90 = sphi 0, %s76
    %s94 = sphi 0, %s94
    %s96 = sphi 0, %s94
    %s97 = sphi 0, %s96
    %s111 = sphi 0, %s97
    %s115 = sphi 0, %s115
    %s117 = sphi 0, %s115
    %s118 = sphi 0, %s117
    %s132 = sphi 0, %s118
    %s138 = sphi 0, %s140
    %s141 = sphi 0, %s138
    %s142 = sphi 0, %s141
    %s158 = sphi 0, %s142
    %s164 = sphi 0, %s166
    %s167 = sphi 0, %s164
    %s168 = sphi 0, %s167
    %s184 = sphi 0, %s168
  $region4: #{up_step_forward.5} parent=0 // loop_header_branch
    %16 = sbr.rel (%p14) target = $region8
  $region5: #{up_step_forward.5} parent=0 // loop_body
    %s18 = ssub.s32 %s13, 1
    %s19 = ssub.s32 %s13, 2
    %s20 = sadd.s32 %s13, 1
    %s21 = ssub.s32 %s13, %s20
    %p22 = scmp.eq.s32.totalorder %s21, 0
    %s24 = sadd.s32 %s23, 1
    %s25 = scalar_select %p22, %s23, %s24
    %p28 = pneg %p22
    %p29 = scmp.eq.s32.totalorder %s13, 1
    %p30 = por %p28, %p29
    %p31 = scmp.ne.s32.totalorder %s23, %s26
    %p32 = scmp.eq.s32.totalorder %s13, 0
    %p33 = por %p31, %p32
    %p34 = scmp.ne.s32.totalorder %s23, %s26
    %p35 = scmp.eq.s32.totalorder %s18, 1
    %p36 = por %p34, %p35
    %p37 = scmp.ne.s32.totalorder %s26, %s27
    %p38 = scmp.eq.s32.totalorder %s18, 0
    %p39 = por %p37, %p38
    %p40 = scmp.ne.s32.totalorder %s26, %s27
    %p41 = scmp.eq.s32.totalorder %s19, 1
    %p42 = por %p40, %p41
    %p44 = scmp.ne.s32.totalorder %s27, %s43
    %p45 = scmp.eq.s32.totalorder %s19, 0
    %p46 = por %p44, %p45
    %s47 = ssub.s32 %s13, %s20
    %p48 = scmp.eq.s32.totalorder %s47, 0
    %s50 = sadd.s32 %s49, 1
    %s51 = scalar_select %p48, %s49, %s50
    %p54 = pneg %p48
    %p55 = scmp.eq.s32.totalorder %s13, 1
    %p56 = por %p54, %p55
    %p57 = scmp.ne.s32.totalorder %s49, %s52
    %p58 = scmp.eq.s32.totalorder %s13, 0
    %p59 = por %p57, %p58
    %p60 = scmp.ne.s32.totalorder %s49, %s52
    %p61 = scmp.eq.s32.totalorder %s18, 1
    %p62 = por %p60, %p61
    %p63 = scmp.ne.s32.totalorder %s52, %s53
    %p64 = scmp.eq.s32.totalorder %s18, 0
    %p65 = por %p63, %p64
    %p66 = scmp.ne.s32.totalorder %s52, %s53
    %p67 = scmp.eq.s32.totalorder %s19, 1
    %p68 = por %p66, %p67
    %p70 = scmp.ne.s32.totalorder %s53, %s69
    %p71 = scmp.eq.s32.totalorder %s19, 0
    %p72 = por %p70, %p71
    %s74 = sadd.s32 %s73, 1
    %p77 = scmp.eq.s32.totalorder %s13, 1
    %p78 = scmp.ne.s32.totalorder %s73, %s75
    %p79 = scmp.eq.s32.totalorder %s13, 0
    %p80 = por %p78, %p79
    %p81 = scmp.ne.s32.totalorder %s73, %s75
    %p82 = scmp.eq.s32.totalorder %s18, 1
    %p83 = por %p81, %p82
    %p84 = scmp.ne.s32.totalorder %s75, %s76
    %p85 = scmp.eq.s32.totalorder %s18, 0
    %p86 = por %p84, %p85
    %p87 = scmp.ne.s32.totalorder %s75, %s76
    %p88 = scmp.eq.s32.totalorder %s19, 1
    %p89 = por %p87, %p88
    %p91 = scmp.ne.s32.totalorder %s76, %s90
    %p92 = scmp.eq.s32.totalorder %s19, 0
    %p93 = por %p91, %p92
    %s95 = sadd.s32 %s94, 1
    %p98 = scmp.eq.s32.totalorder %s13, 1
    %p99 = scmp.ne.s32.totalorder %s94, %s96
    %p100 = scmp.eq.s32.totalorder %s13, 0
    %p101 = por %p99, %p100
    %p102 = scmp.ne.s32.totalorder %s94, %s96
    %p103 = scmp.eq.s32.totalorder %s18, 1
    %p104 = por %p102, %p103
    %p105 = scmp.ne.s32.totalorder %s96, %s97
    %p106 = scmp.eq.s32.totalorder %s18, 0
    %p107 = por %p105, %p106
    %p108 = scmp.ne.s32.totalorder %s96, %s97
    %p109 = scmp.eq.s32.totalorder %s19, 1
    %p110 = por %p108, %p109
    %p112 = scmp.ne.s32.totalorder %s97, %s111
    %p113 = scmp.eq.s32.totalorder %s19, 0
    %p114 = por %p112, %p113
    %s116 = sadd.s32 %s115, 1
    %p119 = scmp.eq.s32.totalorder %s13, 1
    %p120 = scmp.ne.s32.totalorder %s115, %s117
    %p121 = scmp.eq.s32.totalorder %s13, 0
    %p122 = por %p120, %p121
    %p123 = scmp.ne.s32.totalorder %s115, %s117
    %p124 = scmp.eq.s32.totalorder %s18, 1
    %p125 = por %p123, %p124
    %p126 = scmp.ne.s32.totalorder %s117, %s118
    %p127 = scmp.eq.s32.totalorder %s18, 0
    %p128 = por %p126, %p127
    %p129 = scmp.ne.s32.totalorder %s117, %s118
    %p130 = scmp.eq.s32.totalorder %s19, 1
    %p131 = por %p129, %p130
    %p133 = scmp.ne.s32.totalorder %s118, %s132
    %p134 = scmp.eq.s32.totalorder %s19, 0
    %p135 = por %p133, %p134
    %s136 = ssub.s32 %s13, %s20
    %p137 = scmp.eq.s32.totalorder %s136, 0
    %s139 = sadd.s32 %s138, 1
    %s140 = scalar_select %p137, %s138, %s139
    %p143 = pneg %p137
    %p144 = scmp.eq.s32.totalorder %s13, 1
    %p145 = por %p143, %p144
    %p146 = scmp.ne.s32.totalorder %s138, %s141
    %p147 = scmp.eq.s32.totalorder %s13, 0
    %p148 = por %p146, %p147
    %p149 = scmp.ne.s32.totalorder %s138, %s141
    %p150 = scmp.eq.s32.totalorder %s18, 1
    %p151 = por %p149, %p150
    %p152 = scmp.ne.s32.totalorder %s141, %s142
    %p153 = scmp.eq.s32.totalorder %s18, 0
    %p154 = por %p152, %p153
    %p155 = scmp.ne.s32.totalorder %s141, %s142
    %p156 = scmp.eq.s32.totalorder %s19, 1
    %p157 = por %p155, %p156
    %p159 = scmp.ne.s32.totalorder %s142, %s158
    %p160 = scmp.eq.s32.totalorder %s19, 0
    %p161 = por %p159, %p160
    %s162 = ssub.s32 %s13, %s20
    %p163 = scmp.eq.s32.totalorder %s162, 0
    %s165 = sadd.s32 %s164, 1
    %s166 = scalar_select %p163, %s164, %s165
    %p169 = pneg %p163
    %p170 = scmp.eq.s32.totalorder %s13, 1
    %p171 = por %p169, %p170
    %p172 = scmp.ne.s32.totalorder %s164, %s167
    %p173 = scmp.eq.s32.totalorder %s13, 0
    %p174 = por %p172, %p173
    %p175 = scmp.ne.s32.totalorder %s164, %s167
    %p176 = scmp.eq.s32.totalorder %s18, 1
    %p177 = por %p175, %p176
    %p178 = scmp.ne.s32.totalorder %s167, %s168
    %p179 = scmp.eq.s32.totalorder %s18, 0
    %p180 = por %p178, %p179
    %p181 = scmp.ne.s32.totalorder %s167, %s168
    %p182 = scmp.eq.s32.totalorder %s19, 1
    %p183 = por %p181, %p182
    %p185 = scmp.ne.s32.totalorder %s168, %s184
    %p186 = scmp.eq.s32.totalorder %s19, 0
    %p187 = por %p185, %p186
    %p188 = scmp.le.s32.totalorder 1, %s13
    %p189 = scmp.lt.s32.totalorder %s13, 3
    %p190 = pnand %p188, %p189
    %p191 = pneg %p190
    // Predicated region
    $region9: #{up_step_forward.5} parent=5 // pred_check
      _
    $region10: #{up_step_forward.5} parent=5 // pred_check_branch
      %193 = sbr.rel (%p190) target = $region12
    $region11: #{up_step_forward.5} parent=5 // pred_region
      %s194 = ssub.s32 %s13, 1
      // Predicated region
      $region13: #{up_step_forward.5} parent=11 // pred_check
        %p195 = pneg %p86
      $region14: #{up_step_forward.5} parent=11 // pred_check_branch
        %197 = sbr.rel (%p195) target = $region16
      $region15: #{up_step_forward.5} parent=11 // pred_region
        _
      $region16: #{up_step_forward.5} parent=11 // pred_fallthru
        _
      // Predicated region
      $region17: #{up_step_forward.5} parent=11 // pred_check
        %p198 = pneg %p107
      $region18: #{up_step_forward.5} parent=11 // pred_check_branch
        %200 = sbr.rel (%p198) target = $region20
      $region19: #{up_step_forward.5} parent=11 // pred_region
        _
      $region20: #{up_step_forward.5} parent=11 // pred_fallthru
        _
      // Predicated region
      $region21: #{up_step_forward.5} parent=11 // pred_check
        %p201 = pneg %p128
      $region22: #{up_step_forward.5} parent=11 // pred_check_branch
        %203 = sbr.rel (%p201) target = $region24
      $region23: #{up_step_forward.5} parent=11 // pred_region
        _
      $region24: #{up_step_forward.5} parent=11 // pred_fallthru
        _
    $region12: #{up_step_forward.5} parent=5 // pred_fallthru
      _
    %p204 = scmp.lt.s32.totalorder %s13, 2
    // Predicated region
    $region25: #{up_step_forward.5} parent=5 // pred_check
      %p205 = pneg %p204
    $region26: #{up_step_forward.5} parent=5 // pred_check_branch
      %207 = sbr.rel (%p205) target = $region28
    $region27: #{up_step_forward.5} parent=5 // pred_region
      // Predicated region
      $region29: #{up_step_forward.5} parent=27 // pred_check
        %p208 = pneg %p33
      $region30: #{up_step_forward.5} parent=27 // pred_check_branch
        %210 = sbr.rel (%p208) target = $region32
      $region31: #{up_step_forward.5} parent=27 // pred_region
        %p211 = scmp.lt.s32.totalorder %s13, 1
        %s212 = scalar_select %p211, %s13, 1
        %s213 = smul.addr %s212, 32
        %s214 = smul.addr %s213, 8
        %s215 = scalar_lea.vmem %s0, %s214
      $region32: #{up_step_forward.5} parent=27 // pred_fallthru
        _
      // Predicated region
      $region33: #{up_step_forward.5} parent=27 // pred_check
        %p216 = pneg %p59
      $region34: #{up_step_forward.5} parent=27 // pred_check_branch
        %218 = sbr.rel (%p216) target = $region36
      $region35: #{up_step_forward.5} parent=27 // pred_region
        %p219 = scmp.lt.s32.totalorder %s13, 1
        %s220 = scalar_select %p219, %s13, 1
        %s221 = smul.addr %s220, 32
        %s222 = smul.addr %s221, 8
        %s223 = scalar_lea.vmem %s1, %s222
      $region36: #{up_step_forward.5} parent=27 // pred_fallthru
        _
    $region28: #{up_step_forward.5} parent=5 // pred_fallthru
      _
    %p224 = scmp.le.s32.totalorder 1, %s13
    %p225 = scmp.lt.s32.totalorder %s13, 3
    %p226 = pnand %p224, %p225
    %p227 = pneg %p226
    // Predicated region
    $region37: #{up_step_forward.5} parent=5 // pred_check
      _
    $region38: #{up_step_forward.5} parent=5 // pred_check_branch
      %229 = sbr.rel (%p226) target = $region40
    $region39: #{up_step_forward.5} parent=5 // pred_region
      %s230 = ssub.s32 %s13, 1
      %p231 = scmp.lt.s32.totalorder %s18, 1
      %s232 = scalar_select %p231, %s18, 1
      %s233 = smul.addr %s232, 32
      %s234 = smul.addr %s233, 8
      %s235 = scalar_lea.vmem %s0, %s234
      %p236 = pneg %p39
      %p237 = pneg %p36
      %p238 = scmp.lt.s32.totalorder %s18, 1
      %s239 = scalar_select %p238, %s18, 1
      %s240 = smul.addr %s239, 32
      %s241 = smul.addr %s240, 8
      %s242 = scalar_lea.vmem %s1, %s241
      %p243 = pneg %p65
      %p244 = pneg %p62
      %p245 = pneg %p86
      %p246 = pneg %p83
      %p247 = pneg %p107
      %p248 = pneg %p104
      %p249 = pneg %p128
      %p250 = pneg %p125
      %p251 = pneg %p154
      %p252 = pneg %p151
      %p253 = scmp.lt.s32.totalorder %s18, 1
      %s254 = scalar_select %p253, %s18, 1
      %s255 = smul.addr %s254, 28
      %s256 = smul.addr %s255, 8
      %s257 = scalar_lea.vmem %s5, %s256
      %p258 = pneg %p180
      %p259 = pneg %p177
      %p260 = scmp.lt.s32.totalorder %s18, 1
      %s261 = scalar_select %p260, %s18, 1
      %s262 = smul.addr %s261, 2
      %s263 = scalar_lea.vmem %s6, %s262
      %p264 = scmp.lt.s32.totalorder %s18, 1
      %s265 = scalar_select %p264, %s18, 1
      %s266 = smul.addr %s265, 32
      %s267 = smul.addr %s266, 8
      %s268 = scalar_lea.vmem %s0, %s267
      %p269 = scmp.lt.s32.totalorder %s18, 1
      %s270 = scalar_select %p269, %s18, 1
      %s271 = smul.addr %s270, 32
      %s272 = smul.addr %s271, 8
      %s273 = scalar_lea.vmem %s1, %s272
      %p274 = scmp.lt.s32.totalorder %s18, 1
      %s275 = scalar_select %p274, %s18, 1
      %s276 = smul.addr %s275, 28
      %s277 = smul.addr %s276, 8
      %s278 = scalar_lea.vmem %s5, %s277
      %p279 = scmp.lt.s32.totalorder %s18, 1
      %s280 = scalar_select %p279, %s18, 1
      %s281 = smul.addr %s280, 2
      %s282 = scalar_lea.vmem %s6, %s281
      %v284 = vld [vmem:[%s4] sm:$0x1]
      %v286 = vlaneseq
      %v287 = vshrl.u32 %v286, 7
      %v288 = vsub.s32 0, %v287
      %v289 = vrot.slane %v284, %v288
      %v291 = vld [vmem:[%s268] sm:$0xff]
      %v292 = vld [vmem:[%s268 + $0x8] sm:$0xff]
      %v293 = vld [vmem:[%s268 + $0x10] sm:$0xff]
      %v294 = vld [vmem:[%s268 + $0x18] sm:$0xff]
      %v295 = vld [vmem:[%s268 + $0x20] sm:$0xff]
      %v296 = vld [vmem:[%s268 + $0x28] sm:$0xff]
      %v297 = vld [vmem:[%s268 + $0x30] sm:$0xff]
      %v298 = vld [vmem:[%s268 + $0x38] sm:$0xff]
      %v299 = vld [vmem:[%s268 + $0x40] sm:$0xff]
      %v300 = vld [vmem:[%s268 + $0x48] sm:$0xff]
      %v301 = vld [vmem:[%s268 + $0x50] sm:$0xff]
      %v302 = vld [vmem:[%s268 + $0x58] sm:$0xff]
      %v303 = vld [vmem:[%s268 + $0x60] sm:$0xff]
      %v304 = vld [vmem:[%s268 + $0x68] sm:$0xff]
      %v305 = vld [vmem:[%s268 + $0x70] sm:$0xff]
      %v306 = vld [vmem:[%s268 + $0x78] sm:$0xff]
      %v307 = vld [vmem:[%s268 + $0x80] sm:$0xff]
      %v308 = vld [vmem:[%s268 + $0x88] sm:$0xff]
      %v309 = vld [vmem:[%s268 + $0x90] sm:$0xff]
      %v310 = vld [vmem:[%s268 + $0x98] sm:$0xff]
      %v311 = vld [vmem:[%s268 + $0xa0] sm:$0xff]
      %v312 = vld [vmem:[%s268 + $0xa8] sm:$0xff]
      %v313 = vld [vmem:[%s268 + $0xb0] sm:$0xff]
      %v314 = vld [vmem:[%s268 + $0xb8] sm:$0xff]
      %v315 = vld [vmem:[%s268 + $0xc0] sm:$0xff]
      %v316 = vld [vmem:[%s268 + $0xc8] sm:$0xff]
      %v317 = vld [vmem:[%s268 + $0xd0] sm:$0xff]
      %v318 = vld [vmem:[%s268 + $0xd8] sm:$0x3f]
      %v319 = vpack.c.bf16 %v292, %v291
      %v320 = vpack.c.bf16 %v294, %v293
      %v321 = vpack.c.bf16 %v296, %v295
      %v322 = vpack.c.bf16 %v298, %v297
      %v323 = vpack.c.bf16 %v300, %v299
      %v324 = vpack.c.bf16 %v302, %v301
      %v325 = vpack.c.bf16 %v304, %v303
      %v326 = vpack.c.bf16 %v306, %v305
      %v327 = vpack.c.bf16 %v308, %v307
      %v328 = vpack.c.bf16 %v310, %v309
      %v329 = vpack.c.bf16 %v312, %v311
      %v330 = vpack.c.bf16 %v314, %v313
      %v331 = vpack.c.bf16 %v316, %v315
      %v332 = vpack.c.bf16 %v318, %v317
      %v333 = vld [vmem:[%s273] sm:$0xff]
      %v334 = vld [vmem:[%s273 + $0x8] sm:$0xff]
      %v335 = vld [vmem:[%s273 + $0x10] sm:$0xff]
      %v336 = vld [vmem:[%s273 + $0x18] sm:$0xff]
      %v337 = vld [vmem:[%s273 + $0x20] sm:$0xff]
      %v338 = vld [vmem:[%s273 + $0x28] sm:$0xff]
      %v339 = vld [vmem:[%s273 + $0x30] sm:$0xff]
      %v340 = vld [vmem:[%s273 + $0x38] sm:$0xff]
      %v341 = vld [vmem:[%s273 + $0x40] sm:$0xff]
      %v342 = vld [vmem:[%s273 + $0x48] sm:$0xff]
      %v343 = vld [vmem:[%s273 + $0x50] sm:$0xff]
      %v344 = vld [vmem:[%s273 + $0x58] sm:$0xff]
      %v345 = vld [vmem:[%s273 + $0x60] sm:$0xff]
      %v346 = vld [vmem:[%s273 + $0x68] sm:$0xff]
      %v347 = vld [vmem:[%s273 + $0x70] sm:$0xff]
      %v348 = vld [vmem:[%s273 + $0x78] sm:$0xff]
      %v349 = vld [vmem:[%s273 + $0x80] sm:$0xff]
      %v350 = vld [vmem:[%s273 + $0x88] sm:$0xff]
      %v351 = vld [vmem:[%s273 + $0x90] sm:$0xff]
      %v352 = vld [vmem:[%s273 + $0x98] sm:$0xff]
      %v353 = vld [vmem:[%s273 + $0xa0] sm:$0xff]
      %v354 = vld [vmem:[%s273 + $0xa8] sm:$0xff]
      %v355 = vld [vmem:[%s273 + $0xb0] sm:$0xff]
      %v356 = vld [vmem:[%s273 + $0xb8] sm:$0xff]
      %v357 = vld [vmem:[%s273 + $0xc0] sm:$0xff]
      %v358 = vld [vmem:[%s273 + $0xc8] sm:$0xff]
      %v359 = vld [vmem:[%s273 + $0xd0] sm:$0xff]
      %v360 = vld [vmem:[%s273 + $0xd8] sm:$0x3f]
      %v361 = vpack.c.bf16 %v334, %v333
      %v362 = vpack.c.bf16 %v336, %v335
      %v363 = vpack.c.bf16 %v338, %v337
      %v364 = vpack.c.bf16 %v340, %v339
      %v365 = vpack.c.bf16 %v342, %v341
      %v366 = vpack.c.bf16 %v344, %v343
      %v367 = vpack.c.bf16 %v346, %v345
      %v368 = vpack.c.bf16 %v348, %v347
      %v369 = vpack.c.bf16 %v350, %v349
      %v370 = vpack.c.bf16 %v352, %v351
      %v371 = vpack.c.bf16 %v354, %v353
      %v372 = vpack.c.bf16 %v356, %v355
      %v373 = vpack.c.bf16 %v358, %v357
      %v374 = vpack.c.bf16 %v360, %v359
      %v375 = vld [vmem:[%s2] sm:$0x3]
      %vm376 = vcmask 31744
      %v378 = vsel %vm376, %v319, 0
      %v381 = vsel %vm376, %v320, 0
      %v384 = vsel %vm376, %v321, 0
      %v387 = vsel %vm376, %v322, 0
      %v390 = vsel %vm376, %v323, 0
      %v393 = vsel %vm376, %v324, 0
      %v396 = vsel %vm376, %v325, 0
      %v399 = vsel %vm376, %v326, 0
      %v402 = vsel %vm376, %v327, 0
      %v405 = vsel %vm376, %v328, 0
      %v408 = vsel %vm376, %v329, 0
      %v411 = vsel %vm376, %v330, 0
      %v414 = vsel %vm376, %v331, 0
      %v417 = vsel %vm376, %v332, 0
      %vm419 = vcmask 1041408
      %v421 = vsel %vm419, %v375, 0
      %423 = vmatprep.subr.bf16.mxu0 0
      %424 = vmatpush1.bf16.msra.mxu0 %v421
      %425 = vmatprep.subr.bf16.mxu0 0
      %426 = vmatpush1.bf16.msra.mxu0 0
      %427 = vmatprep.subr.bf16.mxu0 0
      %428 = vmatpush1.bf16.msra.mxu0 0
      %429 = vmatprep.subr.bf16.mxu0 0
      %430 = vmatpush1.bf16.msra.mxu0 0
      %431 = vmatprep.subr.bf16.mxu0 0
      %432 = vmatpush1.bf16.msra.mxu0 0
      %433 = vmatprep.subr.bf16.mxu0 0
      %434 = vmatpush1.bf16.msra.mxu0 0
      %435 = vmatprep.subr.bf16.mxu0 0
      %436 = vmatpush1.bf16.msra.mxu0 0
      %437 = vmatprep.subr.bf16.mxu0 0
      %438 = vmatpush1.bf16.msra.mxu0 0
      %439 = vmatprep.subr.bf16.mxu0 0
      %440 = vmatpush1.bf16.msra.mxu0 0
      %441 = vmatprep.subr.bf16.mxu0 0
      %442 = vmatpush1.bf16.msra.mxu0 0
      %443 = vmatprep.subr.bf16.mxu0 0
      %444 = vmatpush1.bf16.msra.mxu0 0
      %445 = vmatprep.subr.bf16.mxu0 0
      %446 = vmatpush1.bf16.msra.mxu0 0
      %447 = vmatprep.subr.bf16.mxu0 0
      %448 = vmatpush1.bf16.msra.mxu0 0
      %449 = vmatprep.subr.bf16.mxu0 0
      %450 = vmatpush1.bf16.msra.mxu0 0
      %451 = vmatprep.subr.bf16.mxu0 0
      %452 = vmatpush1.bf16.msra.mxu0 0
      %453 = vmatprep.subr.bf16.mxu0 0
      %454 = vmatpush1.bf16.msra.mxu0 0
      %455 = vmatprep.mubr.bf16.mxu0 0
      %456 = vmatmul.mubr.bf16.gmra.mrb[0].mxu0 %v378
      %v457 = vpop.f32.mrb[0].mxu0
      %v458 = vadd.f32 0.0, %v457
      %v459 = vpop.f32.mrb[0].mxu0
      %v460 = vpop.f32.mrb[0].mxu0
      %v461 = vadd.f32 0.0, %v460
      %v462 = vpop.f32.mrb[0].mxu0
      %463 = vmatprep.mubr.bf16.mxu0 0
      %464 = vmatmul.mubr.bf16.gmra.mrb[0].mxu0 %v381
      %v465 = vpop.f32.mrb[0].mxu0
      %v466 = vadd.f32 0.0, %v465
      %v467 = vpop.f32.mrb[0].mxu0
      %v468 = vpop.f32.mrb[0].mxu0
      %v469 = vadd.f32 0.0, %v468
      %v470 = vpop.f32.mrb[0].mxu0
      %471 = vmatprep.mubr.bf16.mxu0 0
      %472 = vmatmul.mubr.bf16.gmra.mrb[0].mxu0 %v384
      %v473 = vpop.f32.mrb[0].mxu0
      %v474 = vadd.f32 0.0, %v473
      %v475 = vpop.f32.mrb[0].mxu0
      %v476 = vpop.f32.mrb[0].mxu0
      %v477 = vadd.f32 0.0, %v476
      %v478 = vpop.f32.mrb[0].mxu0
      %479 = vmatprep.mubr.bf16.mxu0 0
      %480 = vmatmul.mubr.bf16.gmra.mrb[0].mxu0 %v387
      %v481 = vpop.f32.mrb[0].mxu0
      %v482 = vadd.f32 0.0, %v481
      %v483 = vpop.f32.mrb[0].mxu0
      %v484 = vpop.f32.mrb[0].mxu0
      %v485 = vadd.f32 0.0, %v484
      %v486 = vpop.f32.mrb[0].mxu0
      %487 = vmatprep.mubr.bf16.mxu0 0
      %488 = vmatmul.mubr.bf16.gmra.mrb[0].mxu0 %v390
      %v489 = vpop.f32.mrb[0].mxu0
      %v490 = vadd.f32 0.0, %v489
      %v491 = vpop.f32.mrb[0].mxu0
      %v492 = vpop.f32.mrb[0].mxu0
      %v493 = vadd.f32 0.0, %v492
      %v494 = vpop.f32.mrb[0].mxu0
      %495 = vmatprep.mubr.bf16.mxu0 0
      %496 = vmatmul.mubr.bf16.gmra.mrb[0].mxu0 %v393
      %v497 = vpop.f32.mrb[0].mxu0
      %v498 = vadd.f32 0.0, %v497
      %v499 = vpop.f32.mrb[0].mxu0
      %v500 = vpop.f32.mrb[0].mxu0
      %v501 = vadd.f32 0.0, %v500
      %v502 = vpop.f32.mrb[0].mxu0
      %503 = vmatprep.mubr.bf16.mxu0 0
      %504 = vmatmul.mubr.bf16.gmra.mrb[0].mxu0 %v396
      %v505 = vpop.f32.mrb[0].mxu0
      %v506 = vadd.f32 0.0, %v505
      %v507 = vpop.f32.mrb[0].mxu0
      %v508 = vpop.f32.mrb[0].mxu0
      %v509 = vadd.f32 0.0, %v508
      %v510 = vpop.f32.mrb[0].mxu0
      %511 = vmatprep.mubr.bf16.mxu0 0
      %512 = vmatmul.mubr.bf16.gmra.mrb[0].mxu0 %v399
      %v513 = vpop.f32.mrb[0].mxu0
      %v514 = vadd.f32 0.0, %v513
      %v515 = vpop.f32.mrb[0].mxu0
      %v516 = vpop.f32.mrb[0].mxu0
      %v517 = vadd.f32 0.0, %v516
      %v518 = vpop.f32.mrb[0].mxu0
      %519 = vmatprep.mubr.bf16.mxu0 0
      %520 = vmatmul.mubr.bf16.gmra.mrb[0].mxu0 %v402
      %v521 = vpop.f32.mrb[0].mxu0
      %v522 = vadd.f32 0.0, %v521
      %v523 = vpop.f32.mrb[0].mxu0
      %v524 = vpop.f32.mrb[0].mxu0
      %v525 = vadd.f32 0.0, %v524
      %v526 = vpop.f32.mrb[0].mxu0
      %527 = vmatprep.mubr.bf16.mxu0 0
      %528 = vmatmul.mubr.bf16.gmra.mrb[0].mxu0 %v405
      %v529 = vpop.f32.mrb[0].mxu0
      %v530 = vadd.f32 0.0, %v529
      %v531 = vpop.f32.mrb[0].mxu0
      %v532 = vpop.f32.mrb[0].mxu0
      %v533 = vadd.f32 0.0, %v532
      %v534 = vpop.f32.mrb[0].mxu0
      %535 = vmatprep.mubr.bf16.mxu0 0
      %536 = vmatmul.mubr.bf16.gmra.mrb[0].mxu0 %v408
      %v537 = vpop.f32.mrb[0].mxu0
      %v538 = vadd.f32 0.0, %v537
      %v539 = vpop.f32.mrb[0].mxu0
      %v540 = vpop.f32.mrb[0].mxu0
      %v541 = vadd.f32 0.0, %v540
      %v542 = vpop.f32.mrb[0].mxu0
      %543 = vmatprep.mubr.bf16.mxu0 0
      %544 = vmatmul.mubr.bf16.gmra.mrb[0].mxu0 %v411
      %v545 = vpop.f32.mrb[0].mxu0
      %v546 = vadd.f32 0.0, %v545
      %v547 = vpop.f32.mrb[0].mxu0
      %v548 = vpop.f32.mrb[0].mxu0
      %v549 = vadd.f32 0.0, %v548
      %v550 = vpop.f32.mrb[0].mxu0
      %551 = vmatprep.mubr.bf16.mxu0 0
      %552 = vmatmul.mubr.bf16.gmra.mrb[0].mxu0 %v414
      %v553 = vpop.f32.mrb[0].mxu0
      %v554 = vadd.f32 0.0, %v553
      %v555 = vpop.f32.mrb[0].mxu0
      %v556 = vpop.f32.mrb[0].mxu0
      %v557 = vadd.f32 0.0, %v556
      %v558 = vpop.f32.mrb[0].mxu0
      %559 = vmatprep.mubr.bf16.mxu0 0
      %560 = vmatmul.mubr.bf16.gmra.mrb[0].mxu0 %v417
      %v561 = vpop.f32.mrb[0].mxu0
      %v562 = vadd.f32 0.0, %v561
      %v563 = vpop.f32.mrb[0].mxu0
      %v564 = vpop.f32.mrb[0].mxu0
      %v565 = vadd.f32 0.0, %v564
      %v566 = vpop.f32.mrb[0].mxu0
      %567 = vdwg.mxu0
      %v568 = vadd.f32 %v289, %v458
      %v569 = vadd.f32 %v289, %v461
      %v570 = vadd.f32 %v289, %v466
      %v571 = vadd.f32 %v289, %v469
      %v572 = vadd.f32 %v289, %v474
      %v573 = vadd.f32 %v289, %v477
      %v574 = vadd.f32 %v289, %v482
      %v575 = vadd.f32 %v289, %v485
      %v576 = vadd.f32 %v289, %v490
      %v577 = vadd.f32 %v289, %v493
      %v578 = vadd.f32 %v289, %v498
      %v579 = vadd.f32 %v289, %v501
      %v580 = vadd.f32 %v289, %v506
      %v581 = vadd.f32 %v289, %v509
      %v582 = vadd.f32 %v289, %v514
      %v583 = vadd.f32 %v289, %v517
      %v584 = vadd.f32 %v289, %v522
      %v585 = vadd.f32 %v289, %v525
      %v586 = vadd.f32 %v289, %v530
      %v587 = vadd.f32 %v289, %v533
      %v588 = vadd.f32 %v289, %v538
      %v589 = vadd.f32 %v289, %v541
      %v590 = vadd.f32 %v289, %v546
      %v591 = vadd.f32 %v289, %v549
      %v592 = vadd.f32 %v289, %v554
      %v593 = vadd.f32 %v289, %v557
      %v594 = vadd.f32 %v289, %v562
      %v595 = vadd.f32 %v289, %v565
      %v596 = vld [vmem:[%s3] sm:$0x3]
      %v598 = vsel %vm376, %v361, 0
      %v601 = vsel %vm376, %v362, 0
      %v604 = vsel %vm376, %v363, 0
      %v607 = vsel %vm376, %v364, 0
      %v610 = vsel %vm376, %v365, 0
      %v613 = vsel %vm376, %v366, 0
      %v616 = vsel %vm376, %v367, 0
      %v619 = vsel %vm376, %v368, 0
      %v622 = vsel %vm376, %v369, 0
      %v625 = vsel %vm376, %v370, 0
      %v628 = vsel %vm376, %v371, 0
      %v631 = vsel %vm376, %v372, 0
      %v634 = vsel %vm376, %v373, 0
      %v637 = vsel %vm376, %v374, 0
      %v640 = vsel %vm419, %v596, 0
      %642 = vmatprep.subr.bf16.mxu0 0
      %643 = vmatpush1.bf16.msra.mxu0 %v640
      %644 = vmatprep.subr.bf16.mxu0 0
      %645 = vmatpush1.bf16.msra.mxu0 0
      %646 = vmatprep.subr.bf16.mxu0 0
      %647 = vmatpush1.bf16.msra.mxu0 0
      %648 = vmatprep.subr.bf16.mxu0 0
      %649 = vmatpush1.bf16.msra.mxu0 0
      %650 = vmatprep.subr.bf16.mxu0 0
      %651 = vmatpush1.bf16.msra.mxu0 0
      %652 = vmatprep.subr.bf16.mxu0 0
      %653 = vmatpush1.bf16.msra.mxu0 0
      %654 = vmatprep.subr.bf16.mxu0 0
      %655 = vmatpush1.bf16.msra.mxu0 0
      %656 = vmatprep.subr.bf16.mxu0 0
      %657 = vmatpush1.bf16.msra.mxu0 0
      %658 = vmatprep.subr.bf16.mxu0 0
      %659 = vmatpush1.bf16.msra.mxu0 0
      %660 = vmatprep.subr.bf16.mxu0 0
      %661 = vmatpush1.bf16.msra.mxu0 0
      %662 = vmatprep.subr.bf16.mxu0 0
      %663 = vmatpush1.bf16.msra.mxu0 0
      %664 = vmatprep.subr.bf16.mxu0 0
      %665 = vmatpush1.bf16.msra.mxu0 0
      %666 = vmatprep.subr.bf16.mxu0 0
      %667 = vmatpush1.bf16.msra.mxu0 0
      %668 = vmatprep.subr.bf16.mxu0 0
      %669 = vmatpush1.bf16.msra.mxu0 0
      %670 = vmatprep.subr.bf16.mxu0 0
      %671 = vmatpush1.bf16.msra.mxu0 0
      %672 = vmatprep.subr.bf16.mxu0 0
      %673 = vmatpush1.bf16.msra.mxu0 0
      %674 = vmatprep.mubr.bf16.mxu0 0
      %675 = vmatmul.mubr.bf16.gmra.mrb[0].mxu0 %v598
      %v676 = vpop.f32.mrb[0].mxu0
      %v677 = vadd.f32 0.0, %v676
      %v678 = vpop.f32.mrb[0].mxu0
      %v679 = vpop.f32.mrb[0].mxu0
      %v680 = vadd.f32 0.0, %v679
      %v681 = vpop.f32.mrb[0].mxu0
      %682 = vmatprep.mubr.bf16.mxu0 0
      %683 = vmatmul.mubr.bf16.gmra.mrb[0].mxu0 %v601
      %v684 = vpop.f32.mrb[0].mxu0
      %v685 = vadd.f32 0.0, %v684
      %v686 = vpop.f32.mrb[0].mxu0
      %v687 = vpop.f32.mrb[0].mxu0
      %v688 = vadd.f32 0.0, %v687
      %v689 = vpop.f32.mrb[0].mxu0
      %690 = vmatprep.mubr.bf16.mxu0 0
      %691 = vmatmul.mubr.bf16.gmra.mrb[0].mxu0 %v604
      %v692 = vpop.f32.mrb[0].mxu0
      %v693 = vadd.f32 0.0, %v692
      %v694 = vpop.f32.mrb[0].mxu0
      %v695 = vpop.f32.mrb[0].mxu0
      %v696 = vadd.f32 0.0, %v695
      %v697 = vpop.f32.mrb[0].mxu0
      %698 = vmatprep.mubr.bf16.mxu0 0
      %699 = vmatmul.mubr.bf16.gmra.mrb[0].mxu0 %v607
      %v700 = vpop.f32.mrb[0].mxu0
      %v701 = vadd.f32 0.0, %v700
      %v702 = vpop.f32.mrb[0].mxu0
      %v703 = vpop.f32.mrb[0].mxu0
      %v704 = vadd.f32 0.0, %v703
      %v705 = vpop.f32.mrb[0].mxu0
      %706 = vmatprep.mubr.bf16.mxu0 0
      %707 = vmatmul.mubr.bf16.gmra.mrb[0].mxu0 %v610
      %v708 = vpop.f32.mrb[0].mxu0
      %v709 = vadd.f32 0.0, %v708
      %v710 = vpop.f32.mrb[0].mxu0
      %v711 = vpop.f32.mrb[0].mxu0
      %v712 = vadd.f32 0.0, %v711
      %v713 = vpop.f32.mrb[0].mxu0
      %714 = vmatprep.mubr.bf16.mxu0 0
      %715 = vmatmul.mubr.bf16.gmra.mrb[0].mxu0 %v613
      %v716 = vpop.f32.mrb[0].mxu0
      %v717 = vadd.f32 0.0, %v716
      %v718 = vpop.f32.mrb[0].mxu0
      %v719 = vpop.f32.mrb[0].mxu0
      %v720 = vadd.f32 0.0, %v719
      %v721 = vpop.f32.mrb[0].mxu0
      %722 = vmatprep.mubr.bf16.mxu0 0
      %723 = vmatmul.mubr.bf16.gmra.mrb[0].mxu0 %v616
      %v724 = vpop.f32.mrb[0].mxu0
      %v725 = vadd.f32 0.0, %v724
      %v726 = vpop.f32.mrb[0].mxu0
      %v727 = vpop.f32.mrb[0].mxu0
      %v728 = vadd.f32 0.0, %v727
      %v729 = vpop.f32.mrb[0].mxu0
      %730 = vmatprep.mubr.bf16.mxu0 0
      %731 = vmatmul.mubr.bf16.gmra.mrb[0].mxu0 %v619
      %v732 = vpop.f32.mrb[0].mxu0
      %v733 = vadd.f32 0.0, %v732
      %v734 = vpop.f32.mrb[0].mxu0
      %v735 = vpop.f32.mrb[0].mxu0
      %v736 = vadd.f32 0.0, %v735
      %v737 = vpop.f32.mrb[0].mxu0
      %738 = vmatprep.mubr.bf16.mxu0 0
      %739 = vmatmul.mubr.bf16.gmra.mrb[0].mxu0 %v622
      %v740 = vpop.f32.mrb[0].mxu0
      %v741 = vadd.f32 0.0, %v740
      %v742 = vpop.f32.mrb[0].mxu0
      %v743 = vpop.f32.mrb[0].mxu0
      %v744 = vadd.f32 0.0, %v743
      %v745 = vpop.f32.mrb[0].mxu0
      %746 = vmatprep.mubr.bf16.mxu0 0
      %747 = vmatmul.mubr.bf16.gmra.mrb[0].mxu0 %v625
      %v748 = vpop.f32.mrb[0].mxu0
      %v749 = vadd.f32 0.0, %v748
      %v750 = vpop.f32.mrb[0].mxu0
      %v751 = vpop.f32.mrb[0].mxu0
      %v752 = vadd.f32 0.0, %v751
      %v753 = vpop.f32.mrb[0].mxu0
      %754 = vmatprep.mubr.bf16.mxu0 0
      %755 = vmatmul.mubr.bf16.gmra.mrb[0].mxu0 %v628
      %v756 = vpop.f32.mrb[0].mxu0
      %v757 = vadd.f32 0.0, %v756
      %v758 = vpop.f32.mrb[0].mxu0
      %v759 = vpop.f32.mrb[0].mxu0
      %v760 = vadd.f32 0.0, %v759
      %v761 = vpop.f32.mrb[0].mxu0
      %762 = vmatprep.mubr.bf16.mxu0 0
      %763 = vmatmul.mubr.bf16.gmra.mrb[0].mxu0 %v631
      %v764 = vpop.f32.mrb[0].mxu0
      %v765 = vadd.f32 0.0, %v764
      %v766 = vpop.f32.mrb[0].mxu0
      %v767 = vpop.f32.mrb[0].mxu0
      %v768 = vadd.f32 0.0, %v767
      %v769 = vpop.f32.mrb[0].mxu0
      %770 = vmatprep.mubr.bf16.mxu0 0
      %771 = vmatmul.mubr.bf16.gmra.mrb[0].mxu0 %v634
      %v772 = vpop.f32.mrb[0].mxu0
      %v773 = vadd.f32 0.0, %v772
      %v774 = vpop.f32.mrb[0].mxu0
      %v775 = vpop.f32.mrb[0].mxu0
      %v776 = vadd.f32 0.0, %v775
      %v777 = vpop.f32.mrb[0].mxu0
      %778 = vmatprep.mubr.bf16.mxu0 0
      %779 = vmatmul.mubr.bf16.gmra.mrb[0].mxu0 %v637
      %v780 = vpop.f32.mrb[0].mxu0
      %v781 = vadd.f32 0.0, %v780
      %v782 = vpop.f32.mrb[0].mxu0
      %v783 = vpop.f32.mrb[0].mxu0
      %v784 = vadd.f32 0.0, %v783
      %v785 = vpop.f32.mrb[0].mxu0
      %786 = vdwg.mxu0
      %v787 = vadd.f32 %v568, %v677
      %v788 = vadd.f32 %v569, %v680
      %v789 = vadd.f32 %v570, %v685
      %v790 = vadd.f32 %v571, %v688
      %v791 = vadd.f32 %v572, %v693
      %v792 = vadd.f32 %v573, %v696
      %v793 = vadd.f32 %v574, %v701
      %v794 = vadd.f32 %v575, %v704
      %v795 = vadd.f32 %v576, %v709
      %v796 = vadd.f32 %v577, %v712
      %v797 = vadd.f32 %v578, %v717
      %v798 = vadd.f32 %v579, %v720
      %v799 = vadd.f32 %v580, %v725
      %v800 = vadd.f32 %v581, %v728
      %v801 = vadd.f32 %v582, %v733
      %v802 = vadd.f32 %v583, %v736
      %v803 = vadd.f32 %v584, %v741
      %v804 = vadd.f32 %v585, %v744
      %v805 = vadd.f32 %v586, %v749
      %v806 = vadd.f32 %v587, %v752
      %v807 = vadd.f32 %v588, %v757
      %v808 = vadd.f32 %v589, %v760
      %v809 = vadd.f32 %v590, %v765
      %v810 = vadd.f32 %v591, %v768
      %v811 = vadd.f32 %v592, %v773
      %v812 = vadd.f32 %v593, %v776
      %v813 = vadd.f32 %v594, %v781
      %v814 = vadd.f32 %v595, %v784
      %v815 = vld [vmem:[%s268 + $0x1] sm:$0xff]
      %v816 = vld [vmem:[%s268 + $0x9] sm:$0xff]
      %v817 = vld [vmem:[%s268 + $0x11] sm:$0xff]
      %v818 = vld [vmem:[%s268 + $0x19] sm:$0xff]
      %v819 = vld [vmem:[%s268 + $0x21] sm:$0xff]
      %v820 = vld [vmem:[%s268 + $0x29] sm:$0xff]
      %v821 = vld [vmem:[%s268 + $0x31] sm:$0xff]
      %v822 = vld [vmem:[%s268 + $0x39] sm:$0xff]
      %v823 = vld [vmem:[%s268 + $0x41] sm:$0xff]
      %v824 = vld [vmem:[%s268 + $0x49] sm:$0xff]
      %v825 = vld [vmem:[%s268 + $0x51] sm:$0xff]
      %v826 = vld [vmem:[%s268 + $0x59] sm:$0xff]
      %v827 = vld [vmem:[%s268 + $0x61] sm:$0xff]
      %v828 = vld [vmem:[%s268 + $0x69] sm:$0xff]
      %v829 = vld [vmem:[%s268 + $0x71] sm:$0xff]
      %v830 = vld [vmem:[%s268 + $0x79] sm:$0xff]
      %v831 = vld [vmem:[%s268 + $0x81] sm:$0xff]
      %v832 = vld [vmem:[%s268 + $0x89] sm:$0xff]
      %v833 = vld [vmem:[%s268 + $0x91] sm:$0xff]
      %v834 = vld [vmem:[%s268 + $0x99] sm:$0xff]
      %v835 = vld [vmem:[%s268 + $0xa1] sm:$0xff]
      %v836 = vld [vmem:[%s268 + $0xa9] sm:$0xff]
      %v837 = vld [vmem:[%s268 + $0xb1] sm:$0xff]
      %v838 = vld [vmem:[%s268 + $0xb9] sm:$0xff]
      %v839 = vld [vmem:[%s268 + $0xc1] sm:$0xff]
      %v840 = vld [vmem:[%s268 + $0xc9] sm:$0xff]
      %v841 = vld [vmem:[%s268 + $0xd1] sm:$0xff]
      %v842 = vld [vmem:[%s268 + $0xd9] sm:$0x3f]
      %v843 = vpack.c.bf16 %v816, %v815
      %v844 = vpack.c.bf16 %v818, %v817
      %v845 = vpack.c.bf16 %v820, %v819
      %v846 = vpack.c.bf16 %v822, %v821
      %v847 = vpack.c.bf16 %v824, %v823
      %v848 = vpack.c.bf16 %v826, %v825
      %v849 = vpack.c.bf16 %v828, %v827
      %v850 = vpack.c.bf16 %v830, %v829
      %v851 = vpack.c.bf16 %v832, %v831
      %v852 = vpack.c.bf16 %v834, %v833
      %v853 = vpack.c.bf16 %v836, %v835
      %v854 = vpack.c.bf16 %v838, %v837
      %v855 = vpack.c.bf16 %v840, %v839
      %v856 = vpack.c.bf16 %v842, %v841
      %v857 = vld [vmem:[%s273 + $0x1] sm:$0xff]
      %v858 = vld [vmem:[%s273 + $0x9] sm:$0xff]
      %v859 = vld [vmem:[%s273 + $0x11] sm:$0xff]
      %v860 = vld [vmem:[%s273 + $0x19] sm:$0xff]
      %v861 = vld [vmem:[%s273 + $0x21] sm:$0xff]
      %v862 = vld [vmem:[%s273 + $0x29] sm:$0xff]
      %v863 = vld [vmem:[%s273 + $0x31] sm:$0xff]
      %v864 = vld [vmem:[%s273 + $0x39] sm:$0xff]
      %v865 = vld [vmem:[%s273 + $0x41] sm:$0xff]
      %v866 = vld [vmem:[%s273 + $0x49] sm:$0xff]
      %v867 = vld [vmem:[%s273 + $0x51] sm:$0xff]
      %v868 = vld [vmem:[%s273 + $0x59] sm:$0xff]
      %v869 = vld [vmem:[%s273 + $0x61] sm:$0xff]
      %v870 = vld [vmem:[%s273 + $0x69] sm:$0xff]
      %v871 = vld [vmem:[%s273 + $0x71] sm:$0xff]
      %v872 = vld [vmem:[%s273 + $0x79] sm:$0xff]
      %v873 = vld [vmem:[%s273 + $0x81] sm:$0xff]
      %v874 = vld [vmem:[%s273 + $0x89] sm:$0xff]
      %v875 = vld [vmem:[%s273 + $0x91] sm:$0xff]
      %v876 = vld [vmem:[%s273 + $0x99] sm:$0xff]
      %v877 = vld [vmem:[%s273 + $0xa1] sm:$0xff]
      %v878 = vld [vmem:[%s273 + $0xa9] sm:$0xff]
      %v879 = vld [vmem:[%s273 + $0xb1] sm:$0xff]
      %v880 = vld [vmem:[%s273 + $0xb9] sm:$0xff]
      %v881 = vld [vmem:[%s273 + $0xc1] sm:$0xff]
      %v882 = vld [vmem:[%s273 + $0xc9] sm:$0xff]
      %v883 = vld [vmem:[%s273 + $0xd1] sm:$0xff]
      %v884 = vld [vmem:[%s273 + $0xd9] sm:$0x3f]
      %v885 = vpack.c.bf16 %v858, %v857
      %v886 = vpack.c.bf16 %v860, %v859
      %v887 = vpack.c.bf16 %v862, %v861
      %v888 = vpack.c.bf16 %v864, %v863
      %v889 = vpack.c.bf16 %v866, %v865
      %v890 = vpack.c.bf16 %v868, %v867
      %v891 = vpack.c.bf16 %v870, %v869
      %v892 = vpack.c.bf16 %v872, %v871
      %v893 = vpack.c.bf16 %v874, %v873
      %v894 = vpack.c.bf16 %v876, %v875
      %v895 = vpack.c.bf16 %v878, %v877
      %v896 = vpack.c.bf16 %v880, %v879
      %v897 = vpack.c.bf16 %v882, %v881
      %v898 = vpack.c.bf16 %v884, %v883
      %s899 = scalar_lea.vmem %s2, 2
      %v900 = vld [vmem:[%s899] sm:$0x3]
      %v902 = vsel %vm376, %v843, 0
      %v905 = vsel %vm376, %v844, 0
      %v908 = vsel %vm376, %v845, 0
      %v911 = vsel %vm376, %v846, 0
      %v914 = vsel %vm376, %v847, 0
      %v917 = vsel %vm376, %v848, 0
      %v920 = vsel %vm376, %v849, 0
      %v923 = vsel %vm376, %v850, 0
      %v926 = vsel %vm376, %v851, 0
      %v929 = vsel %vm376, %v852, 0
      %v932 = vsel %vm376, %v853, 0
      %v935 = vsel %vm376, %v854, 0
      %v938 = vsel %vm376, %v855, 0
      %v941 = vsel %vm376, %v856, 0
      %v944 = vsel %vm419, %v900, 0
      %946 = vmatprep.subr.bf16.mxu0 0
      %947 = vmatpush1.bf16.msra.mxu0 %v944
      %948 = vmatprep.subr.bf16.mxu0 0
      %949 = vmatpush1.bf16.msra.mxu0 0
      %950 = vmatprep.subr.bf16.mxu0 0
      %951 = vmatpush1.bf16.msra.mxu0 0
      %952 = vmatprep.subr.bf16.mxu0 0
      %953 = vmatpush1.bf16.msra.mxu0 0
      %954 = vmatprep.subr.bf16.mxu0 0
      %955 = vmatpush1.bf16.msra.mxu0 0
      %956 = vmatprep.subr.bf16.mxu0 0
      %957 = vmatpush1.bf16.msra.mxu0 0
      %958 = vmatprep.subr.bf16.mxu0 0
      %959 = vmatpush1.bf16.msra.mxu0 0
      %960 = vmatprep.subr.bf16.mxu0 0
      %961 = vmatpush1.bf16.msra.mxu0 0
      %962 = vmatprep.subr.bf16.mxu0 0
      %963 = vmatpush1.bf16.msra.mxu0 0
      %964 = vmatprep.subr.bf16.mxu0 0
      %965 = vmatpush1.bf16.msra.mxu0 0
      %966 = vmatprep.subr.bf16.mxu0 0
      %967 = vmatpush1.bf16.msra.mxu0 0
      %968 = vmatprep.subr.bf16.mxu0 0
      %969 = vmatpush1.bf16.msra.mxu0 0
      %970 = vmatprep.subr.bf16.mxu0 0
      %971 = vmatpush1.bf16.msra.mxu0 0
      %972 = vmatprep.subr.bf16.mxu0 0
      %973 = vmatpush1.bf16.msra.mxu0 0
      %974 = vmatprep.subr.bf16.mxu0 0
      %975 = vmatpush1.bf16.msra.mxu0 0
      %976 = vmatprep.subr.bf16.mxu0 0
      %977 = vmatpush1.bf16.msra.mxu0 0
      %978 = vmatprep.mubr.bf16.mxu0 0
      %979 = vmatmul.mubr.bf16.gmra.mrb[0].mxu0 %v902
      %v980 = vpop.f32.mrb[0].mxu0
      %v981 = vadd.f32 0.0, %v980
      %v982 = vpop.f32.mrb[0].mxu0
      %v983 = vpop.f32.mrb[0].mxu0
      %v984 = vadd.f32 0.0, %v983
      %v985 = vpop.f32.mrb[0].mxu0
      %986 = vmatprep.mubr.bf16.mxu0 0
      %987 = vmatmul.mubr.bf16.gmra.mrb[0].mxu0 %v905
      %v988 = vpop.f32.mrb[0].mxu0
      %v989 = vadd.f32 0.0, %v988
      %v990 = vpop.f32.mrb[0].mxu0
      %v991 = vpop.f32.mrb[0].mxu0
      %v992 = vadd.f32 0.0, %v991
      %v993 = vpop.f32.mrb[0].mxu0
      %994 = vmatprep.mubr.bf16.mxu0 0
      %995 = vmatmul.mubr.bf16.gmra.mrb[0].mxu0 %v908
      %v996 = vpop.f32.mrb[0].mxu0
      %v997 = vadd.f32 0.0, %v996
      %v998 = vpop.f32.mrb[0].mxu0
      %v999 = vpop.f32.mrb[0].mxu0
      %v1000 = vadd.f32 0.0, %v999
      %v1001 = vpop.f32.mrb[0].mxu0
      %1002 = vmatprep.mubr.bf16.mxu0 0
      %1003 = vmatmul.mubr.bf16.gmra.mrb[0].mxu0 %v911
      %v1004 = vpop.f32.mrb[0].mxu0
      %v1005 = vadd.f32 0.0, %v1004
      %v1006 = vpop.f32.mrb[0].mxu0
      %v1007 = vpop.f32.mrb[0].mxu0
      %v1008 = vadd.f32 0.0, %v1007
      %v1009 = vpop.f32.mrb[0].mxu0
      %1010 = vmatprep.mubr.bf16.mxu0 0
      %1011 = vmatmul.mubr.bf16.gmra.mrb[0].mxu0 %v914
      %v1012 = vpop.f32.mrb[0].mxu0
      %v1013 = vadd.f32 0.0, %v1012
      %v1014 = vpop.f32.mrb[0].mxu0
      %v1015 = vpop.f32.mrb[0].mxu0
      %v1016 = vadd.f32 0.0, %v1015
      %v1017 = vpop.f32.mrb[0].mxu0
      %1018 = vmatprep.mubr.bf16.mxu0 0
      %1019 = vmatmul.mubr.bf16.gmra.mrb[0].mxu0 %v917
      %v1020 = vpop.f32.mrb[0].mxu0
      %v1021 = vadd.f32 0.0, %v1020
      %v1022 = vpop.f32.mrb[0].mxu0
      %v1023 = vpop.f32.mrb[0].mxu0
      %v1024 = vadd.f32 0.0, %v1023
      %v1025 = vpop.f32.mrb[0].mxu0
      %1026 = vmatprep.mubr.bf16.mxu0 0
      %1027 = vmatmul.mubr.bf16.gmra.mrb[0].mxu0 %v920
      %v1028 = vpop.f32.mrb[0].mxu0
      %v1029 = vadd.f32 0.0, %v1028
      %v1030 = vpop.f32.mrb[0].mxu0
      %v1031 = vpop.f32.mrb[0].mxu0
      %v1032 = vadd.f32 0.0, %v1031
      %v1033 = vpop.f32.mrb[0].mxu0
      %1034 = vmatprep.mubr.bf16.mxu0 0
      %1035 = vmatmul.mubr.bf16.gmra.mrb[0].mxu0 %v923
      %v1036 = vpop.f32.mrb[0].mxu0
      %v1037 = vadd.f32 0.0, %v1036
      %v1038 = vpop.f32.mrb[0].mxu0
      %v1039 = vpop.f32.mrb[0].mxu0
      %v1040 = vadd.f32 0.0, %v1039
      %v1041 = vpop.f32.mrb[0].mxu0
      %1042 = vmatprep.mubr.bf16.mxu0 0
      %1043 = vmatmul.mubr.bf16.gmra.mrb[0].mxu0 %v926
      %v1044 = vpop.f32.mrb[0].mxu0
      %v1045 = vadd.f32 0.0, %v1044
      %v1046 = vpop.f32.mrb[0].mxu0
      %v1047 = vpop.f32.mrb[0].mxu0
      %v1048 = vadd.f32 0.0, %v1047
      %v1049 = vpop.f32.mrb[0].mxu0
      %1050 = vmatprep.mubr.bf16.mxu0 0
      %1051 = vmatmul.mubr.bf16.gmra.mrb[0].mxu0 %v929
      %v1052 = vpop.f32.mrb[0].mxu0
      %v1053 = vadd.f32 0.0, %v1052
      %v1054 = vpop.f32.mrb[0].mxu0
      %v1055 = vpop.f32.mrb[0].mxu0
      %v1056 = vadd.f32 0.0, %v1055
      %v1057 = vpop.f32.mrb[0].mxu0
      %1058 = vmatprep.mubr.bf16.mxu0 0
      %1059 = vmatmul.mubr.bf16.gmra.mrb[0].mxu0 %v932
      %v1060 = vpop.f32.mrb[0].mxu0
      %v1061 = vadd.f32 0.0, %v1060
      %v1062 = vpop.f32.mrb[0].mxu0
      %v1063 = vpop.f32.mrb[0].mxu0
      %v1064 = vadd.f32 0.0, %v1063
      %v1065 = vpop.f32.mrb[0].mxu0
      %1066 = vmatprep.mubr.bf16.mxu0 0
      %1067 = vmatmul.mubr.bf16.gmra.mrb[0].mxu0 %v935
      %v1068 = vpop.f32.mrb[0].mxu0
      %v1069 = vadd.f32 0.0, %v1068
      %v1070 = vpop.f32.mrb[0].mxu0
      %v1071 = vpop.f32.mrb[0].mxu0
      %v1072 = vadd.f32 0.0, %v1071
      %v1073 = vpop.f32.mrb[0].mxu0
      %1074 = vmatprep.mubr.bf16.mxu0 0
      %1075 = vmatmul.mubr.bf16.gmra.mrb[0].mxu0 %v938
      %v1076 = vpop.f32.mrb[0].mxu0
      %v1077 = vadd.f32 0.0, %v1076
      %v1078 = vpop.f32.mrb[0].mxu0
      %v1079 = vpop.f32.mrb[0].mxu0
      %v1080 = vadd.f32 0.0, %v1079
      %v1081 = vpop.f32.mrb[0].mxu0
      %1082 = vmatprep.mubr.bf16.mxu0 0
      %1083 = vmatmul.mubr.bf16.gmra.mrb[0].mxu0 %v941
      %v1084 = vpop.f32.mrb[0].mxu0
      %v1085 = vadd.f32 0.0, %v1084
      %v1086 = vpop.f32.mrb[0].mxu0
      %v1087 = vpop.f32.mrb[0].mxu0
      %v1088 = vadd.f32 0.0, %v1087
      %v1089 = vpop.f32.mrb[0].mxu0
      %1090 = vdwg.mxu0
      %v1091 = vadd.f32 %v787, %v981
      %v1092 = vadd.f32 %v788, %v984
      %v1093 = vadd.f32 %v789, %v989
      %v1094 = vadd.f32 %v790, %v992
      %v1095 = vadd.f32 %v791, %v997
      %v1096 = vadd.f32 %v792, %v1000
      %v1097 = vadd.f32 %v793, %v1005
      %v1098 = vadd.f32 %v794, %v1008
      %v1099 = vadd.f32 %v795, %v1013
      %v1100 = vadd.f32 %v796, %v1016
      %v1101 = vadd.f32 %v797, %v1021
      %v1102 = vadd.f32 %v798, %v1024
      %v1103 = vadd.f32 %v799, %v1029
      %v1104 = vadd.f32 %v800, %v1032
      %v1105 = vadd.f32 %v801, %v1037
      %v1106 = vadd.f32 %v802, %v1040
      %v1107 = vadd.f32 %v803, %v1045
      %v1108 = vadd.f32 %v804, %v1048
      %v1109 = vadd.f32 %v805, %v1053
      %v1110 = vadd.f32 %v806, %v1056
      %v1111 = vadd.f32 %v807, %v1061
      %v1112 = vadd.f32 %v808, %v1064
      %v1113 = vadd.f32 %v809, %v1069
      %v1114 = vadd.f32 %v810, %v1072
      %v1115 = vadd.f32 %v811, %v1077
      %v1116 = vadd.f32 %v812, %v1080
      %v1117 = vadd.f32 %v813, %v1085
      %v1118 = vadd.f32 %v814, %v1088
      %s1119 = scalar_lea.vmem %s3, 2
      %v1120 = vld [vmem:[%s1119] sm:$0x3]
      %v1122 = vsel %vm376, %v885, 0
      %v1125 = vsel %vm376, %v886, 0
      %v1128 = vsel %vm376, %v887, 0
      %v1131 = vsel %vm376, %v888, 0
      %v1134 = vsel %vm376, %v889, 0
      %v1137 = vsel %vm376, %v890, 0
      %v1140 = vsel %vm376, %v891, 0
      %v1143 = vsel %vm376, %v892, 0
      %v1146 = vsel %vm376, %v893, 0
      %v1149 = vsel %vm376, %v894, 0
      %v1152 = vsel %vm376, %v895, 0
      %v1155 = vsel %vm376, %v896, 0
      %v1158 = vsel %vm376, %v897, 0
      %v1161 = vsel %vm376, %v898, 0
      %v1164 = vsel %vm419, %v1120, 0
      %1166 = vmatprep.subr.bf16.mxu0 0
      %1167 = vmatpush1.bf16.msra.mxu0 %v1164
      %1168 = vmatprep.subr.bf16.mxu0 0
      %1169 = vmatpush1.bf16.msra.mxu0 0
      %1170 = vmatprep.subr.bf16.mxu0 0
      %1171 = vmatpush1.bf16.msra.mxu0 0
      %1172 = vmatprep.subr.bf16.mxu0 0
      %1173 = vmatpush1.bf16.msra.mxu0 0
      %1174 = vmatprep.subr.bf16.mxu0 0
      %1175 = vmatpush1.bf16.msra.mxu0 0
      %1176 = vmatprep.subr.bf16.mxu0 0
      %1177 = vmatpush1.bf16.msra.mxu0 0
      %1178 = vmatprep.subr.bf16.mxu0 0
      %1179 = vmatpush1.bf16.msra.mxu0 0
      %1180 = vmatprep.subr.bf16.mxu0 0
      %1181 = vmatpush1.bf16.msra.mxu0 0
      %1182 = vmatprep.subr.bf16.mxu0 0
      %1183 = vmatpush1.bf16.msra.mxu0 0
      %1184 = vmatprep.subr.bf16.mxu0 0
      %1185 = vmatpush1.bf16.msra.mxu0 0
      %1186 = vmatprep.subr.bf16.mxu0 0
      %1187 = vmatpush1.bf16.msra.mxu0 0
      %1188 = vmatprep.subr.bf16.mxu0 0
      %1189 = vmatpush1.bf16.msra.mxu0 0
      %1190 = vmatprep.subr.bf16.mxu0 0
      %1191 = vmatpush1.bf16.msra.mxu0 0
      %1192 = vmatprep.subr.bf16.mxu0 0
      %1193 = vmatpush1.bf16.msra.mxu0 0
      %1194 = vmatprep.subr.bf16.mxu0 0
      %1195 = vmatpush1.bf16.msra.mxu0 0
      %1196 = vmatprep.subr.bf16.mxu0 0
      %1197 = vmatpush1.bf16.msra.mxu0 0
      %1198 = vmatprep.mubr.bf16.mxu0 0
      %1199 = vmatmul.mubr.bf16.gmra.mrb[0].mxu0 %v1122
      %v1200 = vpop.f32.mrb[0].mxu0
      %v1201 = vadd.f32 0.0, %v1200
      %v1202 = vpop.f32.mrb[0].mxu0
      %v1203 = vpop.f32.mrb[0].mxu0
      %v1204 = vadd.f32 0.0, %v1203
      %v1205 = vpop.f32.mrb[0].mxu0
      %1206 = vmatprep.mubr.bf16.mxu0 0
      %1207 = vmatmul.mubr.bf16.gmra.mrb[0].mxu0 %v1125
      %v1208 = vpop.f32.mrb[0].mxu0
      %v1209 = vadd.f32 0.0, %v1208
      %v1210 = vpop.f32.mrb[0].mxu0
      %v1211 = vpop.f32.mrb[0].mxu0
      %v1212 = vadd.f32 0.0, %v1211
      %v1213 = vpop.f32.mrb[0].mxu0
      %1214 = vmatprep.mubr.bf16.mxu0 0
      %1215 = vmatmul.mubr.bf16.gmra.mrb[0].mxu0 %v1128
      %v1216 = vpop.f32.mrb[0].mxu0
      %v1217 = vadd.f32 0.0, %v1216
      %v1218 = vpop.f32.mrb[0].mxu0
      %v1219 = vpop.f32.mrb[0].mxu0
      %v1220 = vadd.f32 0.0, %v1219
      %v1221 = vpop.f32.mrb[0].mxu0
      %1222 = vmatprep.mubr.bf16.mxu0 0
      %1223 = vmatmul.mubr.bf16.gmra.mrb[0].mxu0 %v1131
      %v1224 = vpop.f32.mrb[0].mxu0
      %v1225 = vadd.f32 0.0, %v1224
      %v1226 = vpop.f32.mrb[0].mxu0
      %v1227 = vpop.f32.mrb[0].mxu0
      %v1228 = vadd.f32 0.0, %v1227
      %v1229 = vpop.f32.mrb[0].mxu0
      %1230 = vmatprep.mubr.bf16.mxu0 0
      %1231 = vmatmul.mubr.bf16.gmra.mrb[0].mxu0 %v1134
      %v1232 = vpop.f32.mrb[0].mxu0
      %v1233 = vadd.f32 0.0, %v1232
      %v1234 = vpop.f32.mrb[0].mxu0
      %v1235 = vpop.f32.mrb[0].mxu0
      %v1236 = vadd.f32 0.0, %v1235
      %v1237 = vpop.f32.mrb[0].mxu0
      %1238 = vmatprep.mubr.bf16.mxu0 0
      %1239 = vmatmul.mubr.bf16.gmra.mrb[0].mxu0 %v1137
      %v1240 = vpop.f32.mrb[0].mxu0
      %v1241 = vadd.f32 0.0, %v1240
      %v1242 = vpop.f32.mrb[0].mxu0
      %v1243 = vpop.f32.mrb[0].mxu0
      %v1244 = vadd.f32 0.0, %v1243
      %v1245 = vpop.f32.mrb[0].mxu0
      %1246 = vmatprep.mubr.bf16.mxu0 0
      %1247 = vmatmul.mubr.bf16.gmra.mrb[0].mxu0 %v1140
      %v1248 = vpop.f32.mrb[0].mxu0
      %v1249 = vadd.f32 0.0, %v1248
      %v1250 = vpop.f32.mrb[0].mxu0
      %v1251 = vpop.f32.mrb[0].mxu0
      %v1252 = vadd.f32 0.0, %v1251
      %v1253 = vpop.f32.mrb[0].mxu0
      %1254 = vmatprep.mubr.bf16.mxu0 0
      %1255 = vmatmul.mubr.bf16.gmra.mrb[0].mxu0 %v1143
      %v1256 = vpop.f32.mrb[0].mxu0
      %v1257 = vadd.f32 0.0, %v1256
      %v1258 = vpop.f32.mrb[0].mxu0
      %v1259 = vpop.f32.mrb[0].mxu0
      %v1260 = vadd.f32 0.0, %v1259
      %v1261 = vpop.f32.mrb[0].mxu0
      %1262 = vmatprep.mubr.bf16.mxu0 0
      %1263 = vmatmul.mubr.bf16.gmra.mrb[0].mxu0 %v1146
      %v1264 = vpop.f32.mrb[0].mxu0
      %v1265 = vadd.f32 0.0, %v1264
      %v1266 = vpop.f32.mrb[0].mxu0
      %v1267 = vpop.f32.mrb[0].mxu0
      %v1268 = vadd.f32 0.0, %v1267
      %v1269 = vpop.f32.mrb[0].mxu0
      %1270 = vmatprep.mubr.bf16.mxu0 0
      %1271 = vmatmul.mubr.bf16.gmra.mrb[0].mxu0 %v1149
      %v1272 = vpop.f32.mrb[0].mxu0
      %v1273 = vadd.f32 0.0, %v1272
      %v1274 = vpop.f32.mrb[0].mxu0
      %v1275 = vpop.f32.mrb[0].mxu0
      %v1276 = vadd.f32 0.0, %v1275
      %v1277 = vpop.f32.mrb[0].mxu0
      %1278 = vmatprep.mubr.bf16.mxu0 0
      %1279 = vmatmul.mubr.bf16.gmra.mrb[0].mxu0 %v1152
      %v1280 = vpop.f32.mrb[0].mxu0
      %v1281 = vadd.f32 0.0, %v1280
      %v1282 = vpop.f32.mrb[0].mxu0
      %v1283 = vpop.f32.mrb[0].mxu0
      %v1284 = vadd.f32 0.0, %v1283
      %v1285 = vpop.f32.mrb[0].mxu0
      %1286 = vmatprep.mubr.bf16.mxu0 0
      %1287 = vmatmul.mubr.bf16.gmra.mrb[0].mxu0 %v1155
      %v1288 = vpop.f32.mrb[0].mxu0
      %v1289 = vadd.f32 0.0, %v1288
      %v1290 = vpop.f32.mrb[0].mxu0
      %v1291 = vpop.f32.mrb[0].mxu0
      %v1292 = vadd.f32 0.0, %v1291
      %v1293 = vpop.f32.mrb[0].mxu0
      %1294 = vmatprep.mubr.bf16.mxu0 0
      %1295 = vmatmul.mubr.bf16.gmra.mrb[0].mxu0 %v1158
      %v1296 = vpop.f32.mrb[0].mxu0
      %v1297 = vadd.f32 0.0, %v1296
      %v1298 = vpop.f32.mrb[0].mxu0
      %v1299 = vpop.f32.mrb[0].mxu0
      %v1300 = vadd.f32 0.0, %v1299
      %v1301 = vpop.f32.mrb[0].mxu0
      %1302 = vmatprep.mubr.bf16.mxu0 0
      %1303 = vmatmul.mubr.bf16.gmra.mrb[0].mxu0 %v1161
      %v1304 = vpop.f32.mrb[0].mxu0
      %v1305 = vadd.f32 0.0, %v1304
      %v1306 = vpop.f32.mrb[0].mxu0
      %v1307 = vpop.f32.mrb[0].mxu0
      %v1308 = vadd.f32 0.0, %v1307
      %v1309 = vpop.f32.mrb[0].mxu0
      %1310 = vdwg.mxu0
      %v1311 = vadd.f32 %v1091, %v1201
      %v1312 = vadd.f32 %v1092, %v1204
      %v1313 = vadd.f32 %v1093, %v1209
      %v1314 = vadd.f32 %v1094, %v1212
      %v1315 = vadd.f32 %v1095, %v1217
      %v1316 = vadd.f32 %v1096, %v1220
      %v1317 = vadd.f32 %v1097, %v1225
      %v1318 = vadd.f32 %v1098, %v1228
      %v1319 = vadd.f32 %v1099, %v1233
      %v1320 = vadd.f32 %v1100, %v1236
      %v1321 = vadd.f32 %v1101, %v1241
      %v1322 = vadd.f32 %v1102, %v1244
      %v1323 = vadd.f32 %v1103, %v1249
      %v1324 = vadd.f32 %v1104, %v1252
      %v1325 = vadd.f32 %v1105, %v1257
      %v1326 = vadd.f32 %v1106, %v1260
      %v1327 = vadd.f32 %v1107, %v1265
      %v1328 = vadd.f32 %v1108, %v1268
      %v1329 = vadd.f32 %v1109, %v1273
      %v1330 = vadd.f32 %v1110, %v1276
      %v1331 = vadd.f32 %v1111, %v1281
      %v1332 = vadd.f32 %v1112, %v1284
      %v1333 = vadd.f32 %v1113, %v1289
      %v1334 = vadd.f32 %v1114, %v1292
      %v1335 = vadd.f32 %v1115, %v1297
      %v1336 = vadd.f32 %v1116, %v1300
      %v1337 = vadd.f32 %v1117, %v1305
      %v1338 = vadd.f32 %v1118, %v1308
      %v1339 = vld [vmem:[%s268 + $0x2] sm:$0xff]
      %v1340 = vld [vmem:[%s268 + $0xa] sm:$0xff]
      %v1341 = vld [vmem:[%s268 + $0x12] sm:$0xff]
      %v1342 = vld [vmem:[%s268 + $0x1a] sm:$0xff]
      %v1343 = vld [vmem:[%s268 + $0x22] sm:$0xff]
      %v1344 = vld [vmem:[%s268 + $0x2a] sm:$0xff]
      %v1345 = vld [vmem:[%s268 + $0x32] sm:$0xff]
      %v1346 = vld [vmem:[%s268 + $0x3a] sm:$0xff]
      %v1347 = vld [vmem:[%s268 + $0x42] sm:$0xff]
      %v1348 = vld [vmem:[%s268 + $0x4a] sm:$0xff]
      %v1349 = vld [vmem:[%s268 + $0x52] sm:$0xff]
      %v1350 = vld [vmem:[%s268 + $0x5a] sm:$0xff]
      %v1351 = vld [vmem:[%s268 + $0x62] sm:$0xff]
      %v1352 = vld [vmem:[%s268 + $0x6a] sm:$0xff]
      %v1353 = vld [vmem:[%s268 + $0x72] sm:$0xff]
      %v1354 = vld [vmem:[%s268 + $0x7a] sm:$0xff]
      %v1355 = vld [vmem:[%s268 + $0x82] sm:$0xff]
      %v1356 = vld [vmem:[%s268 + $0x8a] sm:$0xff]
      %v1357 = vld [vmem:[%s268 + $0x92] sm:$0xff]
      %v1358 = vld [vmem:[%s268 + $0x9a] sm:$0xff]
      %v1359 = vld [vmem:[%s268 + $0xa2] sm:$0xff]
      %v1360 = vld [vmem:[%s268 + $0xaa] sm:$0xff]
      %v1361 = vld [vmem:[%s268 + $0xb2] sm:$0xff]
      %v1362 = vld [vmem:[%s268 + $0xba] sm:$0xff]
      %v1363 = vld [vmem:[%s268 + $0xc2] sm:$0xff]
      %v1364 = vld [vmem:[%s268 + $0xca] sm:$0xff]
      %v1365 = vld [vmem:[%s268 + $0xd2] sm:$0xff]
      %v1366 = vld [vmem:[%s268 + $0xda] sm:$0x3f]
      %v1367 = vpack.c.bf16 %v1340, %v1339
      %v1368 = vpack.c.bf16 %v1342, %v1341
      %v1369 = vpack.c.bf16 %v1344, %v1343
      %v1370 = vpack.c.bf16 %v1346, %v1345
      %v1371 = vpack.c.bf16 %v1348, %v1347
      %v1372 = vpack.c.bf16 %v1350, %v1349
      %v1373 = vpack.c.bf16 %v1352, %v1351
      %v1374 = vpack.c.bf16 %v1354, %v1353
      %v1375 = vpack.c.bf16 %v1356, %v1355
      %v1376 = vpack.c.bf16 %v1358, %v1357
      %v1377 = vpack.c.bf16 %v1360, %v1359
      %v1378 = vpack.c.bf16 %v1362, %v1361
      %v1379 = vpack.c.bf16 %v1364, %v1363
      %v1380 = vpack.c.bf16 %v1366, %v1365
      %v1381 = vld [vmem:[%s273 + $0x2] sm:$0xff]
      %v1382 = vld [vmem:[%s273 + $0xa] sm:$0xff]
      %v1383 = vld [vmem:[%s273 + $0x12] sm:$0xff]
      %v1384 = vld [vmem:[%s273 + $0x1a] sm:$0xff]
      %v1385 = vld [vmem:[%s273 + $0x22] sm:$0xff]
      %v1386 = vld [vmem:[%s273 + $0x2a] sm:$0xff]
      %v1387 = vld [vmem:[%s273 + $0x32] sm:$0xff]
      %v1388 = vld [vmem:[%s273 + $0x3a] sm:$0xff]
      %v1389 = vld [vmem:[%s273 + $0x42] sm:$0xff]
      %v1390 = vld [vmem:[%s273 + $0x4a] sm:$0xff]
      %v1391 = vld [vmem:[%s273 + $0x52] sm:$0xff]
      %v1392 = vld [vmem:[%s273 + $0x5a] sm:$0xff]
      %v1393 = vld [vmem:[%s273 + $0x62] sm:$0xff]
      %v1394 = vld [vmem:[%s273 + $0x6a] sm:$0xff]
      %v1395 = vld [vmem:[%s273 + $0x72] sm:$0xff]
      %v1396 = vld [vmem:[%s273 + $0x7a] sm:$0xff]
      %v1397 = vld [vmem:[%s273 + $0x82] sm:$0xff]
      %v1398 = vld [vmem:[%s273 + $0x8a] sm:$0xff]
      %v1399 = vld [vmem:[%s273 + $0x92] sm:$0xff]
      %v1400 = vld [vmem:[%s273 + $0x9a] sm:$0xff]
      %v1401 = vld [vmem:[%s273 + $0xa2] sm:$0xff]
      %v1402 = vld [vmem:[%s273 + $0xaa] sm:$0xff]
      %v1403 = vld [vmem:[%s273 + $0xb2] sm:$0xff]
      %v1404 = vld [vmem:[%s273 + $0xba] sm:$0xff]
      %v1405 = vld [vmem:[%s273 + $0xc2] sm:$0xff]
      %v1406 = vld [vmem:[%s273 + $0xca] sm:$0xff]
      %v1407 = vld [vmem:[%s273 + $0xd2] sm:$0xff]
      %v1408 = vld [vmem:[%s273 + $0xda] sm:$0x3f]
      %v1409 = vpack.c.bf16 %v1382, %v1381
      %v1410 = vpack.c.bf16 %v1384, %v1383
      %v1411 = vpack.c.bf16 %v1386, %v1385
      %v1412 = vpack.c.bf16 %v1388, %v1387
      %v1413 = vpack.c.bf16 %v1390, %v1389
      %v1414 = vpack.c.bf16 %v1392, %v1391
      %v1415 = vpack.c.bf16 %v1394, %v1393
      %v1416 = vpack.c.bf16 %v1396, %v1395
      %v1417 = vpack.c.bf16 %v1398, %v1397
      %v1418 = vpack.c.bf16 %v1400, %v1399
      %v1419 = vpack.c.bf16 %v1402, %v1401
      %v1420 = vpack.c.bf16 %v1404, %v1403
      %v1421 = vpack.c.bf16 %v1406, %v1405
      %v1422 = vpack.c.bf16 %v1408, %v1407
      %s1423 = scalar_lea.vmem %s2, 4
      %v1424 = vld [vmem:[%s1423] sm:$0x3]
      %v1426 = vsel %vm376, %v1367, 0
      %v1429 = vsel %vm376, %v1368, 0
      %v1432 = vsel %vm376, %v1369, 0
      %v1435 = vsel %vm376, %v1370, 0
      %v1438 = vsel %vm376, %v1371, 0
      %v1441 = vsel %vm376, %v1372, 0
      %v1444 = vsel %vm376, %v1373, 0
      %v1447 = vsel %vm376, %v1374, 0
      %v1450 = vsel %vm376, %v1375, 0
      %v1453 = vsel %vm376, %v1376, 0
      %v1456 = vsel %vm376, %v1377, 0
      %v1459 = vsel %vm376, %v1378, 0
      %v1462 = vsel %vm376, %v1379, 0
      %v1465 = vsel %vm376, %v1380, 0
      %v1468 = vsel %vm419, %v1424, 0
      %1470 = vmatprep.subr.bf16.mxu0 0
      %1471 = vmatpush1.bf16.msra.mxu0 %v1468
      %1472 = vmatprep.subr.bf16.mxu0 0
      %1473 = vmatpush1.bf16.msra.mxu0 0
      %1474 = vmatprep.subr.bf16.mxu0 0
      %1475 = vmatpush1.bf16.msra.mxu0 0
      %1476 = vmatprep.subr.bf16.mxu0 0
      %1477 = vmatpush1.bf16.msra.mxu0 0
      %1478 = vmatprep.subr.bf16.mxu0 0
      %1479 = vmatpush1.bf16.msra.mxu0 0
      %1480 = vmatprep.subr.bf16.mxu0 0
      %1481 = vmatpush1.bf16.msra.mxu0 0
      %1482 = vmatprep.subr.bf16.mxu0 0
      %1483 = vmatpush1.bf16.msra.mxu0 0
      %1484 = vmatprep.subr.bf16.mxu0 0
      %1485 = vmatpush1.bf16.msra.mxu0 0
      %1486 = vmatprep.subr.bf16.mxu0 0
      %1487 = vmatpush1.bf16.msra.mxu0 0
      %1488 = vmatprep.subr.bf16.mxu0 0
      %1489 = vmatpush1.bf16.msra.mxu0 0
      %1490 = vmatprep.subr.bf16.mxu0 0
      %1491 = vmatpush1.bf16.msra.mxu0 0
      %1492 = vmatprep.subr.bf16.mxu0 0
      %1493 = vmatpush1.bf16.msra.mxu0 0
      %1494 = vmatprep.subr.bf16.mxu0 0
      %1495 = vmatpush1.bf16.msra.mxu0 0
      %1496 = vmatprep.subr.bf16.mxu0 0
      %1497 = vmatpush1.bf16.msra.mxu0 0
      %1498 = vmatprep.subr.bf16.mxu0 0
      %1499 = vmatpush1.bf16.msra.mxu0 0
      %1500 = vmatprep.subr.bf16.mxu0 0
      %1501 = vmatpush1.bf16.msra.mxu0 0
      %1502 = vmatprep.mubr.bf16.mxu0 0
      %1503 = vmatmul.mubr.bf16.gmra.mrb[0].mxu0 %v1426
      %v1504 = vpop.f32.mrb[0].mxu0
      %v1505 = vadd.f32 0.0, %v1504
      %v1506 = vpop.f32.mrb[0].mxu0
      %v1507 = vpop.f32.mrb[0].mxu0
      %v1508 = vadd.f32 0.0, %v1507
      %v1509 = vpop.f32.mrb[0].mxu0
      %1510 = vmatprep.mubr.bf16.mxu0 0
      %1511 = vmatmul.mubr.bf16.gmra.mrb[0].mxu0 %v1429
      %v1512 = vpop.f32.mrb[0].mxu0
      %v1513 = vadd.f32 0.0, %v1512
      %v1514 = vpop.f32.mrb[0].mxu0
      %v1515 = vpop.f32.mrb[0].mxu0
      %v1516 = vadd.f32 0.0, %v1515
      %v1517 = vpop.f32.mrb[0].mxu0
      %1518 = vmatprep.mubr.bf16.mxu0 0
      %1519 = vmatmul.mubr.bf16.gmra.mrb[0].mxu0 %v1432
      %v1520 = vpop.f32.mrb[0].mxu0
      %v1521 = vadd.f32 0.0, %v1520
      %v1522 = vpop.f32.mrb[0].mxu0
      %v1523 = vpop.f32.mrb[0].mxu0
      %v1524 = vadd.f32 0.0, %v1523
      %v1525 = vpop.f32.mrb[0].mxu0
      %1526 = vmatprep.mubr.bf16.mxu0 0
      %1527 = vmatmul.mubr.bf16.gmra.mrb[0].mxu0 %v1435
      %v1528 = vpop.f32.mrb[0].mxu0
      %v1529 = vadd.f32 0.0, %v1528
      %v1530 = vpop.f32.mrb[0].mxu0
      %v1531 = vpop.f32.mrb[0].mxu0
      %v1532 = vadd.f32 0.0, %v1531
      %v1533 = vpop.f32.mrb[0].mxu0
      %1534 = vmatprep.mubr.bf16.mxu0 0
      %1535 = vmatmul.mubr.bf16.gmra.mrb[0].mxu0 %v1438
      %v1536 = vpop.f32.mrb[0].mxu0
      %v1537 = vadd.f32 0.0, %v1536
      %v1538 = vpop.f32.mrb[0].mxu0
      %v1539 = vpop.f32.mrb[0].mxu0
      %v1540 = vadd.f32 0.0, %v1539
      %v1541 = vpop.f32.mrb[0].mxu0
      %1542 = vmatprep.mubr.bf16.mxu0 0
      %1543 = vmatmul.mubr.bf16.gmra.mrb[0].mxu0 %v1441
      %v1544 = vpop.f32.mrb[0].mxu0
      %v1545 = vadd.f32 0.0, %v1544
      %v1546 = vpop.f32.mrb[0].mxu0
      %v1547 = vpop.f32.mrb[0].mxu0
      %v1548 = vadd.f32 0.0, %v1547
      %v1549 = vpop.f32.mrb[0].mxu0
      %1550 = vmatprep.mubr.bf16.mxu0 0
      %1551 = vmatmul.mubr.bf16.gmra.mrb[0].mxu0 %v1444
      %v1552 = vpop.f32.mrb[0].mxu0
      %v1553 = vadd.f32 0.0, %v1552
      %v1554 = vpop.f32.mrb[0].mxu0
      %v1555 = vpop.f32.mrb[0].mxu0
      %v1556 = vadd.f32 0.0, %v1555
      %v1557 = vpop.f32.mrb[0].mxu0
      %1558 = vmatprep.mubr.bf16.mxu0 0
      %1559 = vmatmul.mubr.bf16.gmra.mrb[0].mxu0 %v1447
      %v1560 = vpop.f32.mrb[0].mxu0
      %v1561 = vadd.f32 0.0, %v1560
      %v1562 = vpop.f32.mrb[0].mxu0
      %v1563 = vpop.f32.mrb[0].mxu0
      %v1564 = vadd.f32 0.0, %v1563
      %v1565 = vpop.f32.mrb[0].mxu0
      %1566 = vmatprep.mubr.bf16.mxu0 0
      %1567 = vmatmul.mubr.bf16.gmra.mrb[0].mxu0 %v1450
      %v1568 = vpop.f32.mrb[0].mxu0
      %v1569 = vadd.f32 0.0, %v1568
      %v1570 = vpop.f32.mrb[0].mxu0
      %v1571 = vpop.f32.mrb[0].mxu0
      %v1572 = vadd.f32 0.0, %v1571
      %v1573 = vpop.f32.mrb[0].mxu0
      %1574 = vmatprep.mubr.bf16.mxu0 0
      %1575 = vmatmul.mubr.bf16.gmra.mrb[0].mxu0 %v1453
      %v1576 = vpop.f32.mrb[0].mxu0
      %v1577 = vadd.f32 0.0, %v1576
      %v1578 = vpop.f32.mrb[0].mxu0
      %v1579 = vpop.f32.mrb[0].mxu0
      %v1580 = vadd.f32 0.0, %v1579
      %v1581 = vpop.f32.mrb[0].mxu0
      %1582 = vmatprep.mubr.bf16.mxu0 0
      %1583 = vmatmul.mubr.bf16.gmra.mrb[0].mxu0 %v1456
      %v1584 = vpop.f32.mrb[0].mxu0
      %v1585 = vadd.f32 0.0, %v1584
      %v1586 = vpop.f32.mrb[0].mxu0
      %v1587 = vpop.f32.mrb[0].mxu0
      %v1588 = vadd.f32 0.0, %v1587
      %v1589 = vpop.f32.mrb[0].mxu0
      %1590 = vmatprep.mubr.bf16.mxu0 0
      %1591 = vmatmul.mubr.bf16.gmra.mrb[0].mxu0 %v1459
      %v1592 = vpop.f32.mrb[0].mxu0
      %v1593 = vadd.f32 0.0, %v1592
      %v1594 = vpop.f32.mrb[0].mxu0
      %v1595 = vpop.f32.mrb[0].mxu0
      %v1596 = vadd.f32 0.0, %v1595
      %v1597 = vpop.f32.mrb[0].mxu0
      %1598 = vmatprep.mubr.bf16.mxu0 0
      %1599 = vmatmul.mubr.bf16.gmra.mrb[0].mxu0 %v1462
      %v1600 = vpop.f32.mrb[0].mxu0
      %v1601 = vadd.f32 0.0, %v1600
      %v1602 = vpop.f32.mrb[0].mxu0
      %v1603 = vpop.f32.mrb[0].mxu0
      %v1604 = vadd.f32 0.0, %v1603
      %v1605 = vpop.f32.mrb[0].mxu0
      %1606 = vmatprep.mubr.bf16.mxu0 0
      %1607 = vmatmul.mubr.bf16.gmra.mrb[0].mxu0 %v1465
      %v1608 = vpop.f32.mrb[0].mxu0
      %v1609 = vadd.f32 0.0, %v1608
      %v1610 = vpop.f32.mrb[0].mxu0
      %v1611 = vpop.f32.mrb[0].mxu0
      %v1612 = vadd.f32 0.0, %v1611
      %v1613 = vpop.f32.mrb[0].mxu0
      %1614 = vdwg.mxu0
      %v1615 = vadd.f32 %v1311, %v1505
      %v1616 = vadd.f32 %v1312, %v1508
      %v1617 = vadd.f32 %v1313, %v1513
      %v1618 = vadd.f32 %v1314, %v1516
      %v1619 = vadd.f32 %v1315, %v1521
      %v1620 = vadd.f32 %v1316, %v1524
      %v1621 = vadd.f32 %v1317, %v1529
      %v1622 = vadd.f32 %v1318, %v1532
      %v1623 = vadd.f32 %v1319, %v1537
      %v1624 = vadd.f32 %v1320, %v1540
      %v1625 = vadd.f32 %v1321, %v1545
      %v1626 = vadd.f32 %v1322, %v1548
      %v1627 = vadd.f32 %v1323, %v1553
      %v1628 = vadd.f32 %v1324, %v1556
      %v1629 = vadd.f32 %v1325, %v1561
      %v1630 = vadd.f32 %v1326, %v1564
      %v1631 = vadd.f32 %v1327, %v1569
      %v1632 = vadd.f32 %v1328, %v1572
      %v1633 = vadd.f32 %v1329, %v1577
      %v1634 = vadd.f32 %v1330, %v1580
      %v1635 = vadd.f32 %v1331, %v1585
      %v1636 = vadd.f32 %v1332, %v1588
      %v1637 = vadd.f32 %v1333, %v1593
      %v1638 = vadd.f32 %v1334, %v1596
      %v1639 = vadd.f32 %v1335, %v1601
      %v1640 = vadd.f32 %v1336, %v1604
      %v1641 = vadd.f32 %v1337, %v1609
      %v1642 = vadd.f32 %v1338, %v1612
      %s1643 = scalar_lea.vmem %s3, 4
      %v1644 = vld [vmem:[%s1643] sm:$0x3]
      %v1646 = vsel %vm376, %v1409, 0
      %v1649 = vsel %vm376, %v1410, 0
      %v1652 = vsel %vm376, %v1411, 0
      %v1655 = vsel %vm376, %v1412, 0
      %v1658 = vsel %vm376, %v1413, 0
      %v1661 = vsel %vm376, %v1414, 0
      %v1664 = vsel %vm376, %v1415, 0
      %v1667 = vsel %vm376, %v1416, 0
      %v1670 = vsel %vm376, %v1417, 0
      %v1673 = vsel %vm376, %v1418, 0
      %v1676 = vsel %vm376, %v1419, 0
      %v1679 = vsel %vm376, %v1420, 0
      %v1682 = vsel %vm376, %v1421, 0
      %v1685 = vsel %vm376, %v1422, 0
      %v1688 = vsel %vm419, %v1644, 0
      %1690 = vmatprep.subr.bf16.mxu0 0
      %1691 = vmatpush1.bf16.msra.mxu0 %v1688
      %1692 = vmatprep.subr.bf16.mxu0 0
      %1693 = vmatpush1.bf16.msra.mxu0 0
      %1694 = vmatprep.subr.bf16.mxu0 0
      %1695 = vmatpush1.bf16.msra.mxu0 0
      %1696 = vmatprep.subr.bf16.mxu0 0
      %1697 = vmatpush1.bf16.msra.mxu0 0
      %1698 = vmatprep.subr.bf16.mxu0 0
      %1699 = vmatpush1.bf16.msra.mxu0 0
      %1700 = vmatprep.subr.bf16.mxu0 0
      %1701 = vmatpush1.bf16.msra.mxu0 0
      %1702 = vmatprep.subr.bf16.mxu0 0
      %1703 = vmatpush1.bf16.msra.mxu0 0
      %1704 = vmatprep.subr.bf16.mxu0 0
      %1705 = vmatpush1.bf16.msra.mxu0 0
      %1706 = vmatprep.subr.bf16.mxu0 0
      %1707 = vmatpush1.bf16.msra.mxu0 0
      %1708 = vmatprep.subr.bf16.mxu0 0
      %1709 = vmatpush1.bf16.msra.mxu0 0
      %1710 = vmatprep.subr.bf16.mxu0 0
      %1711 = vmatpush1.bf16.msra.mxu0 0
      %1712 = vmatprep.subr.bf16.mxu0 0
      %1713 = vmatpush1.bf16.msra.mxu0 0
      %1714 = vmatprep.subr.bf16.mxu0 0
      %1715 = vmatpush1.bf16.msra.mxu0 0
      %1716 = vmatprep.subr.bf16.mxu0 0
      %1717 = vmatpush1.bf16.msra.mxu0 0
      %1718 = vmatprep.subr.bf16.mxu0 0
      %1719 = vmatpush1.bf16.msra.mxu0 0
      %1720 = vmatprep.subr.bf16.mxu0 0
      %1721 = vmatpush1.bf16.msra.mxu0 0
      %1722 = vmatprep.mubr.bf16.mxu0 0
      %1723 = vmatmul.mubr.bf16.gmra.mrb[0].mxu0 %v1646
      %v1724 = vpop.f32.mrb[0].mxu0
      %v1725 = vadd.f32 0.0, %v1724
      %v1726 = vpop.f32.mrb[0].mxu0
      %v1727 = vpop.f32.mrb[0].mxu0
      %v1728 = vadd.f32 0.0, %v1727
      %v1729 = vpop.f32.mrb[0].mxu0
      %1730 = vmatprep.mubr.bf16.mxu0 0
      %1731 = vmatmul.mubr.bf16.gmra.mrb[0].mxu0 %v1649
      %v1732 = vpop.f32.mrb[0].mxu0
      %v1733 = vadd.f32 0.0, %v1732
      %v1734 = vpop.f32.mrb[0].mxu0
      %v1735 = vpop.f32.mrb[0].mxu0
      %v1736 = vadd.f32 0.0, %v1735
      %v1737 = vpop.f32.mrb[0].mxu0
      %1738 = vmatprep.mubr.bf16.mxu0 0
      %1739 = vmatmul.mubr.bf16.gmra.mrb[0].mxu0 %v1652
      %v1740 = vpop.f32.mrb[0].mxu0
      %v1741 = vadd.f32 0.0, %v1740
      %v1742 = vpop.f32.mrb[0].mxu0
      %v1743 = vpop.f32.mrb[0].mxu0
      %v1744 = vadd.f32 0.0, %v1743
      %v1745 = vpop.f32.mrb[0].mxu0
      %1746 = vmatprep.mubr.bf16.mxu0 0
      %1747 = vmatmul.mubr.bf16.gmra.mrb[0].mxu0 %v1655
      %v1748 = vpop.f32.mrb[0].mxu0
      %v1749 = vadd.f32 0.0, %v1748
      %v1750 = vpop.f32.mrb[0].mxu0
      %v1751 = vpop.f32.mrb[0].mxu0
      %v1752 = vadd.f32 0.0, %v1751
      %v1753 = vpop.f32.mrb[0].mxu0
      %1754 = vmatprep.mubr.bf16.mxu0 0
      %1755 = vmatmul.mubr.bf16.gmra.mrb[0].mxu0 %v1658
      %v1756 = vpop.f32.mrb[0].mxu0
      %v1757 = vadd.f32 0.0, %v1756
      %v1758 = vpop.f32.mrb[0].mxu0
      %v1759 = vpop.f32.mrb[0].mxu0
      %v1760 = vadd.f32 0.0, %v1759
      %v1761 = vpop.f32.mrb[0].mxu0
      %1762 = vmatprep.mubr.bf16.mxu0 0
      %1763 = vmatmul.mubr.bf16.gmra.mrb[0].mxu0 %v1661
      %v1764 = vpop.f32.mrb[0].mxu0
      %v1765 = vadd.f32 0.0, %v1764
      %v1766 = vpop.f32.mrb[0].mxu0
      %v1767 = vpop.f32.mrb[0].mxu0
      %v1768 = vadd.f32 0.0, %v1767
      %v1769 = vpop.f32.mrb[0].mxu0
      %1770 = vmatprep.mubr.bf16.mxu0 0
      %1771 = vmatmul.mubr.bf16.gmra.mrb[0].mxu0 %v1664
      %v1772 = vpop.f32.mrb[0].mxu0
      %v1773 = vadd.f32 0.0, %v1772
      %v1774 = vpop.f32.mrb[0].mxu0
      %v1775 = vpop.f32.mrb[0].mxu0
      %v1776 = vadd.f32 0.0, %v1775
      %v1777 = vpop.f32.mrb[0].mxu0
      %1778 = vmatprep.mubr.bf16.mxu0 0
      %1779 = vmatmul.mubr.bf16.gmra.mrb[0].mxu0 %v1667
      %v1780 = vpop.f32.mrb[0].mxu0
      %v1781 = vadd.f32 0.0, %v1780
      %v1782 = vpop.f32.mrb[0].mxu0
      %v1783 = vpop.f32.mrb[0].mxu0
      %v1784 = vadd.f32 0.0, %v1783
      %v1785 = vpop.f32.mrb[0].mxu0
      %1786 = vmatprep.mubr.bf16.mxu0 0
      %1787 = vmatmul.mubr.bf16.gmra.mrb[0].mxu0 %v1670
      %v1788 = vpop.f32.mrb[0].mxu0
      %v1789 = vadd.f32 0.0, %v1788
      %v1790 = vpop.f32.mrb[0].mxu0
      %v1791 = vpop.f32.mrb[0].mxu0
      %v1792 = vadd.f32 0.0, %v1791
      %v1793 = vpop.f32.mrb[0].mxu0
      %1794 = vmatprep.mubr.bf16.mxu0 0
      %1795 = vmatmul.mubr.bf16.gmra.mrb[0].mxu0 %v1673
      %v1796 = vpop.f32.mrb[0].mxu0
      %v1797 = vadd.f32 0.0, %v1796
      %v1798 = vpop.f32.mrb[0].mxu0
      %v1799 = vpop.f32.mrb[0].mxu0
      %v1800 = vadd.f32 0.0, %v1799
      %v1801 = vpop.f32.mrb[0].mxu0
      %1802 = vmatprep.mubr.bf16.mxu0 0
      %1803 = vmatmul.mubr.bf16.gmra.mrb[0].mxu0 %v1676
      %v1804 = vpop.f32.mrb[0].mxu0
      %v1805 = vadd.f32 0.0, %v1804
      %v1806 = vpop.f32.mrb[0].mxu0
      %v1807 = vpop.f32.mrb[0].mxu0
      %v1808 = vadd.f32 0.0, %v1807
      %v1809 = vpop.f32.mrb[0].mxu0
      %1810 = vmatprep.mubr.bf16.mxu0 0
      %1811 = vmatmul.mubr.bf16.gmra.mrb[0].mxu0 %v1679
      %v1812 = vpop.f32.mrb[0].mxu0
      %v1813 = vadd.f32 0.0, %v1812
      %v1814 = vpop.f32.mrb[0].mxu0
      %v1815 = vpop.f32.mrb[0].mxu0
      %v1816 = vadd.f32 0.0, %v1815
      %v1817 = vpop.f32.mrb[0].mxu0
      %1818 = vmatprep.mubr.bf16.mxu0 0
      %1819 = vmatmul.mubr.bf16.gmra.mrb[0].mxu0 %v1682
      %v1820 = vpop.f32.mrb[0].mxu0
      %v1821 = vadd.f32 0.0, %v1820
      %v1822 = vpop.f32.mrb[0].mxu0
      %v1823 = vpop.f32.mrb[0].mxu0
      %v1824 = vadd.f32 0.0, %v1823
      %v1825 = vpop.f32.mrb[0].mxu0
      %1826 = vmatprep.mubr.bf16.mxu0 0
      %1827 = vmatmul.mubr.bf16.gmra.mrb[0].mxu0 %v1685
      %v1828 = vpop.f32.mrb[0].mxu0
      %v1829 = vadd.f32 0.0, %v1828
      %v1830 = vpop.f32.mrb[0].mxu0
      %v1831 = vpop.f32.mrb[0].mxu0
      %v1832 = vadd.f32 0.0, %v1831
      %v1833 = vpop.f32.mrb[0].mxu0
      %1834 = vdwg.mxu0
      %v1835 = vadd.f32 %v1615, %v1725
      %v1836 = vadd.f32 %v1616, %v1728
      %v1837 = vadd.f32 %v1617, %v1733
      %v1838 = vadd.f32 %v1618, %v1736
      %v1839 = vadd.f32 %v1619, %v1741
      %v1840 = vadd.f32 %v1620, %v1744
      %v1841 = vadd.f32 %v1621, %v1749
      %v1842 = vadd.f32 %v1622, %v1752
      %v1843 = vadd.f32 %v1623, %v1757
      %v1844 = vadd.f32 %v1624, %v1760
      %v1845 = vadd.f32 %v1625, %v1765
      %v1846 = vadd.f32 %v1626, %v1768
      %v1847 = vadd.f32 %v1627, %v1773
      %v1848 = vadd.f32 %v1628, %v1776
      %v1849 = vadd.f32 %v1629, %v1781
      %v1850 = vadd.f32 %v1630, %v1784
      %v1851 = vadd.f32 %v1631, %v1789
      %v1852 = vadd.f32 %v1632, %v1792
      %v1853 = vadd.f32 %v1633, %v1797
      %v1854 = vadd.f32 %v1634, %v1800
      %v1855 = vadd.f32 %v1635, %v1805
      %v1856 = vadd.f32 %v1636, %v1808
      %v1857 = vadd.f32 %v1637, %v1813
      %v1858 = vadd.f32 %v1638, %v1816
      %v1859 = vadd.f32 %v1639, %v1821
      %v1860 = vadd.f32 %v1640, %v1824
      %v1861 = vadd.f32 %v1641, %v1829
      %v1862 = vadd.f32 %v1642, %v1832
      %v1863 = vld [vmem:[%s268 + $0x10] sm:$0xff]
      %v1864 = vld [vmem:[%s268 + $0x18] sm:$0xff]
      %v1865 = vld [vmem:[%s268 + $0x20] sm:$0xff]
      %v1866 = vld [vmem:[%s268 + $0x28] sm:$0xff]
      %v1867 = vld [vmem:[%s268 + $0x30] sm:$0xff]
      %v1868 = vld [vmem:[%s268 + $0x38] sm:$0xff]
      %v1869 = vld [vmem:[%s268 + $0x40] sm:$0xff]
      %v1870 = vld [vmem:[%s268 + $0x48] sm:$0xff]
      %v1871 = vld [vmem:[%s268 + $0x50] sm:$0xff]
      %v1872 = vld [vmem:[%s268 + $0x58] sm:$0xff]
      %v1873 = vld [vmem:[%s268 + $0x60] sm:$0xff]
      %v1874 = vld [vmem:[%s268 + $0x68] sm:$0xff]
      %v1875 = vld [vmem:[%s268 + $0x70] sm:$0xff]
      %v1876 = vld [vmem:[%s268 + $0x78] sm:$0xff]
      %v1877 = vld [vmem:[%s268 + $0x80] sm:$0xff]
      %v1878 = vld [vmem:[%s268 + $0x88] sm:$0xff]
      %v1879 = vld [vmem:[%s268 + $0x90] sm:$0xff]
      %v1880 = vld [vmem:[%s268 + $0x98] sm:$0xff]
      %v1881 = vld [vmem:[%s268 + $0xa0] sm:$0xff]
      %v1882 = vld [vmem:[%s268 + $0xa8] sm:$0xff]
      %v1883 = vld [vmem:[%s268 + $0xb0] sm:$0xff]
      %v1884 = vld [vmem:[%s268 + $0xb8] sm:$0xff]
      %v1885 = vld [vmem:[%s268 + $0xc0] sm:$0xff]
      %v1886 = vld [vmem:[%s268 + $0xc8] sm:$0xff]
      %v1887 = vld [vmem:[%s268 + $0xd0] sm:$0xff]
      %v1888 = vld [vmem:[%s268 + $0xd8] sm:$0xff]
      %v1889 = vld [vmem:[%s268 + $0xe0] sm:$0xff]
      %v1890 = vld [vmem:[%s268 + $0xe8] sm:$0x3f]
      %v1891 = vpack.c.bf16 %v1864, %v1863
      %v1892 = vpack.c.bf16 %v1866, %v1865
      %v1893 = vpack.c.bf16 %v1868, %v1867
      %v1894 = vpack.c.bf16 %v1870, %v1869
      %v1895 = vpack.c.bf16 %v1872, %v1871
      %v1896 = vpack.c.bf16 %v1874, %v1873
      %v1897 = vpack.c.bf16 %v1876, %v1875
      %v1898 = vpack.c.bf16 %v1878, %v1877
      %v1899 = vpack.c.bf16 %v1880, %v1879
      %v1900 = vpack.c.bf16 %v1882, %v1881
      %v1901 = vpack.c.bf16 %v1884, %v1883
      %v1902 = vpack.c.bf16 %v1886, %v1885
      %v1903 = vpack.c.bf16 %v1888, %v1887
      %v1904 = vpack.c.bf16 %v1890, %v1889
      %v1905 = vld [vmem:[%s273 + $0x10] sm:$0xff]
      %v1906 = vld [vmem:[%s273 + $0x18] sm:$0xff]
      %v1907 = vld [vmem:[%s273 + $0x20] sm:$0xff]
      %v1908 = vld [vmem:[%s273 + $0x28] sm:$0xff]
      %v1909 = vld [vmem:[%s273 + $0x30] sm:$0xff]
      %v1910 = vld [vmem:[%s273 + $0x38] sm:$0xff]
      %v1911 = vld [vmem:[%s273 + $0x40] sm:$0xff]
      %v1912 = vld [vmem:[%s273 + $0x48] sm:$0xff]
      %v1913 = vld [vmem:[%s273 + $0x50] sm:$0xff]
      %v1914 = vld [vmem:[%s273 + $0x58] sm:$0xff]
      %v1915 = vld [vmem:[%s273 + $0x60] sm:$0xff]
      %v1916 = vld [vmem:[%s273 + $0x68] sm:$0xff]
      %v1917 = vld [vmem:[%s273 + $0x70] sm:$0xff]
      %v1918 = vld [vmem:[%s273 + $0x78] sm:$0xff]
      %v1919 = vld [vmem:[%s273 + $0x80] sm:$0xff]
      %v1920 = vld [vmem:[%s273 + $0x88] sm:$0xff]
      %v1921 = vld [vmem:[%s273 + $0x90] sm:$0xff]
      %v1922 = vld [vmem:[%s273 + $0x98] sm:$0xff]
      %v1923 = vld [vmem:[%s273 + $0xa0] sm:$0xff]
      %v1924 = vld [vmem:[%s273 + $0xa8] sm:$0xff]
      %v1925 = vld [vmem:[%s273 + $0xb0] sm:$0xff]
      %v1926 = vld [vmem:[%s273 + $0xb8] sm:$0xff]
      %v1927 = vld [vmem:[%s273 + $0xc0] sm:$0xff]
      %v1928 = vld [vmem:[%s273 + $0xc8] sm:$0xff]
      %v1929 = vld [vmem:[%s273 + $0xd0] sm:$0xff]
      %v1930 = vld [vmem:[%s273 + $0xd8] sm:$0xff]
      %v1931 = vld [vmem:[%s273 + $0xe0] sm:$0xff]
      %v1932 = vld [vmem:[%s273 + $0xe8] sm:$0x3f]
      %v1933 = vpack.c.bf16 %v1906, %v1905
      %v1934 = vpack.c.bf16 %v1908, %v1907
      %v1935 = vpack.c.bf16 %v1910, %v1909
      %v1936 = vpack.c.bf16 %v1912, %v1911
      %v1937 = vpack.c.bf16 %v1914, %v1913
      %v1938 = vpack.c.bf16 %v1916, %v1915
      %v1939 = vpack.c.bf16 %v1918, %v1917
      %v1940 = vpack.c.bf16 %v1920, %v1919
      %v1941 = vpack.c.bf16 %v1922, %v1921
      %v1942 = vpack.c.bf16 %v1924, %v1923
      %v1943 = vpack.c.bf16 %v1926, %v1925
      %v1944 = vpack.c.bf16 %v1928, %v1927
      %v1945 = vpack.c.bf16 %v1930, %v1929
      %v1946 = vpack.c.bf16 %v1932, %v1931
      %s1947 = scalar_lea.vmem %s2, 6
      %v1948 = vld [vmem:[%s1947] sm:$0x3]
      %v1950 = vsel %vm376, %v1891, 0
      %v1953 = vsel %vm376, %v1892, 0
      %v1956 = vsel %vm376, %v1893, 0
      %v1959 = vsel %vm376, %v1894, 0
      %v1962 = vsel %vm376, %v1895, 0
      %v1965 = vsel %vm376, %v1896, 0
      %v1968 = vsel %vm376, %v1897, 0
      %v1971 = vsel %vm376, %v1898, 0
      %v1974 = vsel %vm376, %v1899, 0
      %v1977 = vsel %vm376, %v1900, 0
      %v1980 = vsel %vm376, %v1901, 0
      %v1983 = vsel %vm376, %v1902, 0
      %v1986 = vsel %vm376, %v1903, 0
      %v1989 = vsel %vm376, %v1904, 0
      %v1992 = vsel %vm419, %v1948, 0
      %1994 = vmatprep.subr.bf16.mxu0 0
      %1995 = vmatpush1.bf16.msra.mxu0 %v1992
      %1996 = vmatprep.subr.bf16.mxu0 0
      %1997 = vmatpush1.bf16.msra.mxu0 0
      %1998 = vmatprep.subr.bf16.mxu0 0
      %1999 = vmatpush1.bf16.msra.mxu0 0
      %2000 = vmatprep.subr.bf16.mxu0 0
      %2001 = vmatpush1.bf16.msra.mxu0 0
      %2002 = vmatprep.subr.bf16.mxu0 0
      %2003 = vmatpush1.bf16.msra.mxu0 0
      %2004 = vmatprep.subr.bf16.mxu0 0
      %2005 = vmatpush1.bf16.msra.mxu0 0
      %2006 = vmatprep.subr.bf16.mxu0 0
      %2007 = vmatpush1.bf16.msra.mxu0 0
      %2008 = vmatprep.subr.bf16.mxu0 0
      %2009 = vmatpush1.bf16.msra.mxu0 0
      %2010 = vmatprep.subr.bf16.mxu0 0
      %2011 = vmatpush1.bf16.msra.mxu0 0
      %2012 = vmatprep.subr.bf16.mxu0 0
      %2013 = vmatpush1.bf16.msra.mxu0 0
      %2014 = vmatprep.subr.bf16.mxu0 0
      %2015 = vmatpush1.bf16.msra.mxu0 0
      %2016 = vmatprep.subr.bf16.mxu0 0
      %2017 = vmatpush1.bf16.msra.mxu0 0
      %2018 = vmatprep.subr.bf16.mxu0 0
      %2019 = vmatpush1.bf16.msra.mxu0 0
      %2020 = vmatprep.subr.bf16.mxu0 0
      %2021 = vmatpush1.bf16.msra.mxu0 0
      %2022 = vmatprep.subr.bf16.mxu0 0
      %2023 = vmatpush1.bf16.msra.mxu0 0
      %2024 = vmatprep.subr.bf16.mxu0 0
      %2025 = vmatpush1.bf16.msra.mxu0 0
      %2026 = vmatprep.mubr.bf16.mxu0 0
      %2027 = vmatmul.mubr.bf16.gmra.mrb[0].mxu0 %v1950
      %v2028 = vpop.f32.mrb[0].mxu0
      %v2029 = vadd.f32 0.0, %v2028
      %v2030 = vpop.f32.mrb[0].mxu0
      %v2031 = vpop.f32.mrb[0].mxu0
      %v2032 = vadd.f32 0.0, %v2031
      %v2033 = vpop.f32.mrb[0].mxu0
      %2034 = vmatprep.mubr.bf16.mxu0 0
      %2035 = vmatmul.mubr.bf16.gmra.mrb[0].mxu0 %v1953
      %v2036 = vpop.f32.mrb[0].mxu0
      %v2037 = vadd.f32 0.0, %v2036
      %v2038 = vpop.f32.mrb[0].mxu0
      %v2039 = vpop.f32.mrb[0].mxu0
      %v2040 = vadd.f32 0.0, %v2039
      %v2041 = vpop.f32.mrb[0].mxu0
      %2042 = vmatprep.mubr.bf16.mxu0 0
      %2043 = vmatmul.mubr.bf16.gmra.mrb[0].mxu0 %v1956
      %v2044 = vpop.f32.mrb[0].mxu0
      %v2045 = vadd.f32 0.0, %v2044
      %v2046 = vpop.f32.mrb[0].mxu0
      %v2047 = vpop.f32.mrb[0].mxu0
      %v2048 = vadd.f32 0.0, %v2047
      %v2049 = vpop.f32.mrb[0].mxu0
      %2050 = vmatprep.mubr.bf16.mxu0 0
      %2051 = vmatmul.mubr.bf16.gmra.mrb[0].mxu0 %v1959
      %v2052 = vpop.f32.mrb[0].mxu0
      %v2053 = vadd.f32 0.0, %v2052
      %v2054 = vpop.f32.mrb[0].mxu0
      %v2055 = vpop.f32.mrb[0].mxu0
      %v2056 = vadd.f32 0.0, %v2055
      %v2057 = vpop.f32.mrb[0].mxu0
      %2058 = vmatprep.mubr.bf16.mxu0 0
      %2059 = vmatmul.mubr.bf16.gmra.mrb[0].mxu0 %v1962
      %v2060 = vpop.f32.mrb[0].mxu0
      %v2061 = vadd.f32 0.0, %v2060
      %v2062 = vpop.f32.mrb[0].mxu0
      %v2063 = vpop.f32.mrb[0].mxu0
      %v2064 = vadd.f32 0.0, %v2063
      %v2065 = vpop.f32.mrb[0].mxu0
      %2066 = vmatprep.mubr.bf16.mxu0 0
      %2067 = vmatmul.mubr.bf16.gmra.mrb[0].mxu0 %v1965
      %v2068 = vpop.f32.mrb[0].mxu0
      %v2069 = vadd.f32 0.0, %v2068
      %v2070 = vpop.f32.mrb[0].mxu0
      %v2071 = vpop.f32.mrb[0].mxu0
      %v2072 = vadd.f32 0.0, %v2071
      %v2073 = vpop.f32.mrb[0].mxu0
      %2074 = vmatprep.mubr.bf16.mxu0 0
      %2075 = vmatmul.mubr.bf16.gmra.mrb[0].mxu0 %v1968
      %v2076 = vpop.f32.mrb[0].mxu0
      %v2077 = vadd.f32 0.0, %v2076
      %v2078 = vpop.f32.mrb[0].mxu0
      %v2079 = vpop.f32.mrb[0].mxu0
      %v2080 = vadd.f32 0.0, %v2079
      %v2081 = vpop.f32.mrb[0].mxu0
      %2082 = vmatprep.mubr.bf16.mxu0 0
      %2083 = vmatmul.mubr.bf16.gmra.mrb[0].mxu0 %v1971
      %v2084 = vpop.f32.mrb[0].mxu0
      %v2085 = vadd.f32 0.0, %v2084
      %v2086 = vpop.f32.mrb[0].mxu0
      %v2087 = vpop.f32.mrb[0].mxu0
      %v2088 = vadd.f32 0.0, %v2087
      %v2089 = vpop.f32.mrb[0].mxu0
      %2090 = vmatprep.mubr.bf16.mxu0 0
      %2091 = vmatmul.mubr.bf16.gmra.mrb[0].mxu0 %v1974
      %v2092 = vpop.f32.mrb[0].mxu0
      %v2093 = vadd.f32 0.0, %v2092
      %v2094 = vpop.f32.mrb[0].mxu0
      %v2095 = vpop.f32.mrb[0].mxu0
      %v2096 = vadd.f32 0.0, %v2095
      %v2097 = vpop.f32.mrb[0].mxu0
      %2098 = vmatprep.mubr.bf16.mxu0 0
      %2099 = vmatmul.mubr.bf16.gmra.mrb[0].mxu0 %v1977
      %v2100 = vpop.f32.mrb[0].mxu0
      %v2101 = vadd.f32 0.0, %v2100
      %v2102 = vpop.f32.mrb[0].mxu0
      %v2103 = vpop.f32.mrb[0].mxu0
      %v2104 = vadd.f32 0.0, %v2103
      %v2105 = vpop.f32.mrb[0].mxu0
      %2106 = vmatprep.mubr.bf16.mxu0 0
      %2107 = vmatmul.mubr.bf16.gmra.mrb[0].mxu0 %v1980
      %v2108 = vpop.f32.mrb[0].mxu0
      %v2109 = vadd.f32 0.0, %v2108
      %v2110 = vpop.f32.mrb[0].mxu0
      %v2111 = vpop.f32.mrb[0].mxu0
      %v2112 = vadd.f32 0.0, %v2111
      %v2113 = vpop.f32.mrb[0].mxu0
      %2114 = vmatprep.mubr.bf16.mxu0 0
      %2115 = vmatmul.mubr.bf16.gmra.mrb[0].mxu0 %v1983
      %v2116 = vpop.f32.mrb[0].mxu0
      %v2117 = vadd.f32 0.0, %v2116
      %v2118 = vpop.f32.mrb[0].mxu0
      %v2119 = vpop.f32.mrb[0].mxu0
      %v2120 = vadd.f32 0.0, %v2119
      %v2121 = vpop.f32.mrb[0].mxu0
      %2122 = vmatprep.mubr.bf16.mxu0 0
      %2123 = vmatmul.mubr.bf16.gmra.mrb[0].mxu0 %v1986
      %v2124 = vpop.f32.mrb[0].mxu0
      %v2125 = vadd.f32 0.0, %v2124
      %v2126 = vpop.f32.mrb[0].mxu0
      %v2127 = vpop.f32.mrb[0].mxu0
      %v2128 = vadd.f32 0.0, %v2127
      %v2129 = vpop.f32.mrb[0].mxu0
      %2130 = vmatprep.mubr.bf16.mxu0 0
      %2131 = vmatmul.mubr.bf16.gmra.mrb[0].mxu0 %v1989
      %v2132 = vpop.f32.mrb[0].mxu0
      %v2133 = vadd.f32 0.0, %v2132
      %v2134 = vpop.f32.mrb[0].mxu0
      %v2135 = vpop.f32.mrb[0].mxu0
      %v2136 = vadd.f32 0.0, %v2135
      %v2137 = vpop.f32.mrb[0].mxu0
      %2138 = vdwg.mxu0
      %v2139 = vadd.f32 %v1835, %v2029
      %v2140 = vadd.f32 %v1836, %v2032
      %v2141 = vadd.f32 %v1837, %v2037
      %v2142 = vadd.f32 %v1838, %v2040
      %v2143 = vadd.f32 %v1839, %v2045
      %v2144 = vadd.f32 %v1840, %v2048
      %v2145 = vadd.f32 %v1841, %v2053
      %v2146 = vadd.f32 %v1842, %v2056
      %v2147 = vadd.f32 %v1843, %v2061
      %v2148 = vadd.f32 %v1844, %v2064
      %v2149 = vadd.f32 %v1845, %v2069
      %v2150 = vadd.f32 %v1846, %v2072
      %v2151 = vadd.f32 %v1847, %v2077
      %v2152 = vadd.f32 %v1848, %v2080
      %v2153 = vadd.f32 %v1849, %v2085
      %v2154 = vadd.f32 %v1850, %v2088
      %v2155 = vadd.f32 %v1851, %v2093
      %v2156 = vadd.f32 %v1852, %v2096
      %v2157 = vadd.f32 %v1853, %v2101
      %v2158 = vadd.f32 %v1854, %v2104
      %v2159 = vadd.f32 %v1855, %v2109
      %v2160 = vadd.f32 %v1856, %v2112
      %v2161 = vadd.f32 %v1857, %v2117
      %v2162 = vadd.f32 %v1858, %v2120
      %v2163 = vadd.f32 %v1859, %v2125
      %v2164 = vadd.f32 %v1860, %v2128
      %v2165 = vadd.f32 %v1861, %v2133
      %v2166 = vadd.f32 %v1862, %v2136
      %s2167 = scalar_lea.vmem %s3, 6
      %v2168 = vld [vmem:[%s2167] sm:$0x3]
      %v2170 = vsel %vm376, %v1933, 0
      %v2173 = vsel %vm376, %v1934, 0
      %v2176 = vsel %vm376, %v1935, 0
      %v2179 = vsel %vm376, %v1936, 0
      %v2182 = vsel %vm376, %v1937, 0
      %v2185 = vsel %vm376, %v1938, 0
      %v2188 = vsel %vm376, %v1939, 0
      %v2191 = vsel %vm376, %v1940, 0
      %v2194 = vsel %vm376, %v1941, 0
      %v2197 = vsel %vm376, %v1942, 0
      %v2200 = vsel %vm376, %v1943, 0
      %v2203 = vsel %vm376, %v1944, 0
      %v2206 = vsel %vm376, %v1945, 0
      %v2209 = vsel %vm376, %v1946, 0
      %v2212 = vsel %vm419, %v2168, 0
      %2214 = vmatprep.subr.bf16.mxu0 0
      %2215 = vmatpush1.bf16.msra.mxu0 %v2212
      %2216 = vmatprep.subr.bf16.mxu0 0
      %2217 = vmatpush1.bf16.msra.mxu0 0
      %2218 = vmatprep.subr.bf16.mxu0 0
      %2219 = vmatpush1.bf16.msra.mxu0 0
      %2220 = vmatprep.subr.bf16.mxu0 0
      %2221 = vmatpush1.bf16.msra.mxu0 0
      %2222 = vmatprep.subr.bf16.mxu0 0
      %2223 = vmatpush1.bf16.msra.mxu0 0
      %2224 = vmatprep.subr.bf16.mxu0 0
      %2225 = vmatpush1.bf16.msra.mxu0 0
      %2226 = vmatprep.subr.bf16.mxu0 0
      %2227 = vmatpush1.bf16.msra.mxu0 0
      %2228 = vmatprep.subr.bf16.mxu0 0
      %2229 = vmatpush1.bf16.msra.mxu0 0
      %2230 = vmatprep.subr.bf16.mxu0 0
      %2231 = vmatpush1.bf16.msra.mxu0 0
      %2232 = vmatprep.subr.bf16.mxu0 0
      %2233 = vmatpush1.bf16.msra.mxu0 0
      %2234 = vmatprep.subr.bf16.mxu0 0
      %2235 = vmatpush1.bf16.msra.mxu0 0
      %2236 = vmatprep.subr.bf16.mxu0 0
      %2237 = vmatpush1.bf16.msra.mxu0 0
      %2238 = vmatprep.subr.bf16.mxu0 0
      %2239 = vmatpush1.bf16.msra.mxu0 0
      %2240 = vmatprep.subr.bf16.mxu0 0
      %2241 = vmatpush1.bf16.msra.mxu0 0
      %2242 = vmatprep.subr.bf16.mxu0 0
      %2243 = vmatpush1.bf16.msra.mxu0 0
      %2244 = vmatprep.subr.bf16.mxu0 0
      %2245 = vmatpush1.bf16.msra.mxu0 0
      %2246 = vmatprep.mubr.bf16.mxu0 0
      %2247 = vmatmul.mubr.bf16.gmra.mrb[0].mxu0 %v2170
      %v2248 = vpop.f32.mrb[0].mxu0
      %v2249 = vadd.f32 0.0, %v2248
      %v2250 = vpop.f32.mrb[0].mxu0
      %v2251 = vpop.f32.mrb[0].mxu0
      %v2252 = vadd.f32 0.0, %v2251
      %v2253 = vpop.f32.mrb[0].mxu0
      %2254 = vmatprep.mubr.bf16.mxu0 0
      %2255 = vmatmul.mubr.bf16.gmra.mrb[0].mxu0 %v2173
      %v2256 = vpop.f32.mrb[0].mxu0
      %v2257 = vadd.f32 0.0, %v2256
      %v2258 = vpop.f32.mrb[0].mxu0
      %v2259 = vpop.f32.mrb[0].mxu0
      %v2260 = vadd.f32 0.0, %v2259
      %v2261 = vpop.f32.mrb[0].mxu0
      %2262 = vmatprep.mubr.bf16.mxu0 0
      %2263 = vmatmul.mubr.bf16.gmra.mrb[0].mxu0 %v2176
      %v2264 = vpop.f32.mrb[0].mxu0
      %v2265 = vadd.f32 0.0, %v2264
      %v2266 = vpop.f32.mrb[0].mxu0
      %v2267 = vpop.f32.mrb[0].mxu0
      %v2268 = vadd.f32 0.0, %v2267
      %v2269 = vpop.f32.mrb[0].mxu0
      %2270 = vmatprep.mubr.bf16.mxu0 0
      %2271 = vmatmul.mubr.bf16.gmra.mrb[0].mxu0 %v2179
      %v2272 = vpop.f32.mrb[0].mxu0
      %v2273 = vadd.f32 0.0, %v2272
      %v2274 = vpop.f32.mrb[0].mxu0
      %v2275 = vpop.f32.mrb[0].mxu0
      %v2276 = vadd.f32 0.0, %v2275
      %v2277 = vpop.f32.mrb[0].mxu0
      %2278 = vmatprep.mubr.bf16.mxu0 0
      %2279 = vmatmul.mubr.bf16.gmra.mrb[0].mxu0 %v2182
      %v2280 = vpop.f32.mrb[0].mxu0
      %v2281 = vadd.f32 0.0, %v2280
      %v2282 = vpop.f32.mrb[0].mxu0
      %v2283 = vpop.f32.mrb[0].mxu0
      %v2284 = vadd.f32 0.0, %v2283
      %v2285 = vpop.f32.mrb[0].mxu0
      %2286 = vmatprep.mubr.bf16.mxu0 0
      %2287 = vmatmul.mubr.bf16.gmra.mrb[0].mxu0 %v2185
      %v2288 = vpop.f32.mrb[0].mxu0
      %v2289 = vadd.f32 0.0, %v2288
      %v2290 = vpop.f32.mrb[0].mxu0
      %v2291 = vpop.f32.mrb[0].mxu0
      %v2292 = vadd.f32 0.0, %v2291
      %v2293 = vpop.f32.mrb[0].mxu0
      %2294 = vmatprep.mubr.bf16.mxu0 0
      %2295 = vmatmul.mubr.bf16.gmra.mrb[0].mxu0 %v2188
      %v2296 = vpop.f32.mrb[0].mxu0
      %v2297 = vadd.f32 0.0, %v2296
      %v2298 = vpop.f32.mrb[0].mxu0
      %v2299 = vpop.f32.mrb[0].mxu0
      %v2300 = vadd.f32 0.0, %v2299
      %v2301 = vpop.f32.mrb[0].mxu0
      %2302 = vmatprep.mubr.bf16.mxu0 0
      %2303 = vmatmul.mubr.bf16.gmra.mrb[0].mxu0 %v2191
      %v2304 = vpop.f32.mrb[0].mxu0
      %v2305 = vadd.f32 0.0, %v2304
      %v2306 = vpop.f32.mrb[0].mxu0
      %v2307 = vpop.f32.mrb[0].mxu0
      %v2308 = vadd.f32 0.0, %v2307
      %v2309 = vpop.f32.mrb[0].mxu0
      %2310 = vmatprep.mubr.bf16.mxu0 0
      %2311 = vmatmul.mubr.bf16.gmra.mrb[0].mxu0 %v2194
      %v2312 = vpop.f32.mrb[0].mxu0
      %v2313 = vadd.f32 0.0, %v2312
      %v2314 = vpop.f32.mrb[0].mxu0
      %v2315 = vpop.f32.mrb[0].mxu0
      %v2316 = vadd.f32 0.0, %v2315
      %v2317 = vpop.f32.mrb[0].mxu0
      %2318 = vmatprep.mubr.bf16.mxu0 0
      %2319 = vmatmul.mubr.bf16.gmra.mrb[0].mxu0 %v2197
      %v2320 = vpop.f32.mrb[0].mxu0
      %v2321 = vadd.f32 0.0, %v2320
      %v2322 = vpop.f32.mrb[0].mxu0
      %v2323 = vpop.f32.mrb[0].mxu0
      %v2324 = vadd.f32 0.0, %v2323
      %v2325 = vpop.f32.mrb[0].mxu0
      %2326 = vmatprep.mubr.bf16.mxu0 0
      %2327 = vmatmul.mubr.bf16.gmra.mrb[0].mxu0 %v2200
      %v2328 = vpop.f32.mrb[0].mxu0
      %v2329 = vadd.f32 0.0, %v2328
      %v2330 = vpop.f32.mrb[0].mxu0
      %v2331 = vpop.f32.mrb[0].mxu0
      %v2332 = vadd.f32 0.0, %v2331
      %v2333 = vpop.f32.mrb[0].mxu0
      %2334 = vmatprep.mubr.bf16.mxu0 0
      %2335 = vmatmul.mubr.bf16.gmra.mrb[0].mxu0 %v2203
      %v2336 = vpop.f32.mrb[0].mxu0
      %v2337 = vadd.f32 0.0, %v2336
      %v2338 = vpop.f32.mrb[0].mxu0
      %v2339 = vpop.f32.mrb[0].mxu0
      %v2340 = vadd.f32 0.0, %v2339
      %v2341 = vpop.f32.mrb[0].mxu0
      %2342 = vmatprep.mubr.bf16.mxu0 0
      %2343 = vmatmul.mubr.bf16.gmra.mrb[0].mxu0 %v2206
      %v2344 = vpop.f32.mrb[0].mxu0
      %v2345 = vadd.f32 0.0, %v2344
      %v2346 = vpop.f32.mrb[0].mxu0
      %v2347 = vpop.f32.mrb[0].mxu0
      %v2348 = vadd.f32 0.0, %v2347
      %v2349 = vpop.f32.mrb[0].mxu0
      %2350 = vmatprep.mubr.bf16.mxu0 0
      %2351 = vmatmul.mubr.bf16.gmra.mrb[0].mxu0 %v2209
      %v2352 = vpop.f32.mrb[0].mxu0
      %v2353 = vadd.f32 0.0, %v2352
      %v2354 = vpop.f32.mrb[0].mxu0
      %v2355 = vpop.f32.mrb[0].mxu0
      %v2356 = vadd.f32 0.0, %v2355
      %v2357 = vpop.f32.mrb[0].mxu0
      %2358 = vdwg.mxu0
      %v2359 = vadd.f32 %v2139, %v2249
      %v2360 = vadd.f32 %v2140, %v2252
      %v2361 = vadd.f32 %v2141, %v2257
      %v2362 = vadd.f32 %v2142, %v2260
      %v2363 = vadd.f32 %v2143, %v2265
      %v2364 = vadd.f32 %v2144, %v2268
      %v2365 = vadd.f32 %v2145, %v2273
      %v2366 = vadd.f32 %v2146, %v2276
      %v2367 = vadd.f32 %v2147, %v2281
      %v2368 = vadd.f32 %v2148, %v2284
      %v2369 = vadd.f32 %v2149, %v2289
      %v2370 = vadd.f32 %v2150, %v2292
      %v2371 = vadd.f32 %v2151, %v2297
      %v2372 = vadd.f32 %v2152, %v2300
      %v2373 = vadd.f32 %v2153, %v2305
      %v2374 = vadd.f32 %v2154, %v2308
      %v2375 = vadd.f32 %v2155, %v2313
      %v2376 = vadd.f32 %v2156, %v2316
      %v2377 = vadd.f32 %v2157, %v2321
      %v2378 = vadd.f32 %v2158, %v2324
      %v2379 = vadd.f32 %v2159, %v2329
      %v2380 = vadd.f32 %v2160, %v2332
      %v2381 = vadd.f32 %v2161, %v2337
      %v2382 = vadd.f32 %v2162, %v2340
      %v2383 = vadd.f32 %v2163, %v2345
      %v2384 = vadd.f32 %v2164, %v2348
      %v2385 = vadd.f32 %v2165, %v2353
      %v2386 = vadd.f32 %v2166, %v2356
      %v2387 = vld [vmem:[%s268 + $0x11] sm:$0xff]
      %v2388 = vld [vmem:[%s268 + $0x19] sm:$0xff]
      %v2389 = vld [vmem:[%s268 + $0x21] sm:$0xff]
      %v2390 = vld [vmem:[%s268 + $0x29] sm:$0xff]
      %v2391 = vld [vmem:[%s268 + $0x31] sm:$0xff]
      %v2392 = vld [vmem:[%s268 + $0x39] sm:$0xff]
      %v2393 = vld [vmem:[%s268 + $0x41] sm:$0xff]
      %v2394 = vld [vmem:[%s268 + $0x49] sm:$0xff]
      %v2395 = vld [vmem:[%s268 + $0x51] sm:$0xff]
      %v2396 = vld [vmem:[%s268 + $0x59] sm:$0xff]
      %v2397 = vld [vmem:[%s268 + $0x61] sm:$0xff]
      %v2398 = vld [vmem:[%s268 + $0x69] sm:$0xff]
      %v2399 = vld [vmem:[%s268 + $0x71] sm:$0xff]
      %v2400 = vld [vmem:[%s268 + $0x79] sm:$0xff]
      %v2401 = vld [vmem:[%s268 + $0x81] sm:$0xff]
      %v2402 = vld [vmem:[%s268 + $0x89] sm:$0xff]
      %v2403 = vld [vmem:[%s268 + $0x91] sm:$0xff]
      %v2404 = vld [vmem:[%s268 + $0x99] sm:$0xff]
      %v2405 = vld [vmem:[%s268 + $0xa1] sm:$0xff]
      %v2406 = vld [vmem:[%s268 + $0xa9] sm:$0xff]
      %v2407 = vld [vmem:[%s268 + $0xb1] sm:$0xff]
      %v2408 = vld [vmem:[%s268 + $0xb9] sm:$0xff]
      %v2409 = vld [vmem:[%s268 + $0xc1] sm:$0xff]
      %v2410 = vld [vmem:[%s268 + $0xc9] sm:$0xff]
      %v2411 = vld [vmem:[%s268 + $0xd1] sm:$0xff]
      %v2412 = vld [vmem:[%s268 + $0xd9] sm:$0xff]
      %v2413 = vld [vmem:[%s268 + $0xe1] sm:$0xff]
      %v2414 = vld [vmem:[%s268 + $0xe9] sm:$0x3f]
      %v2415 = vpack.c.bf16 %v2388, %v2387
      %v2416 = vpack.c.bf16 %v2390, %v2389
      %v2417 = vpack.c.bf16 %v2392, %v2391
      %v2418 = vpack.c.bf16 %v2394, %v2393
      %v2419 = vpack.c.bf16 %v2396, %v2395
      %v2420 = vpack.c.bf16 %v2398, %v2397
      %v2421 = vpack.c.bf16 %v2400, %v2399
      %v2422 = vpack.c.bf16 %v2402, %v2401
      %v2423 = vpack.c.bf16 %v2404, %v2403
      %v2424 = vpack.c.bf16 %v2406, %v2405
      %v2425 = vpack.c.bf16 %v2408, %v2407
      %v2426 = vpack.c.bf16 %v2410, %v2409
      %v2427 = vpack.c.bf16 %v2412, %v2411
      %v2428 = vpack.c.bf16 %v2414, %v2413
      %v2429 = vld [vmem:[%s273 + $0x11] sm:$0xff]
      %v2430 = vld [vmem:[%s273 + $0x19] sm:$0xff]
      %v2431 = vld [vmem:[%s273 + $0x21] sm:$0xff]
      %v2432 = vld [vmem:[%s273 + $0x29] sm:$0xff]
      %v2433 = vld [vmem:[%s273 + $0x31] sm:$0xff]
      %v2434 = vld [vmem:[%s273 + $0x39] sm:$0xff]
      %v2435 = vld [vmem:[%s273 + $0x41] sm:$0xff]
      %v2436 = vld [vmem:[%s273 + $0x49] sm:$0xff]
      %v2437 = vld [vmem:[%s273 + $0x51] sm:$0xff]
      %v2438 = vld [vmem:[%s273 + $0x59] sm:$0xff]
      %v2439 = vld [vmem:[%s273 + $0x61] sm:$0xff]
      %v2440 = vld [vmem:[%s273 + $0x69] sm:$0xff]
      %v2441 = vld [vmem:[%s273 + $0x71] sm:$0xff]
      %v2442 = vld [vmem:[%s273 + $0x79] sm:$0xff]
      %v2443 = vld [vmem:[%s273 + $0x81] sm:$0xff]
      %v2444 = vld [vmem:[%s273 + $0x89] sm:$0xff]
      %v2445 = vld [vmem:[%s273 + $0x91] sm:$0xff]
      %v2446 = vld [vmem:[%s273 + $0x99] sm:$0xff]
      %v2447 = vld [vmem:[%s273 + $0xa1] sm:$0xff]
      %v2448 = vld [vmem:[%s273 + $0xa9] sm:$0xff]
      %v2449 = vld [vmem:[%s273 + $0xb1] sm:$0xff]
      %v2450 = vld [vmem:[%s273 + $0xb9] sm:$0xff]
      %v2451 = vld [vmem:[%s273 + $0xc1] sm:$0xff]
      %v2452 = vld [vmem:[%s273 + $0xc9] sm:$0xff]
      %v2453 = vld [vmem:[%s273 + $0xd1] sm:$0xff]
      %v2454 = vld [vmem:[%s273 + $0xd9] sm:$0xff]
      %v2455 = vld [vmem:[%s273 + $0xe1] sm:$0xff]
      %v2456 = vld [vmem:[%s273 + $0xe9] sm:$0x3f]
      %v2457 = vpack.c.bf16 %v2430, %v2429
      %v2458 = vpack.c.bf16 %v2432, %v2431
      %v2459 = vpack.c.bf16 %v2434, %v2433
      %v2460 = vpack.c.bf16 %v2436, %v2435
      %v2461 = vpack.c.bf16 %v2438, %v2437
      %v2462 = vpack.c.bf16 %v2440, %v2439
      %v2463 = vpack.c.bf16 %v2442, %v2441
      %v2464 = vpack.c.bf16 %v2444, %v2443
      %v2465 = vpack.c.bf16 %v2446, %v2445
      %v2466 = vpack.c.bf16 %v2448, %v2447
      %v2467 = vpack.c.bf16 %v2450, %v2449
      %v2468 = vpack.c.bf16 %v2452, %v2451
      %v2469 = vpack.c.bf16 %v2454, %v2453
      %v2470 = vpack.c.bf16 %v2456, %v2455
      %s2471 = scalar_lea.vmem %s2, 8
      %v2472 = vld [vmem:[%s2471] sm:$0x3]
      %v2474 = vsel %vm376, %v2415, 0
      %v2477 = vsel %vm376, %v2416, 0
      %v2480 = vsel %vm376, %v2417, 0
      %v2483 = vsel %vm376, %v2418, 0
      %v2486 = vsel %vm376, %v2419, 0
      %v2489 = vsel %vm376, %v2420, 0
      %v2492 = vsel %vm376, %v2421, 0
      %v2495 = vsel %vm376, %v2422, 0
      %v2498 = vsel %vm376, %v2423, 0
      %v2501 = vsel %vm376, %v2424, 0
      %v2504 = vsel %vm376, %v2425, 0
      %v2507 = vsel %vm376, %v2426, 0
      %v2510 = vsel %vm376, %v2427, 0
      %v2513 = vsel %vm376, %v2428, 0
      %v2516 = vsel %vm419, %v2472, 0
      %2518 = vmatprep.subr.bf16.mxu0 0
      %2519 = vmatpush1.bf16.msra.mxu0 %v2516
      %2520 = vmatprep.subr.bf16.mxu0 0
      %2521 = vmatpush1.bf16.msra.mxu0 0
      %2522 = vmatprep.subr.bf16.mxu0 0
      %2523 = vmatpush1.bf16.msra.mxu0 0
      %2524 = vmatprep.subr.bf16.mxu0 0
      %2525 = vmatpush1.bf16.msra.mxu0 0
      %2526 = vmatprep.subr.bf16.mxu0 0
      %2527 = vmatpush1.bf16.msra.mxu0 0
      %2528 = vmatprep.subr.bf16.mxu0 0
      %2529 = vmatpush1.bf16.msra.mxu0 0
      %2530 = vmatprep.subr.bf16.mxu0 0
      %2531 = vmatpush1.bf16.msra.mxu0 0
      %2532 = vmatprep.subr.bf16.mxu0 0
      %2533 = vmatpush1.bf16.msra.mxu0 0
      %2534 = vmatprep.subr.bf16.mxu0 0
      %2535 = vmatpush1.bf16.msra.mxu0 0
      %2536 = vmatprep.subr.bf16.mxu0 0
      %2537 = vmatpush1.bf16.msra.mxu0 0
      %2538 = vmatprep.subr.bf16.mxu0 0
      %2539 = vmatpush1.bf16.msra.mxu0 0
      %2540 = vmatprep.subr.bf16.mxu0 0
      %2541 = vmatpush1.bf16.msra.mxu0 0
      %2542 = vmatprep.subr.bf16.mxu0 0
      %2543 = vmatpush1.bf16.msra.mxu0 0
      %2544 = vmatprep.subr.bf16.mxu0 0
      %2545 = vmatpush1.bf16.msra.mxu0 0
      %2546 = vmatprep.subr.bf16.mxu0 0
      %2547 = vmatpush1.bf16.msra.mxu0 0
      %2548 = vmatprep.subr.bf16.mxu0 0
      %2549 = vmatpush1.bf16.msra.mxu0 0
      %2550 = vmatprep.mubr.bf16.mxu0 0
      %2551 = vmatmul.mubr.bf16.gmra.mrb[0].mxu0 %v2474
      %v2552 = vpop.f32.mrb[0].mxu0
      %v2553 = vadd.f32 0.0, %v2552
      %v2554 = vpop.f32.mrb[0].mxu0
      %v2555 = vpop.f32.mrb[0].mxu0
      %v2556 = vadd.f32 0.0, %v2555
      %v2557 = vpop.f32.mrb[0].mxu0
      %2558 = vmatprep.mubr.bf16.mxu0 0
      %2559 = vmatmul.mubr.bf16.gmra.mrb[0].mxu0 %v2477
      %v2560 = vpop.f32.mrb[0].mxu0
      %v2561 = vadd.f32 0.0, %v2560
      %v2562 = vpop.f32.mrb[0].mxu0
      %v2563 = vpop.f32.mrb[0].mxu0
      %v2564 = vadd.f32 0.0, %v2563
      %v2565 = vpop.f32.mrb[0].mxu0
      %2566 = vmatprep.mubr.bf16.mxu0 0
      %2567 = vmatmul.mubr.bf16.gmra.mrb[0].mxu0 %v2480
      %v2568 = vpop.f32.mrb[0].mxu0
      %v2569 = vadd.f32 0.0, %v2568
      %v2570 = vpop.f32.mrb[0].mxu0
      %v2571 = vpop.f32.mrb[0].mxu0
      %v2572 = vadd.f32 0.0, %v2571
      %v2573 = vpop.f32.mrb[0].mxu0
      %2574 = vmatprep.mubr.bf16.mxu0 0
      %2575 = vmatmul.mubr.bf16.gmra.mrb[0].mxu0 %v2483
      %v2576 = vpop.f32.mrb[0].mxu0
      %v2577 = vadd.f32 0.0, %v2576
      %v2578 = vpop.f32.mrb[0].mxu0
      %v2579 = vpop.f32.mrb[0].mxu0
      %v2580 = vadd.f32 0.0, %v2579
      %v2581 = vpop.f32.mrb[0].mxu0
      %2582 = vmatprep.mubr.bf16.mxu0 0
      %2583 = vmatmul.mubr.bf16.gmra.mrb[0].mxu0 %v2486
      %v2584 = vpop.f32.mrb[0].mxu0
      %v2585 = vadd.f32 0.0, %v2584
      %v2586 = vpop.f32.mrb[0].mxu0
      %v2587 = vpop.f32.mrb[0].mxu0
      %v2588 = vadd.f32 0.0, %v2587
      %v2589 = vpop.f32.mrb[0].mxu0
      %2590 = vmatprep.mubr.bf16.mxu0 0
      %2591 = vmatmul.mubr.bf16.gmra.mrb[0].mxu0 %v2489
      %v2592 = vpop.f32.mrb[0].mxu0
      %v2593 = vadd.f32 0.0, %v2592
      %v2594 = vpop.f32.mrb[0].mxu0
      %v2595 = vpop.f32.mrb[0].mxu0
      %v2596 = vadd.f32 0.0, %v2595
      %v2597 = vpop.f32.mrb[0].mxu0
      %2598 = vmatprep.mubr.bf16.mxu0 0
      %2599 = vmatmul.mubr.bf16.gmra.mrb[0].mxu0 %v2492
      %v2600 = vpop.f32.mrb[0].mxu0
      %v2601 = vadd.f32 0.0, %v2600
      %v2602 = vpop.f32.mrb[0].mxu0
      %v2603 = vpop.f32.mrb[0].mxu0
      %v2604 = vadd.f32 0.0, %v2603
      %v2605 = vpop.f32.mrb[0].mxu0
      %2606 = vmatprep.mubr.bf16.mxu0 0
      %2607 = vmatmul.mubr.bf16.gmra.mrb[0].mxu0 %v2495
      %v2608 = vpop.f32.mrb[0].mxu0
      %v2609 = vadd.f32 0.0, %v2608
      %v2610 = vpop.f32.mrb[0].mxu0
      %v2611 = vpop.f32.mrb[0].mxu0
      %v2612 = vadd.f32 0.0, %v2611
      %v2613 = vpop.f32.mrb[0].mxu0
      %2614 = vmatprep.mubr.bf16.mxu0 0
      %2615 = vmatmul.mubr.bf16.gmra.mrb[0].mxu0 %v2498
      %v2616 = vpop.f32.mrb[0].mxu0
      %v2617 = vadd.f32 0.0, %v2616
      %v2618 = vpop.f32.mrb[0].mxu0
      %v2619 = vpop.f32.mrb[0].mxu0
      %v2620 = vadd.f32 0.0, %v2619
      %v2621 = vpop.f32.mrb[0].mxu0
      %2622 = vmatprep.mubr.bf16.mxu0 0
      %2623 = vmatmul.mubr.bf16.gmra.mrb[0].mxu0 %v2501
      %v2624 = vpop.f32.mrb[0].mxu0
      %v2625 = vadd.f32 0.0, %v2624
      %v2626 = vpop.f32.mrb[0].mxu0
      %v2627 = vpop.f32.mrb[0].mxu0
      %v2628 = vadd.f32 0.0, %v2627
      %v2629 = vpop.f32.mrb[0].mxu0
      %2630 = vmatprep.mubr.bf16.mxu0 0
      %2631 = vmatmul.mubr.bf16.gmra.mrb[0].mxu0 %v2504
      %v2632 = vpop.f32.mrb[0].mxu0
      %v2633 = vadd.f32 0.0, %v2632
      %v2634 = vpop.f32.mrb[0].mxu0
      %v2635 = vpop.f32.mrb[0].mxu0
      %v2636 = vadd.f32 0.0, %v2635
      %v2637 = vpop.f32.mrb[0].mxu0
      %2638 = vmatprep.mubr.bf16.mxu0 0
      %2639 = vmatmul.mubr.bf16.gmra.mrb[0].mxu0 %v2507
      %v2640 = vpop.f32.mrb[0].mxu0
      %v2641 = vadd.f32 0.0, %v2640
      %v2642 = vpop.f32.mrb[0].mxu0
      %v2643 = vpop.f32.mrb[0].mxu0
      %v2644 = vadd.f32 0.0, %v2643
      %v2645 = vpop.f32.mrb[0].mxu0
      %2646 = vmatprep.mubr.bf16.mxu0 0
      %2647 = vmatmul.mubr.bf16.gmra.mrb[0].mxu0 %v2510
      %v2648 = vpop.f32.mrb[0].mxu0
      %v2649 = vadd.f32 0.0, %v2648
      %v2650 = vpop.f32.mrb[0].mxu0
      %v2651 = vpop.f32.mrb[0].mxu0
      %v2652 = vadd.f32 0.0, %v2651
      %v2653 = vpop.f32.mrb[0].mxu0
      %2654 = vmatprep.mubr.bf16.mxu0 0
      %2655 = vmatmul.mubr.bf16.gmra.mrb[0].mxu0 %v2513
      %v2656 = vpop.f32.mrb[0].mxu0
      %v2657 = vadd.f32 0.0, %v2656
      %v2658 = vpop.f32.mrb[0].mxu0
      %v2659 = vpop.f32.mrb[0].mxu0
      %v2660 = vadd.f32 0.0, %v2659
      %v2661 = vpop.f32.mrb[0].mxu0
      %2662 = vdwg.mxu0
      %v2663 = vadd.f32 %v2359, %v2553
      %v2664 = vadd.f32 %v2360, %v2556
      %v2665 = vadd.f32 %v2361, %v2561
      %v2666 = vadd.f32 %v2362, %v2564
      %v2667 = vadd.f32 %v2363, %v2569
      %v2668 = vadd.f32 %v2364, %v2572
      %v2669 = vadd.f32 %v2365, %v2577
      %v2670 = vadd.f32 %v2366, %v2580
      %v2671 = vadd.f32 %v2367, %v2585
      %v2672 = vadd.f32 %v2368, %v2588
      %v2673 = vadd.f32 %v2369, %v2593
      %v2674 = vadd.f32 %v2370, %v2596
      %v2675 = vadd.f32 %v2371, %v2601
      %v2676 = vadd.f32 %v2372, %v2604
      %v2677 = vadd.f32 %v2373, %v2609
      %v2678 = vadd.f32 %v2374, %v2612
      %v2679 = vadd.f32 %v2375, %v2617
      %v2680 = vadd.f32 %v2376, %v2620
      %v2681 = vadd.f32 %v2377, %v2625
      %v2682 = vadd.f32 %v2378, %v2628
      %v2683 = vadd.f32 %v2379, %v2633
      %v2684 = vadd.f32 %v2380, %v2636
      %v2685 = vadd.f32 %v2381, %v2641
      %v2686 = vadd.f32 %v2382, %v2644
      %v2687 = vadd.f32 %v2383, %v2649
      %v2688 = vadd.f32 %v2384, %v2652
      %v2689 = vadd.f32 %v2385, %v2657
      %v2690 = vadd.f32 %v2386, %v2660
      %s2691 = scalar_lea.vmem %s3, 8
      %v2692 = vld [vmem:[%s2691] sm:$0x3]
      %v2694 = vsel %vm376, %v2457, 0
      %v2697 = vsel %vm376, %v2458, 0
      %v2700 = vsel %vm376, %v2459, 0
      %v2703 = vsel %vm376, %v2460, 0
      %v2706 = vsel %vm376, %v2461, 0
      %v2709 = vsel %vm376, %v2462, 0
      %v2712 = vsel %vm376, %v2463, 0
      %v2715 = vsel %vm376, %v2464, 0
      %v2718 = vsel %vm376, %v2465, 0
      %v2721 = vsel %vm376, %v2466, 0
      %v2724 = vsel %vm376, %v2467, 0
      %v2727 = vsel %vm376, %v2468, 0
      %v2730 = vsel %vm376, %v2469, 0
      %v2733 = vsel %vm376, %v2470, 0
      %v2736 = vsel %vm419, %v2692, 0
      %2738 = vmatprep.subr.bf16.mxu0 0
      %2739 = vmatpush1.bf16.msra.mxu0 %v2736
      %2740 = vmatprep.subr.bf16.mxu0 0
      %2741 = vmatpush1.bf16.msra.mxu0 0
      %2742 = vmatprep.subr.bf16.mxu0 0
      %2743 = vmatpush1.bf16.msra.mxu0 0
      %2744 = vmatprep.subr.bf16.mxu0 0
      %2745 = vmatpush1.bf16.msra.mxu0 0
      %2746 = vmatprep.subr.bf16.mxu0 0
      %2747 = vmatpush1.bf16.msra.mxu0 0
      %2748 = vmatprep.subr.bf16.mxu0 0
      %2749 = vmatpush1.bf16.msra.mxu0 0
      %2750 = vmatprep.subr.bf16.mxu0 0
      %2751 = vmatpush1.bf16.msra.mxu0 0
      %2752 = vmatprep.subr.bf16.mxu0 0
      %2753 = vmatpush1.bf16.msra.mxu0 0
      %2754 = vmatprep.subr.bf16.mxu0 0
      %2755 = vmatpush1.bf16.msra.mxu0 0
      %2756 = vmatprep.subr.bf16.mxu0 0
      %2757 = vmatpush1.bf16.msra.mxu0 0
      %2758 = vmatprep.subr.bf16.mxu0 0
      %2759 = vmatpush1.bf16.msra.mxu0 0
      %2760 = vmatprep.subr.bf16.mxu0 0
      %2761 = vmatpush1.bf16.msra.mxu0 0
      %2762 = vmatprep.subr.bf16.mxu0 0
      %2763 = vmatpush1.bf16.msra.mxu0 0
      %2764 = vmatprep.subr.bf16.mxu0 0
      %2765 = vmatpush1.bf16.msra.mxu0 0
      %2766 = vmatprep.subr.bf16.mxu0 0
      %2767 = vmatpush1.bf16.msra.mxu0 0
      %2768 = vmatprep.subr.bf16.mxu0 0
      %2769 = vmatpush1.bf16.msra.mxu0 0
      %2770 = vmatprep.mubr.bf16.mxu0 0
      %2771 = vmatmul.mubr.bf16.gmra.mrb[0].mxu0 %v2694
      %v2772 = vpop.f32.mrb[0].mxu0
      %v2773 = vadd.f32 0.0, %v2772
      %v2774 = vpop.f32.mrb[0].mxu0
      %v2775 = vpop.f32.mrb[0].mxu0
      %v2776 = vadd.f32 0.0, %v2775
      %v2777 = vpop.f32.mrb[0].mxu0
      %2778 = vmatprep.mubr.bf16.mxu0 0
      %2779 = vmatmul.mubr.bf16.gmra.mrb[0].mxu0 %v2697
      %v2780 = vpop.f32.mrb[0].mxu0
      %v2781 = vadd.f32 0.0, %v2780
      %v2782 = vpop.f32.mrb[0].mxu0
      %v2783 = vpop.f32.mrb[0].mxu0
      %v2784 = vadd.f32 0.0, %v2783
      %v2785 = vpop.f32.mrb[0].mxu0
      %2786 = vmatprep.mubr.bf16.mxu0 0
      %2787 = vmatmul.mubr.bf16.gmra.mrb[0].mxu0 %v2700
      %v2788 = vpop.f32.mrb[0].mxu0
      %v2789 = vadd.f32 0.0, %v2788
      %v2790 = vpop.f32.mrb[0].mxu0
      %v2791 = vpop.f32.mrb[0].mxu0
      %v2792 = vadd.f32 0.0, %v2791
      %v2793 = vpop.f32.mrb[0].mxu0
      %2794 = vmatprep.mubr.bf16.mxu0 0
      %2795 = vmatmul.mubr.bf16.gmra.mrb[0].mxu0 %v2703
      %v2796 = vpop.f32.mrb[0].mxu0
      %v2797 = vadd.f32 0.0, %v2796
      %v2798 = vpop.f32.mrb[0].mxu0
      %v2799 = vpop.f32.mrb[0].mxu0
      %v2800 = vadd.f32 0.0, %v2799
      %v2801 = vpop.f32.mrb[0].mxu0
      %2802 = vmatprep.mubr.bf16.mxu0 0
      %2803 = vmatmul.mubr.bf16.gmra.mrb[0].mxu0 %v2706
      %v2804 = vpop.f32.mrb[0].mxu0
      %v2805 = vadd.f32 0.0, %v2804
      %v2806 = vpop.f32.mrb[0].mxu0
      %v2807 = vpop.f32.mrb[0].mxu0
      %v2808 = vadd.f32 0.0, %v2807
      %v2809 = vpop.f32.mrb[0].mxu0
      %2810 = vmatprep.mubr.bf16.mxu0 0
      %2811 = vmatmul.mubr.bf16.gmra.mrb[0].mxu0 %v2709
      %v2812 = vpop.f32.mrb[0].mxu0
      %v2813 = vadd.f32 0.0, %v2812
      %v2814 = vpop.f32.mrb[0].mxu0
      %v2815 = vpop.f32.mrb[0].mxu0
      %v2816 = vadd.f32 0.0, %v2815
      %v2817 = vpop.f32.mrb[0].mxu0
      %2818 = vmatprep.mubr.bf16.mxu0 0
      %2819 = vmatmul.mubr.bf16.gmra.mrb[0].mxu0 %v2712
      %v2820 = vpop.f32.mrb[0].mxu0
      %v2821 = vadd.f32 0.0, %v2820
      %v2822 = vpop.f32.mrb[0].mxu0
      %v2823 = vpop.f32.mrb[0].mxu0
      %v2824 = vadd.f32 0.0, %v2823
      %v2825 = vpop.f32.mrb[0].mxu0
      %2826 = vmatprep.mubr.bf16.mxu0 0
      %2827 = vmatmul.mubr.bf16.gmra.mrb[0].mxu0 %v2715
      %v2828 = vpop.f32.mrb[0].mxu0
      %v2829 = vadd.f32 0.0, %v2828
      %v2830 = vpop.f32.mrb[0].mxu0
      %v2831 = vpop.f32.mrb[0].mxu0
      %v2832 = vadd.f32 0.0, %v2831
      %v2833 = vpop.f32.mrb[0].mxu0
      %2834 = vmatprep.mubr.bf16.mxu0 0
      %2835 = vmatmul.mubr.bf16.gmra.mrb[0].mxu0 %v2718
      %v2836 = vpop.f32.mrb[0].mxu0
      %v2837 = vadd.f32 0.0, %v2836
      %v2838 = vpop.f32.mrb[0].mxu0
      %v2839 = vpop.f32.mrb[0].mxu0
      %v2840 = vadd.f32 0.0, %v2839
      %v2841 = vpop.f32.mrb[0].mxu0
      %2842 = vmatprep.mubr.bf16.mxu0 0
      %2843 = vmatmul.mubr.bf16.gmra.mrb[0].mxu0 %v2721
      %v2844 = vpop.f32.mrb[0].mxu0
      %v2845 = vadd.f32 0.0, %v2844
      %v2846 = vpop.f32.mrb[0].mxu0
      %v2847 = vpop.f32.mrb[0].mxu0
      %v2848 = vadd.f32 0.0, %v2847
      %v2849 = vpop.f32.mrb[0].mxu0
      %2850 = vmatprep.mubr.bf16.mxu0 0
      %2851 = vmatmul.mubr.bf16.gmra.mrb[0].mxu0 %v2724
      %v2852 = vpop.f32.mrb[0].mxu0
      %v2853 = vadd.f32 0.0, %v2852
      %v2854 = vpop.f32.mrb[0].mxu0
      %v2855 = vpop.f32.mrb[0].mxu0
      %v2856 = vadd.f32 0.0, %v2855
      %v2857 = vpop.f32.mrb[0].mxu0
      %2858 = vmatprep.mubr.bf16.mxu0 0
      %2859 = vmatmul.mubr.bf16.gmra.mrb[0].mxu0 %v2727
      %v2860 = vpop.f32.mrb[0].mxu0
      %v2861 = vadd.f32 0.0, %v2860
      %v2862 = vpop.f32.mrb[0].mxu0
      %v2863 = vpop.f32.mrb[0].mxu0
      %v2864 = vadd.f32 0.0, %v2863
      %v2865 = vpop.f32.mrb[0].mxu0
      %2866 = vmatprep.mubr.bf16.mxu0 0
      %2867 = vmatmul.mubr.bf16.gmra.mrb[0].mxu0 %v2730
      %v2868 = vpop.f32.mrb[0].mxu0
      %v2869 = vadd.f32 0.0, %v2868
      %v2870 = vpop.f32.mrb[0].mxu0
      %v2871 = vpop.f32.mrb[0].mxu0
      %v2872 = vadd.f32 0.0, %v2871
      %v2873 = vpop.f32.mrb[0].mxu0
      %2874 = vmatprep.mubr.bf16.mxu0 0
      %2875 = vmatmul.mubr.bf16.gmra.mrb[0].mxu0 %v2733
      %v2876 = vpop.f32.mrb[0].mxu0
      %v2877 = vadd.f32 0.0, %v2876
      %v2878 = vpop.f32.mrb[0].mxu0
      %v2879 = vpop.f32.mrb[0].mxu0
      %v2880 = vadd.f32 0.0, %v2879
      %v2881 = vpop.f32.mrb[0].mxu0
      %2882 = vdwg.mxu0
      %v2883 = vadd.f32 %v2663, %v2773
      %v2884 = vadd.f32 %v2664, %v2776
      %v2885 = vadd.f32 %v2665, %v2781
      %v2886 = vadd.f32 %v2666, %v2784
      %v2887 = vadd.f32 %v2667, %v2789
      %v2888 = vadd.f32 %v2668, %v2792
      %v2889 = vadd.f32 %v2669, %v2797
      %v2890 = vadd.f32 %v2670, %v2800
      %v2891 = vadd.f32 %v2671, %v2805
      %v2892 = vadd.f32 %v2672, %v2808
      %v2893 = vadd.f32 %v2673, %v2813
      %v2894 = vadd.f32 %v2674, %v2816
      %v2895 = vadd.f32 %v2675, %v2821
      %v2896 = vadd.f32 %v2676, %v2824
      %v2897 = vadd.f32 %v2677, %v2829
      %v2898 = vadd.f32 %v2678, %v2832
      %v2899 = vadd.f32 %v2679, %v2837
      %v2900 = vadd.f32 %v2680, %v2840
      %v2901 = vadd.f32 %v2681, %v2845
      %v2902 = vadd.f32 %v2682, %v2848
      %v2903 = vadd.f32 %v2683, %v2853
      %v2904 = vadd.f32 %v2684, %v2856
      %v2905 = vadd.f32 %v2685, %v2861
      %v2906 = vadd.f32 %v2686, %v2864
      %v2907 = vadd.f32 %v2687, %v2869
      %v2908 = vadd.f32 %v2688, %v2872
      %v2909 = vadd.f32 %v2689, %v2877
      %v2910 = vadd.f32 %v2690, %v2880
      %v2911 = vld [vmem:[%s268 + $0x12] sm:$0xff]
      %v2912 = vld [vmem:[%s268 + $0x1a] sm:$0xff]
      %v2913 = vld [vmem:[%s268 + $0x22] sm:$0xff]
      %v2914 = vld [vmem:[%s268 + $0x2a] sm:$0xff]
      %v2915 = vld [vmem:[%s268 + $0x32] sm:$0xff]
      %v2916 = vld [vmem:[%s268 + $0x3a] sm:$0xff]
      %v2917 = vld [vmem:[%s268 + $0x42] sm:$0xff]
      %v2918 = vld [vmem:[%s268 + $0x4a] sm:$0xff]
      %v2919 = vld [vmem:[%s268 + $0x52] sm:$0xff]
      %v2920 = vld [vmem:[%s268 + $0x5a] sm:$0xff]
      %v2921 = vld [vmem:[%s268 + $0x62] sm:$0xff]
      %v2922 = vld [vmem:[%s268 + $0x6a] sm:$0xff]
      %v2923 = vld [vmem:[%s268 + $0x72] sm:$0xff]
      %v2924 = vld [vmem:[%s268 + $0x7a] sm:$0xff]
      %v2925 = vld [vmem:[%s268 + $0x82] sm:$0xff]
      %v2926 = vld [vmem:[%s268 + $0x8a] sm:$0xff]
      %v2927 = vld [vmem:[%s268 + $0x92] sm:$0xff]
      %v2928 = vld [vmem:[%s268 + $0x9a] sm:$0xff]
      %v2929 = vld [vmem:[%s268 + $0xa2] sm:$0xff]
      %v2930 = vld [vmem:[%s268 + $0xaa] sm:$0xff]
      %v2931 = vld [vmem:[%s268 + $0xb2] sm:$0xff]
      %v2932 = vld [vmem:[%s268 + $0xba] sm:$0xff]
      %v2933 = vld [vmem:[%s268 + $0xc2] sm:$0xff]
      %v2934 = vld [vmem:[%s268 + $0xca] sm:$0xff]
      %v2935 = vld [vmem:[%s268 + $0xd2] sm:$0xff]
      %v2936 = vld [vmem:[%s268 + $0xda] sm:$0xff]
      %v2937 = vld [vmem:[%s268 + $0xe2] sm:$0xff]
      %v2938 = vld [vmem:[%s268 + $0xea] sm:$0x3f]
      %v2939 = vpack.c.bf16 %v2912, %v2911
      %v2940 = vpack.c.bf16 %v2914, %v2913
      %v2941 = vpack.c.bf16 %v2916, %v2915
      %v2942 = vpack.c.bf16 %v2918, %v2917
      %v2943 = vpack.c.bf16 %v2920, %v2919
      %v2944 = vpack.c.bf16 %v2922, %v2921
      %v2945 = vpack.c.bf16 %v2924, %v2923
      %v2946 = vpack.c.bf16 %v2926, %v2925
      %v2947 = vpack.c.bf16 %v2928, %v2927
      %v2948 = vpack.c.bf16 %v2930, %v2929
      %v2949 = vpack.c.bf16 %v2932, %v2931
      %v2950 = vpack.c.bf16 %v2934, %v2933
      %v2951 = vpack.c.bf16 %v2936, %v2935
      %v2952 = vpack.c.bf16 %v2938, %v2937
      %v2953 = vld [vmem:[%s273 + $0x12] sm:$0xff]
      %v2954 = vld [vmem:[%s273 + $0x1a] sm:$0xff]
      %v2955 = vld [vmem:[%s273 + $0x22] sm:$0xff]
      %v2956 = vld [vmem:[%s273 + $0x2a] sm:$0xff]
      %v2957 = vld [vmem:[%s273 + $0x32] sm:$0xff]
      %v2958 = vld [vmem:[%s273 + $0x3a] sm:$0xff]
      %v2959 = vld [vmem:[%s273 + $0x42] sm:$0xff]
      %v2960 = vld [vmem:[%s273 + $0x4a] sm:$0xff]
      %v2961 = vld [vmem:[%s273 + $0x52] sm:$0xff]
      %v2962 = vld [vmem:[%s273 + $0x5a] sm:$0xff]
      %v2963 = vld [vmem:[%s273 + $0x62] sm:$0xff]
      %v2964 = vld [vmem:[%s273 + $0x6a] sm:$0xff]
      %v2965 = vld [vmem:[%s273 + $0x72] sm:$0xff]
      %v2966 = vld [vmem:[%s273 + $0x7a] sm:$0xff]
      %v2967 = vld [vmem:[%s273 + $0x82] sm:$0xff]
      %v2968 = vld [vmem:[%s273 + $0x8a] sm:$0xff]
      %v2969 = vld [vmem:[%s273 + $0x92] sm:$0xff]
      %v2970 = vld [vmem:[%s273 + $0x9a] sm:$0xff]
      %v2971 = vld [vmem:[%s273 + $0xa2] sm:$0xff]
      %v2972 = vld [vmem:[%s273 + $0xaa] sm:$0xff]
      %v2973 = vld [vmem:[%s273 + $0xb2] sm:$0xff]
      %v2974 = vld [vmem:[%s273 + $0xba] sm:$0xff]
      %v2975 = vld [vmem:[%s273 + $0xc2] sm:$0xff]
      %v2976 = vld [vmem:[%s273 + $0xca] sm:$0xff]
      %v2977 = vld [vmem:[%s273 + $0xd2] sm:$0xff]
      %v2978 = vld [vmem:[%s273 + $0xda] sm:$0xff]
      %v2979 = vld [vmem:[%s273 + $0xe2] sm:$0xff]
      %v2980 = vld [vmem:[%s273 + $0xea] sm:$0x3f]
      %v2981 = vpack.c.bf16 %v2954, %v2953
      %v2982 = vpack.c.bf16 %v2956, %v2955
      %v2983 = vpack.c.bf16 %v2958, %v2957
      %v2984 = vpack.c.bf16 %v2960, %v2959
      %v2985 = vpack.c.bf16 %v2962, %v2961
      %v2986 = vpack.c.bf16 %v2964, %v2963
      %v2987 = vpack.c.bf16 %v2966, %v2965
      %v2988 = vpack.c.bf16 %v2968, %v2967
      %v2989 = vpack.c.bf16 %v2970, %v2969
      %v2990 = vpack.c.bf16 %v2972, %v2971
      %v2991 = vpack.c.bf16 %v2974, %v2973
      %v2992 = vpack.c.bf16 %v2976, %v2975
      %v2993 = vpack.c.bf16 %v2978, %v2977
      %v2994 = vpack.c.bf16 %v2980, %v2979
      %s2995 = scalar_lea.vmem %s2, 10
      %v2996 = vld [vmem:[%s2995] sm:$0x3]
      %v2998 = vsel %vm376, %v2939, 0
      %v3001 = vsel %vm376, %v2940, 0
      %v3004 = vsel %vm376, %v2941, 0
      %v3007 = vsel %vm376, %v2942, 0
      %v3010 = vsel %vm376, %v2943, 0
      %v3013 = vsel %vm376, %v2944, 0
      %v3016 = vsel %vm376, %v2945, 0
      %v3019 = vsel %vm376, %v2946, 0
      %v3022 = vsel %vm376, %v2947, 0
      %v3025 = vsel %vm376, %v2948, 0
      %v3028 = vsel %vm376, %v2949, 0
      %v3031 = vsel %vm376, %v2950, 0
      %v3034 = vsel %vm376, %v2951, 0
      %v3037 = vsel %vm376, %v2952, 0
      %v3040 = vsel %vm419, %v2996, 0
      %3042 = vmatprep.subr.bf16.mxu0 0
      %3043 = vmatpush1.bf16.msra.mxu0 %v3040
      %3044 = vmatprep.subr.bf16.mxu0 0
      %3045 = vmatpush1.bf16.msra.mxu0 0
      %3046 = vmatprep.subr.bf16.mxu0 0
      %3047 = vmatpush1.bf16.msra.mxu0 0
      %3048 = vmatprep.subr.bf16.mxu0 0
      %3049 = vmatpush1.bf16.msra.mxu0 0
      %3050 = vmatprep.subr.bf16.mxu0 0
      %3051 = vmatpush1.bf16.msra.mxu0 0
      %3052 = vmatprep.subr.bf16.mxu0 0
      %3053 = vmatpush1.bf16.msra.mxu0 0
      %3054 = vmatprep.subr.bf16.mxu0 0
      %3055 = vmatpush1.bf16.msra.mxu0 0
      %3056 = vmatprep.subr.bf16.mxu0 0
      %3057 = vmatpush1.bf16.msra.mxu0 0
      %3058 = vmatprep.subr.bf16.mxu0 0
      %3059 = vmatpush1.bf16.msra.mxu0 0
      %3060 = vmatprep.subr.bf16.mxu0 0
      %3061 = vmatpush1.bf16.msra.mxu0 0
      %3062 = vmatprep.subr.bf16.mxu0 0
      %3063 = vmatpush1.bf16.msra.mxu0 0
      %3064 = vmatprep.subr.bf16.mxu0 0
      %3065 = vmatpush1.bf16.msra.mxu0 0
      %3066 = vmatprep.subr.bf16.mxu0 0
      %3067 = vmatpush1.bf16.msra.mxu0 0
      %3068 = vmatprep.subr.bf16.mxu0 0
      %3069 = vmatpush1.bf16.msra.mxu0 0
      %3070 = vmatprep.subr.bf16.mxu0 0
      %3071 = vmatpush1.bf16.msra.mxu0 0
      %3072 = vmatprep.subr.bf16.mxu0 0
      %3073 = vmatpush1.bf16.msra.mxu0 0
      %3074 = vmatprep.mubr.bf16.mxu0 0
      %3075 = vmatmul.mubr.bf16.gmra.mrb[0].mxu0 %v2998
      %v3076 = vpop.f32.mrb[0].mxu0
      %v3077 = vadd.f32 0.0, %v3076
      %v3078 = vpop.f32.mrb[0].mxu0
      %v3079 = vpop.f32.mrb[0].mxu0
      %v3080 = vadd.f32 0.0, %v3079
      %v3081 = vpop.f32.mrb[0].mxu0
      %3082 = vmatprep.mubr.bf16.mxu0 0
      %3083 = vmatmul.mubr.bf16.gmra.mrb[0].mxu0 %v3001
      %v3084 = vpop.f32.mrb[0].mxu0
      %v3085 = vadd.f32 0.0, %v3084
      %v3086 = vpop.f32.mrb[0].mxu0
      %v3087 = vpop.f32.mrb[0].mxu0
      %v3088 = vadd.f32 0.0, %v3087
      %v3089 = vpop.f32.mrb[0].mxu0
      %3090 = vmatprep.mubr.bf16.mxu0 0
      %3091 = vmatmul.mubr.bf16.gmra.mrb[0].mxu0 %v3004
      %v3092 = vpop.f32.mrb[0].mxu0
      %v3093 = vadd.f32 0.0, %v3092
      %v3094 = vpop.f32.mrb[0].mxu0
      %v3095 = vpop.f32.mrb[0].mxu0
      %v3096 = vadd.f32 0.0, %v3095
      %v3097 = vpop.f32.mrb[0].mxu0
      %3098 = vmatprep.mubr.bf16.mxu0 0
      %3099 = vmatmul.mubr.bf16.gmra.mrb[0].mxu0 %v3007
      %v3100 = vpop.f32.mrb[0].mxu0
      %v3101 = vadd.f32 0.0, %v3100
      %v3102 = vpop.f32.mrb[0].mxu0
      %v3103 = vpop.f32.mrb[0].mxu0
      %v3104 = vadd.f32 0.0, %v3103
      %v3105 = vpop.f32.mrb[0].mxu0
      %3106 = vmatprep.mubr.bf16.mxu0 0
      %3107 = vmatmul.mubr.bf16.gmra.mrb[0].mxu0 %v3010
      %v3108 = vpop.f32.mrb[0].mxu0
      %v3109 = vadd.f32 0.0, %v3108
      %v3110 = vpop.f32.mrb[0].mxu0
      %v3111 = vpop.f32.mrb[0].mxu0
      %v3112 = vadd.f32 0.0, %v3111
      %v3113 = vpop.f32.mrb[0].mxu0
      %3114 = vmatprep.mubr.bf16.mxu0 0
      %3115 = vmatmul.mubr.bf16.gmra.mrb[0].mxu0 %v3013
      %v3116 = vpop.f32.mrb[0].mxu0
      %v3117 = vadd.f32 0.0, %v3116
      %v3118 = vpop.f32.mrb[0].mxu0
      %v3119 = vpop.f32.mrb[0].mxu0
      %v3120 = vadd.f32 0.0, %v3119
      %v3121 = vpop.f32.mrb[0].mxu0
      %3122 = vmatprep.mubr.bf16.mxu0 0
      %3123 = vmatmul.mubr.bf16.gmra.mrb[0].mxu0 %v3016
      %v3124 = vpop.f32.mrb[0].mxu0
      %v3125 = vadd.f32 0.0, %v3124
      %v3126 = vpop.f32.mrb[0].mxu0
      %v3127 = vpop.f32.mrb[0].mxu0
      %v3128 = vadd.f32 0.0, %v3127
      %v3129 = vpop.f32.mrb[0].mxu0
      %3130 = vmatprep.mubr.bf16.mxu0 0
      %3131 = vmatmul.mubr.bf16.gmra.mrb[0].mxu0 %v3019
      %v3132 = vpop.f32.mrb[0].mxu0
      %v3133 = vadd.f32 0.0, %v3132
      %v3134 = vpop.f32.mrb[0].mxu0
      %v3135 = vpop.f32.mrb[0].mxu0
      %v3136 = vadd.f32 0.0, %v3135
      %v3137 = vpop.f32.mrb[0].mxu0
      %3138 = vmatprep.mubr.bf16.mxu0 0
      %3139 = vmatmul.mubr.bf16.gmra.mrb[0].mxu0 %v3022
      %v3140 = vpop.f32.mrb[0].mxu0
      %v3141 = vadd.f32 0.0, %v3140
      %v3142 = vpop.f32.mrb[0].mxu0
      %v3143 = vpop.f32.mrb[0].mxu0
      %v3144 = vadd.f32 0.0, %v3143
      %v3145 = vpop.f32.mrb[0].mxu0
      %3146 = vmatprep.mubr.bf16.mxu0 0
      %3147 = vmatmul.mubr.bf16.gmra.mrb[0].mxu0 %v3025
      %v3148 = vpop.f32.mrb[0].mxu0
      %v3149 = vadd.f32 0.0, %v3148
      %v3150 = vpop.f32.mrb[0].mxu0
      %v3151 = vpop.f32.mrb[0].mxu0
      %v3152 = vadd.f32 0.0, %v3151
      %v3153 = vpop.f32.mrb[0].mxu0
      %3154 = vmatprep.mubr.bf16.mxu0 0
      %3155 = vmatmul.mubr.bf16.gmra.mrb[0].mxu0 %v3028
      %v3156 = vpop.f32.mrb[0].mxu0
      %v3157 = vadd.f32 0.0, %v3156
      %v3158 = vpop.f32.mrb[0].mxu0
      %v3159 = vpop.f32.mrb[0].mxu0
      %v3160 = vadd.f32 0.0, %v3159
      %v3161 = vpop.f32.mrb[0].mxu0
      %3162 = vmatprep.mubr.bf16.mxu0 0
      %3163 = vmatmul.mubr.bf16.gmra.mrb[0].mxu0 %v3031
      %v3164 = vpop.f32.mrb[0].mxu0
      %v3165 = vadd.f32 0.0, %v3164
      %v3166 = vpop.f32.mrb[0].mxu0
      %v3167 = vpop.f32.mrb[0].mxu0
      %v3168 = vadd.f32 0.0, %v3167
      %v3169 = vpop.f32.mrb[0].mxu0
      %3170 = vmatprep.mubr.bf16.mxu0 0
      %3171 = vmatmul.mubr.bf16.gmra.mrb[0].mxu0 %v3034
      %v3172 = vpop.f32.mrb[0].mxu0
      %v3173 = vadd.f32 0.0, %v3172
      %v3174 = vpop.f32.mrb[0].mxu0
      %v3175 = vpop.f32.mrb[0].mxu0
      %v3176 = vadd.f32 0.0, %v3175
      %v3177 = vpop.f32.mrb[0].mxu0
      %3178 = vmatprep.mubr.bf16.mxu0 0
      %3179 = vmatmul.mubr.bf16.gmra.mrb[0].mxu0 %v3037
      %v3180 = vpop.f32.mrb[0].mxu0
      %v3181 = vadd.f32 0.0, %v3180
      %v3182 = vpop.f32.mrb[0].mxu0
      %v3183 = vpop.f32.mrb[0].mxu0
      %v3184 = vadd.f32 0.0, %v3183
      %v3185 = vpop.f32.mrb[0].mxu0
      %3186 = vdwg.mxu0
      %v3187 = vadd.f32 %v2883, %v3077
      %v3188 = vadd.f32 %v2884, %v3080
      %v3189 = vadd.f32 %v2885, %v3085
      %v3190 = vadd.f32 %v2886, %v3088
      %v3191 = vadd.f32 %v2887, %v3093
      %v3192 = vadd.f32 %v2888, %v3096
      %v3193 = vadd.f32 %v2889, %v3101
      %v3194 = vadd.f32 %v2890, %v3104
      %v3195 = vadd.f32 %v2891, %v3109
      %v3196 = vadd.f32 %v2892, %v3112
      %v3197 = vadd.f32 %v2893, %v3117
      %v3198 = vadd.f32 %v2894, %v3120
      %v3199 = vadd.f32 %v2895, %v3125
      %v3200 = vadd.f32 %v2896, %v3128
      %v3201 = vadd.f32 %v2897, %v3133
      %v3202 = vadd.f32 %v2898, %v3136
      %v3203 = vadd.f32 %v2899, %v3141
      %v3204 = vadd.f32 %v2900, %v3144
      %v3205 = vadd.f32 %v2901, %v3149
      %v3206 = vadd.f32 %v2902, %v3152
      %v3207 = vadd.f32 %v2903, %v3157
      %v3208 = vadd.f32 %v2904, %v3160
      %v3209 = vadd.f32 %v2905, %v3165
      %v3210 = vadd.f32 %v2906, %v3168
      %v3211 = vadd.f32 %v2907, %v3173
      %v3212 = vadd.f32 %v2908, %v3176
      %v3213 = vadd.f32 %v2909, %v3181
      %v3214 = vadd.f32 %v2910, %v3184
      %s3215 = scalar_lea.vmem %s3, 10
      %v3216 = vld [vmem:[%s3215] sm:$0x3]
      %v3218 = vsel %vm376, %v2981, 0
      %v3221 = vsel %vm376, %v2982, 0
      %v3224 = vsel %vm376, %v2983, 0
      %v3227 = vsel %vm376, %v2984, 0
      %v3230 = vsel %vm376, %v2985, 0
      %v3233 = vsel %vm376, %v2986, 0
      %v3236 = vsel %vm376, %v2987, 0
      %v3239 = vsel %vm376, %v2988, 0
      %v3242 = vsel %vm376, %v2989, 0
      %v3245 = vsel %vm376, %v2990, 0
      %v3248 = vsel %vm376, %v2991, 0
      %v3251 = vsel %vm376, %v2992, 0
      %v3254 = vsel %vm376, %v2993, 0
      %v3257 = vsel %vm376, %v2994, 0
      %v3260 = vsel %vm419, %v3216, 0
      %3262 = vmatprep.subr.bf16.mxu0 0
      %3263 = vmatpush1.bf16.msra.mxu0 %v3260
      %3264 = vmatprep.subr.bf16.mxu0 0
      %3265 = vmatpush1.bf16.msra.mxu0 0
      %3266 = vmatprep.subr.bf16.mxu0 0
      %3267 = vmatpush1.bf16.msra.mxu0 0
      %3268 = vmatprep.subr.bf16.mxu0 0
      %3269 = vmatpush1.bf16.msra.mxu0 0
      %3270 = vmatprep.subr.bf16.mxu0 0
      %3271 = vmatpush1.bf16.msra.mxu0 0
      %3272 = vmatprep.subr.bf16.mxu0 0
      %3273 = vmatpush1.bf16.msra.mxu0 0
      %3274 = vmatprep.subr.bf16.mxu0 0
      %3275 = vmatpush1.bf16.msra.mxu0 0
      %3276 = vmatprep.subr.bf16.mxu0 0
      %3277 = vmatpush1.bf16.msra.mxu0 0
      %3278 = vmatprep.subr.bf16.mxu0 0
      %3279 = vmatpush1.bf16.msra.mxu0 0
      %3280 = vmatprep.subr.bf16.mxu0 0
      %3281 = vmatpush1.bf16.msra.mxu0 0
      %3282 = vmatprep.subr.bf16.mxu0 0
      %3283 = vmatpush1.bf16.msra.mxu0 0
      %3284 = vmatprep.subr.bf16.mxu0 0
      %3285 = vmatpush1.bf16.msra.mxu0 0
      %3286 = vmatprep.subr.bf16.mxu0 0
      %3287 = vmatpush1.bf16.msra.mxu0 0
      %3288 = vmatprep.subr.bf16.mxu0 0
      %3289 = vmatpush1.bf16.msra.mxu0 0
      %3290 = vmatprep.subr.bf16.mxu0 0
      %3291 = vmatpush1.bf16.msra.mxu0 0
      %3292 = vmatprep.subr.bf16.mxu0 0
      %3293 = vmatpush1.bf16.msra.mxu0 0
      %3294 = vmatprep.mubr.bf16.mxu0 0
      %3295 = vmatmul.mubr.bf16.gmra.mrb[0].mxu0 %v3218
      %v3296 = vpop.f32.mrb[0].mxu0
      %v3297 = vadd.f32 0.0, %v3296
      %v3298 = vpop.f32.mrb[0].mxu0
      %v3299 = vpop.f32.mrb[0].mxu0
      %v3300 = vadd.f32 0.0, %v3299
      %v3301 = vpop.f32.mrb[0].mxu0
      %3302 = vmatprep.mubr.bf16.mxu0 0
      %3303 = vmatmul.mubr.bf16.gmra.mrb[0].mxu0 %v3221
      %v3304 = vpop.f32.mrb[0].mxu0
      %v3305 = vadd.f32 0.0, %v3304
      %v3306 = vpop.f32.mrb[0].mxu0
      %v3307 = vpop.f32.mrb[0].mxu0
      %v3308 = vadd.f32 0.0, %v3307
      %v3309 = vpop.f32.mrb[0].mxu0
      %3310 = vmatprep.mubr.bf16.mxu0 0
      %3311 = vmatmul.mubr.bf16.gmra.mrb[0].mxu0 %v3224
      %v3312 = vpop.f32.mrb[0].mxu0
      %v3313 = vadd.f32 0.0, %v3312
      %v3314 = vpop.f32.mrb[0].mxu0
      %v3315 = vpop.f32.mrb[0].mxu0
      %v3316 = vadd.f32 0.0, %v3315
      %v3317 = vpop.f32.mrb[0].mxu0
      %3318 = vmatprep.mubr.bf16.mxu0 0
      %3319 = vmatmul.mubr.bf16.gmra.mrb[0].mxu0 %v3227
      %v3320 = vpop.f32.mrb[0].mxu0
      %v3321 = vadd.f32 0.0, %v3320
      %v3322 = vpop.f32.mrb[0].mxu0
      %v3323 = vpop.f32.mrb[0].mxu0
      %v3324 = vadd.f32 0.0, %v3323
      %v3325 = vpop.f32.mrb[0].mxu0
      %3326 = vmatprep.mubr.bf16.mxu0 0
      %3327 = vmatmul.mubr.bf16.gmra.mrb[0].mxu0 %v3230
      %v3328 = vpop.f32.mrb[0].mxu0
      %v3329 = vadd.f32 0.0, %v3328
      %v3330 = vpop.f32.mrb[0].mxu0
      %v3331 = vpop.f32.mrb[0].mxu0
      %v3332 = vadd.f32 0.0, %v3331
      %v3333 = vpop.f32.mrb[0].mxu0
      %3334 = vmatprep.mubr.bf16.mxu0 0
      %3335 = vmatmul.mubr.bf16.gmra.mrb[0].mxu0 %v3233
      %v3336 = vpop.f32.mrb[0].mxu0
      %v3337 = vadd.f32 0.0, %v3336
      %v3338 = vpop.f32.mrb[0].mxu0
      %v3339 = vpop.f32.mrb[0].mxu0
      %v3340 = vadd.f32 0.0, %v3339
      %v3341 = vpop.f32.mrb[0].mxu0
      %3342 = vmatprep.mubr.bf16.mxu0 0
      %3343 = vmatmul.mubr.bf16.gmra.mrb[0].mxu0 %v3236
      %v3344 = vpop.f32.mrb[0].mxu0
      %v3345 = vadd.f32 0.0, %v3344
      %v3346 = vpop.f32.mrb[0].mxu0
      %v3347 = vpop.f32.mrb[0].mxu0
      %v3348 = vadd.f32 0.0, %v3347
      %v3349 = vpop.f32.mrb[0].mxu0
      %3350 = vmatprep.mubr.bf16.mxu0 0
      %3351 = vmatmul.mubr.bf16.gmra.mrb[0].mxu0 %v3239
      %v3352 = vpop.f32.mrb[0].mxu0
      %v3353 = vadd.f32 0.0, %v3352
      %v3354 = vpop.f32.mrb[0].mxu0
      %v3355 = vpop.f32.mrb[0].mxu0
      %v3356 = vadd.f32 0.0, %v3355
      %v3357 = vpop.f32.mrb[0].mxu0
      %3358 = vmatprep.mubr.bf16.mxu0 0
      %3359 = vmatmul.mubr.bf16.gmra.mrb[0].mxu0 %v3242
      %v3360 = vpop.f32.mrb[0].mxu0
      %v3361 = vadd.f32 0.0, %v3360
      %v3362 = vpop.f32.mrb[0].mxu0
      %v3363 = vpop.f32.mrb[0].mxu0
      %v3364 = vadd.f32 0.0, %v3363
      %v3365 = vpop.f32.mrb[0].mxu0
      %3366 = vmatprep.mubr.bf16.mxu0 0
      %3367 = vmatmul.mubr.bf16.gmra.mrb[0].mxu0 %v3245
      %v3368 = vpop.f32.mrb[0].mxu0
      %v3369 = vadd.f32 0.0, %v3368
      %v3370 = vpop.f32.mrb[0].mxu0
      %v3371 = vpop.f32.mrb[0].mxu0
      %v3372 = vadd.f32 0.0, %v3371
      %v3373 = vpop.f32.mrb[0].mxu0
      %3374 = vmatprep.mubr.bf16.mxu0 0
      %3375 = vmatmul.mubr.bf16.gmra.mrb[0].mxu0 %v3248
      %v3376 = vpop.f32.mrb[0].mxu0
      %v3377 = vadd.f32 0.0, %v3376
      %v3378 = vpop.f32.mrb[0].mxu0
      %v3379 = vpop.f32.mrb[0].mxu0
      %v3380 = vadd.f32 0.0, %v3379
      %v3381 = vpop.f32.mrb[0].mxu0
      %3382 = vmatprep.mubr.bf16.mxu0 0
      %3383 = vmatmul.mubr.bf16.gmra.mrb[0].mxu0 %v3251
      %v3384 = vpop.f32.mrb[0].mxu0
      %v3385 = vadd.f32 0.0, %v3384
      %v3386 = vpop.f32.mrb[0].mxu0
      %v3387 = vpop.f32.mrb[0].mxu0
      %v3388 = vadd.f32 0.0, %v3387
      %v3389 = vpop.f32.mrb[0].mxu0
      %3390 = vmatprep.mubr.bf16.mxu0 0
      %3391 = vmatmul.mubr.bf16.gmra.mrb[0].mxu0 %v3254
      %v3392 = vpop.f32.mrb[0].mxu0
      %v3393 = vadd.f32 0.0, %v3392
      %v3394 = vpop.f32.mrb[0].mxu0
      %v3395 = vpop.f32.mrb[0].mxu0
      %v3396 = vadd.f32 0.0, %v3395
      %v3397 = vpop.f32.mrb[0].mxu0
      %3398 = vmatprep.mubr.bf16.mxu0 0
      %3399 = vmatmul.mubr.bf16.gmra.mrb[0].mxu0 %v3257
      %v3400 = vpop.f32.mrb[0].mxu0
      %v3401 = vadd.f32 0.0, %v3400
      %v3402 = vpop.f32.mrb[0].mxu0
      %v3403 = vpop.f32.mrb[0].mxu0
      %v3404 = vadd.f32 0.0, %v3403
      %v3405 = vpop.f32.mrb[0].mxu0
      %3406 = vdwg.mxu0
      %v3407 = vadd.f32 %v3187, %v3297
      %v3408 = vadd.f32 %v3188, %v3300
      %v3409 = vadd.f32 %v3189, %v3305
      %v3410 = vadd.f32 %v3190, %v3308
      %v3411 = vadd.f32 %v3191, %v3313
      %v3412 = vadd.f32 %v3192, %v3316
      %v3413 = vadd.f32 %v3193, %v3321
      %v3414 = vadd.f32 %v3194, %v3324
      %v3415 = vadd.f32 %v3195, %v3329
      %v3416 = vadd.f32 %v3196, %v3332
      %v3417 = vadd.f32 %v3197, %v3337
      %v3418 = vadd.f32 %v3198, %v3340
      %v3419 = vadd.f32 %v3199, %v3345
      %v3420 = vadd.f32 %v3200, %v3348
      %v3421 = vadd.f32 %v3201, %v3353
      %v3422 = vadd.f32 %v3202, %v3356
      %v3423 = vadd.f32 %v3203, %v3361
      %v3424 = vadd.f32 %v3204, %v3364
      %v3425 = vadd.f32 %v3205, %v3369
      %v3426 = vadd.f32 %v3206, %v3372
      %v3427 = vadd.f32 %v3207, %v3377
      %v3428 = vadd.f32 %v3208, %v3380
      %v3429 = vadd.f32 %v3209, %v3385
      %v3430 = vadd.f32 %v3210, %v3388
      %v3431 = vadd.f32 %v3211, %v3393
      %v3432 = vadd.f32 %v3212, %v3396
      %v3433 = vadd.f32 %v3213, %v3401
      %v3434 = vadd.f32 %v3214, %v3404
      %v3435 = vld [vmem:[%s268 + $0x20] sm:$0xff]
      %v3436 = vld [vmem:[%s268 + $0x28] sm:$0xff]
      %v3437 = vld [vmem:[%s268 + $0x30] sm:$0xff]
      %v3438 = vld [vmem:[%s268 + $0x38] sm:$0xff]
      %v3439 = vld [vmem:[%s268 + $0x40] sm:$0xff]
      %v3440 = vld [vmem:[%s268 + $0x48] sm:$0xff]
      %v3441 = vld [vmem:[%s268 + $0x50] sm:$0xff]
      %v3442 = vld [vmem:[%s268 + $0x58] sm:$0xff]
      %v3443 = vld [vmem:[%s268 + $0x60] sm:$0xff]
      %v3444 = vld [vmem:[%s268 + $0x68] sm:$0xff]
      %v3445 = vld [vmem:[%s268 + $0x70] sm:$0xff]
      %v3446 = vld [vmem:[%s268 + $0x78] sm:$0xff]
      %v3447 = vld [vmem:[%s268 + $0x80] sm:$0xff]
      %v3448 = vld [vmem:[%s268 + $0x88] sm:$0xff]
      %v3449 = vld [vmem:[%s268 + $0x90] sm:$0xff]
      %v3450 = vld [vmem:[%s268 + $0x98] sm:$0xff]
      %v3451 = vld [vmem:[%s268 + $0xa0] sm:$0xff]
      %v3452 = vld [vmem:[%s268 + $0xa8] sm:$0xff]
      %v3453 = vld [vmem:[%s268 + $0xb0] sm:$0xff]
      %v3454 = vld [vmem:[%s268 + $0xb8] sm:$0xff]
      %v3455 = vld [vmem:[%s268 + $0xc0] sm:$0xff]
      %v3456 = vld [vmem:[%s268 + $0xc8] sm:$0xff]
      %v3457 = vld [vmem:[%s268 + $0xd0] sm:$0xff]
      %v3458 = vld [vmem:[%s268 + $0xd8] sm:$0xff]
      %v3459 = vld [vmem:[%s268 + $0xe0] sm:$0xff]
      %v3460 = vld [vmem:[%s268 + $0xe8] sm:$0xff]
      %v3461 = vld [vmem:[%s268 + $0xf0] sm:$0xff]
      %v3462 = vld [vmem:[%s268 + $0xf8] sm:$0x3f]
      %v3463 = vpack.c.bf16 %v3436, %v3435
      %v3464 = vpack.c.bf16 %v3438, %v3437
      %v3465 = vpack.c.bf16 %v3440, %v3439
      %v3466 = vpack.c.bf16 %v3442, %v3441
      %v3467 = vpack.c.bf16 %v3444, %v3443
      %v3468 = vpack.c.bf16 %v3446, %v3445
      %v3469 = vpack.c.bf16 %v3448, %v3447
      %v3470 = vpack.c.bf16 %v3450, %v3449
      %v3471 = vpack.c.bf16 %v3452, %v3451
      %v3472 = vpack.c.bf16 %v3454, %v3453
      %v3473 = vpack.c.bf16 %v3456, %v3455
      %v3474 = vpack.c.bf16 %v3458, %v3457
      %v3475 = vpack.c.bf16 %v3460, %v3459
      %v3476 = vpack.c.bf16 %v3462, %v3461
      %v3477 = vld [vmem:[%s273 + $0x20] sm:$0xff]
      %v3478 = vld [vmem:[%s273 + $0x28] sm:$0xff]
      %v3479 = vld [vmem:[%s273 + $0x30] sm:$0xff]
      %v3480 = vld [vmem:[%s273 + $0x38] sm:$0xff]
      %v3481 = vld [vmem:[%s273 + $0x40] sm:$0xff]
      %v3482 = vld [vmem:[%s273 + $0x48] sm:$0xff]
      %v3483 = vld [vmem:[%s273 + $0x50] sm:$0xff]
      %v3484 = vld [vmem:[%s273 + $0x58] sm:$0xff]
      %v3485 = vld [vmem:[%s273 + $0x60] sm:$0xff]
      %v3486 = vld [vmem:[%s273 + $0x68] sm:$0xff]
      %v3487 = vld [vmem:[%s273 + $0x70] sm:$0xff]
      %v3488 = vld [vmem:[%s273 + $0x78] sm:$0xff]
      %v3489 = vld [vmem:[%s273 + $0x80] sm:$0xff]
      %v3490 = vld [vmem:[%s273 + $0x88] sm:$0xff]
      %v3491 = vld [vmem:[%s273 + $0x90] sm:$0xff]
      %v3492 = vld [vmem:[%s273 + $0x98] sm:$0xff]
      %v3493 = vld [vmem:[%s273 + $0xa0] sm:$0xff]
      %v3494 = vld [vmem:[%s273 + $0xa8] sm:$0xff]
      %v3495 = vld [vmem:[%s273 + $0xb0] sm:$0xff]
      %v3496 = vld [vmem:[%s273 + $0xb8] sm:$0xff]
      %v3497 = vld [vmem:[%s273 + $0xc0] sm:$0xff]
      %v3498 = vld [vmem:[%s273 + $0xc8] sm:$0xff]
      %v3499 = vld [vmem:[%s273 + $0xd0] sm:$0xff]
      %v3500 = vld [vmem:[%s273 + $0xd8] sm:$0xff]
      %v3501 = vld [vmem:[%s273 + $0xe0] sm:$0xff]
      %v3502 = vld [vmem:[%s273 + $0xe8] sm:$0xff]
      %v3503 = vld [vmem:[%s273 + $0xf0] sm:$0xff]
      %v3504 = vld [vmem:[%s273 + $0xf8] sm:$0x3f]
      %v3505 = vpack.c.bf16 %v3478, %v3477
      %v3506 = vpack.c.bf16 %v3480, %v3479
      %v3507 = vpack.c.bf16 %v3482, %v3481
      %v3508 = vpack.c.bf16 %v3484, %v3483
      %v3509 = vpack.c.bf16 %v3486, %v3485
      %v3510 = vpack.c.bf16 %v3488, %v3487
      %v3511 = vpack.c.bf16 %v3490, %v3489
      %v3512 = vpack.c.bf16 %v3492, %v3491
      %v3513 = vpack.c.bf16 %v3494, %v3493
      %v3514 = vpack.c.bf16 %v3496, %v3495
      %v3515 = vpack.c.bf16 %v3498, %v3497
      %v3516 = vpack.c.bf16 %v3500, %v3499
      %v3517 = vpack.c.bf16 %v3502, %v3501
      %v3518 = vpack.c.bf16 %v3504, %v3503
      %s3519 = scalar_lea.vmem %s2, 12
      %v3520 = vld [vmem:[%s3519] sm:$0x3]
      %v3522 = vsel %vm376, %v3463, 0
      %v3525 = vsel %vm376, %v3464, 0
      %v3528 = vsel %vm376, %v3465, 0
      %v3531 = vsel %vm376, %v3466, 0
      %v3534 = vsel %vm376, %v3467, 0
      %v3537 = vsel %vm376, %v3468, 0
      %v3540 = vsel %vm376, %v3469, 0
      %v3543 = vsel %vm376, %v3470, 0
      %v3546 = vsel %vm376, %v3471, 0
      %v3549 = vsel %vm376, %v3472, 0
      %v3552 = vsel %vm376, %v3473, 0
      %v3555 = vsel %vm376, %v3474, 0
      %v3558 = vsel %vm376, %v3475, 0
      %v3561 = vsel %vm376, %v3476, 0
      %v3564 = vsel %vm419, %v3520, 0
      %3566 = vmatprep.subr.bf16.mxu0 0
      %3567 = vmatpush1.bf16.msra.mxu0 %v3564
      %3568 = vmatprep.subr.bf16.mxu0 0
      %3569 = vmatpush1.bf16.msra.mxu0 0
      %3570 = vmatprep.subr.bf16.mxu0 0
      %3571 = vmatpush1.bf16.msra.mxu0 0
      %3572 = vmatprep.subr.bf16.mxu0 0
      %3573 = vmatpush1.bf16.msra.mxu0 0
      %3574 = vmatprep.subr.bf16.mxu0 0
      %3575 = vmatpush1.bf16.msra.mxu0 0
      %3576 = vmatprep.subr.bf16.mxu0 0
      %3577 = vmatpush1.bf16.msra.mxu0 0
      %3578 = vmatprep.subr.bf16.mxu0 0
      %3579 = vmatpush1.bf16.msra.mxu0 0
      %3580 = vmatprep.subr.bf16.mxu0 0
      %3581 = vmatpush1.bf16.msra.mxu0 0
      %3582 = vmatprep.subr.bf16.mxu0 0
      %3583 = vmatpush1.bf16.msra.mxu0 0
      %3584 = vmatprep.subr.bf16.mxu0 0
      %3585 = vmatpush1.bf16.msra.mxu0 0
      %3586 = vmatprep.subr.bf16.mxu0 0
      %3587 = vmatpush1.bf16.msra.mxu0 0
      %3588 = vmatprep.subr.bf16.mxu0 0
      %3589 = vmatpush1.bf16.msra.mxu0 0
      %3590 = vmatprep.subr.bf16.mxu0 0
      %3591 = vmatpush1.bf16.msra.mxu0 0
      %3592 = vmatprep.subr.bf16.mxu0 0
      %3593 = vmatpush1.bf16.msra.mxu0 0
      %3594 = vmatprep.subr.bf16.mxu0 0
      %3595 = vmatpush1.bf16.msra.mxu0 0
      %3596 = vmatprep.subr.bf16.mxu0 0
      %3597 = vmatpush1.bf16.msra.mxu0 0
      %3598 = vmatprep.mubr.bf16.mxu0 0
      %3599 = vmatmul.mubr.bf16.gmra.mrb[0].mxu0 %v3522
      %v3600 = vpop.f32.mrb[0].mxu0
      %v3601 = vadd.f32 0.0, %v3600
      %v3602 = vpop.f32.mrb[0].mxu0
      %v3603 = vpop.f32.mrb[0].mxu0
      %v3604 = vadd.f32 0.0, %v3603
      %v3605 = vpop.f32.mrb[0].mxu0
      %3606 = vmatprep.mubr.bf16.mxu0 0
      %3607 = vmatmul.mubr.bf16.gmra.mrb[0].mxu0 %v3525
      %v3608 = vpop.f32.mrb[0].mxu0
      %v3609 = vadd.f32 0.0, %v3608
      %v3610 = vpop.f32.mrb[0].mxu0
      %v3611 = vpop.f32.mrb[0].mxu0
      %v3612 = vadd.f32 0.0, %v3611
      %v3613 = vpop.f32.mrb[0].mxu0
      %3614 = vmatprep.mubr.bf16.mxu0 0
      %3615 = vmatmul.mubr.bf16.gmra.mrb[0].mxu0 %v3528
      %v3616 = vpop.f32.mrb[0].mxu0
      %v3617 = vadd.f32 0.0, %v3616
      %v3618 = vpop.f32.mrb[0].mxu0
      %v3619 = vpop.f32.mrb[0].mxu0
      %v3620 = vadd.f32 0.0, %v3619
      %v3621 = vpop.f32.mrb[0].mxu0
      %3622 = vmatprep.mubr.bf16.mxu0 0
      %3623 = vmatmul.mubr.bf16.gmra.mrb[0].mxu0 %v3531
      %v3624 = vpop.f32.mrb[0].mxu0
      %v3625 = vadd.f32 0.0, %v3624
      %v3626 = vpop.f32.mrb[0].mxu0
      %v3627 = vpop.f32.mrb[0].mxu0
      %v3628 = vadd.f32 0.0, %v3627
      %v3629 = vpop.f32.mrb[0].mxu0
      %3630 = vmatprep.mubr.bf16.mxu0 0
      %3631 = vmatmul.mubr.bf16.gmra.mrb[0].mxu0 %v3534
      %v3632 = vpop.f32.mrb[0].mxu0
      %v3633 = vadd.f32 0.0, %v3632
      %v3634 = vpop.f32.mrb[0].mxu0
      %v3635 = vpop.f32.mrb[0].mxu0
      %v3636 = vadd.f32 0.0, %v3635
      %v3637 = vpop.f32.mrb[0].mxu0
      %3638 = vmatprep.mubr.bf16.mxu0 0
      %3639 = vmatmul.mubr.bf16.gmra.mrb[0].mxu0 %v3537
      %v3640 = vpop.f32.mrb[0].mxu0
      %v3641 = vadd.f32 0.0, %v3640
      %v3642 = vpop.f32.mrb[0].mxu0
      %v3643 = vpop.f32.mrb[0].mxu0
      %v3644 = vadd.f32 0.0, %v3643
      %v3645 = vpop.f32.mrb[0].mxu0
      %3646 = vmatprep.mubr.bf16.mxu0 0
      %3647 = vmatmul.mubr.bf16.gmra.mrb[0].mxu0 %v3540
      %v3648 = vpop.f32.mrb[0].mxu0
      %v3649 = vadd.f32 0.0, %v3648
      %v3650 = vpop.f32.mrb[0].mxu0
      %v3651 = vpop.f32.mrb[0].mxu0
      %v3652 = vadd.f32 0.0, %v3651
      %v3653 = vpop.f32.mrb[0].mxu0
      %3654 = vmatprep.mubr.bf16.mxu0 0
      %3655 = vmatmul.mubr.bf16.gmra.mrb[0].mxu0 %v3543
      %v3656 = vpop.f32.mrb[0].mxu0
      %v3657 = vadd.f32 0.0, %v3656
      %v3658 = vpop.f32.mrb[0].mxu0
      %v3659 = vpop.f32.mrb[0].mxu0
      %v3660 = vadd.f32 0.0, %v3659
      %v3661 = vpop.f32.mrb[0].mxu0
      %3662 = vmatprep.mubr.bf16.mxu0 0
      %3663 = vmatmul.mubr.bf16.gmra.mrb[0].mxu0 %v3546
      %v3664 = vpop.f32.mrb[0].mxu0
      %v3665 = vadd.f32 0.0, %v3664
      %v3666 = vpop.f32.mrb[0].mxu0
      %v3667 = vpop.f32.mrb[0].mxu0
      %v3668 = vadd.f32 0.0, %v3667
      %v3669 = vpop.f32.mrb[0].mxu0
      %3670 = vmatprep.mubr.bf16.mxu0 0
      %3671 = vmatmul.mubr.bf16.gmra.mrb[0].mxu0 %v3549
      %v3672 = vpop.f32.mrb[0].mxu0
      %v3673 = vadd.f32 0.0, %v3672
      %v3674 = vpop.f32.mrb[0].mxu0
      %v3675 = vpop.f32.mrb[0].mxu0
      %v3676 = vadd.f32 0.0, %v3675
      %v3677 = vpop.f32.mrb[0].mxu0
      %3678 = vmatprep.mubr.bf16.mxu0 0
      %3679 = vmatmul.mubr.bf16.gmra.mrb[0].mxu0 %v3552
      %v3680 = vpop.f32.mrb[0].mxu0
      %v3681 = vadd.f32 0.0, %v3680
      %v3682 = vpop.f32.mrb[0].mxu0
      %v3683 = vpop.f32.mrb[0].mxu0
      %v3684 = vadd.f32 0.0, %v3683
      %v3685 = vpop.f32.mrb[0].mxu0
      %3686 = vmatprep.mubr.bf16.mxu0 0
      %3687 = vmatmul.mubr.bf16.gmra.mrb[0].mxu0 %v3555
      %v3688 = vpop.f32.mrb[0].mxu0
      %v3689 = vadd.f32 0.0, %v3688
      %v3690 = vpop.f32.mrb[0].mxu0
      %v3691 = vpop.f32.mrb[0].mxu0
      %v3692 = vadd.f32 0.0, %v3691
      %v3693 = vpop.f32.mrb[0].mxu0
      %3694 = vmatprep.mubr.bf16.mxu0 0
      %3695 = vmatmul.mubr.bf16.gmra.mrb[0].mxu0 %v3558
      %v3696 = vpop.f32.mrb[0].mxu0
      %v3697 = vadd.f32 0.0, %v3696
      %v3698 = vpop.f32.mrb[0].mxu0
      %v3699 = vpop.f32.mrb[0].mxu0
      %v3700 = vadd.f32 0.0, %v3699
      %v3701 = vpop.f32.mrb[0].mxu0
      %3702 = vmatprep.mubr.bf16.mxu0 0
      %3703 = vmatmul.mubr.bf16.gmra.mrb[0].mxu0 %v3561
      %v3704 = vpop.f32.mrb[0].mxu0
      %v3705 = vadd.f32 0.0, %v3704
      %v3706 = vpop.f32.mrb[0].mxu0
      %v3707 = vpop.f32.mrb[0].mxu0
      %v3708 = vadd.f32 0.0, %v3707
      %v3709 = vpop.f32.mrb[0].mxu0
      %3710 = vdwg.mxu0
      %v3711 = vadd.f32 %v3407, %v3601
      %v3712 = vadd.f32 %v3408, %v3604
      %v3713 = vadd.f32 %v3409, %v3609
      %v3714 = vadd.f32 %v3410, %v3612
      %v3715 = vadd.f32 %v3411, %v3617
      %v3716 = vadd.f32 %v3412, %v3620
      %v3717 = vadd.f32 %v3413, %v3625
      %v3718 = vadd.f32 %v3414, %v3628
      %v3719 = vadd.f32 %v3415, %v3633
      %v3720 = vadd.f32 %v3416, %v3636
      %v3721 = vadd.f32 %v3417, %v3641
      %v3722 = vadd.f32 %v3418, %v3644
      %v3723 = vadd.f32 %v3419, %v3649
      %v3724 = vadd.f32 %v3420, %v3652
      %v3725 = vadd.f32 %v3421, %v3657
      %v3726 = vadd.f32 %v3422, %v3660
      %v3727 = vadd.f32 %v3423, %v3665
      %v3728 = vadd.f32 %v3424, %v3668
      %v3729 = vadd.f32 %v3425, %v3673
      %v3730 = vadd.f32 %v3426, %v3676
      %v3731 = vadd.f32 %v3427, %v3681
      %v3732 = vadd.f32 %v3428, %v3684
      %v3733 = vadd.f32 %v3429, %v3689
      %v3734 = vadd.f32 %v3430, %v3692
      %v3735 = vadd.f32 %v3431, %v3697
      %v3736 = vadd.f32 %v3432, %v3700
      %v3737 = vadd.f32 %v3433, %v3705
      %v3738 = vadd.f32 %v3434, %v3708
      %s3739 = scalar_lea.vmem %s3, 12
      %v3740 = vld [vmem:[%s3739] sm:$0x3]
      %v3742 = vsel %vm376, %v3505, 0
      %v3745 = vsel %vm376, %v3506, 0
      %v3748 = vsel %vm376, %v3507, 0
      %v3751 = vsel %vm376, %v3508, 0
      %v3754 = vsel %vm376, %v3509, 0
      %v3757 = vsel %vm376, %v3510, 0
      %v3760 = vsel %vm376, %v3511, 0
      %v3763 = vsel %vm376, %v3512, 0
      %v3766 = vsel %vm376, %v3513, 0
      %v3769 = vsel %vm376, %v3514, 0
      %v3772 = vsel %vm376, %v3515, 0
      %v3775 = vsel %vm376, %v3516, 0
      %v3778 = vsel %vm376, %v3517, 0
      %v3781 = vsel %vm376, %v3518, 0
      %v3784 = vsel %vm419, %v3740, 0
      %3786 = vmatprep.subr.bf16.mxu0 0
      %3787 = vmatpush1.bf16.msra.mxu0 %v3784
      %3788 = vmatprep.subr.bf16.mxu0 0
      %3789 = vmatpush1.bf16.msra.mxu0 0
      %3790 = vmatprep.subr.bf16.mxu0 0
      %3791 = vmatpush1.bf16.msra.mxu0 0
      %3792 = vmatprep.subr.bf16.mxu0 0
      %3793 = vmatpush1.bf16.msra.mxu0 0
      %3794 = vmatprep.subr.bf16.mxu0 0
      %3795 = vmatpush1.bf16.msra.mxu0 0
      %3796 = vmatprep.subr.bf16.mxu0 0
      %3797 = vmatpush1.bf16.msra.mxu0 0
      %3798 = vmatprep.subr.bf16.mxu0 0
      %3799 = vmatpush1.bf16.msra.mxu0 0
      %3800 = vmatprep.subr.bf16.mxu0 0
      %3801 = vmatpush1.bf16.msra.mxu0 0
      %3802 = vmatprep.subr.bf16.mxu0 0
      %3803 = vmatpush1.bf16.msra.mxu0 0
      %3804 = vmatprep.subr.bf16.mxu0 0
      %3805 = vmatpush1.bf16.msra.mxu0 0
      %3806 = vmatprep.subr.bf16.mxu0 0
      %3807 = vmatpush1.bf16.msra.mxu0 0
      %3808 = vmatprep.subr.bf16.mxu0 0
      %3809 = vmatpush1.bf16.msra.mxu0 0
      %3810 = vmatprep.subr.bf16.mxu0 0
      %3811 = vmatpush1.bf16.msra.mxu0 0
      %3812 = vmatprep.subr.bf16.mxu0 0
      %3813 = vmatpush1.bf16.msra.mxu0 0
      %3814 = vmatprep.subr.bf16.mxu0 0
      %3815 = vmatpush1.bf16.msra.mxu0 0
      %3816 = vmatprep.subr.bf16.mxu0 0
      %3817 = vmatpush1.bf16.msra.mxu0 0
      %3818 = vmatprep.mubr.bf16.mxu0 0
      %3819 = vmatmul.mubr.bf16.gmra.mrb[0].mxu0 %v3742
      %v3820 = vpop.f32.mrb[0].mxu0
      %v3821 = vadd.f32 0.0, %v3820
      %v3822 = vpop.f32.mrb[0].mxu0
      %v3823 = vpop.f32.mrb[0].mxu0
      %v3824 = vadd.f32 0.0, %v3823
      %v3825 = vpop.f32.mrb[0].mxu0
      %3826 = vmatprep.mubr.bf16.mxu0 0
      %3827 = vmatmul.mubr.bf16.gmra.mrb[0].mxu0 %v3745
      %v3828 = vpop.f32.mrb[0].mxu0
      %v3829 = vadd.f32 0.0, %v3828
      %v3830 = vpop.f32.mrb[0].mxu0
      %v3831 = vpop.f32.mrb[0].mxu0
      %v3832 = vadd.f32 0.0, %v3831
      %v3833 = vpop.f32.mrb[0].mxu0
      %3834 = vmatprep.mubr.bf16.mxu0 0
      %3835 = vmatmul.mubr.bf16.gmra.mrb[0].mxu0 %v3748
      %v3836 = vpop.f32.mrb[0].mxu0
      %v3837 = vadd.f32 0.0, %v3836
      %v3838 = vpop.f32.mrb[0].mxu0
      %v3839 = vpop.f32.mrb[0].mxu0
      %v3840 = vadd.f32 0.0, %v3839
      %v3841 = vpop.f32.mrb[0].mxu0
      %3842 = vmatprep.mubr.bf16.mxu0 0
      %3843 = vmatmul.mubr.bf16.gmra.mrb[0].mxu0 %v3751
      %v3844 = vpop.f32.mrb[0].mxu0
      %v3845 = vadd.f32 0.0, %v3844
      %v3846 = vpop.f32.mrb[0].mxu0
      %v3847 = vpop.f32.mrb[0].mxu0
      %v3848 = vadd.f32 0.0, %v3847
      %v3849 = vpop.f32.mrb[0].mxu0
      %3850 = vmatprep.mubr.bf16.mxu0 0
      %3851 = vmatmul.mubr.bf16.gmra.mrb[0].mxu0 %v3754
      %v3852 = vpop.f32.mrb[0].mxu0
      %v3853 = vadd.f32 0.0, %v3852
      %v3854 = vpop.f32.mrb[0].mxu0
      %v3855 = vpop.f32.mrb[0].mxu0
      %v3856 = vadd.f32 0.0, %v3855
      %v3857 = vpop.f32.mrb[0].mxu0
      %3858 = vmatprep.mubr.bf16.mxu0 0
      %3859 = vmatmul.mubr.bf16.gmra.mrb[0].mxu0 %v3757
      %v3860 = vpop.f32.mrb[0].mxu0
      %v3861 = vadd.f32 0.0, %v3860
      %v3862 = vpop.f32.mrb[0].mxu0
      %v3863 = vpop.f32.mrb[0].mxu0
      %v3864 = vadd.f32 0.0, %v3863
      %v3865 = vpop.f32.mrb[0].mxu0
      %3866 = vmatprep.mubr.bf16.mxu0 0
      %3867 = vmatmul.mubr.bf16.gmra.mrb[0].mxu0 %v3760
      %v3868 = vpop.f32.mrb[0].mxu0
      %v3869 = vadd.f32 0.0, %v3868
      %v3870 = vpop.f32.mrb[0].mxu0
      %v3871 = vpop.f32.mrb[0].mxu0
      %v3872 = vadd.f32 0.0, %v3871
      %v3873 = vpop.f32.mrb[0].mxu0
      %3874 = vmatprep.mubr.bf16.mxu0 0
      %3875 = vmatmul.mubr.bf16.gmra.mrb[0].mxu0 %v3763
      %v3876 = vpop.f32.mrb[0].mxu0
      %v3877 = vadd.f32 0.0, %v3876
      %v3878 = vpop.f32.mrb[0].mxu0
      %v3879 = vpop.f32.mrb[0].mxu0
      %v3880 = vadd.f32 0.0, %v3879
      %v3881 = vpop.f32.mrb[0].mxu0
      %3882 = vmatprep.mubr.bf16.mxu0 0
      %3883 = vmatmul.mubr.bf16.gmra.mrb[0].mxu0 %v3766
      %v3884 = vpop.f32.mrb[0].mxu0
      %v3885 = vadd.f32 0.0, %v3884
      %v3886 = vpop.f32.mrb[0].mxu0
      %v3887 = vpop.f32.mrb[0].mxu0
      %v3888 = vadd.f32 0.0, %v3887
      %v3889 = vpop.f32.mrb[0].mxu0
      %3890 = vmatprep.mubr.bf16.mxu0 0
      %3891 = vmatmul.mubr.bf16.gmra.mrb[0].mxu0 %v3769
      %v3892 = vpop.f32.mrb[0].mxu0
      %v3893 = vadd.f32 0.0, %v3892
      %v3894 = vpop.f32.mrb[0].mxu0
      %v3895 = vpop.f32.mrb[0].mxu0
      %v3896 = vadd.f32 0.0, %v3895
      %v3897 = vpop.f32.mrb[0].mxu0
      %3898 = vmatprep.mubr.bf16.mxu0 0
      %3899 = vmatmul.mubr.bf16.gmra.mrb[0].mxu0 %v3772
      %v3900 = vpop.f32.mrb[0].mxu0
      %v3901 = vadd.f32 0.0, %v3900
      %v3902 = vpop.f32.mrb[0].mxu0
      %v3903 = vpop.f32.mrb[0].mxu0
      %v3904 = vadd.f32 0.0, %v3903
      %v3905 = vpop.f32.mrb[0].mxu0
      %3906 = vmatprep.mubr.bf16.mxu0 0
      %3907 = vmatmul.mubr.bf16.gmra.mrb[0].mxu0 %v3775
      %v3908 = vpop.f32.mrb[0].mxu0
      %v3909 = vadd.f32 0.0, %v3908
      %v3910 = vpop.f32.mrb[0].mxu0
      %v3911 = vpop.f32.mrb[0].mxu0
      %v3912 = vadd.f32 0.0, %v3911
      %v3913 = vpop.f32.mrb[0].mxu0
      %3914 = vmatprep.mubr.bf16.mxu0 0
      %3915 = vmatmul.mubr.bf16.gmra.mrb[0].mxu0 %v3778
      %v3916 = vpop.f32.mrb[0].mxu0
      %v3917 = vadd.f32 0.0, %v3916
      %v3918 = vpop.f32.mrb[0].mxu0
      %v3919 = vpop.f32.mrb[0].mxu0
      %v3920 = vadd.f32 0.0, %v3919
      %v3921 = vpop.f32.mrb[0].mxu0
      %3922 = vmatprep.mubr.bf16.mxu0 0
      %3923 = vmatmul.mubr.bf16.gmra.mrb[0].mxu0 %v3781
      %v3924 = vpop.f32.mrb[0].mxu0
      %v3925 = vadd.f32 0.0, %v3924
      %v3926 = vpop.f32.mrb[0].mxu0
      %v3927 = vpop.f32.mrb[0].mxu0
      %v3928 = vadd.f32 0.0, %v3927
      %v3929 = vpop.f32.mrb[0].mxu0
      %3930 = vdwg.mxu0
      %v3931 = vadd.f32 %v3711, %v3821
      %v3932 = vadd.f32 %v3712, %v3824
      %v3933 = vadd.f32 %v3713, %v3829
      %v3934 = vadd.f32 %v3714, %v3832
      %v3935 = vadd.f32 %v3715, %v3837
      %v3936 = vadd.f32 %v3716, %v3840
      %v3937 = vadd.f32 %v3717, %v3845
      %v3938 = vadd.f32 %v3718, %v3848
      %v3939 = vadd.f32 %v3719, %v3853
      %v3940 = vadd.f32 %v3720, %v3856
      %v3941 = vadd.f32 %v3721, %v3861
      %v3942 = vadd.f32 %v3722, %v3864
      %v3943 = vadd.f32 %v3723, %v3869
      %v3944 = vadd.f32 %v3724, %v3872
      %v3945 = vadd.f32 %v3725, %v3877
      %v3946 = vadd.f32 %v3726, %v3880
      %v3947 = vadd.f32 %v3727, %v3885
      %v3948 = vadd.f32 %v3728, %v3888
      %v3949 = vadd.f32 %v3729, %v3893
      %v3950 = vadd.f32 %v3730, %v3896
      %v3951 = vadd.f32 %v3731, %v3901
      %v3952 = vadd.f32 %v3732, %v3904
      %v3953 = vadd.f32 %v3733, %v3909
      %v3954 = vadd.f32 %v3734, %v3912
      %v3955 = vadd.f32 %v3735, %v3917
      %v3956 = vadd.f32 %v3736, %v3920
      %v3957 = vadd.f32 %v3737, %v3925
      %v3958 = vadd.f32 %v3738, %v3928
      %v3959 = vld [vmem:[%s268 + $0x21] sm:$0xff]
      %v3960 = vld [vmem:[%s268 + $0x29] sm:$0xff]
      %v3961 = vld [vmem:[%s268 + $0x31] sm:$0xff]
      %v3962 = vld [vmem:[%s268 + $0x39] sm:$0xff]
      %v3963 = vld [vmem:[%s268 + $0x41] sm:$0xff]
      %v3964 = vld [vmem:[%s268 + $0x49] sm:$0xff]
      %v3965 = vld [vmem:[%s268 + $0x51] sm:$0xff]
      %v3966 = vld [vmem:[%s268 + $0x59] sm:$0xff]
      %v3967 = vld [vmem:[%s268 + $0x61] sm:$0xff]
      %v3968 = vld [vmem:[%s268 + $0x69] sm:$0xff]
      %v3969 = vld [vmem:[%s268 + $0x71] sm:$0xff]
      %v3970 = vld [vmem:[%s268 + $0x79] sm:$0xff]
      %v3971 = vld [vmem:[%s268 + $0x81] sm:$0xff]
      %v3972 = vld [vmem:[%s268 + $0x89] sm:$0xff]
      %v3973 = vld [vmem:[%s268 + $0x91] sm:$0xff]
      %v3974 = vld [vmem:[%s268 + $0x99] sm:$0xff]
      %v3975 = vld [vmem:[%s268 + $0xa1] sm:$0xff]
      %v3976 = vld [vmem:[%s268 + $0xa9] sm:$0xff]
      %v3977 = vld [vmem:[%s268 + $0xb1] sm:$0xff]
      %v3978 = vld [vmem:[%s268 + $0xb9] sm:$0xff]
      %v3979 = vld [vmem:[%s268 + $0xc1] sm:$0xff]
      %v3980 = vld [vmem:[%s268 + $0xc9] sm:$0xff]
      %v3981 = vld [vmem:[%s268 + $0xd1] sm:$0xff]
      %v3982 = vld [vmem:[%s268 + $0xd9] sm:$0xff]
      %v3983 = vld [vmem:[%s268 + $0xe1] sm:$0xff]
      %v3984 = vld [vmem:[%s268 + $0xe9] sm:$0xff]
      %v3985 = vld [vmem:[%s268 + $0xf1] sm:$0xff]
      %v3986 = vld [vmem:[%s268 + $0xf9] sm:$0x3f]
      %v3987 = vpack.c.bf16 %v3960, %v3959
      %v3988 = vpack.c.bf16 %v3962, %v3961
      %v3989 = vpack.c.bf16 %v3964, %v3963
      %v3990 = vpack.c.bf16 %v3966, %v3965
      %v3991 = vpack.c.bf16 %v3968, %v3967
      %v3992 = vpack.c.bf16 %v3970, %v3969
      %v3993 = vpack.c.bf16 %v3972, %v3971
      %v3994 = vpack.c.bf16 %v3974, %v3973
      %v3995 = vpack.c.bf16 %v3976, %v3975
      %v3996 = vpack.c.bf16 %v3978, %v3977
      %v3997 = vpack.c.bf16 %v3980, %v3979
      %v3998 = vpack.c.bf16 %v3982, %v3981
      %v3999 = vpack.c.bf16 %v3984, %v3983
      %v4000 = vpack.c.bf16 %v3986, %v3985
      %v4001 = vld [vmem:[%s273 + $0x21] sm:$0xff]
      %v4002 = vld [vmem:[%s273 + $0x29] sm:$0xff]
      %v4003 = vld [vmem:[%s273 + $0x31] sm:$0xff]
      %v4004 = vld [vmem:[%s273 + $0x39] sm:$0xff]
      %v4005 = vld [vmem:[%s273 + $0x41] sm:$0xff]
      %v4006 = vld [vmem:[%s273 + $0x49] sm:$0xff]
      %v4007 = vld [vmem:[%s273 + $0x51] sm:$0xff]
      %v4008 = vld [vmem:[%s273 + $0x59] sm:$0xff]
      %v4009 = vld [vmem:[%s273 + $0x61] sm:$0xff]
      %v4010 = vld [vmem:[%s273 + $0x69] sm:$0xff]
      %v4011 = vld [vmem:[%s273 + $0x71] sm:$0xff]
      %v4012 = vld [vmem:[%s273 + $0x79] sm:$0xff]
      %v4013 = vld [vmem:[%s273 + $0x81] sm:$0xff]
      %v4014 = vld [vmem:[%s273 + $0x89] sm:$0xff]
      %v4015 = vld [vmem:[%s273 + $0x91] sm:$0xff]
      %v4016 = vld [vmem:[%s273 + $0x99] sm:$0xff]
      %v4017 = vld [vmem:[%s273 + $0xa1] sm:$0xff]
      %v4018 = vld [vmem:[%s273 + $0xa9] sm:$0xff]
      %v4019 = vld [vmem:[%s273 + $0xb1] sm:$0xff]
      %v4020 = vld [vmem:[%s273 + $0xb9] sm:$0xff]
      %v4021 = vld [vmem:[%s273 + $0xc1] sm:$0xff]
      %v4022 = vld [vmem:[%s273 + $0xc9] sm:$0xff]
      %v4023 = vld [vmem:[%s273 + $0xd1] sm:$0xff]
      %v4024 = vld [vmem:[%s273 + $0xd9] sm:$0xff]
      %v4025 = vld [vmem:[%s273 + $0xe1] sm:$0xff]
      %v4026 = vld [vmem:[%s273 + $0xe9] sm:$0xff]
      %v4027 = vld [vmem:[%s273 + $0xf1] sm:$0xff]
      %v4028 = vld [vmem:[%s273 + $0xf9] sm:$0x3f]
      %v4029 = vpack.c.bf16 %v4002, %v4001
      %v4030 = vpack.c.bf16 %v4004, %v4003
      %v4031 = vpack.c.bf16 %v4006, %v4005
      %v4032 = vpack.c.bf16 %v4008, %v4007
      %v4033 = vpack.c.bf16 %v4010, %v4009
      %v4034 = vpack.c.bf16 %v4012, %v4011
      %v4035 = vpack.c.bf16 %v4014, %v4013
      %v4036 = vpack.c.bf16 %v4016, %v4015
      %v4037 = vpack.c.bf16 %v4018, %v4017
      %v4038 = vpack.c.bf16 %v4020, %v4019
      %v4039 = vpack.c.bf16 %v4022, %v4021
      %v4040 = vpack.c.bf16 %v4024, %v4023
      %v4041 = vpack.c.bf16 %v4026, %v4025
      %v4042 = vpack.c.bf16 %v4028, %v4027
      %s4043 = scalar_lea.vmem %s2, 14
      %v4044 = vld [vmem:[%s4043] sm:$0x3]
      %v4046 = vsel %vm376, %v3987, 0
      %v4049 = vsel %vm376, %v3988, 0
      %v4052 = vsel %vm376, %v3989, 0
      %v4055 = vsel %vm376, %v3990, 0
      %v4058 = vsel %vm376, %v3991, 0
      %v4061 = vsel %vm376, %v3992, 0
      %v4064 = vsel %vm376, %v3993, 0
      %v4067 = vsel %vm376, %v3994, 0
      %v4070 = vsel %vm376, %v3995, 0
      %v4073 = vsel %vm376, %v3996, 0
      %v4076 = vsel %vm376, %v3997, 0
      %v4079 = vsel %vm376, %v3998, 0
      %v4082 = vsel %vm376, %v3999, 0
      %v4085 = vsel %vm376, %v4000, 0
      %v4088 = vsel %vm419, %v4044, 0
      %4090 = vmatprep.subr.bf16.mxu0 0
      %4091 = vmatpush1.bf16.msra.mxu0 %v4088
      %4092 = vmatprep.subr.bf16.mxu0 0
      %4093 = vmatpush1.bf16.msra.mxu0 0
      %4094 = vmatprep.subr.bf16.mxu0 0
      %4095 = vmatpush1.bf16.msra.mxu0 0
      %4096 = vmatprep.subr.bf16.mxu0 0
      %4097 = vmatpush1.bf16.msra.mxu0 0
      %4098 = vmatprep.subr.bf16.mxu0 0
      %4099 = vmatpush1.bf16.msra.mxu0 0
      %4100 = vmatprep.subr.bf16.mxu0 0
      %4101 = vmatpush1.bf16.msra.mxu0 0
      %4102 = vmatprep.subr.bf16.mxu0 0
      %4103 = vmatpush1.bf16.msra.mxu0 0
      %4104 = vmatprep.subr.bf16.mxu0 0
      %4105 = vmatpush1.bf16.msra.mxu0 0
      %4106 = vmatprep.subr.bf16.mxu0 0
      %4107 = vmatpush1.bf16.msra.mxu0 0
      %4108 = vmatprep.subr.bf16.mxu0 0
      %4109 = vmatpush1.bf16.msra.mxu0 0
      %4110 = vmatprep.subr.bf16.mxu0 0
      %4111 = vmatpush1.bf16.msra.mxu0 0
      %4112 = vmatprep.subr.bf16.mxu0 0
      %4113 = vmatpush1.bf16.msra.mxu0 0
      %4114 = vmatprep.subr.bf16.mxu0 0
      %4115 = vmatpush1.bf16.msra.mxu0 0
      %4116 = vmatprep.subr.bf16.mxu0 0
      %4117 = vmatpush1.bf16.msra.mxu0 0
      %4118 = vmatprep.subr.bf16.mxu0 0
      %4119 = vmatpush1.bf16.msra.mxu0 0
      %4120 = vmatprep.subr.bf16.mxu0 0
      %4121 = vmatpush1.bf16.msra.mxu0 0
      %4122 = vmatprep.mubr.bf16.mxu0 0
      %4123 = vmatmul.mubr.bf16.gmra.mrb[0].mxu0 %v4046
      %v4124 = vpop.f32.mrb[0].mxu0
      %v4125 = vadd.f32 0.0, %v4124
      %v4126 = vpop.f32.mrb[0].mxu0
      %v4127 = vpop.f32.mrb[0].mxu0
      %v4128 = vadd.f32 0.0, %v4127
      %v4129 = vpop.f32.mrb[0].mxu0
      %4130 = vmatprep.mubr.bf16.mxu0 0
      %4131 = vmatmul.mubr.bf16.gmra.mrb[0].mxu0 %v4049
      %v4132 = vpop.f32.mrb[0].mxu0
      %v4133 = vadd.f32 0.0, %v4132
      %v4134 = vpop.f32.mrb[0].mxu0
      %v4135 = vpop.f32.mrb[0].mxu0
      %v4136 = vadd.f32 0.0, %v4135
      %v4137 = vpop.f32.mrb[0].mxu0
      %4138 = vmatprep.mubr.bf16.mxu0 0
      %4139 = vmatmul.mubr.bf16.gmra.mrb[0].mxu0 %v4052
      %v4140 = vpop.f32.mrb[0].mxu0
      %v4141 = vadd.f32 0.0, %v4140
      %v4142 = vpop.f32.mrb[0].mxu0
      %v4143 = vpop.f32.mrb[0].mxu0
      %v4144 = vadd.f32 0.0, %v4143
      %v4145 = vpop.f32.mrb[0].mxu0
      %4146 = vmatprep.mubr.bf16.mxu0 0
      %4147 = vmatmul.mubr.bf16.gmra.mrb[0].mxu0 %v4055
      %v4148 = vpop.f32.mrb[0].mxu0
      %v4149 = vadd.f32 0.0, %v4148
      %v4150 = vpop.f32.mrb[0].mxu0
      %v4151 = vpop.f32.mrb[0].mxu0
      %v4152 = vadd.f32 0.0, %v4151
      %v4153 = vpop.f32.mrb[0].mxu0
      %4154 = vmatprep.mubr.bf16.mxu0 0
      %4155 = vmatmul.mubr.bf16.gmra.mrb[0].mxu0 %v4058
      %v4156 = vpop.f32.mrb[0].mxu0
      %v4157 = vadd.f32 0.0, %v4156
      %v4158 = vpop.f32.mrb[0].mxu0
      %v4159 = vpop.f32.mrb[0].mxu0
      %v4160 = vadd.f32 0.0, %v4159
      %v4161 = vpop.f32.mrb[0].mxu0
      %4162 = vmatprep.mubr.bf16.mxu0 0
      %4163 = vmatmul.mubr.bf16.gmra.mrb[0].mxu0 %v4061
      %v4164 = vpop.f32.mrb[0].mxu0
      %v4165 = vadd.f32 0.0, %v4164
      %v4166 = vpop.f32.mrb[0].mxu0
      %v4167 = vpop.f32.mrb[0].mxu0
      %v4168 = vadd.f32 0.0, %v4167
      %v4169 = vpop.f32.mrb[0].mxu0
      %4170 = vmatprep.mubr.bf16.mxu0 0
      %4171 = vmatmul.mubr.bf16.gmra.mrb[0].mxu0 %v4064
      %v4172 = vpop.f32.mrb[0].mxu0
      %v4173 = vadd.f32 0.0, %v4172
      %v4174 = vpop.f32.mrb[0].mxu0
      %v4175 = vpop.f32.mrb[0].mxu0
      %v4176 = vadd.f32 0.0, %v4175
      %v4177 = vpop.f32.mrb[0].mxu0
      %4178 = vmatprep.mubr.bf16.mxu0 0
      %4179 = vmatmul.mubr.bf16.gmra.mrb[0].mxu0 %v4067
      %v4180 = vpop.f32.mrb[0].mxu0
      %v4181 = vadd.f32 0.0, %v4180
      %v4182 = vpop.f32.mrb[0].mxu0
      %v4183 = vpop.f32.mrb[0].mxu0
      %v4184 = vadd.f32 0.0, %v4183
      %v4185 = vpop.f32.mrb[0].mxu0
      %4186 = vmatprep.mubr.bf16.mxu0 0
      %4187 = vmatmul.mubr.bf16.gmra.mrb[0].mxu0 %v4070
      %v4188 = vpop.f32.mrb[0].mxu0
      %v4189 = vadd.f32 0.0, %v4188
      %v4190 = vpop.f32.mrb[0].mxu0
      %v4191 = vpop.f32.mrb[0].mxu0
      %v4192 = vadd.f32 0.0, %v4191
      %v4193 = vpop.f32.mrb[0].mxu0
      %4194 = vmatprep.mubr.bf16.mxu0 0
      %4195 = vmatmul.mubr.bf16.gmra.mrb[0].mxu0 %v4073
      %v4196 = vpop.f32.mrb[0].mxu0
      %v4197 = vadd.f32 0.0, %v4196
      %v4198 = vpop.f32.mrb[0].mxu0
      %v4199 = vpop.f32.mrb[0].mxu0
      %v4200 = vadd.f32 0.0, %v4199
      %v4201 = vpop.f32.mrb[0].mxu0
      %4202 = vmatprep.mubr.bf16.mxu0 0
      %4203 = vmatmul.mubr.bf16.gmra.mrb[0].mxu0 %v4076
      %v4204 = vpop.f32.mrb[0].mxu0
      %v4205 = vadd.f32 0.0, %v4204
      %v4206 = vpop.f32.mrb[0].mxu0
      %v4207 = vpop.f32.mrb[0].mxu0
      %v4208 = vadd.f32 0.0, %v4207
      %v4209 = vpop.f32.mrb[0].mxu0
      %4210 = vmatprep.mubr.bf16.mxu0 0
      %4211 = vmatmul.mubr.bf16.gmra.mrb[0].mxu0 %v4079
      %v4212 = vpop.f32.mrb[0].mxu0
      %v4213 = vadd.f32 0.0, %v4212
      %v4214 = vpop.f32.mrb[0].mxu0
      %v4215 = vpop.f32.mrb[0].mxu0
      %v4216 = vadd.f32 0.0, %v4215
      %v4217 = vpop.f32.mrb[0].mxu0
      %4218 = vmatprep.mubr.bf16.mxu0 0
      %4219 = vmatmul.mubr.bf16.gmra.mrb[0].mxu0 %v4082
      %v4220 = vpop.f32.mrb[0].mxu0
      %v4221 = vadd.f32 0.0, %v4220
      %v4222 = vpop.f32.mrb[0].mxu0
      %v4223 = vpop.f32.mrb[0].mxu0
      %v4224 = vadd.f32 0.0, %v4223
      %v4225 = vpop.f32.mrb[0].mxu0
      %4226 = vmatprep.mubr.bf16.mxu0 0
      %4227 = vmatmul.mubr.bf16.gmra.mrb[0].mxu0 %v4085
      %v4228 = vpop.f32.mrb[0].mxu0
      %v4229 = vadd.f32 0.0, %v4228
      %v4230 = vpop.f32.mrb[0].mxu0
      %v4231 = vpop.f32.mrb[0].mxu0
      %v4232 = vadd.f32 0.0, %v4231
      %v4233 = vpop.f32.mrb[0].mxu0
      %4234 = vdwg.mxu0
      %v4235 = vadd.f32 %v3931, %v4125
      %v4236 = vadd.f32 %v3932, %v4128
      %v4237 = vadd.f32 %v3933, %v4133
      %v4238 = vadd.f32 %v3934, %v4136
      %v4239 = vadd.f32 %v3935, %v4141
      %v4240 = vadd.f32 %v3936, %v4144
      %v4241 = vadd.f32 %v3937, %v4149
      %v4242 = vadd.f32 %v3938, %v4152
      %v4243 = vadd.f32 %v3939, %v4157
      %v4244 = vadd.f32 %v3940, %v4160
      %v4245 = vadd.f32 %v3941, %v4165
      %v4246 = vadd.f32 %v3942, %v4168
      %v4247 = vadd.f32 %v3943, %v4173
      %v4248 = vadd.f32 %v3944, %v4176
      %v4249 = vadd.f32 %v3945, %v4181
      %v4250 = vadd.f32 %v3946, %v4184
      %v4251 = vadd.f32 %v3947, %v4189
      %v4252 = vadd.f32 %v3948, %v4192
      %v4253 = vadd.f32 %v3949, %v4197
      %v4254 = vadd.f32 %v3950, %v4200
      %v4255 = vadd.f32 %v3951, %v4205
      %v4256 = vadd.f32 %v3952, %v4208
      %v4257 = vadd.f32 %v3953, %v4213
      %v4258 = vadd.f32 %v3954, %v4216
      %v4259 = vadd.f32 %v3955, %v4221
      %v4260 = vadd.f32 %v3956, %v4224
      %v4261 = vadd.f32 %v3957, %v4229
      %v4262 = vadd.f32 %v3958, %v4232
      %s4263 = scalar_lea.vmem %s3, 14
      %v4264 = vld [vmem:[%s4263] sm:$0x3]
      %v4266 = vsel %vm376, %v4029, 0
      %v4269 = vsel %vm376, %v4030, 0
      %v4272 = vsel %vm376, %v4031, 0
      %v4275 = vsel %vm376, %v4032, 0
      %v4278 = vsel %vm376, %v4033, 0
      %v4281 = vsel %vm376, %v4034, 0
      %v4284 = vsel %vm376, %v4035, 0
      %v4287 = vsel %vm376, %v4036, 0
      %v4290 = vsel %vm376, %v4037, 0
      %v4293 = vsel %vm376, %v4038, 0
      %v4296 = vsel %vm376, %v4039, 0
      %v4299 = vsel %vm376, %v4040, 0
      %v4302 = vsel %vm376, %v4041, 0
      %v4305 = vsel %vm376, %v4042, 0
      %v4308 = vsel %vm419, %v4264, 0
      %4310 = vmatprep.subr.bf16.mxu0 0
      %4311 = vmatpush1.bf16.msra.mxu0 %v4308
      %4312 = vmatprep.subr.bf16.mxu0 0
      %4313 = vmatpush1.bf16.msra.mxu0 0
      %4314 = vmatprep.subr.bf16.mxu0 0
      %4315 = vmatpush1.bf16.msra.mxu0 0
      %4316 = vmatprep.subr.bf16.mxu0 0
      %4317 = vmatpush1.bf16.msra.mxu0 0
      %4318 = vmatprep.subr.bf16.mxu0 0
      %4319 = vmatpush1.bf16.msra.mxu0 0
      %4320 = vmatprep.subr.bf16.mxu0 0
      %4321 = vmatpush1.bf16.msra.mxu0 0
      %4322 = vmatprep.subr.bf16.mxu0 0
      %4323 = vmatpush1.bf16.msra.mxu0 0
      %4324 = vmatprep.subr.bf16.mxu0 0
      %4325 = vmatpush1.bf16.msra.mxu0 0
      %4326 = vmatprep.subr.bf16.mxu0 0
      %4327 = vmatpush1.bf16.msra.mxu0 0
      %4328 = vmatprep.subr.bf16.mxu0 0
      %4329 = vmatpush1.bf16.msra.mxu0 0
      %4330 = vmatprep.subr.bf16.mxu0 0
      %4331 = vmatpush1.bf16.msra.mxu0 0
      %4332 = vmatprep.subr.bf16.mxu0 0
      %4333 = vmatpush1.bf16.msra.mxu0 0
      %4334 = vmatprep.subr.bf16.mxu0 0
      %4335 = vmatpush1.bf16.msra.mxu0 0
      %4336 = vmatprep.subr.bf16.mxu0 0
      %4337 = vmatpush1.bf16.msra.mxu0 0
      %4338 = vmatprep.subr.bf16.mxu0 0
      %4339 = vmatpush1.bf16.msra.mxu0 0
      %4340 = vmatprep.subr.bf16.mxu0 0
      %4341 = vmatpush1.bf16.msra.mxu0 0
      %4342 = vmatprep.mubr.bf16.mxu0 0
      %4343 = vmatmul.mubr.bf16.gmra.mrb[0].mxu0 %v4266
      %v4344 = vpop.f32.mrb[0].mxu0
      %v4345 = vadd.f32 0.0, %v4344
      %v4346 = vpop.f32.mrb[0].mxu0
      %v4347 = vpop.f32.mrb[0].mxu0
      %v4348 = vadd.f32 0.0, %v4347
      %v4349 = vpop.f32.mrb[0].mxu0
      %4350 = vmatprep.mubr.bf16.mxu0 0
      %4351 = vmatmul.mubr.bf16.gmra.mrb[0].mxu0 %v4269
      %v4352 = vpop.f32.mrb[0].mxu0
      %v4353 = vadd.f32 0.0, %v4352
      %v4354 = vpop.f32.mrb[0].mxu0
      %v4355 = vpop.f32.mrb[0].mxu0
      %v4356 = vadd.f32 0.0, %v4355
      %v4357 = vpop.f32.mrb[0].mxu0
      %4358 = vmatprep.mubr.bf16.mxu0 0
      %4359 = vmatmul.mubr.bf16.gmra.mrb[0].mxu0 %v4272
      %v4360 = vpop.f32.mrb[0].mxu0
      %v4361 = vadd.f32 0.0, %v4360
      %v4362 = vpop.f32.mrb[0].mxu0
      %v4363 = vpop.f32.mrb[0].mxu0
      %v4364 = vadd.f32 0.0, %v4363
      %v4365 = vpop.f32.mrb[0].mxu0
      %4366 = vmatprep.mubr.bf16.mxu0 0
      %4367 = vmatmul.mubr.bf16.gmra.mrb[0].mxu0 %v4275
      %v4368 = vpop.f32.mrb[0].mxu0
      %v4369 = vadd.f32 0.0, %v4368
      %v4370 = vpop.f32.mrb[0].mxu0
      %v4371 = vpop.f32.mrb[0].mxu0
      %v4372 = vadd.f32 0.0, %v4371
      %v4373 = vpop.f32.mrb[0].mxu0
      %4374 = vmatprep.mubr.bf16.mxu0 0
      %4375 = vmatmul.mubr.bf16.gmra.mrb[0].mxu0 %v4278
      %v4376 = vpop.f32.mrb[0].mxu0
      %v4377 = vadd.f32 0.0, %v4376
      %v4378 = vpop.f32.mrb[0].mxu0
      %v4379 = vpop.f32.mrb[0].mxu0
      %v4380 = vadd.f32 0.0, %v4379
      %v4381 = vpop.f32.mrb[0].mxu0
      %4382 = vmatprep.mubr.bf16.mxu0 0
      %4383 = vmatmul.mubr.bf16.gmra.mrb[0].mxu0 %v4281
      %v4384 = vpop.f32.mrb[0].mxu0
      %v4385 = vadd.f32 0.0, %v4384
      %v4386 = vpop.f32.mrb[0].mxu0
      %v4387 = vpop.f32.mrb[0].mxu0
      %v4388 = vadd.f32 0.0, %v4387
      %v4389 = vpop.f32.mrb[0].mxu0
      %4390 = vmatprep.mubr.bf16.mxu0 0
      %4391 = vmatmul.mubr.bf16.gmra.mrb[0].mxu0 %v4284
      %v4392 = vpop.f32.mrb[0].mxu0
      %v4393 = vadd.f32 0.0, %v4392
      %v4394 = vpop.f32.mrb[0].mxu0
      %v4395 = vpop.f32.mrb[0].mxu0
      %v4396 = vadd.f32 0.0, %v4395
      %v4397 = vpop.f32.mrb[0].mxu0
      %4398 = vmatprep.mubr.bf16.mxu0 0
      %4399 = vmatmul.mubr.bf16.gmra.mrb[0].mxu0 %v4287
      %v4400 = vpop.f32.mrb[0].mxu0
      %v4401 = vadd.f32 0.0, %v4400
      %v4402 = vpop.f32.mrb[0].mxu0
      %v4403 = vpop.f32.mrb[0].mxu0
      %v4404 = vadd.f32 0.0, %v4403
      %v4405 = vpop.f32.mrb[0].mxu0
      %4406 = vmatprep.mubr.bf16.mxu0 0
      %4407 = vmatmul.mubr.bf16.gmra.mrb[0].mxu0 %v4290
      %v4408 = vpop.f32.mrb[0].mxu0
      %v4409 = vadd.f32 0.0, %v4408
      %v4410 = vpop.f32.mrb[0].mxu0
      %v4411 = vpop.f32.mrb[0].mxu0
      %v4412 = vadd.f32 0.0, %v4411
      %v4413 = vpop.f32.mrb[0].mxu0
      %4414 = vmatprep.mubr.bf16.mxu0 0
      %4415 = vmatmul.mubr.bf16.gmra.mrb[0].mxu0 %v4293
      %v4416 = vpop.f32.mrb[0].mxu0
      %v4417 = vadd.f32 0.0, %v4416
      %v4418 = vpop.f32.mrb[0].mxu0
      %v4419 = vpop.f32.mrb[0].mxu0
      %v4420 = vadd.f32 0.0, %v4419
      %v4421 = vpop.f32.mrb[0].mxu0
      %4422 = vmatprep.mubr.bf16.mxu0 0
      %4423 = vmatmul.mubr.bf16.gmra.mrb[0].mxu0 %v4296
      %v4424 = vpop.f32.mrb[0].mxu0
      %v4425 = vadd.f32 0.0, %v4424
      %v4426 = vpop.f32.mrb[0].mxu0
      %v4427 = vpop.f32.mrb[0].mxu0
      %v4428 = vadd.f32 0.0, %v4427
      %v4429 = vpop.f32.mrb[0].mxu0
      %4430 = vmatprep.mubr.bf16.mxu0 0
      %4431 = vmatmul.mubr.bf16.gmra.mrb[0].mxu0 %v4299
      %v4432 = vpop.f32.mrb[0].mxu0
      %v4433 = vadd.f32 0.0, %v4432
      %v4434 = vpop.f32.mrb[0].mxu0
      %v4435 = vpop.f32.mrb[0].mxu0
      %v4436 = vadd.f32 0.0, %v4435
      %v4437 = vpop.f32.mrb[0].mxu0
      %4438 = vmatprep.mubr.bf16.mxu0 0
      %4439 = vmatmul.mubr.bf16.gmra.mrb[0].mxu0 %v4302
      %v4440 = vpop.f32.mrb[0].mxu0
      %v4441 = vadd.f32 0.0, %v4440
      %v4442 = vpop.f32.mrb[0].mxu0
      %v4443 = vpop.f32.mrb[0].mxu0
      %v4444 = vadd.f32 0.0, %v4443
      %v4445 = vpop.f32.mrb[0].mxu0
      %4446 = vmatprep.mubr.bf16.mxu0 0
      %4447 = vmatmul.mubr.bf16.gmra.mrb[0].mxu0 %v4305
      %v4448 = vpop.f32.mrb[0].mxu0
      %v4449 = vadd.f32 0.0, %v4448
      %v4450 = vpop.f32.mrb[0].mxu0
      %v4451 = vpop.f32.mrb[0].mxu0
      %v4452 = vadd.f32 0.0, %v4451
      %v4453 = vpop.f32.mrb[0].mxu0
      %4454 = vdwg.mxu0
      %v4455 = vadd.f32 %v4235, %v4345
      %v4456 = vadd.f32 %v4236, %v4348
      %v4457 = vadd.f32 %v4237, %v4353
      %v4458 = vadd.f32 %v4238, %v4356
      %v4459 = vadd.f32 %v4239, %v4361
      %v4460 = vadd.f32 %v4240, %v4364
      %v4461 = vadd.f32 %v4241, %v4369
      %v4462 = vadd.f32 %v4242, %v4372
      %v4463 = vadd.f32 %v4243, %v4377
      %v4464 = vadd.f32 %v4244, %v4380
      %v4465 = vadd.f32 %v4245, %v4385
      %v4466 = vadd.f32 %v4246, %v4388
      %v4467 = vadd.f32 %v4247, %v4393
      %v4468 = vadd.f32 %v4248, %v4396
      %v4469 = vadd.f32 %v4249, %v4401
      %v4470 = vadd.f32 %v4250, %v4404
      %v4471 = vadd.f32 %v4251, %v4409
      %v4472 = vadd.f32 %v4252, %v4412
      %v4473 = vadd.f32 %v4253, %v4417
      %v4474 = vadd.f32 %v4254, %v4420
      %v4475 = vadd.f32 %v4255, %v4425
      %v4476 = vadd.f32 %v4256, %v4428
      %v4477 = vadd.f32 %v4257, %v4433
      %v4478 = vadd.f32 %v4258, %v4436
      %v4479 = vadd.f32 %v4259, %v4441
      %v4480 = vadd.f32 %v4260, %v4444
      %v4481 = vadd.f32 %v4261, %v4449
      %v4482 = vadd.f32 %v4262, %v4452
      %v4483 = vld [vmem:[%s268 + $0x22] sm:$0xff]
      %v4484 = vld [vmem:[%s268 + $0x2a] sm:$0xff]
      %v4485 = vld [vmem:[%s268 + $0x32] sm:$0xff]
      %v4486 = vld [vmem:[%s268 + $0x3a] sm:$0xff]
      %v4487 = vld [vmem:[%s268 + $0x42] sm:$0xff]
      %v4488 = vld [vmem:[%s268 + $0x4a] sm:$0xff]
      %v4489 = vld [vmem:[%s268 + $0x52] sm:$0xff]
      %v4490 = vld [vmem:[%s268 + $0x5a] sm:$0xff]
      %v4491 = vld [vmem:[%s268 + $0x62] sm:$0xff]
      %v4492 = vld [vmem:[%s268 + $0x6a] sm:$0xff]
      %v4493 = vld [vmem:[%s268 + $0x72] sm:$0xff]
      %v4494 = vld [vmem:[%s268 + $0x7a] sm:$0xff]
      %v4495 = vld [vmem:[%s268 + $0x82] sm:$0xff]
      %v4496 = vld [vmem:[%s268 + $0x8a] sm:$0xff]
      %v4497 = vld [vmem:[%s268 + $0x92] sm:$0xff]
      %v4498 = vld [vmem:[%s268 + $0x9a] sm:$0xff]
      %v4499 = vld [vmem:[%s268 + $0xa2] sm:$0xff]
      %v4500 = vld [vmem:[%s268 + $0xaa] sm:$0xff]
      %v4501 = vld [vmem:[%s268 + $0xb2] sm:$0xff]
      %v4502 = vld [vmem:[%s268 + $0xba] sm:$0xff]
      %v4503 = vld [vmem:[%s268 + $0xc2] sm:$0xff]
      %v4504 = vld [vmem:[%s268 + $0xca] sm:$0xff]
      %v4505 = vld [vmem:[%s268 + $0xd2] sm:$0xff]
      %v4506 = vld [vmem:[%s268 + $0xda] sm:$0xff]
      %v4507 = vld [vmem:[%s268 + $0xe2] sm:$0xff]
      %v4508 = vld [vmem:[%s268 + $0xea] sm:$0xff]
      %v4509 = vld [vmem:[%s268 + $0xf2] sm:$0xff]
      %v4510 = vld [vmem:[%s268 + $0xfa] sm:$0x3f]
      %v4511 = vpack.c.bf16 %v4484, %v4483
      %v4512 = vpack.c.bf16 %v4486, %v4485
      %v4513 = vpack.c.bf16 %v4488, %v4487
      %v4514 = vpack.c.bf16 %v4490, %v4489
      %v4515 = vpack.c.bf16 %v4492, %v4491
      %v4516 = vpack.c.bf16 %v4494, %v4493
      %v4517 = vpack.c.bf16 %v4496, %v4495
      %v4518 = vpack.c.bf16 %v4498, %v4497
      %v4519 = vpack.c.bf16 %v4500, %v4499
      %v4520 = vpack.c.bf16 %v4502, %v4501
      %v4521 = vpack.c.bf16 %v4504, %v4503
      %v4522 = vpack.c.bf16 %v4506, %v4505
      %v4523 = vpack.c.bf16 %v4508, %v4507
      %v4524 = vpack.c.bf16 %v4510, %v4509
      %v4525 = vld [vmem:[%s273 + $0x22] sm:$0xff]
      %v4526 = vld [vmem:[%s273 + $0x2a] sm:$0xff]
      %v4527 = vld [vmem:[%s273 + $0x32] sm:$0xff]
      %v4528 = vld [vmem:[%s273 + $0x3a] sm:$0xff]
      %v4529 = vld [vmem:[%s273 + $0x42] sm:$0xff]
      %v4530 = vld [vmem:[%s273 + $0x4a] sm:$0xff]
      %v4531 = vld [vmem:[%s273 + $0x52] sm:$0xff]
      %v4532 = vld [vmem:[%s273 + $0x5a] sm:$0xff]
      %v4533 = vld [vmem:[%s273 + $0x62] sm:$0xff]
      %v4534 = vld [vmem:[%s273 + $0x6a] sm:$0xff]
      %v4535 = vld [vmem:[%s273 + $0x72] sm:$0xff]
      %v4536 = vld [vmem:[%s273 + $0x7a] sm:$0xff]
      %v4537 = vld [vmem:[%s273 + $0x82] sm:$0xff]
      %v4538 = vld [vmem:[%s273 + $0x8a] sm:$0xff]
      %v4539 = vld [vmem:[%s273 + $0x92] sm:$0xff]
      %v4540 = vld [vmem:[%s273 + $0x9a] sm:$0xff]
      %v4541 = vld [vmem:[%s273 + $0xa2] sm:$0xff]
      %v4542 = vld [vmem:[%s273 + $0xaa] sm:$0xff]
      %v4543 = vld [vmem:[%s273 + $0xb2] sm:$0xff]
      %v4544 = vld [vmem:[%s273 + $0xba] sm:$0xff]
      %v4545 = vld [vmem:[%s273 + $0xc2] sm:$0xff]
      %v4546 = vld [vmem:[%s273 + $0xca] sm:$0xff]
      %v4547 = vld [vmem:[%s273 + $0xd2] sm:$0xff]
      %v4548 = vld [vmem:[%s273 + $0xda] sm:$0xff]
      %v4549 = vld [vmem:[%s273 + $0xe2] sm:$0xff]
      %v4550 = vld [vmem:[%s273 + $0xea] sm:$0xff]
      %v4551 = vld [vmem:[%s273 + $0xf2] sm:$0xff]
      %v4552 = vld [vmem:[%s273 + $0xfa] sm:$0x3f]
      %v4553 = vpack.c.bf16 %v4526, %v4525
      %v4554 = vpack.c.bf16 %v4528, %v4527
      %v4555 = vpack.c.bf16 %v4530, %v4529
      %v4556 = vpack.c.bf16 %v4532, %v4531
      %v4557 = vpack.c.bf16 %v4534, %v4533
      %v4558 = vpack.c.bf16 %v4536, %v4535
      %v4559 = vpack.c.bf16 %v4538, %v4537
      %v4560 = vpack.c.bf16 %v4540, %v4539
      %v4561 = vpack.c.bf16 %v4542, %v4541
      %v4562 = vpack.c.bf16 %v4544, %v4543
      %v4563 = vpack.c.bf16 %v4546, %v4545
      %v4564 = vpack.c.bf16 %v4548, %v4547
      %v4565 = vpack.c.bf16 %v4550, %v4549
      %v4566 = vpack.c.bf16 %v4552, %v4551
      %s4567 = scalar_lea.vmem %s2, 16
      %v4568 = vld [vmem:[%s4567] sm:$0x3]
      %v4570 = vsel %vm376, %v4511, 0
      %v4573 = vsel %vm376, %v4512, 0
      %v4576 = vsel %vm376, %v4513, 0
      %v4579 = vsel %vm376, %v4514, 0
      %v4582 = vsel %vm376, %v4515, 0
      %v4585 = vsel %vm376, %v4516, 0
      %v4588 = vsel %vm376, %v4517, 0
      %v4591 = vsel %vm376, %v4518, 0
      %v4594 = vsel %vm376, %v4519, 0
      %v4597 = vsel %vm376, %v4520, 0
      %v4600 = vsel %vm376, %v4521, 0
      %v4603 = vsel %vm376, %v4522, 0
      %v4606 = vsel %vm376, %v4523, 0
      %v4609 = vsel %vm376, %v4524, 0
      %v4612 = vsel %vm419, %v4568, 0
      %4614 = vmatprep.subr.bf16.mxu0 0
      %4615 = vmatpush1.bf16.msra.mxu0 %v4612
      %4616 = vmatprep.subr.bf16.mxu0 0
      %4617 = vmatpush1.bf16.msra.mxu0 0
      %4618 = vmatprep.subr.bf16.mxu0 0
      %4619 = vmatpush1.bf16.msra.mxu0 0
      %4620 = vmatprep.subr.bf16.mxu0 0
      %4621 = vmatpush1.bf16.msra.mxu0 0
      %4622 = vmatprep.subr.bf16.mxu0 0
      %4623 = vmatpush1.bf16.msra.mxu0 0
      %4624 = vmatprep.subr.bf16.mxu0 0
      %4625 = vmatpush1.bf16.msra.mxu0 0
      %4626 = vmatprep.subr.bf16.mxu0 0
      %4627 = vmatpush1.bf16.msra.mxu0 0
      %4628 = vmatprep.subr.bf16.mxu0 0
      %4629 = vmatpush1.bf16.msra.mxu0 0
      %4630 = vmatprep.subr.bf16.mxu0 0
      %4631 = vmatpush1.bf16.msra.mxu0 0
      %4632 = vmatprep.subr.bf16.mxu0 0
      %4633 = vmatpush1.bf16.msra.mxu0 0
      %4634 = vmatprep.subr.bf16.mxu0 0
      %4635 = vmatpush1.bf16.msra.mxu0 0
      %4636 = vmatprep.subr.bf16.mxu0 0
      %4637 = vmatpush1.bf16.msra.mxu0 0
      %4638 = vmatprep.subr.bf16.mxu0 0
      %4639 = vmatpush1.bf16.msra.mxu0 0
      %4640 = vmatprep.subr.bf16.mxu0 0
      %4641 = vmatpush1.bf16.msra.mxu0 0
      %4642 = vmatprep.subr.bf16.mxu0 0
      %4643 = vmatpush1.bf16.msra.mxu0 0
      %4644 = vmatprep.subr.bf16.mxu0 0
      %4645 = vmatpush1.bf16.msra.mxu0 0
      %4646 = vmatprep.mubr.bf16.mxu0 0
      %4647 = vmatmul.mubr.bf16.gmra.mrb[0].mxu0 %v4570
      %v4648 = vpop.f32.mrb[0].mxu0
      %v4649 = vadd.f32 0.0, %v4648
      %v4650 = vpop.f32.mrb[0].mxu0
      %v4651 = vpop.f32.mrb[0].mxu0
      %v4652 = vadd.f32 0.0, %v4651
      %v4653 = vpop.f32.mrb[0].mxu0
      %4654 = vmatprep.mubr.bf16.mxu0 0
      %4655 = vmatmul.mubr.bf16.gmra.mrb[0].mxu0 %v4573
      %v4656 = vpop.f32.mrb[0].mxu0
      %v4657 = vadd.f32 0.0, %v4656
      %v4658 = vpop.f32.mrb[0].mxu0
      %v4659 = vpop.f32.mrb[0].mxu0
      %v4660 = vadd.f32 0.0, %v4659
      %v4661 = vpop.f32.mrb[0].mxu0
      %4662 = vmatprep.mubr.bf16.mxu0 0
      %4663 = vmatmul.mubr.bf16.gmra.mrb[0].mxu0 %v4576
      %v4664 = vpop.f32.mrb[0].mxu0
      %v4665 = vadd.f32 0.0, %v4664
      %v4666 = vpop.f32.mrb[0].mxu0
      %v4667 = vpop.f32.mrb[0].mxu0
      %v4668 = vadd.f32 0.0, %v4667
      %v4669 = vpop.f32.mrb[0].mxu0
      %4670 = vmatprep.mubr.bf16.mxu0 0
      %4671 = vmatmul.mubr.bf16.gmra.mrb[0].mxu0 %v4579
      %v4672 = vpop.f32.mrb[0].mxu0
      %v4673 = vadd.f32 0.0, %v4672
      %v4674 = vpop.f32.mrb[0].mxu0
      %v4675 = vpop.f32.mrb[0].mxu0
      %v4676 = vadd.f32 0.0, %v4675
      %v4677 = vpop.f32.mrb[0].mxu0
      %4678 = vmatprep.mubr.bf16.mxu0 0
      %4679 = vmatmul.mubr.bf16.gmra.mrb[0].mxu0 %v4582
      %v4680 = vpop.f32.mrb[0].mxu0
      %v4681 = vadd.f32 0.0, %v4680
      %v4682 = vpop.f32.mrb[0].mxu0
      %v4683 = vpop.f32.mrb[0].mxu0
      %v4684 = vadd.f32 0.0, %v4683
      %v4685 = vpop.f32.mrb[0].mxu0
      %4686 = vmatprep.mubr.bf16.mxu0 0
      %4687 = vmatmul.mubr.bf16.gmra.mrb[0].mxu0 %v4585
      %v4688 = vpop.f32.mrb[0].mxu0
      %v4689 = vadd.f32 0.0, %v4688
      %v4690 = vpop.f32.mrb[0].mxu0
      %v4691 = vpop.f32.mrb[0].mxu0
      %v4692 = vadd.f32 0.0, %v4691
      %v4693 = vpop.f32.mrb[0].mxu0
      %4694 = vmatprep.mubr.bf16.mxu0 0
      %4695 = vmatmul.mubr.bf16.gmra.mrb[0].mxu0 %v4588
      %v4696 = vpop.f32.mrb[0].mxu0
      %v4697 = vadd.f32 0.0, %v4696
      %v4698 = vpop.f32.mrb[0].mxu0
      %v4699 = vpop.f32.mrb[0].mxu0
      %v4700 = vadd.f32 0.0, %v4699
      %v4701 = vpop.f32.mrb[0].mxu0
      %4702 = vmatprep.mubr.bf16.mxu0 0
      %4703 = vmatmul.mubr.bf16.gmra.mrb[0].mxu0 %v4591
      %v4704 = vpop.f32.mrb[0].mxu0
      %v4705 = vadd.f32 0.0, %v4704
      %v4706 = vpop.f32.mrb[0].mxu0
      %v4707 = vpop.f32.mrb[0].mxu0
      %v4708 = vadd.f32 0.0, %v4707
      %v4709 = vpop.f32.mrb[0].mxu0
      %4710 = vmatprep.mubr.bf16.mxu0 0
      %4711 = vmatmul.mubr.bf16.gmra.mrb[0].mxu0 %v4594
      %v4712 = vpop.f32.mrb[0].mxu0
      %v4713 = vadd.f32 0.0, %v4712
      %v4714 = vpop.f32.mrb[0].mxu0
      %v4715 = vpop.f32.mrb[0].mxu0
      %v4716 = vadd.f32 0.0, %v4715
      %v4717 = vpop.f32.mrb[0].mxu0
      %4718 = vmatprep.mubr.bf16.mxu0 0
      %4719 = vmatmul.mubr.bf16.gmra.mrb[0].mxu0 %v4597
      %v4720 = vpop.f32.mrb[0].mxu0
      %v4721 = vadd.f32 0.0, %v4720
      %v4722 = vpop.f32.mrb[0].mxu0
      %v4723 = vpop.f32.mrb[0].mxu0
      %v4724 = vadd.f32 0.0, %v4723
      %v4725 = vpop.f32.mrb[0].mxu0
      %4726 = vmatprep.mubr.bf16.mxu0 0
      %4727 = vmatmul.mubr.bf16.gmra.mrb[0].mxu0 %v4600
      %v4728 = vpop.f32.mrb[0].mxu0
      %v4729 = vadd.f32 0.0, %v4728
      %v4730 = vpop.f32.mrb[0].mxu0
      %v4731 = vpop.f32.mrb[0].mxu0
      %v4732 = vadd.f32 0.0, %v4731
      %v4733 = vpop.f32.mrb[0].mxu0
      %4734 = vmatprep.mubr.bf16.mxu0 0
      %4735 = vmatmul.mubr.bf16.gmra.mrb[0].mxu0 %v4603
      %v4736 = vpop.f32.mrb[0].mxu0
      %v4737 = vadd.f32 0.0, %v4736
      %v4738 = vpop.f32.mrb[0].mxu0
      %v4739 = vpop.f32.mrb[0].mxu0
      %v4740 = vadd.f32 0.0, %v4739
      %v4741 = vpop.f32.mrb[0].mxu0
      %4742 = vmatprep.mubr.bf16.mxu0 0
      %4743 = vmatmul.mubr.bf16.gmra.mrb[0].mxu0 %v4606
      %v4744 = vpop.f32.mrb[0].mxu0
      %v4745 = vadd.f32 0.0, %v4744
      %v4746 = vpop.f32.mrb[0].mxu0
      %v4747 = vpop.f32.mrb[0].mxu0
      %v4748 = vadd.f32 0.0, %v4747
      %v4749 = vpop.f32.mrb[0].mxu0
      %4750 = vmatprep.mubr.bf16.mxu0 0
      %4751 = vmatmul.mubr.bf16.gmra.mrb[0].mxu0 %v4609
      %v4752 = vpop.f32.mrb[0].mxu0
      %v4753 = vadd.f32 0.0, %v4752
      %v4754 = vpop.f32.mrb[0].mxu0
      %v4755 = vpop.f32.mrb[0].mxu0
      %v4756 = vadd.f32 0.0, %v4755
      %v4757 = vpop.f32.mrb[0].mxu0
      %4758 = vdwg.mxu0
      %v4759 = vadd.f32 %v4455, %v4649
      %v4760 = vadd.f32 %v4456, %v4652
      %v4761 = vadd.f32 %v4457, %v4657
      %v4762 = vadd.f32 %v4458, %v4660
      %v4763 = vadd.f32 %v4459, %v4665
      %v4764 = vadd.f32 %v4460, %v4668
      %v4765 = vadd.f32 %v4461, %v4673
      %v4766 = vadd.f32 %v4462, %v4676
      %v4767 = vadd.f32 %v4463, %v4681
      %v4768 = vadd.f32 %v4464, %v4684
      %v4769 = vadd.f32 %v4465, %v4689
      %v4770 = vadd.f32 %v4466, %v4692
      %v4771 = vadd.f32 %v4467, %v4697
      %v4772 = vadd.f32 %v4468, %v4700
      %v4773 = vadd.f32 %v4469, %v4705
      %v4774 = vadd.f32 %v4470, %v4708
      %v4775 = vadd.f32 %v4471, %v4713
      %v4776 = vadd.f32 %v4472, %v4716
      %v4777 = vadd.f32 %v4473, %v4721
      %v4778 = vadd.f32 %v4474, %v4724
      %v4779 = vadd.f32 %v4475, %v4729
      %v4780 = vadd.f32 %v4476, %v4732
      %v4781 = vadd.f32 %v4477, %v4737
      %v4782 = vadd.f32 %v4478, %v4740
      %v4783 = vadd.f32 %v4479, %v4745
      %v4784 = vadd.f32 %v4480, %v4748
      %v4785 = vadd.f32 %v4481, %v4753
      %v4786 = vadd.f32 %v4482, %v4756
      %s4787 = scalar_lea.vmem %s3, 16
      %v4788 = vld [vmem:[%s4787] sm:$0x3]
      %v4790 = vsel %vm376, %v4553, 0
      %v4793 = vsel %vm376, %v4554, 0
      %v4796 = vsel %vm376, %v4555, 0
      %v4799 = vsel %vm376, %v4556, 0
      %v4802 = vsel %vm376, %v4557, 0
      %v4805 = vsel %vm376, %v4558, 0
      %v4808 = vsel %vm376, %v4559, 0
      %v4811 = vsel %vm376, %v4560, 0
      %v4814 = vsel %vm376, %v4561, 0
      %v4817 = vsel %vm376, %v4562, 0
      %v4820 = vsel %vm376, %v4563, 0
      %v4823 = vsel %vm376, %v4564, 0
      %v4826 = vsel %vm376, %v4565, 0
      %v4829 = vsel %vm376, %v4566, 0
      %v4832 = vsel %vm419, %v4788, 0
      %4834 = vmatprep.subr.bf16.mxu0 0
      %4835 = vmatpush1.bf16.msra.mxu0 %v4832
      %4836 = vmatprep.subr.bf16.mxu0 0
      %4837 = vmatpush1.bf16.msra.mxu0 0
      %4838 = vmatprep.subr.bf16.mxu0 0
      %4839 = vmatpush1.bf16.msra.mxu0 0
      %4840 = vmatprep.subr.bf16.mxu0 0
      %4841 = vmatpush1.bf16.msra.mxu0 0
      %4842 = vmatprep.subr.bf16.mxu0 0
      %4843 = vmatpush1.bf16.msra.mxu0 0
      %4844 = vmatprep.subr.bf16.mxu0 0
      %4845 = vmatpush1.bf16.msra.mxu0 0
      %4846 = vmatprep.subr.bf16.mxu0 0
      %4847 = vmatpush1.bf16.msra.mxu0 0
      %4848 = vmatprep.subr.bf16.mxu0 0
      %4849 = vmatpush1.bf16.msra.mxu0 0
      %4850 = vmatprep.subr.bf16.mxu0 0
      %4851 = vmatpush1.bf16.msra.mxu0 0
      %4852 = vmatprep.subr.bf16.mxu0 0
      %4853 = vmatpush1.bf16.msra.mxu0 0
      %4854 = vmatprep.subr.bf16.mxu0 0
      %4855 = vmatpush1.bf16.msra.mxu0 0
      %4856 = vmatprep.subr.bf16.mxu0 0
      %4857 = vmatpush1.bf16.msra.mxu0 0
      %4858 = vmatprep.subr.bf16.mxu0 0
      %4859 = vmatpush1.bf16.msra.mxu0 0
      %4860 = vmatprep.subr.bf16.mxu0 0
      %4861 = vmatpush1.bf16.msra.mxu0 0
      %4862 = vmatprep.subr.bf16.mxu0 0
      %4863 = vmatpush1.bf16.msra.mxu0 0
      %4864 = vmatprep.subr.bf16.mxu0 0
      %4865 = vmatpush1.bf16.msra.mxu0 0
      %4866 = vmatprep.mubr.bf16.mxu0 0
      %4867 = vmatmul.mubr.bf16.gmra.mrb[0].mxu0 %v4790
      %v4868 = vpop.f32.mrb[0].mxu0
      %v4869 = vadd.f32 0.0, %v4868
      %v4870 = vpop.f32.mrb[0].mxu0
      %v4871 = vpop.f32.mrb[0].mxu0
      %v4872 = vadd.f32 0.0, %v4871
      %v4873 = vpop.f32.mrb[0].mxu0
      %4874 = vmatprep.mubr.bf16.mxu0 0
      %4875 = vmatmul.mubr.bf16.gmra.mrb[0].mxu0 %v4793
      %v4876 = vpop.f32.mrb[0].mxu0
      %v4877 = vadd.f32 0.0, %v4876
      %v4878 = vpop.f32.mrb[0].mxu0
      %v4879 = vpop.f32.mrb[0].mxu0
      %v4880 = vadd.f32 0.0, %v4879
      %v4881 = vpop.f32.mrb[0].mxu0
      %4882 = vmatprep.mubr.bf16.mxu0 0
      %4883 = vmatmul.mubr.bf16.gmra.mrb[0].mxu0 %v4796
      %v4884 = vpop.f32.mrb[0].mxu0
      %v4885 = vadd.f32 0.0, %v4884
      %v4886 = vpop.f32.mrb[0].mxu0
      %v4887 = vpop.f32.mrb[0].mxu0
      %v4888 = vadd.f32 0.0, %v4887
      %v4889 = vpop.f32.mrb[0].mxu0
      %4890 = vmatprep.mubr.bf16.mxu0 0
      %4891 = vmatmul.mubr.bf16.gmra.mrb[0].mxu0 %v4799
      %v4892 = vpop.f32.mrb[0].mxu0
      %v4893 = vadd.f32 0.0, %v4892
      %v4894 = vpop.f32.mrb[0].mxu0
      %v4895 = vpop.f32.mrb[0].mxu0
      %v4896 = vadd.f32 0.0, %v4895
      %v4897 = vpop.f32.mrb[0].mxu0
      %4898 = vmatprep.mubr.bf16.mxu0 0
      %4899 = vmatmul.mubr.bf16.gmra.mrb[0].mxu0 %v4802
      %v4900 = vpop.f32.mrb[0].mxu0
      %v4901 = vadd.f32 0.0, %v4900
      %v4902 = vpop.f32.mrb[0].mxu0
      %v4903 = vpop.f32.mrb[0].mxu0
      %v4904 = vadd.f32 0.0, %v4903
      %v4905 = vpop.f32.mrb[0].mxu0
      %4906 = vmatprep.mubr.bf16.mxu0 0
      %4907 = vmatmul.mubr.bf16.gmra.mrb[0].mxu0 %v4805
      %v4908 = vpop.f32.mrb[0].mxu0
      %v4909 = vadd.f32 0.0, %v4908
      %v4910 = vpop.f32.mrb[0].mxu0
      %v4911 = vpop.f32.mrb[0].mxu0
      %v4912 = vadd.f32 0.0, %v4911
      %v4913 = vpop.f32.mrb[0].mxu0
      %4914 = vmatprep.mubr.bf16.mxu0 0
      %4915 = vmatmul.mubr.bf16.gmra.mrb[0].mxu0 %v4808
      %v4916 = vpop.f32.mrb[0].mxu0
      %v4917 = vadd.f32 0.0, %v4916
      %v4918 = vpop.f32.mrb[0].mxu0
      %v4919 = vpop.f32.mrb[0].mxu0
      %v4920 = vadd.f32 0.0, %v4919
      %v4921 = vpop.f32.mrb[0].mxu0
      %4922 = vmatprep.mubr.bf16.mxu0 0
      %4923 = vmatmul.mubr.bf16.gmra.mrb[0].mxu0 %v4811
      %v4924 = vpop.f32.mrb[0].mxu0
      %v4925 = vadd.f32 0.0, %v4924
      %v4926 = vpop.f32.mrb[0].mxu0
      %v4927 = vpop.f32.mrb[0].mxu0
      %v4928 = vadd.f32 0.0, %v4927
      %v4929 = vpop.f32.mrb[0].mxu0
      %4930 = vmatprep.mubr.bf16.mxu0 0
      %4931 = vmatmul.mubr.bf16.gmra.mrb[0].mxu0 %v4814
      %v4932 = vpop.f32.mrb[0].mxu0
      %v4933 = vadd.f32 0.0, %v4932
      %v4934 = vpop.f32.mrb[0].mxu0
      %v4935 = vpop.f32.mrb[0].mxu0
      %v4936 = vadd.f32 0.0, %v4935
      %v4937 = vpop.f32.mrb[0].mxu0
      %4938 = vmatprep.mubr.bf16.mxu0 0
      %4939 = vmatmul.mubr.bf16.gmra.mrb[0].mxu0 %v4817
      %v4940 = vpop.f32.mrb[0].mxu0
      %v4941 = vadd.f32 0.0, %v4940
      %v4942 = vpop.f32.mrb[0].mxu0
      %v4943 = vpop.f32.mrb[0].mxu0
      %v4944 = vadd.f32 0.0, %v4943
      %v4945 = vpop.f32.mrb[0].mxu0
      %4946 = vmatprep.mubr.bf16.mxu0 0
      %4947 = vmatmul.mubr.bf16.gmra.mrb[0].mxu0 %v4820
      %v4948 = vpop.f32.mrb[0].mxu0
      %v4949 = vadd.f32 0.0, %v4948
      %v4950 = vpop.f32.mrb[0].mxu0
      %v4951 = vpop.f32.mrb[0].mxu0
      %v4952 = vadd.f32 0.0, %v4951
      %v4953 = vpop.f32.mrb[0].mxu0
      %4954 = vmatprep.mubr.bf16.mxu0 0
      %4955 = vmatmul.mubr.bf16.gmra.mrb[0].mxu0 %v4823
      %v4956 = vpop.f32.mrb[0].mxu0
      %v4957 = vadd.f32 0.0, %v4956
      %v4958 = vpop.f32.mrb[0].mxu0
      %v4959 = vpop.f32.mrb[0].mxu0
      %v4960 = vadd.f32 0.0, %v4959
      %v4961 = vpop.f32.mrb[0].mxu0
      %4962 = vmatprep.mubr.bf16.mxu0 0
      %4963 = vmatmul.mubr.bf16.gmra.mrb[0].mxu0 %v4826
      %v4964 = vpop.f32.mrb[0].mxu0
      %v4965 = vadd.f32 0.0, %v4964
      %v4966 = vpop.f32.mrb[0].mxu0
      %v4967 = vpop.f32.mrb[0].mxu0
      %v4968 = vadd.f32 0.0, %v4967
      %v4969 = vpop.f32.mrb[0].mxu0
      %4970 = vmatprep.mubr.bf16.mxu0 0
      %4971 = vmatmul.mubr.bf16.gmra.mrb[0].mxu0 %v4829
      %v4972 = vpop.f32.mrb[0].mxu0
      %v4973 = vadd.f32 0.0, %v4972
      %v4974 = vpop.f32.mrb[0].mxu0
      %v4975 = vpop.f32.mrb[0].mxu0
      %v4976 = vadd.f32 0.0, %v4975
      %v4977 = vpop.f32.mrb[0].mxu0
      %4978 = vdwg.mxu0
      %v4979 = vadd.f32 %v4759, %v4869
      %v4980 = vadd.f32 %v4760, %v4872
      %v4981 = vadd.f32 %v4761, %v4877
      %v4982 = vadd.f32 %v4762, %v4880
      %v4983 = vadd.f32 %v4763, %v4885
      %v4984 = vadd.f32 %v4764, %v4888
      %v4985 = vadd.f32 %v4765, %v4893
      %v4986 = vadd.f32 %v4766, %v4896
      %v4987 = vadd.f32 %v4767, %v4901
      %v4988 = vadd.f32 %v4768, %v4904
      %v4989 = vadd.f32 %v4769, %v4909
      %v4990 = vadd.f32 %v4770, %v4912
      %v4991 = vadd.f32 %v4771, %v4917
      %v4992 = vadd.f32 %v4772, %v4920
      %v4993 = vadd.f32 %v4773, %v4925
      %v4994 = vadd.f32 %v4774, %v4928
      %v4995 = vadd.f32 %v4775, %v4933
      %v4996 = vadd.f32 %v4776, %v4936
      %v4997 = vadd.f32 %v4777, %v4941
      %v4998 = vadd.f32 %v4778, %v4944
      %v4999 = vadd.f32 %v4779, %v4949
      %v5000 = vadd.f32 %v4780, %v4952
      %v5001 = vadd.f32 %v4781, %v4957
      %v5002 = vadd.f32 %v4782, %v4960
      %v5003 = vadd.f32 %v4783, %v4965
      %v5004 = vadd.f32 %v4784, %v4968
      %v5005 = vadd.f32 %v4785, %v4973
      %v5006 = vadd.f32 %v4786, %v4976
      %v5007 = vmax.f32 %v4979, 0.0
      %v5008 = vmax.f32 %v4980, 0.0
      %v5009 = vmax.f32 %v4981, 0.0
      %v5010 = vmax.f32 %v4982, 0.0
      %v5011 = vmax.f32 %v4983, 0.0
      %v5012 = vmax.f32 %v4984, 0.0
      %v5013 = vmax.f32 %v4985, 0.0
      %v5014 = vmax.f32 %v4986, 0.0
      %v5015 = vmax.f32 %v4987, 0.0
      %v5016 = vmax.f32 %v4988, 0.0
      %v5017 = vmax.f32 %v4989, 0.0
      %v5018 = vmax.f32 %v4990, 0.0
      %v5019 = vmax.f32 %v4991, 0.0
      %v5020 = vmax.f32 %v4992, 0.0
      %v5021 = vmax.f32 %v4993, 0.0
      %v5022 = vmax.f32 %v4994, 0.0
      %v5023 = vmax.f32 %v4995, 0.0
      %v5024 = vmax.f32 %v4996, 0.0
      %v5025 = vmax.f32 %v4997, 0.0
      %v5026 = vmax.f32 %v4998, 0.0
      %v5027 = vmax.f32 %v4999, 0.0
      %v5028 = vmax.f32 %v5000, 0.0
      %v5029 = vmax.f32 %v5001, 0.0
      %v5030 = vmax.f32 %v5002, 0.0
      %v5031 = vmax.f32 %v5003, 0.0
      %v5032 = vmax.f32 %v5004, 0.0
      %v5033 = vmax.f32 %v5005, 0.0
      %v5034 = vmax.f32 %v5006, 0.0
      %5035 = vst.msk [vmem:[%s278] sm:$0xff] %vm376, %v5007
      %5036 = vst.msk [vmem:[%s278 + $0x8] sm:$0xff] %vm376, %v5008
      %5037 = vst.msk [vmem:[%s278 + $0x10] sm:$0xff] %vm376, %v5009
      %5038 = vst.msk [vmem:[%s278 + $0x18] sm:$0xff] %vm376, %v5010
      %5039 = vst.msk [vmem:[%s278 + $0x20] sm:$0xff] %vm376, %v5011
      %5040 = vst.msk [vmem:[%s278 + $0x28] sm:$0xff] %vm376, %v5012
      %5041 = vst.msk [vmem:[%s278 + $0x30] sm:$0xff] %vm376, %v5013
      %5042 = vst.msk [vmem:[%s278 + $0x38] sm:$0xff] %vm376, %v5014
      %5043 = vst.msk [vmem:[%s278 + $0x40] sm:$0xff] %vm376, %v5015
      %5044 = vst.msk [vmem:[%s278 + $0x48] sm:$0xff] %vm376, %v5016
      %5045 = vst.msk [vmem:[%s278 + $0x50] sm:$0xff] %vm376, %v5017
      %5046 = vst.msk [vmem:[%s278 + $0x58] sm:$0xff] %vm376, %v5018
      %5047 = vst.msk [vmem:[%s278 + $0x60] sm:$0xff] %vm376, %v5019
      %5048 = vst.msk [vmem:[%s278 + $0x68] sm:$0xff] %vm376, %v5020
      %5049 = vst.msk [vmem:[%s278 + $0x70] sm:$0xff] %vm376, %v5021
      %5050 = vst.msk [vmem:[%s278 + $0x78] sm:$0xff] %vm376, %v5022
      %5051 = vst.msk [vmem:[%s278 + $0x80] sm:$0xff] %vm376, %v5023
      %5052 = vst.msk [vmem:[%s278 + $0x88] sm:$0xff] %vm376, %v5024
      %5053 = vst.msk [vmem:[%s278 + $0x90] sm:$0xff] %vm376, %v5025
      %5054 = vst.msk [vmem:[%s278 + $0x98] sm:$0xff] %vm376, %v5026
      %5055 = vst.msk [vmem:[%s278 + $0xa0] sm:$0xff] %vm376, %v5027
      %5056 = vst.msk [vmem:[%s278 + $0xa8] sm:$0xff] %vm376, %v5028
      %5057 = vst.msk [vmem:[%s278 + $0xb0] sm:$0xff] %vm376, %v5029
      %5058 = vst.msk [vmem:[%s278 + $0xb8] sm:$0xff] %vm376, %v5030
      %5059 = vst.msk [vmem:[%s278 + $0xc0] sm:$0xff] %vm376, %v5031
      %5060 = vst.msk [vmem:[%s278 + $0xc8] sm:$0xff] %vm376, %v5032
      %5061 = vst.msk [vmem:[%s278 + $0xd0] sm:$0xff] %vm376, %v5033
      %vm5062 = vcmask 29696
      %5063 = vst.msk [vmem:[%s278 + $0xd8] sm:$0x3f] %vm5062, %v5034
      %vm5064 = vcmask 25600
      %5065 = vst.msk [vmem:[%s278 + $0xde] sm:$0x3] %vm5064, 0.0
      %v5066 = vlaneseq
      %v5067 = vshrl.u32 %v5066, 7
      %v5068 = vadd.s32 %v5067, 8
      %v5069 = vadd.s32 %v5067, 16
      %v5070 = vadd.s32 %v5067, 24
      %v5071 = vadd.s32 %v5067, 32
      %v5072 = vadd.s32 %v5067, 40
      %v5073 = vadd.s32 %v5067, 48
      %v5074 = vadd.s32 %v5067, 56
      %v5075 = vadd.s32 %v5067, 64
      %v5076 = vadd.s32 %v5067, 72
      %v5077 = vadd.s32 %v5067, 80
      %v5078 = vadd.s32 %v5067, 88
      %v5079 = vadd.s32 %v5067, 96
      %v5080 = vadd.s32 %v5067, 104
      %v5081 = vadd.s32 %v5067, 112
      %v5082 = vadd.s32 %v5067, 120
      %v5083 = vadd.s32 %v5067, 128
      %v5084 = vadd.s32 %v5067, 136
      %v5085 = vadd.s32 %v5067, 144
      %v5086 = vadd.s32 %v5067, 152
      %v5087 = vadd.s32 %v5067, 160
      %v5088 = vadd.s32 %v5067, 168
      %v5089 = vadd.s32 %v5067, 176
      %v5090 = vadd.s32 %v5067, 184
      %v5091 = vadd.s32 %v5067, 192
      %v5092 = vadd.s32 %v5067, 200
      %v5093 = vadd.s32 %v5067, 208
      %v5094 = vadd.s32 %v5067, 216
      %vm5095 = vcmp.lt.s32.totalorder %v5067, 0
      %v5096 = vsub.s32 0, %v5067
      %v5097 = vsel %vm5095, %v5096, %v5067
      %v5098 = vshrl.u32 %v5097, 4
      %v5099 = vand.u32 %v5097, 15
      %v5100 = vsub.s32 0, %v5099
      %v5101 = vsel %vm5095, %v5100, %v5099
      %vm5102 = vcmp.lt.s32.totalorder %v5068, 0
      %v5103 = vsub.s32 0, %v5068
      %v5104 = vsel %vm5102, %v5103, %v5068
      %v5105 = vshrl.u32 %v5104, 4
      %v5106 = vand.u32 %v5104, 15
      %v5107 = vsub.s32 0, %v5106
      %v5108 = vsel %vm5102, %v5107, %v5106
      %vm5109 = vcmp.lt.s32.totalorder %v5069, 0
      %v5110 = vsub.s32 0, %v5069
      %v5111 = vsel %vm5109, %v5110, %v5069
      %v5112 = vshrl.u32 %v5111, 4
      %v5113 = vand.u32 %v5111, 15
      %v5114 = vsub.s32 0, %v5113
      %v5115 = vsel %vm5109, %v5114, %v5113
      %vm5116 = vcmp.lt.s32.totalorder %v5070, 0
      %v5117 = vsub.s32 0, %v5070
      %v5118 = vsel %vm5116, %v5117, %v5070
      %v5119 = vshrl.u32 %v5118, 4
      %v5120 = vand.u32 %v5118, 15
      %v5121 = vsub.s32 0, %v5120
      %v5122 = vsel %vm5116, %v5121, %v5120
      %vm5123 = vcmp.lt.s32.totalorder %v5071, 0
      %v5124 = vsub.s32 0, %v5071
      %v5125 = vsel %vm5123, %v5124, %v5071
      %v5126 = vshrl.u32 %v5125, 4
      %v5127 = vand.u32 %v5125, 15
      %v5128 = vsub.s32 0, %v5127
      %v5129 = vsel %vm5123, %v5128, %v5127
      %vm5130 = vcmp.lt.s32.totalorder %v5072, 0
      %v5131 = vsub.s32 0, %v5072
      %v5132 = vsel %vm5130, %v5131, %v5072
      %v5133 = vshrl.u32 %v5132, 4
      %v5134 = vand.u32 %v5132, 15
      %v5135 = vsub.s32 0, %v5134
      %v5136 = vsel %vm5130, %v5135, %v5134
      %vm5137 = vcmp.lt.s32.totalorder %v5073, 0
      %v5138 = vsub.s32 0, %v5073
      %v5139 = vsel %vm5137, %v5138, %v5073
      %v5140 = vshrl.u32 %v5139, 4
      %v5141 = vand.u32 %v5139, 15
      %v5142 = vsub.s32 0, %v5141
      %v5143 = vsel %vm5137, %v5142, %v5141
      %vm5144 = vcmp.lt.s32.totalorder %v5074, 0
      %v5145 = vsub.s32 0, %v5074
      %v5146 = vsel %vm5144, %v5145, %v5074
      %v5147 = vshrl.u32 %v5146, 4
      %v5148 = vand.u32 %v5146, 15
      %v5149 = vsub.s32 0, %v5148
      %v5150 = vsel %vm5144, %v5149, %v5148
      %vm5151 = vcmp.lt.s32.totalorder %v5075, 0
      %v5152 = vsub.s32 0, %v5075
      %v5153 = vsel %vm5151, %v5152, %v5075
      %v5154 = vshrl.u32 %v5153, 4
      %v5155 = vand.u32 %v5153, 15
      %v5156 = vsub.s32 0, %v5155
      %v5157 = vsel %vm5151, %v5156, %v5155
      %vm5158 = vcmp.lt.s32.totalorder %v5076, 0
      %v5159 = vsub.s32 0, %v5076
      %v5160 = vsel %vm5158, %v5159, %v5076
      %v5161 = vshrl.u32 %v5160, 4
      %v5162 = vand.u32 %v5160, 15
      %v5163 = vsub.s32 0, %v5162
      %v5164 = vsel %vm5158, %v5163, %v5162
      %vm5165 = vcmp.lt.s32.totalorder %v5077, 0
      %v5166 = vsub.s32 0, %v5077
      %v5167 = vsel %vm5165, %v5166, %v5077
      %v5168 = vshrl.u32 %v5167, 4
      %v5169 = vand.u32 %v5167, 15
      %v5170 = vsub.s32 0, %v5169
      %v5171 = vsel %vm5165, %v5170, %v5169
      %vm5172 = vcmp.lt.s32.totalorder %v5078, 0
      %v5173 = vsub.s32 0, %v5078
      %v5174 = vsel %vm5172, %v5173, %v5078
      %v5175 = vshrl.u32 %v5174, 4
      %v5176 = vand.u32 %v5174, 15
      %v5177 = vsub.s32 0, %v5176
      %v5178 = vsel %vm5172, %v5177, %v5176
      %vm5179 = vcmp.lt.s32.totalorder %v5079, 0
      %v5180 = vsub.s32 0, %v5079
      %v5181 = vsel %vm5179, %v5180, %v5079
      %v5182 = vshrl.u32 %v5181, 4
      %v5183 = vand.u32 %v5181, 15
      %v5184 = vsub.s32 0, %v5183
      %v5185 = vsel %vm5179, %v5184, %v5183
      %vm5186 = vcmp.lt.s32.totalorder %v5080, 0
      %v5187 = vsub.s32 0, %v5080
      %v5188 = vsel %vm5186, %v5187, %v5080
      %v5189 = vshrl.u32 %v5188, 4
      %v5190 = vand.u32 %v5188, 15
      %v5191 = vsub.s32 0, %v5190
      %v5192 = vsel %vm5186, %v5191, %v5190
      %vm5193 = vcmp.lt.s32.totalorder %v5081, 0
      %v5194 = vsub.s32 0, %v5081
      %v5195 = vsel %vm5193, %v5194, %v5081
      %v5196 = vshrl.u32 %v5195, 4
      %v5197 = vand.u32 %v5195, 15
      %v5198 = vsub.s32 0, %v5197
      %v5199 = vsel %vm5193, %v5198, %v5197
      %vm5200 = vcmp.lt.s32.totalorder %v5082, 0
      %v5201 = vsub.s32 0, %v5082
      %v5202 = vsel %vm5200, %v5201, %v5082
      %v5203 = vshrl.u32 %v5202, 4
      %v5204 = vand.u32 %v5202, 15
      %v5205 = vsub.s32 0, %v5204
      %v5206 = vsel %vm5200, %v5205, %v5204
      %vm5207 = vcmp.lt.s32.totalorder %v5083, 0
      %v5208 = vsub.s32 0, %v5083
      %v5209 = vsel %vm5207, %v5208, %v5083
      %v5210 = vshrl.u32 %v5209, 4
      %v5211 = vand.u32 %v5209, 15
      %v5212 = vsub.s32 0, %v5211
      %v5213 = vsel %vm5207, %v5212, %v5211
      %vm5214 = vcmp.lt.s32.totalorder %v5084, 0
      %v5215 = vsub.s32 0, %v5084
      %v5216 = vsel %vm5214, %v5215, %v5084
      %v5217 = vshrl.u32 %v5216, 4
      %v5218 = vand.u32 %v5216, 15
      %v5219 = vsub.s32 0, %v5218
      %v5220 = vsel %vm5214, %v5219, %v5218
      %vm5221 = vcmp.lt.s32.totalorder %v5085, 0
      %v5222 = vsub.s32 0, %v5085
      %v5223 = vsel %vm5221, %v5222, %v5085
      %v5224 = vshrl.u32 %v5223, 4
      %v5225 = vand.u32 %v5223, 15
      %v5226 = vsub.s32 0, %v5225
      %v5227 = vsel %vm5221, %v5226, %v5225
      %vm5228 = vcmp.lt.s32.totalorder %v5086, 0
      %v5229 = vsub.s32 0, %v5086
      %v5230 = vsel %vm5228, %v5229, %v5086
      %v5231 = vshrl.u32 %v5230, 4
      %v5232 = vand.u32 %v5230, 15
      %v5233 = vsub.s32 0, %v5232
      %v5234 = vsel %vm5228, %v5233, %v5232
      %vm5235 = vcmp.lt.s32.totalorder %v5087, 0
      %v5236 = vsub.s32 0, %v5087
      %v5237 = vsel %vm5235, %v5236, %v5087
      %v5238 = vshrl.u32 %v5237, 4
      %v5239 = vand.u32 %v5237, 15
      %v5240 = vsub.s32 0, %v5239
      %v5241 = vsel %vm5235, %v5240, %v5239
      %vm5242 = vcmp.lt.s32.totalorder %v5088, 0
      %v5243 = vsub.s32 0, %v5088
      %v5244 = vsel %vm5242, %v5243, %v5088
      %v5245 = vshrl.u32 %v5244, 4
      %v5246 = vand.u32 %v5244, 15
      %v5247 = vsub.s32 0, %v5246
      %v5248 = vsel %vm5242, %v5247, %v5246
      %vm5249 = vcmp.lt.s32.totalorder %v5089, 0
      %v5250 = vsub.s32 0, %v5089
      %v5251 = vsel %vm5249, %v5250, %v5089
      %v5252 = vshrl.u32 %v5251, 4
      %v5253 = vand.u32 %v5251, 15
      %v5254 = vsub.s32 0, %v5253
      %v5255 = vsel %vm5249, %v5254, %v5253
      %vm5256 = vcmp.lt.s32.totalorder %v5090, 0
      %v5257 = vsub.s32 0, %v5090
      %v5258 = vsel %vm5256, %v5257, %v5090
      %v5259 = vshrl.u32 %v5258, 4
      %v5260 = vand.u32 %v5258, 15
      %v5261 = vsub.s32 0, %v5260
      %v5262 = vsel %vm5256, %v5261, %v5260
      %vm5263 = vcmp.lt.s32.totalorder %v5091, 0
      %v5264 = vsub.s32 0, %v5091
      %v5265 = vsel %vm5263, %v5264, %v5091
      %v5266 = vshrl.u32 %v5265, 4
      %v5267 = vand.u32 %v5265, 15
      %v5268 = vsub.s32 0, %v5267
      %v5269 = vsel %vm5263, %v5268, %v5267
      %vm5270 = vcmp.lt.s32.totalorder %v5092, 0
      %v5271 = vsub.s32 0, %v5092
      %v5272 = vsel %vm5270, %v5271, %v5092
      %v5273 = vshrl.u32 %v5272, 4
      %v5274 = vand.u32 %v5272, 15
      %v5275 = vsub.s32 0, %v5274
      %v5276 = vsel %vm5270, %v5275, %v5274
      %vm5277 = vcmp.lt.s32.totalorder %v5093, 0
      %v5278 = vsub.s32 0, %v5093
      %v5279 = vsel %vm5277, %v5278, %v5093
      %v5280 = vshrl.u32 %v5279, 4
      %v5281 = vand.u32 %v5279, 15
      %v5282 = vsub.s32 0, %v5281
      %v5283 = vsel %vm5277, %v5282, %v5281
      %vm5284 = vcmp.lt.s32.totalorder %v5094, 0
      %v5285 = vsub.s32 0, %v5094
      %v5286 = vsel %vm5284, %v5285, %v5094
      %v5287 = vshrl.u32 %v5286, 4
      %v5288 = vand.u32 %v5286, 15
      %v5289 = vsub.s32 0, %v5288
      %v5290 = vsel %vm5284, %v5289, %v5288
      %vm5291 = vcmp.ne.s32.totalorder %v5101, 0
      %vm5292 = vcmp.ne.s32.totalorder %v5108, 0
      %vm5293 = vcmp.ne.s32.totalorder %v5115, 0
      %vm5294 = vcmp.ne.s32.totalorder %v5122, 0
      %vm5295 = vcmp.ne.s32.totalorder %v5129, 0
      %vm5296 = vcmp.ne.s32.totalorder %v5136, 0
      %vm5297 = vcmp.ne.s32.totalorder %v5143, 0
      %vm5298 = vcmp.ne.s32.totalorder %v5150, 0
      %vm5299 = vcmp.ne.s32.totalorder %v5157, 0
      %vm5300 = vcmp.ne.s32.totalorder %v5164, 0
      %vm5301 = vcmp.ne.s32.totalorder %v5171, 0
      %vm5302 = vcmp.ne.s32.totalorder %v5178, 0
      %vm5303 = vcmp.ne.s32.totalorder %v5185, 0
      %vm5304 = vcmp.ne.s32.totalorder %v5192, 0
      %vm5305 = vcmp.ne.s32.totalorder %v5199, 0
      %vm5306 = vcmp.ne.s32.totalorder %v5206, 0
      %vm5307 = vcmp.ne.s32.totalorder %v5213, 0
      %vm5308 = vcmp.ne.s32.totalorder %v5220, 0
      %vm5309 = vcmp.ne.s32.totalorder %v5227, 0
      %vm5310 = vcmp.ne.s32.totalorder %v5234, 0
      %vm5311 = vcmp.ne.s32.totalorder %v5241, 0
      %vm5312 = vcmp.ne.s32.totalorder %v5248, 0
      %vm5313 = vcmp.ne.s32.totalorder %v5255, 0
      %vm5314 = vcmp.ne.s32.totalorder %v5262, 0
      %vm5315 = vcmp.ne.s32.totalorder %v5269, 0
      %vm5316 = vcmp.ne.s32.totalorder %v5276, 0
      %vm5317 = vcmp.ne.s32.totalorder %v5283, 0
      %vm5318 = vcmp.ne.s32.totalorder %v5290, 0
      %vm5319 = vcmp.lt.s32.totalorder %v5101, 0
      %vm5320 = vcmp.lt.s32.totalorder %v5108, 0
      %vm5321 = vcmp.lt.s32.totalorder %v5115, 0
      %vm5322 = vcmp.lt.s32.totalorder %v5122, 0
      %vm5323 = vcmp.lt.s32.totalorder %v5129, 0
      %vm5324 = vcmp.lt.s32.totalorder %v5136, 0
      %vm5325 = vcmp.lt.s32.totalorder %v5143, 0
      %vm5326 = vcmp.lt.s32.totalorder %v5150, 0
      %vm5327 = vcmp.lt.s32.totalorder %v5157, 0
      %vm5328 = vcmp.lt.s32.totalorder %v5164, 0
      %vm5329 = vcmp.lt.s32.totalorder %v5171, 0
      %vm5330 = vcmp.lt.s32.totalorder %v5178, 0
      %vm5331 = vcmp.lt.s32.totalorder %v5185, 0
      %vm5332 = vcmp.lt.s32.totalorder %v5192, 0
      %vm5333 = vcmp.lt.s32.totalorder %v5199, 0
      %vm5334 = vcmp.lt.s32.totalorder %v5206, 0
      %vm5335 = vcmp.lt.s32.totalorder %v5213, 0
      %vm5336 = vcmp.lt.s32.totalorder %v5220, 0
      %vm5337 = vcmp.lt.s32.totalorder %v5227, 0
      %vm5338 = vcmp.lt.s32.totalorder %v5234, 0
      %vm5339 = vcmp.lt.s32.totalorder %v5241, 0
      %vm5340 = vcmp.lt.s32.totalorder %v5248, 0
      %vm5341 = vcmp.lt.s32.totalorder %v5255, 0
      %vm5342 = vcmp.lt.s32.totalorder %v5262, 0
      %vm5343 = vcmp.lt.s32.totalorder %v5269, 0
      %vm5344 = vcmp.lt.s32.totalorder %v5276, 0
      %vm5345 = vcmp.lt.s32.totalorder %v5283, 0
      %vm5346 = vcmp.lt.s32.totalorder %v5290, 0
      %vm5347 = vmand %vm5319, %vm5291
      %vm5348 = vmand %vm5320, %vm5292
      %vm5349 = vmand %vm5321, %vm5293
      %vm5350 = vmand %vm5322, %vm5294
      %vm5351 = vmand %vm5323, %vm5295
      %vm5352 = vmand %vm5324, %vm5296
      %vm5353 = vmand %vm5325, %vm5297
      %vm5354 = vmand %vm5326, %vm5298
      %vm5355 = vmand %vm5327, %vm5299
      %vm5356 = vmand %vm5328, %vm5300
      %vm5357 = vmand %vm5329, %vm5301
      %vm5358 = vmand %vm5330, %vm5302
      %vm5359 = vmand %vm5331, %vm5303
      %vm5360 = vmand %vm5332, %vm5304
      %vm5361 = vmand %vm5333, %vm5305
      %vm5362 = vmand %vm5334, %vm5306
      %vm5363 = vmand %vm5335, %vm5307
      %vm5364 = vmand %vm5336, %vm5308
      %vm5365 = vmand %vm5337, %vm5309
      %vm5366 = vmand %vm5338, %vm5310
      %vm5367 = vmand %vm5339, %vm5311
      %vm5368 = vmand %vm5340, %vm5312
      %vm5369 = vmand %vm5341, %vm5313
      %vm5370 = vmand %vm5342, %vm5314
      %vm5371 = vmand %vm5343, %vm5315
      %vm5372 = vmand %vm5344, %vm5316
      %vm5373 = vmand %vm5345, %vm5317
      %vm5374 = vmand %vm5346, %vm5318
      %v5375 = vadd.s32 %v5101, 16
      %v5376 = vadd.s32 %v5108, 16
      %v5377 = vadd.s32 %v5115, 16
      %v5378 = vadd.s32 %v5122, 16
      %v5379 = vadd.s32 %v5129, 16
      %v5380 = vadd.s32 %v5136, 16
      %v5381 = vadd.s32 %v5143, 16
      %v5382 = vadd.s32 %v5150, 16
      %v5383 = vadd.s32 %v5157, 16
      %v5384 = vadd.s32 %v5164, 16
      %v5385 = vadd.s32 %v5171, 16
      %v5386 = vadd.s32 %v5178, 16
      %v5387 = vadd.s32 %v5185, 16
      %v5388 = vadd.s32 %v5192, 16
      %v5389 = vadd.s32 %v5199, 16
      %v5390 = vadd.s32 %v5206, 16
      %v5391 = vadd.s32 %v5213, 16
      %v5392 = vadd.s32 %v5220, 16
      %v5393 = vadd.s32 %v5227, 16
      %v5394 = vadd.s32 %v5234, 16
      %v5395 = vadd.s32 %v5241, 16
      %v5396 = vadd.s32 %v5248, 16
      %v5397 = vadd.s32 %v5255, 16
      %v5398 = vadd.s32 %v5262, 16
      %v5399 = vadd.s32 %v5269, 16
      %v5400 = vadd.s32 %v5276, 16
      %v5401 = vadd.s32 %v5283, 16
      %v5402 = vadd.s32 %v5290, 16
      %v5403 = vsel %vm5347, %v5375, %v5101
      %v5404 = vsel %vm5348, %v5376, %v5108
      %v5405 = vsel %vm5349, %v5377, %v5115
      %v5406 = vsel %vm5350, %v5378, %v5122
      %v5407 = vsel %vm5351, %v5379, %v5129
      %v5408 = vsel %vm5352, %v5380, %v5136
      %v5409 = vsel %vm5353, %v5381, %v5143
      %v5410 = vsel %vm5354, %v5382, %v5150
      %v5411 = vsel %vm5355, %v5383, %v5157
      %v5412 = vsel %vm5356, %v5384, %v5164
      %v5413 = vsel %vm5357, %v5385, %v5171
      %v5414 = vsel %vm5358, %v5386, %v5178
      %v5415 = vsel %vm5359, %v5387, %v5185
      %v5416 = vsel %vm5360, %v5388, %v5192
      %v5417 = vsel %vm5361, %v5389, %v5199
      %v5418 = vsel %vm5362, %v5390, %v5206
      %v5419 = vsel %vm5363, %v5391, %v5213
      %v5420 = vsel %vm5364, %v5392, %v5220
      %v5421 = vsel %vm5365, %v5393, %v5227
      %v5422 = vsel %vm5366, %v5394, %v5234
      %v5423 = vsel %vm5367, %v5395, %v5241
      %v5424 = vsel %vm5368, %v5396, %v5248
      %v5425 = vsel %vm5369, %v5397, %v5255
      %v5426 = vsel %vm5370, %v5398, %v5262
      %v5427 = vsel %vm5371, %v5399, %v5269
      %v5428 = vsel %vm5372, %v5400, %v5276
      %v5429 = vsel %vm5373, %v5401, %v5283
      %v5430 = vsel %vm5374, %v5402, %v5290
      %vm5431 = vcmp.lt.s32.totalorder %v5403, 14
      %vm5432 = vcmp.lt.s32.totalorder %v5404, 14
      %vm5433 = vcmp.lt.s32.totalorder %v5405, 14
      %vm5434 = vcmp.lt.s32.totalorder %v5406, 14
      %vm5435 = vcmp.lt.s32.totalorder %v5407, 14
      %vm5436 = vcmp.lt.s32.totalorder %v5408, 14
      %vm5437 = vcmp.lt.s32.totalorder %v5409, 14
      %vm5438 = vcmp.lt.s32.totalorder %v5410, 14
      %vm5439 = vcmp.lt.s32.totalorder %v5411, 14
      %vm5440 = vcmp.lt.s32.totalorder %v5412, 14
      %vm5441 = vcmp.lt.s32.totalorder %v5413, 14
      %vm5442 = vcmp.lt.s32.totalorder %v5414, 14
      %vm5443 = vcmp.lt.s32.totalorder %v5415, 14
      %vm5444 = vcmp.lt.s32.totalorder %v5416, 14
      %vm5445 = vcmp.lt.s32.totalorder %v5417, 14
      %vm5446 = vcmp.lt.s32.totalorder %v5418, 14
      %vm5447 = vcmp.lt.s32.totalorder %v5419, 14
      %vm5448 = vcmp.lt.s32.totalorder %v5420, 14
      %vm5449 = vcmp.lt.s32.totalorder %v5421, 14
      %vm5450 = vcmp.lt.s32.totalorder %v5422, 14
      %vm5451 = vcmp.lt.s32.totalorder %v5423, 14
      %vm5452 = vcmp.lt.s32.totalorder %v5424, 14
      %vm5453 = vcmp.lt.s32.totalorder %v5425, 14
      %vm5454 = vcmp.lt.s32.totalorder %v5426, 14
      %vm5455 = vcmp.lt.s32.totalorder %v5427, 14
      %vm5456 = vcmp.lt.s32.totalorder %v5428, 14
      %vm5457 = vcmp.lt.s32.totalorder %v5429, 14
      %vm5458 = vcmp.lt.s32.totalorder %v5430, 14
      %v5459 = vsel %vm5431, 1, 0
      %v5460 = vsel %vm5432, 1, 0
      %v5461 = vsel %vm5433, 1, 0
      %v5462 = vsel %vm5434, 1, 0
      %v5463 = vsel %vm5435, 1, 0
      %v5464 = vsel %vm5436, 1, 0
      %v5465 = vsel %vm5437, 1, 0
      %v5466 = vsel %vm5438, 1, 0
      %v5467 = vsel %vm5439, 1, 0
      %v5468 = vsel %vm5440, 1, 0
      %v5469 = vsel %vm5441, 1, 0
      %v5470 = vsel %vm5442, 1, 0
      %v5471 = vsel %vm5443, 1, 0
      %v5472 = vsel %vm5444, 1, 0
      %v5473 = vsel %vm5445, 1, 0
      %v5474 = vsel %vm5446, 1, 0
      %v5475 = vsel %vm5447, 1, 0
      %v5476 = vsel %vm5448, 1, 0
      %v5477 = vsel %vm5449, 1, 0
      %v5478 = vsel %vm5450, 1, 0
      %v5479 = vsel %vm5451, 1, 0
      %v5480 = vsel %vm5452, 1, 0
      %v5481 = vsel %vm5453, 1, 0
      %v5482 = vsel %vm5454, 1, 0
      %v5483 = vsel %vm5455, 1, 0
      %v5484 = vsel %vm5456, 1, 0
      %v5485 = vsel %vm5457, 1, 0
      %v5486 = vsel %vm5458, 1, 0
      %vm5487 = vcmp.eq.s32.totalorder %v5459, 1
      %vm5488 = vcmp.eq.s32.totalorder %v5460, 1
      %vm5489 = vcmp.eq.s32.totalorder %v5461, 1
      %vm5490 = vcmp.eq.s32.totalorder %v5462, 1
      %vm5491 = vcmp.eq.s32.totalorder %v5463, 1
      %vm5492 = vcmp.eq.s32.totalorder %v5464, 1
      %vm5493 = vcmp.eq.s32.totalorder %v5465, 1
      %vm5494 = vcmp.eq.s32.totalorder %v5466, 1
      %vm5495 = vcmp.eq.s32.totalorder %v5467, 1
      %vm5496 = vcmp.eq.s32.totalorder %v5468, 1
      %vm5497 = vcmp.eq.s32.totalorder %v5469, 1
      %vm5498 = vcmp.eq.s32.totalorder %v5470, 1
      %vm5499 = vcmp.eq.s32.totalorder %v5471, 1
      %vm5500 = vcmp.eq.s32.totalorder %v5472, 1
      %vm5501 = vcmp.eq.s32.totalorder %v5473, 1
      %vm5502 = vcmp.eq.s32.totalorder %v5474, 1
      %vm5503 = vcmp.eq.s32.totalorder %v5475, 1
      %vm5504 = vcmp.eq.s32.totalorder %v5476, 1
      %vm5505 = vcmp.eq.s32.totalorder %v5477, 1
      %vm5506 = vcmp.eq.s32.totalorder %v5478, 1
      %vm5507 = vcmp.eq.s32.totalorder %v5479, 1
      %vm5508 = vcmp.eq.s32.totalorder %v5480, 1
      %vm5509 = vcmp.eq.s32.totalorder %v5481, 1
      %vm5510 = vcmp.eq.s32.totalorder %v5482, 1
      %vm5511 = vcmp.eq.s32.totalorder %v5483, 1
      %vm5512 = vcmp.eq.s32.totalorder %v5484, 1
      %vm5513 = vcmp.eq.s32.totalorder %v5485, 1
      %vm5514 = vcmp.eq.s32.totalorder %v5486, 1
      %v5515 = vsel %vm5487, %v5007, 0.0
      %v5516 = vsel %vm5488, %v5008, 0.0
      %v5517 = vsel %vm5489, %v5009, 0.0
      %v5518 = vsel %vm5490, %v5010, 0.0
      %v5519 = vsel %vm5491, %v5011, 0.0
      %v5520 = vsel %vm5492, %v5012, 0.0
      %v5521 = vsel %vm5493, %v5013, 0.0
      %v5522 = vsel %vm5494, %v5014, 0.0
      %v5523 = vsel %vm5495, %v5015, 0.0
      %v5524 = vsel %vm5496, %v5016, 0.0
      %v5525 = vsel %vm5497, %v5017, 0.0
      %v5526 = vsel %vm5498, %v5018, 0.0
      %v5527 = vsel %vm5499, %v5019, 0.0
      %v5528 = vsel %vm5500, %v5020, 0.0
      %v5529 = vsel %vm5501, %v5021, 0.0
      %v5530 = vsel %vm5502, %v5022, 0.0
      %v5531 = vsel %vm5503, %v5023, 0.0
      %v5532 = vsel %vm5504, %v5024, 0.0
      %v5533 = vsel %vm5505, %v5025, 0.0
      %v5534 = vsel %vm5506, %v5026, 0.0
      %v5535 = vsel %vm5507, %v5027, 0.0
      %v5536 = vsel %vm5508, %v5028, 0.0
      %v5537 = vsel %vm5509, %v5029, 0.0
      %v5538 = vsel %vm5510, %v5030, 0.0
      %v5539 = vsel %vm5511, %v5031, 0.0
      %v5540 = vsel %vm5512, %v5032, 0.0
      %v5541 = vsel %vm5513, %v5033, 0.0
      %v5542 = vsel %vm5514, %v5034, 0.0
      %v5543 = vsel %vm376, %v5515, 0.0
      %v5544 = vsel %vm376, %v5516, 0.0
      %v5545 = vadd.f32 %v5543, %v5544
      %v5546 = vsel %vm376, %v5517, 0.0
      %v5547 = vadd.f32 %v5545, %v5546
      %v5548 = vsel %vm376, %v5518, 0.0
      %v5549 = vadd.f32 %v5547, %v5548
      %v5550 = vsel %vm376, %v5519, 0.0
      %v5551 = vadd.f32 %v5549, %v5550
      %v5552 = vsel %vm376, %v5520, 0.0
      %v5553 = vadd.f32 %v5551, %v5552
      %v5554 = vsel %vm376, %v5521, 0.0
      %v5555 = vadd.f32 %v5553, %v5554
      %v5556 = vsel %vm376, %v5522, 0.0
      %v5557 = vadd.f32 %v5555, %v5556
      %v5558 = vsel %vm376, %v5523, 0.0
      %v5559 = vadd.f32 %v5557, %v5558
      %v5560 = vsel %vm376, %v5524, 0.0
      %v5561 = vadd.f32 %v5559, %v5560
      %v5562 = vsel %vm376, %v5525, 0.0
      %v5563 = vadd.f32 %v5561, %v5562
      %v5564 = vsel %vm376, %v5526, 0.0
      %v5565 = vadd.f32 %v5563, %v5564
      %v5566 = vsel %vm376, %v5527, 0.0
      %v5567 = vadd.f32 %v5565, %v5566
      %v5568 = vsel %vm376, %v5528, 0.0
      %v5569 = vadd.f32 %v5567, %v5568
      %v5570 = vsel %vm376, %v5529, 0.0
      %v5571 = vadd.f32 %v5569, %v5570
      %v5572 = vsel %vm376, %v5530, 0.0
      %v5573 = vadd.f32 %v5571, %v5572
      %v5574 = vsel %vm376, %v5531, 0.0
      %v5575 = vadd.f32 %v5573, %v5574
      %v5576 = vsel %vm376, %v5532, 0.0
      %v5577 = vadd.f32 %v5575, %v5576
      %v5578 = vsel %vm376, %v5533, 0.0
      %v5579 = vadd.f32 %v5577, %v5578
      %v5580 = vsel %vm376, %v5534, 0.0
      %v5581 = vadd.f32 %v5579, %v5580
      %v5582 = vsel %vm376, %v5535, 0.0
      %v5583 = vadd.f32 %v5581, %v5582
      %v5584 = vsel %vm376, %v5536, 0.0
      %v5585 = vadd.f32 %v5583, %v5584
      %v5586 = vsel %vm376, %v5537, 0.0
      %v5587 = vadd.f32 %v5585, %v5586
      %v5588 = vsel %vm376, %v5538, 0.0
      %v5589 = vadd.f32 %v5587, %v5588
      %v5590 = vsel %vm376, %v5539, 0.0
      %v5591 = vadd.f32 %v5589, %v5590
      %v5592 = vsel %vm376, %v5540, 0.0
      %v5593 = vadd.f32 %v5591, %v5592
      %v5594 = vsel %vm376, %v5541, 0.0
      %v5595 = vadd.f32 %v5593, %v5594
      %v5596 = vsel %vm5062, %v5542, 0.0
      %v5597 = vadd.f32 %v5595, %v5596
      %v5598 = vrot.slane %v5597, 4
      %v5599 = vadd.f32 %v5597, %v5598
      %v5600 = vrot.slane %v5599, 2
      %v5601 = vadd.f32 %v5599, %v5600
      %v5602 = vrot.slane %v5601, 1
      %v5603 = vadd.f32 %v5601, %v5602
      %vm5604 = vcmask 24576
      %5605 = vst.msk [vmem:[%s282] sm:$0x1] %vm5604, %v5603
      %v5606 = vmul.f32 %v5515, %v5515
      %v5607 = vmul.f32 %v5516, %v5516
      %v5608 = vmul.f32 %v5517, %v5517
      %v5609 = vmul.f32 %v5518, %v5518
      %v5610 = vmul.f32 %v5519, %v5519
      %v5611 = vmul.f32 %v5520, %v5520
      %v5612 = vmul.f32 %v5521, %v5521
      %v5613 = vmul.f32 %v5522, %v5522
      %v5614 = vmul.f32 %v5523, %v5523
      %v5615 = vmul.f32 %v5524, %v5524
      %v5616 = vmul.f32 %v5525, %v5525
      %v5617 = vmul.f32 %v5526, %v5526
      %v5618 = vmul.f32 %v5527, %v5527
      %v5619 = vmul.f32 %v5528, %v5528
      %v5620 = vmul.f32 %v5529, %v5529
      %v5621 = vmul.f32 %v5530, %v5530
      %v5622 = vmul.f32 %v5531, %v5531
      %v5623 = vmul.f32 %v5532, %v5532
      %v5624 = vmul.f32 %v5533, %v5533
      %v5625 = vmul.f32 %v5534, %v5534
      %v5626 = vmul.f32 %v5535, %v5535
      %v5627 = vmul.f32 %v5536, %v5536
      %v5628 = vmul.f32 %v5537, %v5537
      %v5629 = vmul.f32 %v5538, %v5538
      %v5630 = vmul.f32 %v5539, %v5539
      %v5631 = vmul.f32 %v5540, %v5540
      %v5632 = vmul.f32 %v5541, %v5541
      %v5633 = vmul.f32 %v5542, %v5542
      %v5634 = vsel %vm376, %v5606, 0.0
      %v5635 = vsel %vm376, %v5607, 0.0
      %v5636 = vadd.f32 %v5634, %v5635
      %v5637 = vsel %vm376, %v5608, 0.0
      %v5638 = vadd.f32 %v5636, %v5637
      %v5639 = vsel %vm376, %v5609, 0.0
      %v5640 = vadd.f32 %v5638, %v5639
      %v5641 = vsel %vm376, %v5610, 0.0
      %v5642 = vadd.f32 %v5640, %v5641
      %v5643 = vsel %vm376, %v5611, 0.0
      %v5644 = vadd.f32 %v5642, %v5643
      %v5645 = vsel %vm376, %v5612, 0.0
      %v5646 = vadd.f32 %v5644, %v5645
      %v5647 = vsel %vm376, %v5613, 0.0
      %v5648 = vadd.f32 %v5646, %v5647
      %v5649 = vsel %vm376, %v5614, 0.0
      %v5650 = vadd.f32 %v5648, %v5649
      %v5651 = vsel %vm376, %v5615, 0.0
      %v5652 = vadd.f32 %v5650, %v5651
      %v5653 = vsel %vm376, %v5616, 0.0
      %v5654 = vadd.f32 %v5652, %v5653
      %v5655 = vsel %vm376, %v5617, 0.0
      %v5656 = vadd.f32 %v5654, %v5655
      %v5657 = vsel %vm376, %v5618, 0.0
      %v5658 = vadd.f32 %v5656, %v5657
      %v5659 = vsel %vm376, %v5619, 0.0
      %v5660 = vadd.f32 %v5658, %v5659
      %v5661 = vsel %vm376, %v5620, 0.0
      %v5662 = vadd.f32 %v5660, %v5661
      %v5663 = vsel %vm376, %v5621, 0.0
      %v5664 = vadd.f32 %v5662, %v5663
      %v5665 = vsel %vm376, %v5622, 0.0
      %v5666 = vadd.f32 %v5664, %v5665
      %v5667 = vsel %vm376, %v5623, 0.0
      %v5668 = vadd.f32 %v5666, %v5667
      %v5669 = vsel %vm376, %v5624, 0.0
      %v5670 = vadd.f32 %v5668, %v5669
      %v5671 = vsel %vm376, %v5625, 0.0
      %v5672 = vadd.f32 %v5670, %v5671
      %v5673 = vsel %vm376, %v5626, 0.0
      %v5674 = vadd.f32 %v5672, %v5673
      %v5675 = vsel %vm376, %v5627, 0.0
      %v5676 = vadd.f32 %v5674, %v5675
      %v5677 = vsel %vm376, %v5628, 0.0
      %v5678 = vadd.f32 %v5676, %v5677
      %v5679 = vsel %vm376, %v5629, 0.0
      %v5680 = vadd.f32 %v5678, %v5679
      %v5681 = vsel %vm376, %v5630, 0.0
      %v5682 = vadd.f32 %v5680, %v5681
      %v5683 = vsel %vm376, %v5631, 0.0
      %v5684 = vadd.f32 %v5682, %v5683
      %v5685 = vsel %vm376, %v5632, 0.0
      %v5686 = vadd.f32 %v5684, %v5685
      %v5687 = vsel %vm5062, %v5633, 0.0
      %v5688 = vadd.f32 %v5686, %v5687
      %v5689 = vrot.slane %v5688, 4
      %v5690 = vadd.f32 %v5688, %v5689
      %v5691 = vrot.slane %v5690, 2
      %v5692 = vadd.f32 %v5690, %v5691
      %v5693 = vrot.slane %v5692, 1
      %v5694 = vadd.f32 %v5692, %v5693
      %5695 = vst.msk [vmem:[%s282 + $0x1] sm:$0x1] %vm5604, %v5694
      %p5696 = scmp.lt.s32.totalorder %s18, 1
      %s5697 = scalar_select %p5696, %s18, 1
      %s5698 = smul.addr %s5697, 28
      %s5699 = smul.addr %s5698, 8
      %s5700 = scalar_lea.vmem %s5, %s5699
      %p5701 = scmp.lt.s32.totalorder %s18, 1
      %s5702 = scalar_select %p5701, %s18, 1
      %s5703 = smul.addr %s5702, 2
      %s5704 = scalar_lea.vmem %s6, %s5703
      // Predicated region
      $region41: #{up_step_forward.5} parent=39 // pred_check
        %p5705 = pneg %p151
      $region42: #{up_step_forward.5} parent=39 // pred_check_branch
        %5707 = sbr.rel (%p5705) target = $region44
      $region43: #{up_step_forward.5} parent=39 // pred_region
        _
      $region44: #{up_step_forward.5} parent=39 // pred_fallthru
        _
      // Predicated region
      $region45: #{up_step_forward.5} parent=39 // pred_check
        %p5708 = pneg %p177
      $region46: #{up_step_forward.5} parent=39 // pred_check_branch
        %5710 = sbr.rel (%p5708) target = $region48
      $region47: #{up_step_forward.5} parent=39 // pred_region
        _
      $region48: #{up_step_forward.5} parent=39 // pred_fallthru
        _
    $region40: #{up_step_forward.5} parent=5 // pred_fallthru
      _
    %p5711 = scmp.le.s32.totalorder 2, %s13
    // Predicated region
    $region49: #{up_step_forward.5} parent=5 // pred_check
      %p5712 = pneg %p5711
    $region50: #{up_step_forward.5} parent=5 // pred_check_branch
      %5714 = sbr.rel (%p5712) target = $region52
    $region51: #{up_step_forward.5} parent=5 // pred_region
      %s5715 = ssub.s32 %s13, 2
      // Predicated region
      $region53: #{up_step_forward.5} parent=51 // pred_check
        %p5716 = pneg %p157
      $region54: #{up_step_forward.5} parent=51 // pred_check_branch
        %5718 = sbr.rel (%p5716) target = $region56
      $region55: #{up_step_forward.5} parent=51 // pred_region
        %p5719 = scmp.lt.s32.totalorder %s19, 1
        %s5720 = scalar_select %p5719, %s19, 1
        %s5721 = smul.addr %s5720, 28
        %s5722 = smul.addr %s5721, 8
        %s5723 = scalar_lea.vmem %s5, %s5722
      $region56: #{up_step_forward.5} parent=51 // pred_fallthru
        _
      // Predicated region
      $region57: #{up_step_forward.5} parent=51 // pred_check
        %p5724 = pneg %p183
      $region58: #{up_step_forward.5} parent=51 // pred_check_branch
        %5726 = sbr.rel (%p5724) target = $region60
      $region59: #{up_step_forward.5} parent=51 // pred_region
        %p5727 = scmp.lt.s32.totalorder %s19, 1
        %s5728 = scalar_select %p5727, %s19, 1
        %s5729 = smul.addr %s5728, 2
        %s5730 = scalar_lea.vmem %s6, %s5729
      $region60: #{up_step_forward.5} parent=51 // pred_fallthru
        _
    $region52: #{up_step_forward.5} parent=5 // pred_fallthru
      _
  $region6: #{up_step_forward.5} parent=0 // loop_footer
    %s17 = sadd.s32 1, %s13
  $region7: #{up_step_forward.5} parent=0 // loop_footer_branch
    %12 = sbr.rel target = $region3
  $region8: #{up_step_forward.5} parent=0 // loop_exit
    _

</llo_original>
